<compile_context>
chip_gen: v6e
topology: v6e:2x2x1
jax: 0.10.0
libtpu: 0.0.40
codegen_flags: <defaults>
</compile_context>

<pallas_src>
import numpy as np
import jax
import jax.numpy as jnp
from jax import lax
from jax.experimental import pallas as pl
from jax.experimental.pallas import tpu as pltpu

CHANNELS = 32           # Encoder(channels=32)
N_FRAMES = 64           # forward reshapes the spectrogram to (B, 64, 257)
WIN = 512               # geom_basis(512, sr) -> 257 bins
HOP = 256
N_BINS = 257
N_BINS_PAD = 384        # zero padded to 3 full 128-lane tiles
N_LAYERS = 6            # int(np.log2(64))
N_SAMPLES = N_FRAMES * HOP   # 16384 samples -> exactly 64 frames (pad=True)
BT = 16                 # batch elements per grid step (one bf16 sublane tile)
OUT_PAD = 128           # lane-dense output width (channels padded 32 -> 128)


def encoder_kernel(frames_ref, basis_ref, w_init_ref, b_init_ref,
                   w_net_ref, b_net_ref, w_fin_ref, b_fin_ref, out_ref):
    # frames_ref : (64, BT, 512) bf16  (time-major)
    # basis_ref  : (512, 384)    bf16
    # w_init_ref : (384, C)  bf16      b_init_ref : (1, C)   f32
    # w_net_ref  : (6, 3C, C) bf16     b_net_ref  : (6, 1, C) f32
    # w_fin_ref  : (C, 128)  bf16      b_fin_ref  : (1, 128)  f32
    # out_ref    : (BT, 128) f32   (wrapper keeps [:, :C])
    C = CHANNELS

    # rows ordered (frame, batch): row index = t*BT + b
    f = frames_ref[...].reshape(N_FRAMES * BT, WIN)                     # (1024, 512)

    # frequency_transform(signal) * 5  ==  |frames @ basis^T| * 5
    spec = jnp.abs(jnp.dot(f, basis_ref[...],
                           preferred_element_type=jnp.float32)) * 5.0   # (1024, 384)

    # initial 1x1 conv (dense over channels, per frame), no activation
    h = (jnp.dot(spec.astype(jnp.bfloat16), w_init_ref[...],
                 preferred_element_type=jnp.float32)
         + b_init_ref[...]).astype(jnp.bfloat16)                        # (1024, C)

    L = N_FRAMES
    for l in range(N_LAYERS):
        Lout = L // 2
        # Conv1d(k=3, s=2, p=1): y[t] = W0 x[2t-1] + W1 x[2t] + W2 x[2t+1] + b
        hb = h.reshape(Lout, 2, BT, C)            # frame = 2*pair + parity
        h_even = hb[:, 0]                         # x[2t]    (Lout, BT, C)
        h_odd = hb[:, 1]                          # x[2t+1]
        zrow = jnp.zeros((1, BT, C), jnp.bfloat16)
        if Lout > 1:
            h_prev = jnp.concatenate([zrow, h_odd[:Lout - 1]], axis=0)  # x[2t-1]
        else:
            h_prev = zrow
        lhs = jnp.concatenate([h_prev, h_even, h_odd],
                              axis=-1).reshape(Lout * BT, 3 * C)        # (Lout*BT, 3C)
        acc = jnp.dot(lhs, w_net_ref[l],
                      preferred_element_type=jnp.float32) + b_net_ref[l]
        h = jnp.where(acc >= 0, acc, 0.2 * acc).astype(jnp.bfloat16)    # LeakyReLU(0.2)
        L = Lout

    # final 1x1 conv; h is (BT, C) (one frame left, batch on sublanes)
    out_ref[...] = (jnp.dot(h, w_fin_ref[...],
                            preferred_element_type=jnp.float32) + b_fin_ref[...])


# ------------------------------ wrapper glue ------------------------------

def frame_signal_time_major(x):
    """STFT framing (win=512, hop=256, pad=True), gathered directly time-major."""
    B = x.shape[0]
    assert x.shape[1] == N_SAMPLES
    xp = jnp.pad(x, ((0, 0), (0, WIN - HOP)))
    idx = jnp.arange(N_FRAMES)[:, None] * HOP + jnp.arange(WIN)[None, :]   # (64, 512)
    return xp[jnp.arange(B)[None, :, None], idx[:, None, :]]               # (64, B, 512)


def prepare_params(p):
    """One-time re-layout / zero-padding / bf16 cast of the module parameters."""
    C = CHANNELS
    basis_t = jnp.zeros((WIN, N_BINS_PAD), jnp.float32)
    basis_t = basis_t.at[:, :N_BINS].set(p["basis"].T)
    w_init = jnp.zeros((N_BINS_PAD, C), jnp.float32)
    w_init = w_init.at[:N_BINS, :].set(p["w_init_pt"][:, :, 0].T)
    # (layer, Cout, Cin, K) -> (layer, K, Cin, Cout) -> (layer, 3*Cin, Cout):
    # row block k matches lhs columns [k*C:(k+1)*C]  (taps x[2t-1+k]).
    w_net = jnp.transpose(p["w_net_pt"], (0, 3, 2, 1)).reshape(N_LAYERS, 3 * C, C)
    w_fin = jnp.zeros((C, OUT_PAD), jnp.float32)
    w_fin = w_fin.at[:, :C].set(p["w_fin_pt"][:, :, 0].T)
    b_fin = jnp.zeros((1, OUT_PAD), jnp.float32).at[0, :C].set(p["b_fin"])
    return {
        "basis_t": basis_t.astype(jnp.bfloat16),
        "w_init": w_init.astype(jnp.bfloat16),
        "b_init": p["b_init"].reshape(1, C).astype(jnp.float32),
        "w_net": w_net.astype(jnp.bfloat16),
        "b_net": p["b_net"].reshape(N_LAYERS, 1, C).astype(jnp.float32),
        "w_fin": w_fin.astype(jnp.bfloat16),
        "b_fin": b_fin,
    }


def encoder_forward(signal, prepped):
    B = signal.shape[0]
    Bp = ((B + BT - 1) // BT) * BT
    x = signal.reshape(B, -1).astype(jnp.bfloat16)
    if Bp != B:
        x = jnp.pad(x, ((0, Bp - B), (0, 0)))
    frames_tb = frame_signal_time_major(x)                  # (64, Bp, 512) bf16

    out = pl.pallas_call(
        encoder_kernel,
        out_shape=jax.ShapeDtypeStruct((Bp, OUT_PAD), jnp.float32),
        grid_spec=pltpu.PrefetchScalarGridSpec(
            num_scalar_prefetch=0,
            grid=(Bp // BT,),
            in_specs=[
                pl.BlockSpec((N_FRAMES, BT, WIN), lambda i: (0, i, 0)),
                pl.BlockSpec((WIN, N_BINS_PAD), lambda i: (0, 0)),
                pl.BlockSpec((N_BINS_PAD, CHANNELS), lambda i: (0, 0)),
                pl.BlockSpec((1, CHANNELS), lambda i: (0, 0)),
                pl.BlockSpec((N_LAYERS, 3 * CHANNELS, CHANNELS),
                             lambda i: (0, 0, 0)),
                pl.BlockSpec((N_LAYERS, 1, CHANNELS), lambda i: (0, 0, 0)),
                pl.BlockSpec((CHANNELS, OUT_PAD), lambda i: (0, 0)),
                pl.BlockSpec((1, OUT_PAD), lambda i: (0, 0)),
            ],
            out_specs=pl.BlockSpec((BT, OUT_PAD), lambda i: (i, 0)),
        ),
        compiler_params=pltpu.CompilerParams(
            dimension_semantics=("parallel",)),
    )(frames_tb, prepped["basis_t"], prepped["w_init"], prepped["b_init"],
      prepped["w_net"], prepped["b_net"], prepped["w_fin"], prepped["b_fin"])
    return out[:B, :CHANNELS]


# ---------------- pure-JAX reference (PyTorch semantics) ----------------

def _ref_conv1d(x_ncl, w_oik, b, stride, padding):
    y = lax.conv_general_dilated(
        x_ncl, w_oik, window_strides=(stride,), padding=[(padding, padding)],
        dimension_numbers=("NCH", "OIH", "NCH"),
        precision=lax.Precision.HIGHEST)
    return y + b[None, :, None]


def encoder_reference(signal, p):
    B = signal.shape[0]
    frames = jnp.transpose(
        frame_signal_time_major(signal.reshape(B, -1).astype(jnp.float32)),
        (1, 0, 2))                                                       # (B,64,512)
    spec = jnp.abs(jnp.einsum("bfw,nw->bfn", frames, p["basis"],
                              precision=lax.Precision.HIGHEST)) * 5.0    # (B,64,257)
    x = jnp.transpose(spec, (0, 2, 1))                                   # NCL
    x = _ref_conv1d(x, p["w_init_pt"], p["b_init"], 1, 0)
    for l in range(N_LAYERS):
        x = _ref_conv1d(x, p["w_net_pt"][l], p["b_net"][l], 2, 1)
        x = jnp.where(x >= 0, x, 0.2 * x)
    x = _ref_conv1d(x, p["w_fin_pt"], p["b_fin"], 1, 0)
    return x.reshape(B, CHANNELS)


def make_params(key):
    ks = jax.random.split(key, 8)
    std = 0.1  # make_initializer(0.1)
    # TODO(synk): zounds geom_basis/short_time_transform (complex geometric STFT
    # basis) is approximated by a deterministic real (257, 512) basis.
    return {
        "basis": std * jax.random.normal(ks[0], (N_BINS, WIN), jnp.float32),
        "w_init_pt": std * jax.random.normal(ks[1], (CHANNELS, N_BINS, 1), jnp.float32),
        "b_init": std * jax.random.normal(ks[2], (CHANNELS,), jnp.float32),
        "w_net_pt": std * jax.random.normal(
            ks[3], (N_LAYERS, CHANNELS, CHANNELS, 3), jnp.float32),
        "b_net": std * jax.random.normal(ks[4], (N_LAYERS, CHANNELS), jnp.float32),
        "w_fin_pt": std * jax.random.normal(ks[5], (CHANNELS, CHANNELS, 1), jnp.float32),
        "b_fin": std * jax.random.normal(ks[6], (CHANNELS,), jnp.float32),
    }


if __name__ == "__main__":
    key = jax.random.PRNGKey(0)
    pkey, xkey = jax.random.split(key)
    params = make_params(pkey)
    prepped = prepare_params(params)      # hoisted out of the hot path

    batch = 20   # not a multiple of BT -> pad/slice path; Bp=32 -> 2 grid steps
    x = jax.random.normal(xkey, (batch, N_SAMPLES), jnp.float32)  # raw audio

    fwd = jax.jit(encoder_forward)
    out = jax.block_until_ready(fwd(x, prepped))
    assert out.shape == (batch, CHANNELS) and out.dtype == jnp.float32

    ref = jax.block_until_ready(encoder_reference(x, params))
    # bf16 matmul operands (f32 accumulate) vs f32/HIGHEST reference.
    np.testing.assert_allclose(np.asarray(out), np.asarray(ref),
                               rtol=3e-2, atol=3e-1)
    print("KERNEL_OK")
</pallas_src>

<mosaic_0001>
module attributes {stable_mosaic.version = 11 : i64} {
  func.func @encoder_kernel(%arg0: i32, %arg1: memref<64x16x512xbf16, #tpu.memory_space<vmem>>, %arg2: memref<512x384xbf16, #tpu.memory_space<vmem>>, %arg3: memref<384x32xbf16, #tpu.memory_space<vmem>>, %arg4: memref<1x32xf32, #tpu.memory_space<vmem>>, %arg5: memref<6x96x32xbf16, #tpu.memory_space<vmem>>, %arg6: memref<6x1x32xf32, #tpu.memory_space<vmem>>, %arg7: memref<32x128xbf16, #tpu.memory_space<vmem>>, %arg8: memref<1x128xf32, #tpu.memory_space<vmem>>, %arg9: memref<16x128xf32, #tpu.memory_space<vmem>>) attributes {dimension_semantics = [#tpu.dimension_semantics<parallel>], iteration_bounds = array<i64: 2>, scalar_prefetch = 0 : i64, scratch_operands = 0 : i64, tpu.core_type = #tpu.core_type<tc>, window_params = [{transform_indices = @transform_0, window_bounds = array<i64: 64, 16, 512>}, {pipeline_mode = #tpu.pipeline_mode<synchronous>, transform_indices = @transform_1, window_bounds = array<i64: 512, 384>}, {pipeline_mode = #tpu.pipeline_mode<synchronous>, transform_indices = @transform_2, window_bounds = array<i64: 384, 32>}, {pipeline_mode = #tpu.pipeline_mode<synchronous>, transform_indices = @transform_3, window_bounds = array<i64: 1, 32>}, {pipeline_mode = #tpu.pipeline_mode<synchronous>, transform_indices = @transform_4, window_bounds = array<i64: 6, 96, 32>}, {pipeline_mode = #tpu.pipeline_mode<synchronous>, transform_indices = @transform_5, window_bounds = array<i64: 6, 1, 32>}, {pipeline_mode = #tpu.pipeline_mode<synchronous>, transform_indices = @transform_6, window_bounds = array<i64: 32, 128>}, {pipeline_mode = #tpu.pipeline_mode<synchronous>, transform_indices = @transform_7, window_bounds = array<i64: 1, 128>}, {transform_indices = @transform_8, window_bounds = array<i64: 16, 128>}]} {
    %c0 = arith.constant 0 : index
    %c0_0 = arith.constant 0 : index
    %c0_1 = arith.constant 0 : index
    %0 = vector.load %arg1[%c0, %c0_0, %c0_1] : memref<64x16x512xbf16, #tpu.memory_space<vmem>>, vector<64x16x512xbf16>
    %1 = vector.shape_cast %0 : vector<64x16x512xbf16> to vector<1024x512xbf16>
    %c0_2 = arith.constant 0 : index
    %c0_3 = arith.constant 0 : index
    %2 = vector.load %arg2[%c0_2, %c0_3] : memref<512x384xbf16, #tpu.memory_space<vmem>>, vector<512x384xbf16>
    %cst = arith.constant dense<0.000000e+00> : vector<1024x384xf32>
    %3 = tpu.matmul %1, %2, %cst {dimension_numbers = #tpu.dot_dimension_numbers<[1], [0], [0], [1], [0, 0, 1, 1], [], []>} : vector<1024x512xbf16>, vector<512x384xbf16>, vector<1024x384xf32> -> vector<1024x384xf32>
    %4 = math.absf %3 : vector<1024x384xf32>
    %cst_4 = arith.constant 5.000000e+00 : f32
    %5 = vector.broadcast %cst_4 : f32 to vector<1024x384xf32>
    %6 = arith.mulf %4, %5 : vector<1024x384xf32>
    %7 = arith.truncf %6 : vector<1024x384xf32> to vector<1024x384xbf16>
    %c0_5 = arith.constant 0 : index
    %c0_6 = arith.constant 0 : index
    %8 = vector.load %arg3[%c0_5, %c0_6] : memref<384x32xbf16, #tpu.memory_space<vmem>>, vector<384x32xbf16>
    %cst_7 = arith.constant dense<0.000000e+00> : vector<1024x32xf32>
    %9 = tpu.matmul %7, %8, %cst_7 {dimension_numbers = #tpu.dot_dimension_numbers<[1], [0], [0], [1], [0, 0, 1, 1], [], []>} : vector<1024x384xbf16>, vector<384x32xbf16>, vector<1024x32xf32> -> vector<1024x32xf32>
    %c0_8 = arith.constant 0 : index
    %c0_9 = arith.constant 0 : index
    %10 = vector.load %arg4[%c0_8, %c0_9] : memref<1x32xf32, #tpu.memory_space<vmem>>, vector<1x32xf32>
    %11 = vector.broadcast %10 : vector<1x32xf32> to vector<1024x32xf32>
    %12 = arith.addf %9, %11 : vector<1024x32xf32>
    %13 = arith.truncf %12 : vector<1024x32xf32> to vector<1024x32xbf16>
    %14 = vector.shape_cast %13 : vector<1024x32xbf16> to vector<32x2x16x32xbf16>
    %15 = vector.extract_strided_slice %14 {offsets = [0, 0, 0, 0], sizes = [32, 1, 16, 32], strides = [1, 1, 1, 1]} : vector<32x2x16x32xbf16> to vector<32x1x16x32xbf16>
    %16 = vector.shape_cast %15 : vector<32x1x16x32xbf16> to vector<32x16x32xbf16>
    %17 = vector.extract_strided_slice %14 {offsets = [0, 1, 0, 0], sizes = [32, 1, 16, 32], strides = [1, 1, 1, 1]} : vector<32x2x16x32xbf16> to vector<32x1x16x32xbf16>
    %18 = vector.shape_cast %17 : vector<32x1x16x32xbf16> to vector<32x16x32xbf16>
    %cst_10 = arith.constant 0.000000e+00 : bf16
    %19 = vector.broadcast %cst_10 : bf16 to vector<1x16x32xbf16>
    %20 = vector.extract_strided_slice %18 {offsets = [0, 0, 0], sizes = [31, 16, 32], strides = [1, 1, 1]} : vector<32x16x32xbf16> to vector<31x16x32xbf16>
    %21 = tpu.concatenate %19, %20 in 0 : vector<1x16x32xbf16>, vector<31x16x32xbf16> -> vector<32x16x32xbf16>
    %22 = tpu.concatenate %21, %16, %18 in 2 : vector<32x16x32xbf16>, vector<32x16x32xbf16>, vector<32x16x32xbf16> -> vector<32x16x96xbf16>
    %23 = vector.shape_cast %22 : vector<32x16x96xbf16> to vector<512x96xbf16>
    %c0_11 = arith.constant 0 : index
    %c0_12 = arith.constant 0 : index
    %c0_13 = arith.constant 0 : index
    %24 = vector.load %arg5[%c0_11, %c0_12, %c0_13] : memref<6x96x32xbf16, #tpu.memory_space<vmem>>, vector<1x96x32xbf16>
    %25 = vector.shape_cast %24 : vector<1x96x32xbf16> to vector<96x32xbf16>
    %cst_14 = arith.constant dense<0.000000e+00> : vector<512x32xf32>
    %26 = tpu.matmul %23, %25, %cst_14 {dimension_numbers = #tpu.dot_dimension_numbers<[1], [0], [0], [1], [0, 0, 1, 1], [], []>} : vector<512x96xbf16>, vector<96x32xbf16>, vector<512x32xf32> -> vector<512x32xf32>
    %c0_15 = arith.constant 0 : index
    %c0_16 = arith.constant 0 : index
    %c0_17 = arith.constant 0 : index
    %27 = vector.load %arg6[%c0_15, %c0_16, %c0_17] : memref<6x1x32xf32, #tpu.memory_space<vmem>>, vector<1x1x32xf32>
    %28 = vector.shape_cast %27 : vector<1x1x32xf32> to vector<1x32xf32>
    %29 = vector.broadcast %28 : vector<1x32xf32> to vector<512x32xf32>
    %30 = arith.addf %26, %29 : vector<512x32xf32>
    %cst_18 = arith.constant 0.000000e+00 : f32
    %31 = vector.broadcast %cst_18 : f32 to vector<512x32xf32>
    %32 = arith.cmpf oge, %30, %31 : vector<512x32xf32>
    %cst_19 = arith.constant 2.000000e-01 : f32
    %33 = vector.broadcast %cst_19 : f32 to vector<512x32xf32>
    %34 = arith.mulf %33, %30 : vector<512x32xf32>
    %35 = arith.select %32, %30, %34 : vector<512x32xi1>, vector<512x32xf32>
    %36 = arith.truncf %35 : vector<512x32xf32> to vector<512x32xbf16>
    %37 = vector.shape_cast %36 : vector<512x32xbf16> to vector<16x2x16x32xbf16>
    %38 = vector.extract_strided_slice %37 {offsets = [0, 0, 0, 0], sizes = [16, 1, 16, 32], strides = [1, 1, 1, 1]} : vector<16x2x16x32xbf16> to vector<16x1x16x32xbf16>
    %39 = vector.shape_cast %38 : vector<16x1x16x32xbf16> to vector<16x16x32xbf16>
    %40 = vector.extract_strided_slice %37 {offsets = [0, 1, 0, 0], sizes = [16, 1, 16, 32], strides = [1, 1, 1, 1]} : vector<16x2x16x32xbf16> to vector<16x1x16x32xbf16>
    %41 = vector.shape_cast %40 : vector<16x1x16x32xbf16> to vector<16x16x32xbf16>
    %cst_20 = arith.constant 0.000000e+00 : bf16
    %42 = vector.broadcast %cst_20 : bf16 to vector<1x16x32xbf16>
    %43 = vector.extract_strided_slice %41 {offsets = [0, 0, 0], sizes = [15, 16, 32], strides = [1, 1, 1]} : vector<16x16x32xbf16> to vector<15x16x32xbf16>
    %44 = tpu.concatenate %42, %43 in 0 : vector<1x16x32xbf16>, vector<15x16x32xbf16> -> vector<16x16x32xbf16>
    %45 = tpu.concatenate %44, %39, %41 in 2 : vector<16x16x32xbf16>, vector<16x16x32xbf16>, vector<16x16x32xbf16> -> vector<16x16x96xbf16>
    %46 = vector.shape_cast %45 : vector<16x16x96xbf16> to vector<256x96xbf16>
    %c1 = arith.constant 1 : index
    %c0_21 = arith.constant 0 : index
    %c0_22 = arith.constant 0 : index
    %47 = vector.load %arg5[%c1, %c0_21, %c0_22] : memref<6x96x32xbf16, #tpu.memory_space<vmem>>, vector<1x96x32xbf16>
    %48 = vector.shape_cast %47 : vector<1x96x32xbf16> to vector<96x32xbf16>
    %cst_23 = arith.constant dense<0.000000e+00> : vector<256x32xf32>
    %49 = tpu.matmul %46, %48, %cst_23 {dimension_numbers = #tpu.dot_dimension_numbers<[1], [0], [0], [1], [0, 0, 1, 1], [], []>} : vector<256x96xbf16>, vector<96x32xbf16>, vector<256x32xf32> -> vector<256x32xf32>
    %c1_24 = arith.constant 1 : index
    %c0_25 = arith.constant 0 : index
    %c0_26 = arith.constant 0 : index
    %50 = vector.load %arg6[%c1_24, %c0_25, %c0_26] : memref<6x1x32xf32, #tpu.memory_space<vmem>>, vector<1x1x32xf32>
    %51 = vector.shape_cast %50 : vector<1x1x32xf32> to vector<1x32xf32>
    %52 = vector.broadcast %51 : vector<1x32xf32> to vector<256x32xf32>
    %53 = arith.addf %49, %52 : vector<256x32xf32>
    %cst_27 = arith.constant 0.000000e+00 : f32
    %54 = vector.broadcast %cst_27 : f32 to vector<256x32xf32>
    %55 = arith.cmpf oge, %53, %54 : vector<256x32xf32>
    %cst_28 = arith.constant 2.000000e-01 : f32
    %56 = vector.broadcast %cst_28 : f32 to vector<256x32xf32>
    %57 = arith.mulf %56, %53 : vector<256x32xf32>
    %58 = arith.select %55, %53, %57 : vector<256x32xi1>, vector<256x32xf32>
    %59 = arith.truncf %58 : vector<256x32xf32> to vector<256x32xbf16>
    %60 = vector.shape_cast %59 : vector<256x32xbf16> to vector<8x2x16x32xbf16>
    %61 = vector.extract_strided_slice %60 {offsets = [0, 0, 0, 0], sizes = [8, 1, 16, 32], strides = [1, 1, 1, 1]} : vector<8x2x16x32xbf16> to vector<8x1x16x32xbf16>
    %62 = vector.shape_cast %61 : vector<8x1x16x32xbf16> to vector<8x16x32xbf16>
    %63 = vector.extract_strided_slice %60 {offsets = [0, 1, 0, 0], sizes = [8, 1, 16, 32], strides = [1, 1, 1, 1]} : vector<8x2x16x32xbf16> to vector<8x1x16x32xbf16>
    %64 = vector.shape_cast %63 : vector<8x1x16x32xbf16> to vector<8x16x32xbf16>
    %cst_29 = arith.constant 0.000000e+00 : bf16
    %65 = vector.broadcast %cst_29 : bf16 to vector<1x16x32xbf16>
    %66 = vector.extract_strided_slice %64 {offsets = [0, 0, 0], sizes = [7, 16, 32], strides = [1, 1, 1]} : vector<8x16x32xbf16> to vector<7x16x32xbf16>
    %67 = tpu.concatenate %65, %66 in 0 : vector<1x16x32xbf16>, vector<7x16x32xbf16> -> vector<8x16x32xbf16>
    %68 = tpu.concatenate %67, %62, %64 in 2 : vector<8x16x32xbf16>, vector<8x16x32xbf16>, vector<8x16x32xbf16> -> vector<8x16x96xbf16>
    %69 = vector.shape_cast %68 : vector<8x16x96xbf16> to vector<128x96xbf16>
    %c2 = arith.constant 2 : index
    %c0_30 = arith.constant 0 : index
    %c0_31 = arith.constant 0 : index
    %70 = vector.load %arg5[%c2, %c0_30, %c0_31] : memref<6x96x32xbf16, #tpu.memory_space<vmem>>, vector<1x96x32xbf16>
    %71 = vector.shape_cast %70 : vector<1x96x32xbf16> to vector<96x32xbf16>
    %cst_32 = arith.constant dense<0.000000e+00> : vector<128x32xf32>
    %72 = tpu.matmul %69, %71, %cst_32 {dimension_numbers = #tpu.dot_dimension_numbers<[1], [0], [0], [1], [0, 0, 1, 1], [], []>} : vector<128x96xbf16>, vector<96x32xbf16>, vector<128x32xf32> -> vector<128x32xf32>
    %c2_33 = arith.constant 2 : index
    %c0_34 = arith.constant 0 : index
    %c0_35 = arith.constant 0 : index
    %73 = vector.load %arg6[%c2_33, %c0_34, %c0_35] : memref<6x1x32xf32, #tpu.memory_space<vmem>>, vector<1x1x32xf32>
    %74 = vector.shape_cast %73 : vector<1x1x32xf32> to vector<1x32xf32>
    %75 = vector.broadcast %74 : vector<1x32xf32> to vector<128x32xf32>
    %76 = arith.addf %72, %75 : vector<128x32xf32>
    %cst_36 = arith.constant 0.000000e+00 : f32
    %77 = vector.broadcast %cst_36 : f32 to vector<128x32xf32>
    %78 = arith.cmpf oge, %76, %77 : vector<128x32xf32>
    %cst_37 = arith.constant 2.000000e-01 : f32
    %79 = vector.broadcast %cst_37 : f32 to vector<128x32xf32>
    %80 = arith.mulf %79, %76 : vector<128x32xf32>
    %81 = arith.select %78, %76, %80 : vector<128x32xi1>, vector<128x32xf32>
    %82 = arith.truncf %81 : vector<128x32xf32> to vector<128x32xbf16>
    %83 = vector.shape_cast %82 : vector<128x32xbf16> to vector<4x2x16x32xbf16>
    %84 = vector.extract_strided_slice %83 {offsets = [0, 0, 0, 0], sizes = [4, 1, 16, 32], strides = [1, 1, 1, 1]} : vector<4x2x16x32xbf16> to vector<4x1x16x32xbf16>
    %85 = vector.shape_cast %84 : vector<4x1x16x32xbf16> to vector<4x16x32xbf16>
    %86 = vector.extract_strided_slice %83 {offsets = [0, 1, 0, 0], sizes = [4, 1, 16, 32], strides = [1, 1, 1, 1]} : vector<4x2x16x32xbf16> to vector<4x1x16x32xbf16>
    %87 = vector.shape_cast %86 : vector<4x1x16x32xbf16> to vector<4x16x32xbf16>
    %cst_38 = arith.constant 0.000000e+00 : bf16
    %88 = vector.broadcast %cst_38 : bf16 to vector<1x16x32xbf16>
    %89 = vector.extract_strided_slice %87 {offsets = [0, 0, 0], sizes = [3, 16, 32], strides = [1, 1, 1]} : vector<4x16x32xbf16> to vector<3x16x32xbf16>
    %90 = tpu.concatenate %88, %89 in 0 : vector<1x16x32xbf16>, vector<3x16x32xbf16> -> vector<4x16x32xbf16>
    %91 = tpu.concatenate %90, %85, %87 in 2 : vector<4x16x32xbf16>, vector<4x16x32xbf16>, vector<4x16x32xbf16> -> vector<4x16x96xbf16>
    %92 = vector.shape_cast %91 : vector<4x16x96xbf16> to vector<64x96xbf16>
    %c3 = arith.constant 3 : index
    %c0_39 = arith.constant 0 : index
    %c0_40 = arith.constant 0 : index
    %93 = vector.load %arg5[%c3, %c0_39, %c0_40] : memref<6x96x32xbf16, #tpu.memory_space<vmem>>, vector<1x96x32xbf16>
    %94 = vector.shape_cast %93 : vector<1x96x32xbf16> to vector<96x32xbf16>
    %cst_41 = arith.constant dense<0.000000e+00> : vector<64x32xf32>
    %95 = tpu.matmul %92, %94, %cst_41 {dimension_numbers = #tpu.dot_dimension_numbers<[1], [0], [0], [1], [0, 0, 1, 1], [], []>} : vector<64x96xbf16>, vector<96x32xbf16>, vector<64x32xf32> -> vector<64x32xf32>
    %c3_42 = arith.constant 3 : index
    %c0_43 = arith.constant 0 : index
    %c0_44 = arith.constant 0 : index
    %96 = vector.load %arg6[%c3_42, %c0_43, %c0_44] : memref<6x1x32xf32, #tpu.memory_space<vmem>>, vector<1x1x32xf32>
    %97 = vector.shape_cast %96 : vector<1x1x32xf32> to vector<1x32xf32>
    %98 = vector.broadcast %97 : vector<1x32xf32> to vector<64x32xf32>
    %99 = arith.addf %95, %98 : vector<64x32xf32>
    %cst_45 = arith.constant 0.000000e+00 : f32
    %100 = vector.broadcast %cst_45 : f32 to vector<64x32xf32>
    %101 = arith.cmpf oge, %99, %100 : vector<64x32xf32>
    %cst_46 = arith.constant 2.000000e-01 : f32
    %102 = vector.broadcast %cst_46 : f32 to vector<64x32xf32>
    %103 = arith.mulf %102, %99 : vector<64x32xf32>
    %104 = arith.select %101, %99, %103 : vector<64x32xi1>, vector<64x32xf32>
    %105 = arith.truncf %104 : vector<64x32xf32> to vector<64x32xbf16>
    %106 = vector.shape_cast %105 : vector<64x32xbf16> to vector<2x2x16x32xbf16>
    %107 = vector.extract_strided_slice %106 {offsets = [0, 0, 0, 0], sizes = [2, 1, 16, 32], strides = [1, 1, 1, 1]} : vector<2x2x16x32xbf16> to vector<2x1x16x32xbf16>
    %108 = vector.shape_cast %107 : vector<2x1x16x32xbf16> to vector<2x16x32xbf16>
    %109 = vector.extract_strided_slice %106 {offsets = [0, 1, 0, 0], sizes = [2, 1, 16, 32], strides = [1, 1, 1, 1]} : vector<2x2x16x32xbf16> to vector<2x1x16x32xbf16>
    %110 = vector.shape_cast %109 : vector<2x1x16x32xbf16> to vector<2x16x32xbf16>
    %cst_47 = arith.constant 0.000000e+00 : bf16
    %111 = vector.broadcast %cst_47 : bf16 to vector<1x16x32xbf16>
    %112 = vector.extract_strided_slice %110 {offsets = [0, 0, 0], sizes = [1, 16, 32], strides = [1, 1, 1]} : vector<2x16x32xbf16> to vector<1x16x32xbf16>
    %113 = tpu.concatenate %111, %112 in 0 : vector<1x16x32xbf16>, vector<1x16x32xbf16> -> vector<2x16x32xbf16>
    %114 = tpu.concatenate %113, %108, %110 in 2 : vector<2x16x32xbf16>, vector<2x16x32xbf16>, vector<2x16x32xbf16> -> vector<2x16x96xbf16>
    %115 = vector.shape_cast %114 : vector<2x16x96xbf16> to vector<32x96xbf16>
    %c4 = arith.constant 4 : index
    %c0_48 = arith.constant 0 : index
    %c0_49 = arith.constant 0 : index
    %116 = vector.load %arg5[%c4, %c0_48, %c0_49] : memref<6x96x32xbf16, #tpu.memory_space<vmem>>, vector<1x96x32xbf16>
    %117 = vector.shape_cast %116 : vector<1x96x32xbf16> to vector<96x32xbf16>
    %cst_50 = arith.constant dense<0.000000e+00> : vector<32x32xf32>
    %118 = tpu.matmul %115, %117, %cst_50 {dimension_numbers = #tpu.dot_dimension_numbers<[1], [0], [0], [1], [0, 0, 1, 1], [], []>} : vector<32x96xbf16>, vector<96x32xbf16>, vector<32x32xf32> -> vector<32x32xf32>
    %c4_51 = arith.constant 4 : index
    %c0_52 = arith.constant 0 : index
    %c0_53 = arith.constant 0 : index
    %119 = vector.load %arg6[%c4_51, %c0_52, %c0_53] : memref<6x1x32xf32, #tpu.memory_space<vmem>>, vector<1x1x32xf32>
    %120 = vector.shape_cast %119 : vector<1x1x32xf32> to vector<1x32xf32>
    %121 = vector.broadcast %120 : vector<1x32xf32> to vector<32x32xf32>
    %122 = arith.addf %118, %121 : vector<32x32xf32>
    %cst_54 = arith.constant 0.000000e+00 : f32
    %123 = vector.broadcast %cst_54 : f32 to vector<32x32xf32>
    %124 = arith.cmpf oge, %122, %123 : vector<32x32xf32>
    %cst_55 = arith.constant 2.000000e-01 : f32
    %125 = vector.broadcast %cst_55 : f32 to vector<32x32xf32>
    %126 = arith.mulf %125, %122 : vector<32x32xf32>
    %127 = arith.select %124, %122, %126 : vector<32x32xi1>, vector<32x32xf32>
    %128 = arith.truncf %127 : vector<32x32xf32> to vector<32x32xbf16>
    %129 = vector.shape_cast %128 : vector<32x32xbf16> to vector<1x2x16x32xbf16>
    %130 = vector.extract_strided_slice %129 {offsets = [0, 0, 0, 0], sizes = [1, 1, 16, 32], strides = [1, 1, 1, 1]} : vector<1x2x16x32xbf16> to vector<1x1x16x32xbf16>
    %131 = vector.shape_cast %130 : vector<1x1x16x32xbf16> to vector<1x16x32xbf16>
    %132 = vector.extract_strided_slice %129 {offsets = [0, 1, 0, 0], sizes = [1, 1, 16, 32], strides = [1, 1, 1, 1]} : vector<1x2x16x32xbf16> to vector<1x1x16x32xbf16>
    %133 = vector.shape_cast %132 : vector<1x1x16x32xbf16> to vector<1x16x32xbf16>
    %cst_56 = arith.constant 0.000000e+00 : bf16
    %134 = vector.broadcast %cst_56 : bf16 to vector<1x16x32xbf16>
    %135 = tpu.concatenate %134, %131, %133 in 2 : vector<1x16x32xbf16>, vector<1x16x32xbf16>, vector<1x16x32xbf16> -> vector<1x16x96xbf16>
    %136 = vector.shape_cast %135 : vector<1x16x96xbf16> to vector<16x96xbf16>
    %c5 = arith.constant 5 : index
    %c0_57 = arith.constant 0 : index
    %c0_58 = arith.constant 0 : index
    %137 = vector.load %arg5[%c5, %c0_57, %c0_58] : memref<6x96x32xbf16, #tpu.memory_space<vmem>>, vector<1x96x32xbf16>
    %138 = vector.shape_cast %137 : vector<1x96x32xbf16> to vector<96x32xbf16>
    %cst_59 = arith.constant dense<0.000000e+00> : vector<16x32xf32>
    %139 = tpu.matmul %136, %138, %cst_59 {dimension_numbers = #tpu.dot_dimension_numbers<[1], [0], [0], [1], [0, 0, 1, 1], [], []>} : vector<16x96xbf16>, vector<96x32xbf16>, vector<16x32xf32> -> vector<16x32xf32>
    %c5_60 = arith.constant 5 : index
    %c0_61 = arith.constant 0 : index
    %c0_62 = arith.constant 0 : index
    %140 = vector.load %arg6[%c5_60, %c0_61, %c0_62] : memref<6x1x32xf32, #tpu.memory_space<vmem>>, vector<1x1x32xf32>
    %141 = vector.shape_cast %140 : vector<1x1x32xf32> to vector<1x32xf32>
    %142 = vector.broadcast %141 : vector<1x32xf32> to vector<16x32xf32>
    %143 = arith.addf %139, %142 : vector<16x32xf32>
    %cst_63 = arith.constant 0.000000e+00 : f32
    %144 = vector.broadcast %cst_63 : f32 to vector<16x32xf32>
    %145 = arith.cmpf oge, %143, %144 : vector<16x32xf32>
    %cst_64 = arith.constant 2.000000e-01 : f32
    %146 = vector.broadcast %cst_64 : f32 to vector<16x32xf32>
    %147 = arith.mulf %146, %143 : vector<16x32xf32>
    %148 = arith.select %145, %143, %147 : vector<16x32xi1>, vector<16x32xf32>
    %149 = arith.truncf %148 : vector<16x32xf32> to vector<16x32xbf16>
    %c0_65 = arith.constant 0 : index
    %c0_66 = arith.constant 0 : index
    %150 = vector.load %arg7[%c0_65, %c0_66] : memref<32x128xbf16, #tpu.memory_space<vmem>>, vector<32x128xbf16>
    %cst_67 = arith.constant dense<0.000000e+00> : vector<16x128xf32>
    %151 = tpu.matmul %149, %150, %cst_67 {dimension_numbers = #tpu.dot_dimension_numbers<[1], [0], [0], [1], [0, 0, 1, 1], [], []>} : vector<16x32xbf16>, vector<32x128xbf16>, vector<16x128xf32> -> vector<16x128xf32>
    %c0_68 = arith.constant 0 : index
    %c0_69 = arith.constant 0 : index
    %152 = vector.load %arg8[%c0_68, %c0_69] : memref<1x128xf32, #tpu.memory_space<vmem>>, vector<1x128xf32>
    %153 = vector.broadcast %152 : vector<1x128xf32> to vector<16x128xf32>
    %154 = arith.addf %151, %153 : vector<16x128xf32>
    %c0_70 = arith.constant 0 : index
    %c0_71 = arith.constant 0 : index
    %155 = vector.load %arg9[%c0_70, %c0_71] : memref<16x128xf32, #tpu.memory_space<vmem>>, vector<16x128xf32>
    tpu.vector_store %arg9[%c0_70, %c0_71], %154 {strides = array<i32>} : memref<16x128xf32, #tpu.memory_space<vmem>>, vector<16x128xf32>,
    return
  }
  func.func @transform_0(%arg0: i32) -> (i32, i32, i32) {
    %c0_i32 = arith.constant 0 : i32
    %c0_i32_0 = arith.constant 0 : i32
    %c0_i32_1 = arith.constant 0 : i32
    return %c0_i32, %arg0, %c0_i32_0 : i32, i32, i32
  }
  func.func @transform_1(%arg0: i32) -> (i32, i32) {
    %c0_i32 = arith.constant 0 : i32
    %c0_i32_0 = arith.constant 0 : i32
    %c0_i32_1 = arith.constant 0 : i32
    return %c0_i32, %c0_i32_0 : i32, i32
  }
  func.func @transform_2(%arg0: i32) -> (i32, i32) {
    %c0_i32 = arith.constant 0 : i32
    %c0_i32_0 = arith.constant 0 : i32
    %c0_i32_1 = arith.constant 0 : i32
    return %c0_i32, %c0_i32_0 : i32, i32
  }
  func.func @transform_3(%arg0: i32) -> (i32, i32) {
    %c0_i32 = arith.constant 0 : i32
    %c0_i32_0 = arith.constant 0 : i32
    %c0_i32_1 = arith.constant 0 : i32
    return %c0_i32, %c0_i32_0 : i32, i32
  }
  func.func @transform_4(%arg0: i32) -> (i32, i32, i32) {
    %c0_i32 = arith.constant 0 : i32
    %c0_i32_0 = arith.constant 0 : i32
    %c0_i32_1 = arith.constant 0 : i32
    %c0_i32_2 = arith.constant 0 : i32
    return %c0_i32, %c0_i32_0, %c0_i32_1 : i32, i32, i32
  }
  func.func @transform_5(%arg0: i32) -> (i32, i32, i32) {
    %c0_i32 = arith.constant 0 : i32
    %c0_i32_0 = arith.constant 0 : i32
    %c0_i32_1 = arith.constant 0 : i32
    %c0_i32_2 = arith.constant 0 : i32
    return %c0_i32, %c0_i32_0, %c0_i32_1 : i32, i32, i32
  }
  func.func @transform_6(%arg0: i32) -> (i32, i32) {
    %c0_i32 = arith.constant 0 : i32
    %c0_i32_0 = arith.constant 0 : i32
    %c0_i32_1 = arith.constant 0 : i32
    return %c0_i32, %c0_i32_0 : i32, i32
  }
  func.func @transform_7(%arg0: i32) -> (i32, i32) {
    %c0_i32 = arith.constant 0 : i32
    %c0_i32_0 = arith.constant 0 : i32
    %c0_i32_1 = arith.constant 0 : i32
    return %c0_i32, %c0_i32_0 : i32, i32
  }
  func.func @transform_8(%arg0: i32) -> (i32, i32) {
    %c0_i32 = arith.constant 0 : i32
    %c0_i32_0 = arith.constant 0 : i32
    return %arg0, %c0_i32 : i32, i32
  }
}

</mosaic_0001>

<llo_original>
// kernel: encoder_forward.1
$region0: #{encoder_forward.1}
  #allocation0 [shape = 'u32[]', space=smem, size = 0x4, offset = 0x4, fixed_abs, tag = 'smem constant byte address 0x4 - core index']
  #allocation1 [shape = 'u32[144,128]{1,0:T(1,128)}', space=vmem, size = 0x12000, scoped, tag = 'internal scratch']
  %s0 = inlined_call_operand.vmem [shape: bf16[64,32,512], index: 0, kind: input, shape index: {}]
  %s1 = inlined_call_operand.vmem [shape: bf16[512,384], index: 1, kind: input, shape index: {}]
  %s2 = inlined_call_operand.vmem [shape: bf16[384,32], index: 2, kind: input, shape index: {}]
  %s3 = inlined_call_operand.vmem [shape: f32[1,32], index: 3, kind: input, shape index: {}]
  %s4 = inlined_call_operand.vmem [shape: bf16[6,96,32], index: 4, kind: input, shape index: {}]
  %s5 = inlined_call_operand.vmem [shape: f32[6,1,32], index: 5, kind: input, shape index: {}]
  %s6 = inlined_call_operand.vmem [shape: bf16[32,128], index: 6, kind: input, shape index: {}]
  %s7 = inlined_call_operand.vmem [shape: f32[1,128], index: 7, kind: input, shape index: {}]
  %s8 = inlined_call_operand.vmem [shape: f32[32,128], index: 8, kind: output, shape index: {}]
  %s9 = sld [smem:[#allocation0]]
  $region88: #{encoder_forward.1} parent=0
    _
  %s11 = ssub.s32 1, %s9
  %s12 = scalar_select 0, %s11, %s9
  $region1: #{encoder_forward.1} parent=0
    #allocation2 [shape = 'u8[2097152]{0}', space=vmem, size = 0x200000, scoped, tag = 'input window, operand 0']
    loop: start=0, step=1, limit=4
    $region2: #{encoder_forward.1} parent=1 // loop_pre_header
      _
    $region3: #{encoder_forward.1} parent=1 // loop_header
      %s14 = sphi 0, %s18
      %p15 = scmp.ge.s32.totalorder %s14, 4
      %s24 = sphi 0, %s26
      %s27 = sphi 0, %s24
      %s28 = sphi 0, %s27
      %s44 = sphi 0, %s28
      %s48 = sphi 0, %s48
      %s50 = sphi 0, %s48
      %s51 = sphi 0, %s50
      %s65 = sphi 0, %s51
      %s69 = sphi 0, %s69
      %s71 = sphi 0, %s69
      %s72 = sphi 0, %s71
      %s86 = sphi 0, %s72
      %s90 = sphi 0, %s90
      %s92 = sphi 0, %s90
      %s93 = sphi 0, %s92
      %s107 = sphi 0, %s93
      %s111 = sphi 0, %s111
      %s113 = sphi 0, %s111
      %s114 = sphi 0, %s113
      %s128 = sphi 0, %s114
      %s132 = sphi 0, %s132
      %s134 = sphi 0, %s132
      %s135 = sphi 0, %s134
      %s149 = sphi 0, %s135
      %s153 = sphi 0, %s153
      %s155 = sphi 0, %s153
      %s156 = sphi 0, %s155
      %s170 = sphi 0, %s156
      %s174 = sphi 0, %s174
      %s176 = sphi 0, %s174
      %s177 = sphi 0, %s176
      %s191 = sphi 0, %s177
      %s197 = sphi 0, %s199
      %s200 = sphi 0, %s197
      %s201 = sphi 0, %s200
      %s217 = sphi 0, %s201
    $region4: #{encoder_forward.1} parent=1 // loop_header_branch
      %17 = sbr.rel (%p15) target = $region8
    $region5: #{encoder_forward.1} parent=1 // loop_body
      %s19 = ssub.s32 %s14, 1
      %s20 = ssub.s32 %s14, 2
      %s21 = sadd.s32 %s14, 1
      %s22 = ssub.s32 %s14, %s21
      %p23 = scmp.eq.s32.totalorder %s22, 0
      %s25 = sadd.s32 %s24, 1
      %s26 = scalar_select %p23, %s24, %s25
      %p29 = pneg %p23
      %p30 = scmp.eq.s32.totalorder %s14, 1
      %p31 = por %p29, %p30
      %p32 = scmp.ne.s32.totalorder %s24, %s27
      %p33 = scmp.eq.s32.totalorder %s14, 0
      %p34 = por %p32, %p33
      %p35 = scmp.ne.s32.totalorder %s24, %s27
      %p36 = scmp.eq.s32.totalorder %s19, 1
      %p37 = por %p35, %p36
      %p38 = scmp.ne.s32.totalorder %s27, %s28
      %p39 = scmp.eq.s32.totalorder %s19, 0
      %p40 = por %p38, %p39
      %p41 = scmp.ne.s32.totalorder %s27, %s28
      %p42 = scmp.eq.s32.totalorder %s20, 1
      %p43 = por %p41, %p42
      %p45 = scmp.ne.s32.totalorder %s28, %s44
      %p46 = scmp.eq.s32.totalorder %s20, 0
      %p47 = por %p45, %p46
      %s49 = sadd.s32 %s48, 1
      %p52 = scmp.eq.s32.totalorder %s14, 1
      %p53 = scmp.ne.s32.totalorder %s48, %s50
      %p54 = scmp.eq.s32.totalorder %s14, 0
      %p55 = por %p53, %p54
      %p56 = scmp.ne.s32.totalorder %s48, %s50
      %p57 = scmp.eq.s32.totalorder %s19, 1
      %p58 = por %p56, %p57
      %p59 = scmp.ne.s32.totalorder %s50, %s51
      %p60 = scmp.eq.s32.totalorder %s19, 0
      %p61 = por %p59, %p60
      %p62 = scmp.ne.s32.totalorder %s50, %s51
      %p63 = scmp.eq.s32.totalorder %s20, 1
      %p64 = por %p62, %p63
      %p66 = scmp.ne.s32.totalorder %s51, %s65
      %p67 = scmp.eq.s32.totalorder %s20, 0
      %p68 = por %p66, %p67
      %s70 = sadd.s32 %s69, 1
      %p73 = scmp.eq.s32.totalorder %s14, 1
      %p74 = scmp.ne.s32.totalorder %s69, %s71
      %p75 = scmp.eq.s32.totalorder %s14, 0
      %p76 = por %p74, %p75
      %p77 = scmp.ne.s32.totalorder %s69, %s71
      %p78 = scmp.eq.s32.totalorder %s19, 1
      %p79 = por %p77, %p78
      %p80 = scmp.ne.s32.totalorder %s71, %s72
      %p81 = scmp.eq.s32.totalorder %s19, 0
      %p82 = por %p80, %p81
      %p83 = scmp.ne.s32.totalorder %s71, %s72
      %p84 = scmp.eq.s32.totalorder %s20, 1
      %p85 = por %p83, %p84
      %p87 = scmp.ne.s32.totalorder %s72, %s86
      %p88 = scmp.eq.s32.totalorder %s20, 0
      %p89 = por %p87, %p88
      %s91 = sadd.s32 %s90, 1
      %p94 = scmp.eq.s32.totalorder %s14, 1
      %p95 = scmp.ne.s32.totalorder %s90, %s92
      %p96 = scmp.eq.s32.totalorder %s14, 0
      %p97 = por %p95, %p96
      %p98 = scmp.ne.s32.totalorder %s90, %s92
      %p99 = scmp.eq.s32.totalorder %s19, 1
      %p100 = por %p98, %p99
      %p101 = scmp.ne.s32.totalorder %s92, %s93
      %p102 = scmp.eq.s32.totalorder %s19, 0
      %p103 = por %p101, %p102
      %p104 = scmp.ne.s32.totalorder %s92, %s93
      %p105 = scmp.eq.s32.totalorder %s20, 1
      %p106 = por %p104, %p105
      %p108 = scmp.ne.s32.totalorder %s93, %s107
      %p109 = scmp.eq.s32.totalorder %s20, 0
      %p110 = por %p108, %p109
      %s112 = sadd.s32 %s111, 1
      %p115 = scmp.eq.s32.totalorder %s14, 1
      %p116 = scmp.ne.s32.totalorder %s111, %s113
      %p117 = scmp.eq.s32.totalorder %s14, 0
      %p118 = por %p116, %p117
      %p119 = scmp.ne.s32.totalorder %s111, %s113
      %p120 = scmp.eq.s32.totalorder %s19, 1
      %p121 = por %p119, %p120
      %p122 = scmp.ne.s32.totalorder %s113, %s114
      %p123 = scmp.eq.s32.totalorder %s19, 0
      %p124 = por %p122, %p123
      %p125 = scmp.ne.s32.totalorder %s113, %s114
      %p126 = scmp.eq.s32.totalorder %s20, 1
      %p127 = por %p125, %p126
      %p129 = scmp.ne.s32.totalorder %s114, %s128
      %p130 = scmp.eq.s32.totalorder %s20, 0
      %p131 = por %p129, %p130
      %s133 = sadd.s32 %s132, 1
      %p136 = scmp.eq.s32.totalorder %s14, 1
      %p137 = scmp.ne.s32.totalorder %s132, %s134
      %p138 = scmp.eq.s32.totalorder %s14, 0
      %p139 = por %p137, %p138
      %p140 = scmp.ne.s32.totalorder %s132, %s134
      %p141 = scmp.eq.s32.totalorder %s19, 1
      %p142 = por %p140, %p141
      %p143 = scmp.ne.s32.totalorder %s134, %s135
      %p144 = scmp.eq.s32.totalorder %s19, 0
      %p145 = por %p143, %p144
      %p146 = scmp.ne.s32.totalorder %s134, %s135
      %p147 = scmp.eq.s32.totalorder %s20, 1
      %p148 = por %p146, %p147
      %p150 = scmp.ne.s32.totalorder %s135, %s149
      %p151 = scmp.eq.s32.totalorder %s20, 0
      %p152 = por %p150, %p151
      %s154 = sadd.s32 %s153, 1
      %p157 = scmp.eq.s32.totalorder %s14, 1
      %p158 = scmp.ne.s32.totalorder %s153, %s155
      %p159 = scmp.eq.s32.totalorder %s14, 0
      %p160 = por %p158, %p159
      %p161 = scmp.ne.s32.totalorder %s153, %s155
      %p162 = scmp.eq.s32.totalorder %s19, 1
      %p163 = por %p161, %p162
      %p164 = scmp.ne.s32.totalorder %s155, %s156
      %p165 = scmp.eq.s32.totalorder %s19, 0
      %p166 = por %p164, %p165
      %p167 = scmp.ne.s32.totalorder %s155, %s156
      %p168 = scmp.eq.s32.totalorder %s20, 1
      %p169 = por %p167, %p168
      %p171 = scmp.ne.s32.totalorder %s156, %s170
      %p172 = scmp.eq.s32.totalorder %s20, 0
      %p173 = por %p171, %p172
      %s175 = sadd.s32 %s174, 1
      %p178 = scmp.eq.s32.totalorder %s14, 1
      %p179 = scmp.ne.s32.totalorder %s174, %s176
      %p180 = scmp.eq.s32.totalorder %s14, 0
      %p181 = por %p179, %p180
      %p182 = scmp.ne.s32.totalorder %s174, %s176
      %p183 = scmp.eq.s32.totalorder %s19, 1
      %p184 = por %p182, %p183
      %p185 = scmp.ne.s32.totalorder %s176, %s177
      %p186 = scmp.eq.s32.totalorder %s19, 0
      %p187 = por %p185, %p186
      %p188 = scmp.ne.s32.totalorder %s176, %s177
      %p189 = scmp.eq.s32.totalorder %s20, 1
      %p190 = por %p188, %p189
      %p192 = scmp.ne.s32.totalorder %s177, %s191
      %p193 = scmp.eq.s32.totalorder %s20, 0
      %p194 = por %p192, %p193
      %s195 = ssub.s32 %s14, %s21
      %p196 = scmp.eq.s32.totalorder %s195, 0
      %s198 = sadd.s32 %s197, 1
      %s199 = scalar_select %p196, %s197, %s198
      %p202 = pneg %p196
      %p203 = scmp.eq.s32.totalorder %s14, 1
      %p204 = por %p202, %p203
      %p205 = scmp.ne.s32.totalorder %s197, %s200
      %p206 = scmp.eq.s32.totalorder %s14, 0
      %p207 = por %p205, %p206
      %p208 = scmp.ne.s32.totalorder %s197, %s200
      %p209 = scmp.eq.s32.totalorder %s19, 1
      %p210 = por %p208, %p209
      %p211 = scmp.ne.s32.totalorder %s200, %s201
      %p212 = scmp.eq.s32.totalorder %s19, 0
      %p213 = por %p211, %p212
      %p214 = scmp.ne.s32.totalorder %s200, %s201
      %p215 = scmp.eq.s32.totalorder %s20, 1
      %p216 = por %p214, %p215
      %p218 = scmp.ne.s32.totalorder %s201, %s217
      %p219 = scmp.eq.s32.totalorder %s20, 0
      %p220 = por %p218, %p219
      %p221 = scmp.le.s32.totalorder 1, %s14
      %p222 = scmp.lt.s32.totalorder %s14, 3
      %p223 = pnand %p221, %p222
      %p224 = pneg %p223
      // Predicated region
      $region9: #{encoder_forward.1} parent=5 // pred_check
        _
      $region10: #{encoder_forward.1} parent=5 // pred_check_branch
        %226 = sbr.rel (%p223) target = $region12
      $region11: #{encoder_forward.1} parent=5 // pred_region
        %s227 = ssub.s32 %s14, 1
        // Predicated region
        $region13: #{encoder_forward.1} parent=11 // pred_check
          %p228 = pneg %p61
        $region14: #{encoder_forward.1} parent=11 // pred_check_branch
          %230 = sbr.rel (%p228) target = $region16
        $region15: #{encoder_forward.1} parent=11 // pred_region
          _
        $region16: #{encoder_forward.1} parent=11 // pred_fallthru
          _
        // Predicated region
        $region17: #{encoder_forward.1} parent=11 // pred_check
          %p231 = pneg %p82
        $region18: #{encoder_forward.1} parent=11 // pred_check_branch
          %233 = sbr.rel (%p231) target = $region20
        $region19: #{encoder_forward.1} parent=11 // pred_region
          _
        $region20: #{encoder_forward.1} parent=11 // pred_fallthru
          _
        // Predicated region
        $region21: #{encoder_forward.1} parent=11 // pred_check
          %p234 = pneg %p103
        $region22: #{encoder_forward.1} parent=11 // pred_check_branch
          %236 = sbr.rel (%p234) target = $region24
        $region23: #{encoder_forward.1} parent=11 // pred_region
          _
        $region24: #{encoder_forward.1} parent=11 // pred_fallthru
          _
        // Predicated region
        $region25: #{encoder_forward.1} parent=11 // pred_check
          %p237 = pneg %p124
        $region26: #{encoder_forward.1} parent=11 // pred_check_branch
          %239 = sbr.rel (%p237) target = $region28
        $region27: #{encoder_forward.1} parent=11 // pred_region
          _
        $region28: #{encoder_forward.1} parent=11 // pred_fallthru
          _
        // Predicated region
        $region29: #{encoder_forward.1} parent=11 // pred_check
          %p240 = pneg %p145
        $region30: #{encoder_forward.1} parent=11 // pred_check_branch
          %242 = sbr.rel (%p240) target = $region32
        $region31: #{encoder_forward.1} parent=11 // pred_region
          _
        $region32: #{encoder_forward.1} parent=11 // pred_fallthru
          _
        // Predicated region
        $region33: #{encoder_forward.1} parent=11 // pred_check
          %p243 = pneg %p166
        $region34: #{encoder_forward.1} parent=11 // pred_check_branch
          %245 = sbr.rel (%p243) target = $region36
        $region35: #{encoder_forward.1} parent=11 // pred_region
          _
        $region36: #{encoder_forward.1} parent=11 // pred_fallthru
          _
        // Predicated region
        $region37: #{encoder_forward.1} parent=11 // pred_check
          %p246 = pneg %p187
        $region38: #{encoder_forward.1} parent=11 // pred_check_branch
          %248 = sbr.rel (%p246) target = $region40
        $region39: #{encoder_forward.1} parent=11 // pred_region
          _
        $region40: #{encoder_forward.1} parent=11 // pred_fallthru
          _
      $region12: #{encoder_forward.1} parent=5 // pred_fallthru
        _
      %p249 = scmp.lt.s32.totalorder %s14, 2
      // Predicated region
      $region41: #{encoder_forward.1} parent=5 // pred_check
        %p250 = pneg %p249
      $region42: #{encoder_forward.1} parent=5 // pred_check_branch
        %252 = sbr.rel (%p250) target = $region44
      $region43: #{encoder_forward.1} parent=5 // pred_region
        // Predicated region
        $region45: #{encoder_forward.1} parent=43 // pred_check
          %p253 = pneg %p34
        $region46: #{encoder_forward.1} parent=43 // pred_check_branch
          %255 = sbr.rel (%p253) target = $region48
        $region47: #{encoder_forward.1} parent=43 // pred_region
          %s256 = sand.u32 %s24, 1
          %s257 = sand.u32 %s24, 1
          %s258 = smul.addr %s257, 2048
          %s259 = scalar_lea.vmem [#allocation2], %s258
          %s260 = smul.u32 2, %s14
          %s261 = smul.addr %s260, 4
          %s262 = smul.addr %s261, 4
          %s263 = scalar_lea.vmem %s0, %s262
          // Predicated region
          $region49: #{encoder_forward.1} parent=47 // pred_check
            _
          $region50: #{encoder_forward.1} parent=47 // pred_check_branch
            %265 = sbr.rel (0) target = $region52
          $region51: #{encoder_forward.1} parent=47 // pred_region
            // Predicated region
            $region53: #{encoder_forward.1} parent=51 // pred_check
              _
            $region54: #{encoder_forward.1} parent=51 // pred_check_branch
              %267 = sbr.rel (0) target = $region56
            $region55: #{encoder_forward.1} parent=51 // pred_region
              loop: start=0, step=1, limit=1
              $region57: #{encoder_forward.1} parent=55 // loop_pre_header
                _
              $region58: #{encoder_forward.1} parent=55 // loop_header
                %s269 = sphi 0, %s273
                %p270 = scmp.ge.s32.totalorder %s269, 1
                %s274 = sphi %s263, %s263
                %s275 = sphi %s259, %s259
              $region59: #{encoder_forward.1} parent=55 // loop_header_branch
                %272 = sbr.rel (%p270) target = $region63
              $region60: #{encoder_forward.1} parent=55 // loop_body
                %v276 = vld [vmem:[%s274] sm:$0xff]
                %277 = vst [vmem:[%s275] sm:$0xff] %v276
                %v278 = vld [vmem:[%s274 + $0x8] sm:$0xff]
                %279 = vst [vmem:[%s275 + $0x8] sm:$0xff] %v278
                %v280 = vld [vmem:[%s274 + $0x10] sm:$0xff]
                %281 = vst [vmem:[%s275 + $0x10] sm:$0xff] %v280
                %v282 = vld [vmem:[%s274 + $0x18] sm:$0xff]
                %283 = vst [vmem:[%s275 + $0x18] sm:$0xff] %v282
                %v284 = vld [vmem:[%s274 + $0x40] sm:$0xff]
                %285 = vst [vmem:[%s275 + $0x20] sm:$0xff] %v284
                %v286 = vld [vmem:[%s274 + $0x48] sm:$0xff]
                %287 = vst [vmem:[%s275 + $0x28] sm:$0xff] %v286
                %v288 = vld [vmem:[%s274 + $0x50] sm:$0xff]
                %289 = vst [vmem:[%s275 + $0x30] sm:$0xff] %v288
                %v290 = vld [vmem:[%s274 + $0x58] sm:$0xff]
                %291 = vst [vmem:[%s275 + $0x38] sm:$0xff] %v290
                %v292 = vld [vmem:[%s274 + $0x80] sm:$0xff]
                %293 = vst [vmem:[%s275 + $0x40] sm:$0xff] %v292
                %v294 = vld [vmem:[%s274 + $0x88] sm:$0xff]
                %295 = vst [vmem:[%s275 + $0x48] sm:$0xff] %v294
                %v296 = vld [vmem:[%s274 + $0x90] sm:$0xff]
                %297 = vst [vmem:[%s275 + $0x50] sm:$0xff] %v296
                %v298 = vld [vmem:[%s274 + $0x98] sm:$0xff]
                %299 = vst [vmem:[%s275 + $0x58] sm:$0xff] %v298
                %v300 = vld [vmem:[%s274 + $0xc0] sm:$0xff]
                %301 = vst [vmem:[%s275 + $0x60] sm:$0xff] %v300
                %v302 = vld [vmem:[%s274 + $0xc8] sm:$0xff]
                %303 = vst [vmem:[%s275 + $0x68] sm:$0xff] %v302
                %v304 = vld [vmem:[%s274 + $0xd0] sm:$0xff]
                %305 = vst [vmem:[%s275 + $0x70] sm:$0xff] %v304
                %v306 = vld [vmem:[%s274 + $0xd8] sm:$0xff]
                %307 = vst [vmem:[%s275 + $0x78] sm:$0xff] %v306
                %v308 = vld [vmem:[%s274 + $0x100] sm:$0xff]
                %309 = vst [vmem:[%s275 + $0x80] sm:$0xff] %v308
                %v310 = vld [vmem:[%s274 + $0x108] sm:$0xff]
                %311 = vst [vmem:[%s275 + $0x88] sm:$0xff] %v310
                %v312 = vld [vmem:[%s274 + $0x110] sm:$0xff]
                %313 = vst [vmem:[%s275 + $0x90] sm:$0xff] %v312
                %v314 = vld [vmem:[%s274 + $0x118] sm:$0xff]
                %315 = vst [vmem:[%s275 + $0x98] sm:$0xff] %v314
                %v316 = vld [vmem:[%s274 + $0x140] sm:$0xff]
                %317 = vst [vmem:[%s275 + $0xa0] sm:$0xff] %v316
                %v318 = vld [vmem:[%s274 + $0x148] sm:$0xff]
                %319 = vst [vmem:[%s275 + $0xa8] sm:$0xff] %v318
                %v320 = vld [vmem:[%s274 + $0x150] sm:$0xff]
                %321 = vst [vmem:[%s275 + $0xb0] sm:$0xff] %v320
                %v322 = vld [vmem:[%s274 + $0x158] sm:$0xff]
                %323 = vst [vmem:[%s275 + $0xb8] sm:$0xff] %v322
                %v324 = vld [vmem:[%s274 + $0x180] sm:$0xff]
                %325 = vst [vmem:[%s275 + $0xc0] sm:$0xff] %v324
                %v326 = vld [vmem:[%s274 + $0x188] sm:$0xff]
                %327 = vst [vmem:[%s275 + $0xc8] sm:$0xff] %v326
                %v328 = vld [vmem:[%s274 + $0x190] sm:$0xff]
                %329 = vst [vmem:[%s275 + $0xd0] sm:$0xff] %v328
                %v330 = vld [vmem:[%s274 + $0x198] sm:$0xff]
                %331 = vst [vmem:[%s275 + $0xd8] sm:$0xff] %v330
                %v332 = vld [vmem:[%s274 + $0x1c0] sm:$0xff]
                %333 = vst [vmem:[%s275 + $0xe0] sm:$0xff] %v332
                %v334 = vld [vmem:[%s274 + $0x1c8] sm:$0xff]
                %335 = vst [vmem:[%s275 + $0xe8] sm:$0xff] %v334
                %v336 = vld [vmem:[%s274 + $0x1d0] sm:$0xff]
                %337 = vst [vmem:[%s275 + $0xf0] sm:$0xff] %v336
                %v338 = vld [vmem:[%s274 + $0x1d8] sm:$0xff]
                %339 = vst [vmem:[%s275 + $0xf8] sm:$0xff] %v338
                %v340 = vld [vmem:[%s274 + $0x200] sm:$0xff]
                %341 = vst [vmem:[%s275 + $0x100] sm:$0xff] %v340
                %v342 = vld [vmem:[%s274 + $0x208] sm:$0xff]
                %343 = vst [vmem:[%s275 + $0x108] sm:$0xff] %v342
                %v344 = vld [vmem:[%s274 + $0x210] sm:$0xff]
                %345 = vst [vmem:[%s275 + $0x110] sm:$0xff] %v344
                %v346 = vld [vmem:[%s274 + $0x218] sm:$0xff]
                %347 = vst [vmem:[%s275 + $0x118] sm:$0xff] %v346
                %v348 = vld [vmem:[%s274 + $0x240] sm:$0xff]
                %349 = vst [vmem:[%s275 + $0x120] sm:$0xff] %v348
                %v350 = vld [vmem:[%s274 + $0x248] sm:$0xff]
                %351 = vst [vmem:[%s275 + $0x128] sm:$0xff] %v350
                %v352 = vld [vmem:[%s274 + $0x250] sm:$0xff]
                %353 = vst [vmem:[%s275 + $0x130] sm:$0xff] %v352
                %v354 = vld [vmem:[%s274 + $0x258] sm:$0xff]
                %355 = vst [vmem:[%s275 + $0x138] sm:$0xff] %v354
                %v356 = vld [vmem:[%s274 + $0x280] sm:$0xff]
                %357 = vst [vmem:[%s275 + $0x140] sm:$0xff] %v356
                %v358 = vld [vmem:[%s274 + $0x288] sm:$0xff]
                %359 = vst [vmem:[%s275 + $0x148] sm:$0xff] %v358
                %v360 = vld [vmem:[%s274 + $0x290] sm:$0xff]
                %361 = vst [vmem:[%s275 + $0x150] sm:$0xff] %v360
                %v362 = vld [vmem:[%s274 + $0x298] sm:$0xff]
                %363 = vst [vmem:[%s275 + $0x158] sm:$0xff] %v362
                %v364 = vld [vmem:[%s274 + $0x2c0] sm:$0xff]
                %365 = vst [vmem:[%s275 + $0x160] sm:$0xff] %v364
                %v366 = vld [vmem:[%s274 + $0x2c8] sm:$0xff]
                %367 = vst [vmem:[%s275 + $0x168] sm:$0xff] %v366
                %v368 = vld [vmem:[%s274 + $0x2d0] sm:$0xff]
                %369 = vst [vmem:[%s275 + $0x170] sm:$0xff] %v368
                %v370 = vld [vmem:[%s274 + $0x2d8] sm:$0xff]
                %371 = vst [vmem:[%s275 + $0x178] sm:$0xff] %v370
                %v372 = vld [vmem:[%s274 + $0x300] sm:$0xff]
                %373 = vst [vmem:[%s275 + $0x180] sm:$0xff] %v372
                %v374 = vld [vmem:[%s274 + $0x308] sm:$0xff]
                %375 = vst [vmem:[%s275 + $0x188] sm:$0xff] %v374
                %v376 = vld [vmem:[%s274 + $0x310] sm:$0xff]
                %377 = vst [vmem:[%s275 + $0x190] sm:$0xff] %v376
                %v378 = vld [vmem:[%s274 + $0x318] sm:$0xff]
                %379 = vst [vmem:[%s275 + $0x198] sm:$0xff] %v378
                %v380 = vld [vmem:[%s274 + $0x340] sm:$0xff]
                %381 = vst [vmem:[%s275 + $0x1a0] sm:$0xff] %v380
                %v382 = vld [vmem:[%s274 + $0x348] sm:$0xff]
                %383 = vst [vmem:[%s275 + $0x1a8] sm:$0xff] %v382
                %v384 = vld [vmem:[%s274 + $0x350] sm:$0xff]
                %385 = vst [vmem:[%s275 + $0x1b0] sm:$0xff] %v384
                %v386 = vld [vmem:[%s274 + $0x358] sm:$0xff]
                %387 = vst [vmem:[%s275 + $0x1b8] sm:$0xff] %v386
                %v388 = vld [vmem:[%s274 + $0x380] sm:$0xff]
                %389 = vst [vmem:[%s275 + $0x1c0] sm:$0xff] %v388
                %v390 = vld [vmem:[%s274 + $0x388] sm:$0xff]
                %391 = vst [vmem:[%s275 + $0x1c8] sm:$0xff] %v390
                %v392 = vld [vmem:[%s274 + $0x390] sm:$0xff]
                %393 = vst [vmem:[%s275 + $0x1d0] sm:$0xff] %v392
                %v394 = vld [vmem:[%s274 + $0x398] sm:$0xff]
                %395 = vst [vmem:[%s275 + $0x1d8] sm:$0xff] %v394
                %v396 = vld [vmem:[%s274 + $0x3c0] sm:$0xff]
                %397 = vst [vmem:[%s275 + $0x1e0] sm:$0xff] %v396
                %v398 = vld [vmem:[%s274 + $0x3c8] sm:$0xff]
                %399 = vst [vmem:[%s275 + $0x1e8] sm:$0xff] %v398
                %v400 = vld [vmem:[%s274 + $0x3d0] sm:$0xff]
                %401 = vst [vmem:[%s275 + $0x1f0] sm:$0xff] %v400
                %v402 = vld [vmem:[%s274 + $0x3d8] sm:$0xff]
                %403 = vst [vmem:[%s275 + $0x1f8] sm:$0xff] %v402
                %v404 = vld [vmem:[%s274 + $0x400] sm:$0xff]
                %405 = vst [vmem:[%s275 + $0x200] sm:$0xff] %v404
                %v406 = vld [vmem:[%s274 + $0x408] sm:$0xff]
                %407 = vst [vmem:[%s275 + $0x208] sm:$0xff] %v406
                %v408 = vld [vmem:[%s274 + $0x410] sm:$0xff]
                %409 = vst [vmem:[%s275 + $0x210] sm:$0xff] %v408
                %v410 = vld [vmem:[%s274 + $0x418] sm:$0xff]
                %411 = vst [vmem:[%s275 + $0x218] sm:$0xff] %v410
                %v412 = vld [vmem:[%s274 + $0x440] sm:$0xff]
                %413 = vst [vmem:[%s275 + $0x220] sm:$0xff] %v412
                %v414 = vld [vmem:[%s274 + $0x448] sm:$0xff]
                %415 = vst [vmem:[%s275 + $0x228] sm:$0xff] %v414
                %v416 = vld [vmem:[%s274 + $0x450] sm:$0xff]
                %417 = vst [vmem:[%s275 + $0x230] sm:$0xff] %v416
                %v418 = vld [vmem:[%s274 + $0x458] sm:$0xff]
                %419 = vst [vmem:[%s275 + $0x238] sm:$0xff] %v418
                %v420 = vld [vmem:[%s274 + $0x480] sm:$0xff]
                %421 = vst [vmem:[%s275 + $0x240] sm:$0xff] %v420
                %v422 = vld [vmem:[%s274 + $0x488] sm:$0xff]
                %423 = vst [vmem:[%s275 + $0x248] sm:$0xff] %v422
                %v424 = vld [vmem:[%s274 + $0x490] sm:$0xff]
                %425 = vst [vmem:[%s275 + $0x250] sm:$0xff] %v424
                %v426 = vld [vmem:[%s274 + $0x498] sm:$0xff]
                %427 = vst [vmem:[%s275 + $0x258] sm:$0xff] %v426
                %v428 = vld [vmem:[%s274 + $0x4c0] sm:$0xff]
                %429 = vst [vmem:[%s275 + $0x260] sm:$0xff] %v428
                %v430 = vld [vmem:[%s274 + $0x4c8] sm:$0xff]
                %431 = vst [vmem:[%s275 + $0x268] sm:$0xff] %v430
                %v432 = vld [vmem:[%s274 + $0x4d0] sm:$0xff]
                %433 = vst [vmem:[%s275 + $0x270] sm:$0xff] %v432
                %v434 = vld [vmem:[%s274 + $0x4d8] sm:$0xff]
                %435 = vst [vmem:[%s275 + $0x278] sm:$0xff] %v434
                %v436 = vld [vmem:[%s274 + $0x500] sm:$0xff]
                %437 = vst [vmem:[%s275 + $0x280] sm:$0xff] %v436
                %v438 = vld [vmem:[%s274 + $0x508] sm:$0xff]
                %439 = vst [vmem:[%s275 + $0x288] sm:$0xff] %v438
                %v440 = vld [vmem:[%s274 + $0x510] sm:$0xff]
                %441 = vst [vmem:[%s275 + $0x290] sm:$0xff] %v440
                %v442 = vld [vmem:[%s274 + $0x518] sm:$0xff]
                %443 = vst [vmem:[%s275 + $0x298] sm:$0xff] %v442
                %v444 = vld [vmem:[%s274 + $0x540] sm:$0xff]
                %445 = vst [vmem:[%s275 + $0x2a0] sm:$0xff] %v444
                %v446 = vld [vmem:[%s274 + $0x548] sm:$0xff]
                %447 = vst [vmem:[%s275 + $0x2a8] sm:$0xff] %v446
                %v448 = vld [vmem:[%s274 + $0x550] sm:$0xff]
                %449 = vst [vmem:[%s275 + $0x2b0] sm:$0xff] %v448
                %v450 = vld [vmem:[%s274 + $0x558] sm:$0xff]
                %451 = vst [vmem:[%s275 + $0x2b8] sm:$0xff] %v450
                %v452 = vld [vmem:[%s274 + $0x580] sm:$0xff]
                %453 = vst [vmem:[%s275 + $0x2c0] sm:$0xff] %v452
                %v454 = vld [vmem:[%s274 + $0x588] sm:$0xff]
                %455 = vst [vmem:[%s275 + $0x2c8] sm:$0xff] %v454
                %v456 = vld [vmem:[%s274 + $0x590] sm:$0xff]
                %457 = vst [vmem:[%s275 + $0x2d0] sm:$0xff] %v456
                %v458 = vld [vmem:[%s274 + $0x598] sm:$0xff]
                %459 = vst [vmem:[%s275 + $0x2d8] sm:$0xff] %v458
                %v460 = vld [vmem:[%s274 + $0x5c0] sm:$0xff]
                %461 = vst [vmem:[%s275 + $0x2e0] sm:$0xff] %v460
                %v462 = vld [vmem:[%s274 + $0x5c8] sm:$0xff]
                %463 = vst [vmem:[%s275 + $0x2e8] sm:$0xff] %v462
                %v464 = vld [vmem:[%s274 + $0x5d0] sm:$0xff]
                %465 = vst [vmem:[%s275 + $0x2f0] sm:$0xff] %v464
                %v466 = vld [vmem:[%s274 + $0x5d8] sm:$0xff]
                %467 = vst [vmem:[%s275 + $0x2f8] sm:$0xff] %v466
                %v468 = vld [vmem:[%s274 + $0x600] sm:$0xff]
                %469 = vst [vmem:[%s275 + $0x300] sm:$0xff] %v468
                %v470 = vld [vmem:[%s274 + $0x608] sm:$0xff]
                %471 = vst [vmem:[%s275 + $0x308] sm:$0xff] %v470
                %v472 = vld [vmem:[%s274 + $0x610] sm:$0xff]
                %473 = vst [vmem:[%s275 + $0x310] sm:$0xff] %v472
                %v474 = vld [vmem:[%s274 + $0x618] sm:$0xff]
                %475 = vst [vmem:[%s275 + $0x318] sm:$0xff] %v474
                %v476 = vld [vmem:[%s274 + $0x640] sm:$0xff]
                %477 = vst [vmem:[%s275 + $0x320] sm:$0xff] %v476
                %v478 = vld [vmem:[%s274 + $0x648] sm:$0xff]
                %479 = vst [vmem:[%s275 + $0x328] sm:$0xff] %v478
                %v480 = vld [vmem:[%s274 + $0x650] sm:$0xff]
                %481 = vst [vmem:[%s275 + $0x330] sm:$0xff] %v480
                %v482 = vld [vmem:[%s274 + $0x658] sm:$0xff]
                %483 = vst [vmem:[%s275 + $0x338] sm:$0xff] %v482
                %v484 = vld [vmem:[%s274 + $0x680] sm:$0xff]
                %485 = vst [vmem:[%s275 + $0x340] sm:$0xff] %v484
                %v486 = vld [vmem:[%s274 + $0x688] sm:$0xff]
                %487 = vst [vmem:[%s275 + $0x348] sm:$0xff] %v486
                %v488 = vld [vmem:[%s274 + $0x690] sm:$0xff]
                %489 = vst [vmem:[%s275 + $0x350] sm:$0xff] %v488
                %v490 = vld [vmem:[%s274 + $0x698] sm:$0xff]
                %491 = vst [vmem:[%s275 + $0x358] sm:$0xff] %v490
                %v492 = vld [vmem:[%s274 + $0x6c0] sm:$0xff]
                %493 = vst [vmem:[%s275 + $0x360] sm:$0xff] %v492
                %v494 = vld [vmem:[%s274 + $0x6c8] sm:$0xff]
                %495 = vst [vmem:[%s275 + $0x368] sm:$0xff] %v494
                %v496 = vld [vmem:[%s274 + $0x6d0] sm:$0xff]
                %497 = vst [vmem:[%s275 + $0x370] sm:$0xff] %v496
                %v498 = vld [vmem:[%s274 + $0x6d8] sm:$0xff]
                %499 = vst [vmem:[%s275 + $0x378] sm:$0xff] %v498
                %v500 = vld [vmem:[%s274 + $0x700] sm:$0xff]
                %501 = vst [vmem:[%s275 + $0x380] sm:$0xff] %v500
                %v502 = vld [vmem:[%s274 + $0x708] sm:$0xff]
                %503 = vst [vmem:[%s275 + $0x388] sm:$0xff] %v502
                %v504 = vld [vmem:[%s274 + $0x710] sm:$0xff]
                %505 = vst [vmem:[%s275 + $0x390] sm:$0xff] %v504
                %v506 = vld [vmem:[%s274 + $0x718] sm:$0xff]
                %507 = vst [vmem:[%s275 + $0x398] sm:$0xff] %v506
                %v508 = vld [vmem:[%s274 + $0x740] sm:$0xff]
                %509 = vst [vmem:[%s275 + $0x3a0] sm:$0xff] %v508
                %v510 = vld [vmem:[%s274 + $0x748] sm:$0xff]
                %511 = vst [vmem:[%s275 + $0x3a8] sm:$0xff] %v510
                %v512 = vld [vmem:[%s274 + $0x750] sm:$0xff]
                %513 = vst [vmem:[%s275 + $0x3b0] sm:$0xff] %v512
                %v514 = vld [vmem:[%s274 + $0x758] sm:$0xff]
                %515 = vst [vmem:[%s275 + $0x3b8] sm:$0xff] %v514
                %v516 = vld [vmem:[%s274 + $0x780] sm:$0xff]
                %517 = vst [vmem:[%s275 + $0x3c0] sm:$0xff] %v516
                %v518 = vld [vmem:[%s274 + $0x788] sm:$0xff]
                %519 = vst [vmem:[%s275 + $0x3c8] sm:$0xff] %v518
                %v520 = vld [vmem:[%s274 + $0x790] sm:$0xff]
                %521 = vst [vmem:[%s275 + $0x3d0] sm:$0xff] %v520
                %v522 = vld [vmem:[%s274 + $0x798] sm:$0xff]
                %523 = vst [vmem:[%s275 + $0x3d8] sm:$0xff] %v522
                %v524 = vld [vmem:[%s274 + $0x7c0] sm:$0xff]
                %525 = vst [vmem:[%s275 + $0x3e0] sm:$0xff] %v524
                %v526 = vld [vmem:[%s274 + $0x7c8] sm:$0xff]
                %527 = vst [vmem:[%s275 + $0x3e8] sm:$0xff] %v526
                %v528 = vld [vmem:[%s274 + $0x7d0] sm:$0xff]
                %529 = vst [vmem:[%s275 + $0x3f0] sm:$0xff] %v528
                %v530 = vld [vmem:[%s274 + $0x7d8] sm:$0xff]
                %531 = vst [vmem:[%s275 + $0x3f8] sm:$0xff] %v530
                %v532 = vld [vmem:[%s274 + $0x800] sm:$0xff]
                %533 = vst [vmem:[%s275 + $0x400] sm:$0xff] %v532
                %v534 = vld [vmem:[%s274 + $0x808] sm:$0xff]
                %535 = vst [vmem:[%s275 + $0x408] sm:$0xff] %v534
                %v536 = vld [vmem:[%s274 + $0x810] sm:$0xff]
                %537 = vst [vmem:[%s275 + $0x410] sm:$0xff] %v536
                %v538 = vld [vmem:[%s274 + $0x818] sm:$0xff]
                %539 = vst [vmem:[%s275 + $0x418] sm:$0xff] %v538
                %v540 = vld [vmem:[%s274 + $0x840] sm:$0xff]
                %541 = vst [vmem:[%s275 + $0x420] sm:$0xff] %v540
                %v542 = vld [vmem:[%s274 + $0x848] sm:$0xff]
                %543 = vst [vmem:[%s275 + $0x428] sm:$0xff] %v542
                %v544 = vld [vmem:[%s274 + $0x850] sm:$0xff]
                %545 = vst [vmem:[%s275 + $0x430] sm:$0xff] %v544
                %v546 = vld [vmem:[%s274 + $0x858] sm:$0xff]
                %547 = vst [vmem:[%s275 + $0x438] sm:$0xff] %v546
                %v548 = vld [vmem:[%s274 + $0x880] sm:$0xff]
                %549 = vst [vmem:[%s275 + $0x440] sm:$0xff] %v548
                %v550 = vld [vmem:[%s274 + $0x888] sm:$0xff]
                %551 = vst [vmem:[%s275 + $0x448] sm:$0xff] %v550
                %v552 = vld [vmem:[%s274 + $0x890] sm:$0xff]
                %553 = vst [vmem:[%s275 + $0x450] sm:$0xff] %v552
                %v554 = vld [vmem:[%s274 + $0x898] sm:$0xff]
                %555 = vst [vmem:[%s275 + $0x458] sm:$0xff] %v554
                %v556 = vld [vmem:[%s274 + $0x8c0] sm:$0xff]
                %557 = vst [vmem:[%s275 + $0x460] sm:$0xff] %v556
                %v558 = vld [vmem:[%s274 + $0x8c8] sm:$0xff]
                %559 = vst [vmem:[%s275 + $0x468] sm:$0xff] %v558
                %v560 = vld [vmem:[%s274 + $0x8d0] sm:$0xff]
                %561 = vst [vmem:[%s275 + $0x470] sm:$0xff] %v560
                %v562 = vld [vmem:[%s274 + $0x8d8] sm:$0xff]
                %563 = vst [vmem:[%s275 + $0x478] sm:$0xff] %v562
                %v564 = vld [vmem:[%s274 + $0x900] sm:$0xff]
                %565 = vst [vmem:[%s275 + $0x480] sm:$0xff] %v564
                %v566 = vld [vmem:[%s274 + $0x908] sm:$0xff]
                %567 = vst [vmem:[%s275 + $0x488] sm:$0xff] %v566
                %v568 = vld [vmem:[%s274 + $0x910] sm:$0xff]
                %569 = vst [vmem:[%s275 + $0x490] sm:$0xff] %v568
                %v570 = vld [vmem:[%s274 + $0x918] sm:$0xff]
                %571 = vst [vmem:[%s275 + $0x498] sm:$0xff] %v570
                %v572 = vld [vmem:[%s274 + $0x940] sm:$0xff]
                %573 = vst [vmem:[%s275 + $0x4a0] sm:$0xff] %v572
                %v574 = vld [vmem:[%s274 + $0x948] sm:$0xff]
                %575 = vst [vmem:[%s275 + $0x4a8] sm:$0xff] %v574
                %v576 = vld [vmem:[%s274 + $0x950] sm:$0xff]
                %577 = vst [vmem:[%s275 + $0x4b0] sm:$0xff] %v576
                %v578 = vld [vmem:[%s274 + $0x958] sm:$0xff]
                %579 = vst [vmem:[%s275 + $0x4b8] sm:$0xff] %v578
                %v580 = vld [vmem:[%s274 + $0x980] sm:$0xff]
                %581 = vst [vmem:[%s275 + $0x4c0] sm:$0xff] %v580
                %v582 = vld [vmem:[%s274 + $0x988] sm:$0xff]
                %583 = vst [vmem:[%s275 + $0x4c8] sm:$0xff] %v582
                %v584 = vld [vmem:[%s274 + $0x990] sm:$0xff]
                %585 = vst [vmem:[%s275 + $0x4d0] sm:$0xff] %v584
                %v586 = vld [vmem:[%s274 + $0x998] sm:$0xff]
                %587 = vst [vmem:[%s275 + $0x4d8] sm:$0xff] %v586
                %v588 = vld [vmem:[%s274 + $0x9c0] sm:$0xff]
                %589 = vst [vmem:[%s275 + $0x4e0] sm:$0xff] %v588
                %v590 = vld [vmem:[%s274 + $0x9c8] sm:$0xff]
                %591 = vst [vmem:[%s275 + $0x4e8] sm:$0xff] %v590
                %v592 = vld [vmem:[%s274 + $0x9d0] sm:$0xff]
                %593 = vst [vmem:[%s275 + $0x4f0] sm:$0xff] %v592
                %v594 = vld [vmem:[%s274 + $0x9d8] sm:$0xff]
                %595 = vst [vmem:[%s275 + $0x4f8] sm:$0xff] %v594
                %v596 = vld [vmem:[%s274 + $0xa00] sm:$0xff]
                %597 = vst [vmem:[%s275 + $0x500] sm:$0xff] %v596
                %v598 = vld [vmem:[%s274 + $0xa08] sm:$0xff]
                %599 = vst [vmem:[%s275 + $0x508] sm:$0xff] %v598
                %v600 = vld [vmem:[%s274 + $0xa10] sm:$0xff]
                %601 = vst [vmem:[%s275 + $0x510] sm:$0xff] %v600
                %v602 = vld [vmem:[%s274 + $0xa18] sm:$0xff]
                %603 = vst [vmem:[%s275 + $0x518] sm:$0xff] %v602
                %v604 = vld [vmem:[%s274 + $0xa40] sm:$0xff]
                %605 = vst [vmem:[%s275 + $0x520] sm:$0xff] %v604
                %v606 = vld [vmem:[%s274 + $0xa48] sm:$0xff]
                %607 = vst [vmem:[%s275 + $0x528] sm:$0xff] %v606
                %v608 = vld [vmem:[%s274 + $0xa50] sm:$0xff]
                %609 = vst [vmem:[%s275 + $0x530] sm:$0xff] %v608
                %v610 = vld [vmem:[%s274 + $0xa58] sm:$0xff]
                %611 = vst [vmem:[%s275 + $0x538] sm:$0xff] %v610
                %v612 = vld [vmem:[%s274 + $0xa80] sm:$0xff]
                %613 = vst [vmem:[%s275 + $0x540] sm:$0xff] %v612
                %v614 = vld [vmem:[%s274 + $0xa88] sm:$0xff]
                %615 = vst [vmem:[%s275 + $0x548] sm:$0xff] %v614
                %v616 = vld [vmem:[%s274 + $0xa90] sm:$0xff]
                %617 = vst [vmem:[%s275 + $0x550] sm:$0xff] %v616
                %v618 = vld [vmem:[%s274 + $0xa98] sm:$0xff]
                %619 = vst [vmem:[%s275 + $0x558] sm:$0xff] %v618
                %v620 = vld [vmem:[%s274 + $0xac0] sm:$0xff]
                %621 = vst [vmem:[%s275 + $0x560] sm:$0xff] %v620
                %v622 = vld [vmem:[%s274 + $0xac8] sm:$0xff]
                %623 = vst [vmem:[%s275 + $0x568] sm:$0xff] %v622
                %v624 = vld [vmem:[%s274 + $0xad0] sm:$0xff]
                %625 = vst [vmem:[%s275 + $0x570] sm:$0xff] %v624
                %v626 = vld [vmem:[%s274 + $0xad8] sm:$0xff]
                %627 = vst [vmem:[%s275 + $0x578] sm:$0xff] %v626
                %v628 = vld [vmem:[%s274 + $0xb00] sm:$0xff]
                %629 = vst [vmem:[%s275 + $0x580] sm:$0xff] %v628
                %v630 = vld [vmem:[%s274 + $0xb08] sm:$0xff]
                %631 = vst [vmem:[%s275 + $0x588] sm:$0xff] %v630
                %v632 = vld [vmem:[%s274 + $0xb10] sm:$0xff]
                %633 = vst [vmem:[%s275 + $0x590] sm:$0xff] %v632
                %v634 = vld [vmem:[%s274 + $0xb18] sm:$0xff]
                %635 = vst [vmem:[%s275 + $0x598] sm:$0xff] %v634
                %v636 = vld [vmem:[%s274 + $0xb40] sm:$0xff]
                %637 = vst [vmem:[%s275 + $0x5a0] sm:$0xff] %v636
                %v638 = vld [vmem:[%s274 + $0xb48] sm:$0xff]
                %639 = vst [vmem:[%s275 + $0x5a8] sm:$0xff] %v638
                %v640 = vld [vmem:[%s274 + $0xb50] sm:$0xff]
                %641 = vst [vmem:[%s275 + $0x5b0] sm:$0xff] %v640
                %v642 = vld [vmem:[%s274 + $0xb58] sm:$0xff]
                %643 = vst [vmem:[%s275 + $0x5b8] sm:$0xff] %v642
                %v644 = vld [vmem:[%s274 + $0xb80] sm:$0xff]
                %645 = vst [vmem:[%s275 + $0x5c0] sm:$0xff] %v644
                %v646 = vld [vmem:[%s274 + $0xb88] sm:$0xff]
                %647 = vst [vmem:[%s275 + $0x5c8] sm:$0xff] %v646
                %v648 = vld [vmem:[%s274 + $0xb90] sm:$0xff]
                %649 = vst [vmem:[%s275 + $0x5d0] sm:$0xff] %v648
                %v650 = vld [vmem:[%s274 + $0xb98] sm:$0xff]
                %651 = vst [vmem:[%s275 + $0x5d8] sm:$0xff] %v650
                %v652 = vld [vmem:[%s274 + $0xbc0] sm:$0xff]
                %653 = vst [vmem:[%s275 + $0x5e0] sm:$0xff] %v652
                %v654 = vld [vmem:[%s274 + $0xbc8] sm:$0xff]
                %655 = vst [vmem:[%s275 + $0x5e8] sm:$0xff] %v654
                %v656 = vld [vmem:[%s274 + $0xbd0] sm:$0xff]
                %657 = vst [vmem:[%s275 + $0x5f0] sm:$0xff] %v656
                %v658 = vld [vmem:[%s274 + $0xbd8] sm:$0xff]
                %659 = vst [vmem:[%s275 + $0x5f8] sm:$0xff] %v658
                %v660 = vld [vmem:[%s274 + $0xc00] sm:$0xff]
                %661 = vst [vmem:[%s275 + $0x600] sm:$0xff] %v660
                %v662 = vld [vmem:[%s274 + $0xc08] sm:$0xff]
                %663 = vst [vmem:[%s275 + $0x608] sm:$0xff] %v662
                %v664 = vld [vmem:[%s274 + $0xc10] sm:$0xff]
                %665 = vst [vmem:[%s275 + $0x610] sm:$0xff] %v664
                %v666 = vld [vmem:[%s274 + $0xc18] sm:$0xff]
                %667 = vst [vmem:[%s275 + $0x618] sm:$0xff] %v666
                %v668 = vld [vmem:[%s274 + $0xc40] sm:$0xff]
                %669 = vst [vmem:[%s275 + $0x620] sm:$0xff] %v668
                %v670 = vld [vmem:[%s274 + $0xc48] sm:$0xff]
                %671 = vst [vmem:[%s275 + $0x628] sm:$0xff] %v670
                %v672 = vld [vmem:[%s274 + $0xc50] sm:$0xff]
                %673 = vst [vmem:[%s275 + $0x630] sm:$0xff] %v672
                %v674 = vld [vmem:[%s274 + $0xc58] sm:$0xff]
                %675 = vst [vmem:[%s275 + $0x638] sm:$0xff] %v674
                %v676 = vld [vmem:[%s274 + $0xc80] sm:$0xff]
                %677 = vst [vmem:[%s275 + $0x640] sm:$0xff] %v676
                %v678 = vld [vmem:[%s274 + $0xc88] sm:$0xff]
                %679 = vst [vmem:[%s275 + $0x648] sm:$0xff] %v678
                %v680 = vld [vmem:[%s274 + $0xc90] sm:$0xff]
                %681 = vst [vmem:[%s275 + $0x650] sm:$0xff] %v680
                %v682 = vld [vmem:[%s274 + $0xc98] sm:$0xff]
                %683 = vst [vmem:[%s275 + $0x658] sm:$0xff] %v682
                %v684 = vld [vmem:[%s274 + $0xcc0] sm:$0xff]
                %685 = vst [vmem:[%s275 + $0x660] sm:$0xff] %v684
                %v686 = vld [vmem:[%s274 + $0xcc8] sm:$0xff]
                %687 = vst [vmem:[%s275 + $0x668] sm:$0xff] %v686
                %v688 = vld [vmem:[%s274 + $0xcd0] sm:$0xff]
                %689 = vst [vmem:[%s275 + $0x670] sm:$0xff] %v688
                %v690 = vld [vmem:[%s274 + $0xcd8] sm:$0xff]
                %691 = vst [vmem:[%s275 + $0x678] sm:$0xff] %v690
                %v692 = vld [vmem:[%s274 + $0xd00] sm:$0xff]
                %693 = vst [vmem:[%s275 + $0x680] sm:$0xff] %v692
                %v694 = vld [vmem:[%s274 + $0xd08] sm:$0xff]
                %695 = vst [vmem:[%s275 + $0x688] sm:$0xff] %v694
                %v696 = vld [vmem:[%s274 + $0xd10] sm:$0xff]
                %697 = vst [vmem:[%s275 + $0x690] sm:$0xff] %v696
                %v698 = vld [vmem:[%s274 + $0xd18] sm:$0xff]
                %699 = vst [vmem:[%s275 + $0x698] sm:$0xff] %v698
                %v700 = vld [vmem:[%s274 + $0xd40] sm:$0xff]
                %701 = vst [vmem:[%s275 + $0x6a0] sm:$0xff] %v700
                %v702 = vld [vmem:[%s274 + $0xd48] sm:$0xff]
                %703 = vst [vmem:[%s275 + $0x6a8] sm:$0xff] %v702
                %v704 = vld [vmem:[%s274 + $0xd50] sm:$0xff]
                %705 = vst [vmem:[%s275 + $0x6b0] sm:$0xff] %v704
                %v706 = vld [vmem:[%s274 + $0xd58] sm:$0xff]
                %707 = vst [vmem:[%s275 + $0x6b8] sm:$0xff] %v706
                %v708 = vld [vmem:[%s274 + $0xd80] sm:$0xff]
                %709 = vst [vmem:[%s275 + $0x6c0] sm:$0xff] %v708
                %v710 = vld [vmem:[%s274 + $0xd88] sm:$0xff]
                %711 = vst [vmem:[%s275 + $0x6c8] sm:$0xff] %v710
                %v712 = vld [vmem:[%s274 + $0xd90] sm:$0xff]
                %713 = vst [vmem:[%s275 + $0x6d0] sm:$0xff] %v712
                %v714 = vld [vmem:[%s274 + $0xd98] sm:$0xff]
                %715 = vst [vmem:[%s275 + $0x6d8] sm:$0xff] %v714
                %v716 = vld [vmem:[%s274 + $0xdc0] sm:$0xff]
                %717 = vst [vmem:[%s275 + $0x6e0] sm:$0xff] %v716
                %v718 = vld [vmem:[%s274 + $0xdc8] sm:$0xff]
                %719 = vst [vmem:[%s275 + $0x6e8] sm:$0xff] %v718
                %v720 = vld [vmem:[%s274 + $0xdd0] sm:$0xff]
                %721 = vst [vmem:[%s275 + $0x6f0] sm:$0xff] %v720
                %v722 = vld [vmem:[%s274 + $0xdd8] sm:$0xff]
                %723 = vst [vmem:[%s275 + $0x6f8] sm:$0xff] %v722
                %v724 = vld [vmem:[%s274 + $0xe00] sm:$0xff]
                %725 = vst [vmem:[%s275 + $0x700] sm:$0xff] %v724
                %v726 = vld [vmem:[%s274 + $0xe08] sm:$0xff]
                %727 = vst [vmem:[%s275 + $0x708] sm:$0xff] %v726
                %v728 = vld [vmem:[%s274 + $0xe10] sm:$0xff]
                %729 = vst [vmem:[%s275 + $0x710] sm:$0xff] %v728
                %v730 = vld [vmem:[%s274 + $0xe18] sm:$0xff]
                %731 = vst [vmem:[%s275 + $0x718] sm:$0xff] %v730
                %v732 = vld [vmem:[%s274 + $0xe40] sm:$0xff]
                %733 = vst [vmem:[%s275 + $0x720] sm:$0xff] %v732
                %v734 = vld [vmem:[%s274 + $0xe48] sm:$0xff]
                %735 = vst [vmem:[%s275 + $0x728] sm:$0xff] %v734
                %v736 = vld [vmem:[%s274 + $0xe50] sm:$0xff]
                %737 = vst [vmem:[%s275 + $0x730] sm:$0xff] %v736
                %v738 = vld [vmem:[%s274 + $0xe58] sm:$0xff]
                %739 = vst [vmem:[%s275 + $0x738] sm:$0xff] %v738
                %v740 = vld [vmem:[%s274 + $0xe80] sm:$0xff]
                %741 = vst [vmem:[%s275 + $0x740] sm:$0xff] %v740
                %v742 = vld [vmem:[%s274 + $0xe88] sm:$0xff]
                %743 = vst [vmem:[%s275 + $0x748] sm:$0xff] %v742
                %v744 = vld [vmem:[%s274 + $0xe90] sm:$0xff]
                %745 = vst [vmem:[%s275 + $0x750] sm:$0xff] %v744
                %v746 = vld [vmem:[%s274 + $0xe98] sm:$0xff]
                %747 = vst [vmem:[%s275 + $0x758] sm:$0xff] %v746
                %v748 = vld [vmem:[%s274 + $0xec0] sm:$0xff]
                %749 = vst [vmem:[%s275 + $0x760] sm:$0xff] %v748
                %v750 = vld [vmem:[%s274 + $0xec8] sm:$0xff]
                %751 = vst [vmem:[%s275 + $0x768] sm:$0xff] %v750
                %v752 = vld [vmem:[%s274 + $0xed0] sm:$0xff]
                %753 = vst [vmem:[%s275 + $0x770] sm:$0xff] %v752
                %v754 = vld [vmem:[%s274 + $0xed8] sm:$0xff]
                %755 = vst [vmem:[%s275 + $0x778] sm:$0xff] %v754
                %v756 = vld [vmem:[%s274 + $0xf00] sm:$0xff]
                %757 = vst [vmem:[%s275 + $0x780] sm:$0xff] %v756
                %v758 = vld [vmem:[%s274 + $0xf08] sm:$0xff]
                %759 = vst [vmem:[%s275 + $0x788] sm:$0xff] %v758
                %v760 = vld [vmem:[%s274 + $0xf10] sm:$0xff]
                %761 = vst [vmem:[%s275 + $0x790] sm:$0xff] %v760
                %v762 = vld [vmem:[%s274 + $0xf18] sm:$0xff]
                %763 = vst [vmem:[%s275 + $0x798] sm:$0xff] %v762
                %v764 = vld [vmem:[%s274 + $0xf40] sm:$0xff]
                %765 = vst [vmem:[%s275 + $0x7a0] sm:$0xff] %v764
                %v766 = vld [vmem:[%s274 + $0xf48] sm:$0xff]
                %767 = vst [vmem:[%s275 + $0x7a8] sm:$0xff] %v766
                %v768 = vld [vmem:[%s274 + $0xf50] sm:$0xff]
                %769 = vst [vmem:[%s275 + $0x7b0] sm:$0xff] %v768
                %v770 = vld [vmem:[%s274 + $0xf58] sm:$0xff]
                %771 = vst [vmem:[%s275 + $0x7b8] sm:$0xff] %v770
                %v772 = vld [vmem:[%s274 + $0xf80] sm:$0xff]
                %773 = vst [vmem:[%s275 + $0x7c0] sm:$0xff] %v772
                %v774 = vld [vmem:[%s274 + $0xf88] sm:$0xff]
                %775 = vst [vmem:[%s275 + $0x7c8] sm:$0xff] %v774
                %v776 = vld [vmem:[%s274 + $0xf90] sm:$0xff]
                %777 = vst [vmem:[%s275 + $0x7d0] sm:$0xff] %v776
                %v778 = vld [vmem:[%s274 + $0xf98] sm:$0xff]
                %779 = vst [vmem:[%s275 + $0x7d8] sm:$0xff] %v778
                %v780 = vld [vmem:[%s274 + $0xfc0] sm:$0xff]
                %781 = vst [vmem:[%s275 + $0x7e0] sm:$0xff] %v780
                %v782 = vld [vmem:[%s274 + $0xfc8] sm:$0xff]
                %783 = vst [vmem:[%s275 + $0x7e8] sm:$0xff] %v782
                %v784 = vld [vmem:[%s274 + $0xfd0] sm:$0xff]
                %785 = vst [vmem:[%s275 + $0x7f0] sm:$0xff] %v784
                %v786 = vld [vmem:[%s274 + $0xfd8] sm:$0xff]
                %787 = vst [vmem:[%s275 + $0x7f8] sm:$0xff] %v786
              $region61: #{encoder_forward.1} parent=55 // loop_footer
                %s273 = sadd.s32 1, %s269
              $region62: #{encoder_forward.1} parent=55 // loop_footer_branch
                %268 = sbr.rel target = $region58
              $region63: #{encoder_forward.1} parent=55 // loop_exit
                _
            $region56: #{encoder_forward.1} parent=51 // pred_fallthru
              _
            // Predicated region
            $region64: #{encoder_forward.1} parent=51 // pred_check
              _
            $region65: #{encoder_forward.1} parent=51 // pred_check_branch
              %789 = sbr.rel target = $region67
            $region66: #{encoder_forward.1} parent=51 // pred_region
              _
            $region67: #{encoder_forward.1} parent=51 // pred_fallthru
              _
          $region52: #{encoder_forward.1} parent=47 // pred_fallthru
            _
          %790 = vnop
        $region48: #{encoder_forward.1} parent=43 // pred_fallthru
          _
      $region44: #{encoder_forward.1} parent=5 // pred_fallthru
        _
      %p791 = scmp.le.s32.totalorder 1, %s14
      %p792 = scmp.lt.s32.totalorder %s14, 3
      %p793 = pnand %p791, %p792
      %p794 = pneg %p793
      // Predicated region
      $region68: #{encoder_forward.1} parent=5 // pred_check
        _
      $region69: #{encoder_forward.1} parent=5 // pred_check_branch
        %796 = sbr.rel (%p793) target = $region71
      $region70: #{encoder_forward.1} parent=5 // pred_region
        %s797 = ssub.s32 %s14, 1
        %s798 = sand.u32 %s27, 1
        %s799 = sand.u32 %s27, 1
        %s800 = smul.addr %s799, 2048
        %s801 = scalar_lea.vmem [#allocation2], %s800
        // Predicated region
        $region72: #{encoder_forward.1} parent=70 // pred_check
          %p802 = pneg %p40
        $region73: #{encoder_forward.1} parent=70 // pred_check_branch
          %804 = sbr.rel (%p802) target = $region75
        $region74: #{encoder_forward.1} parent=70 // pred_region
          _
        $region75: #{encoder_forward.1} parent=70 // pred_fallthru
          _
        %s805 = sand.u32 %s27, 1
        %s806 = sand.u32 %s27, 1
        %s807 = smul.addr %s806, 2048
        %s808 = scalar_lea.vmem [#allocation2], %s807
        %p809 = pneg %p40
        %p810 = pneg %p37
        %p811 = pneg %p61
        %p812 = pneg %p58
        %p813 = pneg %p82
        %p814 = pneg %p79
        %p815 = pneg %p103
        %p816 = pneg %p100
        %p817 = pneg %p124
        %p818 = pneg %p121
        %p819 = pneg %p145
        %p820 = pneg %p142
        %p821 = pneg %p166
        %p822 = pneg %p163
        %p823 = pneg %p187
        %p824 = pneg %p184
        %p825 = pneg %p213
        %p826 = pneg %p210
        %s827 = smul.u32 2, %s19
        %p828 = scmp.lt.s32.totalorder %s827, 3
        %s829 = scalar_select %p828, %s827, 3
        %s830 = smul.addr %s829, 8
        %s831 = scalar_lea.vmem %s8, %s830
        %s832 = smul.u32 2, %s19
        %s833 = smul.u32 2, %s19
        %p834 = scmp.lt.s32.totalorder %s833, 3
        %s835 = scalar_select %p834, %s833, 3
        %s836 = smul.addr %s835, 8
        %s837 = scalar_lea.vmem %s8, %s836
        %s838 = smul.u32 2, %s19
        %v840 = vld [vmem:[%s801] sm:$0xff]
        %v841 = vld [vmem:[%s801 + $0x8] sm:$0xff]
        %v842 = vld [vmem:[%s801 + $0x10] sm:$0xff]
        %v843 = vld [vmem:[%s801 + $0x18] sm:$0xff]
        %v844 = vld [vmem:[%s801 + $0x20] sm:$0xff]
        %v845 = vld [vmem:[%s801 + $0x28] sm:$0xff]
        %v846 = vld [vmem:[%s801 + $0x30] sm:$0xff]
        %v847 = vld [vmem:[%s801 + $0x38] sm:$0xff]
        %v848 = vld [vmem:[%s801 + $0x40] sm:$0xff]
        %v849 = vld [vmem:[%s801 + $0x48] sm:$0xff]
        %v850 = vld [vmem:[%s801 + $0x50] sm:$0xff]
        %v851 = vld [vmem:[%s801 + $0x58] sm:$0xff]
        %v852 = vld [vmem:[%s801 + $0x60] sm:$0xff]
        %v853 = vld [vmem:[%s801 + $0x68] sm:$0xff]
        %v854 = vld [vmem:[%s801 + $0x70] sm:$0xff]
        %v855 = vld [vmem:[%s801 + $0x78] sm:$0xff]
        %v856 = vld [vmem:[%s801 + $0x80] sm:$0xff]
        %v857 = vld [vmem:[%s801 + $0x88] sm:$0xff]
        %v858 = vld [vmem:[%s801 + $0x90] sm:$0xff]
        %v859 = vld [vmem:[%s801 + $0x98] sm:$0xff]
        %v860 = vld [vmem:[%s801 + $0xa0] sm:$0xff]
        %v861 = vld [vmem:[%s801 + $0xa8] sm:$0xff]
        %v862 = vld [vmem:[%s801 + $0xb0] sm:$0xff]
        %v863 = vld [vmem:[%s801 + $0xb8] sm:$0xff]
        %v864 = vld [vmem:[%s801 + $0xc0] sm:$0xff]
        %v865 = vld [vmem:[%s801 + $0xc8] sm:$0xff]
        %v866 = vld [vmem:[%s801 + $0xd0] sm:$0xff]
        %v867 = vld [vmem:[%s801 + $0xd8] sm:$0xff]
        %v868 = vld [vmem:[%s801 + $0xe0] sm:$0xff]
        %v869 = vld [vmem:[%s801 + $0xe8] sm:$0xff]
        %v870 = vld [vmem:[%s801 + $0xf0] sm:$0xff]
        %v871 = vld [vmem:[%s801 + $0xf8] sm:$0xff]
        %v872 = vld [vmem:[%s801 + $0x100] sm:$0xff]
        %v873 = vld [vmem:[%s801 + $0x108] sm:$0xff]
        %v874 = vld [vmem:[%s801 + $0x110] sm:$0xff]
        %v875 = vld [vmem:[%s801 + $0x118] sm:$0xff]
        %v876 = vld [vmem:[%s801 + $0x120] sm:$0xff]
        %v877 = vld [vmem:[%s801 + $0x128] sm:$0xff]
        %v878 = vld [vmem:[%s801 + $0x130] sm:$0xff]
        %v879 = vld [vmem:[%s801 + $0x138] sm:$0xff]
        %v880 = vld [vmem:[%s801 + $0x140] sm:$0xff]
        %v881 = vld [vmem:[%s801 + $0x148] sm:$0xff]
        %v882 = vld [vmem:[%s801 + $0x150] sm:$0xff]
        %v883 = vld [vmem:[%s801 + $0x158] sm:$0xff]
        %v884 = vld [vmem:[%s801 + $0x160] sm:$0xff]
        %v885 = vld [vmem:[%s801 + $0x168] sm:$0xff]
        %v886 = vld [vmem:[%s801 + $0x170] sm:$0xff]
        %v887 = vld [vmem:[%s801 + $0x178] sm:$0xff]
        %v888 = vld [vmem:[%s801 + $0x180] sm:$0xff]
        %v889 = vld [vmem:[%s801 + $0x188] sm:$0xff]
        %v890 = vld [vmem:[%s801 + $0x190] sm:$0xff]
        %v891 = vld [vmem:[%s801 + $0x198] sm:$0xff]
        %v892 = vld [vmem:[%s801 + $0x1a0] sm:$0xff]
        %v893 = vld [vmem:[%s801 + $0x1a8] sm:$0xff]
        %v894 = vld [vmem:[%s801 + $0x1b0] sm:$0xff]
        %v895 = vld [vmem:[%s801 + $0x1b8] sm:$0xff]
        %v896 = vld [vmem:[%s801 + $0x1c0] sm:$0xff]
        %v897 = vld [vmem:[%s801 + $0x1c8] sm:$0xff]
        %v898 = vld [vmem:[%s801 + $0x1d0] sm:$0xff]
        %v899 = vld [vmem:[%s801 + $0x1d8] sm:$0xff]
        %v900 = vld [vmem:[%s801 + $0x1e0] sm:$0xff]
        %v901 = vld [vmem:[%s801 + $0x1e8] sm:$0xff]
        %v902 = vld [vmem:[%s801 + $0x1f0] sm:$0xff]
        %v903 = vld [vmem:[%s801 + $0x1f8] sm:$0xff]
        %v904 = vld [vmem:[%s801 + $0x200] sm:$0xff]
        %v905 = vld [vmem:[%s801 + $0x208] sm:$0xff]
        %v906 = vld [vmem:[%s801 + $0x210] sm:$0xff]
        %v907 = vld [vmem:[%s801 + $0x218] sm:$0xff]
        %v908 = vld [vmem:[%s801 + $0x220] sm:$0xff]
        %v909 = vld [vmem:[%s801 + $0x228] sm:$0xff]
        %v910 = vld [vmem:[%s801 + $0x230] sm:$0xff]
        %v911 = vld [vmem:[%s801 + $0x238] sm:$0xff]
        %v912 = vld [vmem:[%s801 + $0x240] sm:$0xff]
        %v913 = vld [vmem:[%s801 + $0x248] sm:$0xff]
        %v914 = vld [vmem:[%s801 + $0x250] sm:$0xff]
        %v915 = vld [vmem:[%s801 + $0x258] sm:$0xff]
        %v916 = vld [vmem:[%s801 + $0x260] sm:$0xff]
        %v917 = vld [vmem:[%s801 + $0x268] sm:$0xff]
        %v918 = vld [vmem:[%s801 + $0x270] sm:$0xff]
        %v919 = vld [vmem:[%s801 + $0x278] sm:$0xff]
        %v920 = vld [vmem:[%s801 + $0x280] sm:$0xff]
        %v921 = vld [vmem:[%s801 + $0x288] sm:$0xff]
        %v922 = vld [vmem:[%s801 + $0x290] sm:$0xff]
        %v923 = vld [vmem:[%s801 + $0x298] sm:$0xff]
        %v924 = vld [vmem:[%s801 + $0x2a0] sm:$0xff]
        %v925 = vld [vmem:[%s801 + $0x2a8] sm:$0xff]
        %v926 = vld [vmem:[%s801 + $0x2b0] sm:$0xff]
        %v927 = vld [vmem:[%s801 + $0x2b8] sm:$0xff]
        %v928 = vld [vmem:[%s801 + $0x2c0] sm:$0xff]
        %v929 = vld [vmem:[%s801 + $0x2c8] sm:$0xff]
        %v930 = vld [vmem:[%s801 + $0x2d0] sm:$0xff]
        %v931 = vld [vmem:[%s801 + $0x2d8] sm:$0xff]
        %v932 = vld [vmem:[%s801 + $0x2e0] sm:$0xff]
        %v933 = vld [vmem:[%s801 + $0x2e8] sm:$0xff]
        %v934 = vld [vmem:[%s801 + $0x2f0] sm:$0xff]
        %v935 = vld [vmem:[%s801 + $0x2f8] sm:$0xff]
        %v936 = vld [vmem:[%s801 + $0x300] sm:$0xff]
        %v937 = vld [vmem:[%s801 + $0x308] sm:$0xff]
        %v938 = vld [vmem:[%s801 + $0x310] sm:$0xff]
        %v939 = vld [vmem:[%s801 + $0x318] sm:$0xff]
        %v940 = vld [vmem:[%s801 + $0x320] sm:$0xff]
        %v941 = vld [vmem:[%s801 + $0x328] sm:$0xff]
        %v942 = vld [vmem:[%s801 + $0x330] sm:$0xff]
        %v943 = vld [vmem:[%s801 + $0x338] sm:$0xff]
        %v944 = vld [vmem:[%s801 + $0x340] sm:$0xff]
        %v945 = vld [vmem:[%s801 + $0x348] sm:$0xff]
        %v946 = vld [vmem:[%s801 + $0x350] sm:$0xff]
        %v947 = vld [vmem:[%s801 + $0x358] sm:$0xff]
        %v948 = vld [vmem:[%s801 + $0x360] sm:$0xff]
        %v949 = vld [vmem:[%s801 + $0x368] sm:$0xff]
        %v950 = vld [vmem:[%s801 + $0x370] sm:$0xff]
        %v951 = vld [vmem:[%s801 + $0x378] sm:$0xff]
        %v952 = vld [vmem:[%s801 + $0x380] sm:$0xff]
        %v953 = vld [vmem:[%s801 + $0x388] sm:$0xff]
        %v954 = vld [vmem:[%s801 + $0x390] sm:$0xff]
        %v955 = vld [vmem:[%s801 + $0x398] sm:$0xff]
        %v956 = vld [vmem:[%s801 + $0x3a0] sm:$0xff]
        %v957 = vld [vmem:[%s801 + $0x3a8] sm:$0xff]
        %v958 = vld [vmem:[%s801 + $0x3b0] sm:$0xff]
        %v959 = vld [vmem:[%s801 + $0x3b8] sm:$0xff]
        %v960 = vld [vmem:[%s801 + $0x3c0] sm:$0xff]
        %v961 = vld [vmem:[%s801 + $0x3c8] sm:$0xff]
        %v962 = vld [vmem:[%s801 + $0x3d0] sm:$0xff]
        %v963 = vld [vmem:[%s801 + $0x3d8] sm:$0xff]
        %v964 = vld [vmem:[%s801 + $0x3e0] sm:$0xff]
        %v965 = vld [vmem:[%s801 + $0x3e8] sm:$0xff]
        %v966 = vld [vmem:[%s801 + $0x3f0] sm:$0xff]
        %v967 = vld [vmem:[%s801 + $0x3f8] sm:$0xff]
        %v968 = vld [vmem:[%s801 + $0x400] sm:$0xff]
        %v969 = vld [vmem:[%s801 + $0x408] sm:$0xff]
        %v970 = vld [vmem:[%s801 + $0x410] sm:$0xff]
        %v971 = vld [vmem:[%s801 + $0x418] sm:$0xff]
        %v972 = vld [vmem:[%s801 + $0x420] sm:$0xff]
        %v973 = vld [vmem:[%s801 + $0x428] sm:$0xff]
        %v974 = vld [vmem:[%s801 + $0x430] sm:$0xff]
        %v975 = vld [vmem:[%s801 + $0x438] sm:$0xff]
        %v976 = vld [vmem:[%s801 + $0x440] sm:$0xff]
        %v977 = vld [vmem:[%s801 + $0x448] sm:$0xff]
        %v978 = vld [vmem:[%s801 + $0x450] sm:$0xff]
        %v979 = vld [vmem:[%s801 + $0x458] sm:$0xff]
        %v980 = vld [vmem:[%s801 + $0x460] sm:$0xff]
        %v981 = vld [vmem:[%s801 + $0x468] sm:$0xff]
        %v982 = vld [vmem:[%s801 + $0x470] sm:$0xff]
        %v983 = vld [vmem:[%s801 + $0x478] sm:$0xff]
        %v984 = vld [vmem:[%s801 + $0x480] sm:$0xff]
        %v985 = vld [vmem:[%s801 + $0x488] sm:$0xff]
        %v986 = vld [vmem:[%s801 + $0x490] sm:$0xff]
        %v987 = vld [vmem:[%s801 + $0x498] sm:$0xff]
        %v988 = vld [vmem:[%s801 + $0x4a0] sm:$0xff]
        %v989 = vld [vmem:[%s801 + $0x4a8] sm:$0xff]
        %v990 = vld [vmem:[%s801 + $0x4b0] sm:$0xff]
        %v991 = vld [vmem:[%s801 + $0x4b8] sm:$0xff]
        %v992 = vld [vmem:[%s801 + $0x4c0] sm:$0xff]
        %v993 = vld [vmem:[%s801 + $0x4c8] sm:$0xff]
        %v994 = vld [vmem:[%s801 + $0x4d0] sm:$0xff]
        %v995 = vld [vmem:[%s801 + $0x4d8] sm:$0xff]
        %v996 = vld [vmem:[%s801 + $0x4e0] sm:$0xff]
        %v997 = vld [vmem:[%s801 + $0x4e8] sm:$0xff]
        %v998 = vld [vmem:[%s801 + $0x4f0] sm:$0xff]
        %v999 = vld [vmem:[%s801 + $0x4f8] sm:$0xff]
        %v1000 = vld [vmem:[%s801 + $0x500] sm:$0xff]
        %v1001 = vld [vmem:[%s801 + $0x508] sm:$0xff]
        %v1002 = vld [vmem:[%s801 + $0x510] sm:$0xff]
        %v1003 = vld [vmem:[%s801 + $0x518] sm:$0xff]
        %v1004 = vld [vmem:[%s801 + $0x520] sm:$0xff]
        %v1005 = vld [vmem:[%s801 + $0x528] sm:$0xff]
        %v1006 = vld [vmem:[%s801 + $0x530] sm:$0xff]
        %v1007 = vld [vmem:[%s801 + $0x538] sm:$0xff]
        %v1008 = vld [vmem:[%s801 + $0x540] sm:$0xff]
        %v1009 = vld [vmem:[%s801 + $0x548] sm:$0xff]
        %v1010 = vld [vmem:[%s801 + $0x550] sm:$0xff]
        %v1011 = vld [vmem:[%s801 + $0x558] sm:$0xff]
        %v1012 = vld [vmem:[%s801 + $0x560] sm:$0xff]
        %v1013 = vld [vmem:[%s801 + $0x568] sm:$0xff]
        %v1014 = vld [vmem:[%s801 + $0x570] sm:$0xff]
        %v1015 = vld [vmem:[%s801 + $0x578] sm:$0xff]
        %v1016 = vld [vmem:[%s801 + $0x580] sm:$0xff]
        %v1017 = vld [vmem:[%s801 + $0x588] sm:$0xff]
        %v1018 = vld [vmem:[%s801 + $0x590] sm:$0xff]
        %v1019 = vld [vmem:[%s801 + $0x598] sm:$0xff]
        %v1020 = vld [vmem:[%s801 + $0x5a0] sm:$0xff]
        %v1021 = vld [vmem:[%s801 + $0x5a8] sm:$0xff]
        %v1022 = vld [vmem:[%s801 + $0x5b0] sm:$0xff]
        %v1023 = vld [vmem:[%s801 + $0x5b8] sm:$0xff]
        %v1024 = vld [vmem:[%s801 + $0x5c0] sm:$0xff]
        %v1025 = vld [vmem:[%s801 + $0x5c8] sm:$0xff]
        %v1026 = vld [vmem:[%s801 + $0x5d0] sm:$0xff]
        %v1027 = vld [vmem:[%s801 + $0x5d8] sm:$0xff]
        %v1028 = vld [vmem:[%s801 + $0x5e0] sm:$0xff]
        %v1029 = vld [vmem:[%s801 + $0x5e8] sm:$0xff]
        %v1030 = vld [vmem:[%s801 + $0x5f0] sm:$0xff]
        %v1031 = vld [vmem:[%s801 + $0x5f8] sm:$0xff]
        %v1032 = vld [vmem:[%s801 + $0x600] sm:$0xff]
        %v1033 = vld [vmem:[%s801 + $0x608] sm:$0xff]
        %v1034 = vld [vmem:[%s801 + $0x610] sm:$0xff]
        %v1035 = vld [vmem:[%s801 + $0x618] sm:$0xff]
        %v1036 = vld [vmem:[%s801 + $0x620] sm:$0xff]
        %v1037 = vld [vmem:[%s801 + $0x628] sm:$0xff]
        %v1038 = vld [vmem:[%s801 + $0x630] sm:$0xff]
        %v1039 = vld [vmem:[%s801 + $0x638] sm:$0xff]
        %v1040 = vld [vmem:[%s801 + $0x640] sm:$0xff]
        %v1041 = vld [vmem:[%s801 + $0x648] sm:$0xff]
        %v1042 = vld [vmem:[%s801 + $0x650] sm:$0xff]
        %v1043 = vld [vmem:[%s801 + $0x658] sm:$0xff]
        %v1044 = vld [vmem:[%s801 + $0x660] sm:$0xff]
        %v1045 = vld [vmem:[%s801 + $0x668] sm:$0xff]
        %v1046 = vld [vmem:[%s801 + $0x670] sm:$0xff]
        %v1047 = vld [vmem:[%s801 + $0x678] sm:$0xff]
        %v1048 = vld [vmem:[%s801 + $0x680] sm:$0xff]
        %v1049 = vld [vmem:[%s801 + $0x688] sm:$0xff]
        %v1050 = vld [vmem:[%s801 + $0x690] sm:$0xff]
        %v1051 = vld [vmem:[%s801 + $0x698] sm:$0xff]
        %v1052 = vld [vmem:[%s801 + $0x6a0] sm:$0xff]
        %v1053 = vld [vmem:[%s801 + $0x6a8] sm:$0xff]
        %v1054 = vld [vmem:[%s801 + $0x6b0] sm:$0xff]
        %v1055 = vld [vmem:[%s801 + $0x6b8] sm:$0xff]
        %v1056 = vld [vmem:[%s801 + $0x6c0] sm:$0xff]
        %v1057 = vld [vmem:[%s801 + $0x6c8] sm:$0xff]
        %v1058 = vld [vmem:[%s801 + $0x6d0] sm:$0xff]
        %v1059 = vld [vmem:[%s801 + $0x6d8] sm:$0xff]
        %v1060 = vld [vmem:[%s801 + $0x6e0] sm:$0xff]
        %v1061 = vld [vmem:[%s801 + $0x6e8] sm:$0xff]
        %v1062 = vld [vmem:[%s801 + $0x6f0] sm:$0xff]
        %v1063 = vld [vmem:[%s801 + $0x6f8] sm:$0xff]
        %v1064 = vld [vmem:[%s801 + $0x700] sm:$0xff]
        %v1065 = vld [vmem:[%s801 + $0x708] sm:$0xff]
        %v1066 = vld [vmem:[%s801 + $0x710] sm:$0xff]
        %v1067 = vld [vmem:[%s801 + $0x718] sm:$0xff]
        %v1068 = vld [vmem:[%s801 + $0x720] sm:$0xff]
        %v1069 = vld [vmem:[%s801 + $0x728] sm:$0xff]
        %v1070 = vld [vmem:[%s801 + $0x730] sm:$0xff]
        %v1071 = vld [vmem:[%s801 + $0x738] sm:$0xff]
        %v1072 = vld [vmem:[%s801 + $0x740] sm:$0xff]
        %v1073 = vld [vmem:[%s801 + $0x748] sm:$0xff]
        %v1074 = vld [vmem:[%s801 + $0x750] sm:$0xff]
        %v1075 = vld [vmem:[%s801 + $0x758] sm:$0xff]
        %v1076 = vld [vmem:[%s801 + $0x760] sm:$0xff]
        %v1077 = vld [vmem:[%s801 + $0x768] sm:$0xff]
        %v1078 = vld [vmem:[%s801 + $0x770] sm:$0xff]
        %v1079 = vld [vmem:[%s801 + $0x778] sm:$0xff]
        %v1080 = vld [vmem:[%s801 + $0x780] sm:$0xff]
        %v1081 = vld [vmem:[%s801 + $0x788] sm:$0xff]
        %v1082 = vld [vmem:[%s801 + $0x790] sm:$0xff]
        %v1083 = vld [vmem:[%s801 + $0x798] sm:$0xff]
        %v1084 = vld [vmem:[%s801 + $0x7a0] sm:$0xff]
        %v1085 = vld [vmem:[%s801 + $0x7a8] sm:$0xff]
        %v1086 = vld [vmem:[%s801 + $0x7b0] sm:$0xff]
        %v1087 = vld [vmem:[%s801 + $0x7b8] sm:$0xff]
        %v1088 = vld [vmem:[%s801 + $0x7c0] sm:$0xff]
        %v1089 = vld [vmem:[%s801 + $0x7c8] sm:$0xff]
        %v1090 = vld [vmem:[%s801 + $0x7d0] sm:$0xff]
        %v1091 = vld [vmem:[%s801 + $0x7d8] sm:$0xff]
        %v1092 = vld [vmem:[%s801 + $0x7e0] sm:$0xff]
        %v1093 = vld [vmem:[%s801 + $0x7e8] sm:$0xff]
        %v1094 = vld [vmem:[%s801 + $0x7f0] sm:$0xff]
        %v1095 = vld [vmem:[%s801 + $0x7f8] sm:$0xff]
        %v1096 = vld [vmem:[%s1] sm:$0xff]
        %v1097 = vld [vmem:[%s1 + $0x8] sm:$0xf]
        %v1098 = vld [vmem:[%s1 + $0xc] sm:$0xff]
        %v1099 = vld [vmem:[%s1 + $0x14] sm:$0xf]
        %v1100 = vld [vmem:[%s1 + $0x18] sm:$0xff]
        %v1101 = vld [vmem:[%s1 + $0x20] sm:$0xf]
        %v1102 = vld [vmem:[%s1 + $0x24] sm:$0xff]
        %v1103 = vld [vmem:[%s1 + $0x2c] sm:$0xf]
        %v1104 = vld [vmem:[%s1 + $0x30] sm:$0xff]
        %v1105 = vld [vmem:[%s1 + $0x38] sm:$0xf]
        %v1106 = vld [vmem:[%s1 + $0x3c] sm:$0xff]
        %v1107 = vld [vmem:[%s1 + $0x44] sm:$0xf]
        %v1108 = vld [vmem:[%s1 + $0x48] sm:$0xff]
        %v1109 = vld [vmem:[%s1 + $0x50] sm:$0xf]
        %v1110 = vld [vmem:[%s1 + $0x54] sm:$0xff]
        %v1111 = vld [vmem:[%s1 + $0x5c] sm:$0xf]
        %v1112 = vld [vmem:[%s1 + $0x60] sm:$0xff]
        %v1113 = vld [vmem:[%s1 + $0x68] sm:$0xf]
        %v1114 = vld [vmem:[%s1 + $0x6c] sm:$0xff]
        %v1115 = vld [vmem:[%s1 + $0x74] sm:$0xf]
        %v1116 = vld [vmem:[%s1 + $0x78] sm:$0xff]
        %v1117 = vld [vmem:[%s1 + $0x80] sm:$0xf]
        %v1118 = vld [vmem:[%s1 + $0x84] sm:$0xff]
        %v1119 = vld [vmem:[%s1 + $0x8c] sm:$0xf]
        %v1120 = vld [vmem:[%s1 + $0x90] sm:$0xff]
        %v1121 = vld [vmem:[%s1 + $0x98] sm:$0xf]
        %v1122 = vld [vmem:[%s1 + $0x9c] sm:$0xff]
        %v1123 = vld [vmem:[%s1 + $0xa4] sm:$0xf]
        %v1124 = vld [vmem:[%s1 + $0xa8] sm:$0xff]
        %v1125 = vld [vmem:[%s1 + $0xb0] sm:$0xf]
        %v1126 = vld [vmem:[%s1 + $0xb4] sm:$0xff]
        %v1127 = vld [vmem:[%s1 + $0xbc] sm:$0xf]
        %v1128 = vld [vmem:[%s1 + $0xc0] sm:$0xff]
        %v1129 = vld [vmem:[%s1 + $0xc8] sm:$0xf]
        %v1130 = vld [vmem:[%s1 + $0xcc] sm:$0xff]
        %v1131 = vld [vmem:[%s1 + $0xd4] sm:$0xf]
        %v1132 = vld [vmem:[%s1 + $0xd8] sm:$0xff]
        %v1133 = vld [vmem:[%s1 + $0xe0] sm:$0xf]
        %v1134 = vld [vmem:[%s1 + $0xe4] sm:$0xff]
        %v1135 = vld [vmem:[%s1 + $0xec] sm:$0xf]
        %v1136 = vld [vmem:[%s1 + $0xf0] sm:$0xff]
        %v1137 = vld [vmem:[%s1 + $0xf8] sm:$0xf]
        %v1138 = vld [vmem:[%s1 + $0xfc] sm:$0xff]
        %v1139 = vld [vmem:[%s1 + $0x104] sm:$0xf]
        %v1140 = vld [vmem:[%s1 + $0x108] sm:$0xff]
        %v1141 = vld [vmem:[%s1 + $0x110] sm:$0xf]
        %v1142 = vld [vmem:[%s1 + $0x114] sm:$0xff]
        %v1143 = vld [vmem:[%s1 + $0x11c] sm:$0xf]
        %v1144 = vld [vmem:[%s1 + $0x120] sm:$0xff]
        %v1145 = vld [vmem:[%s1 + $0x128] sm:$0xf]
        %v1146 = vld [vmem:[%s1 + $0x12c] sm:$0xff]
        %v1147 = vld [vmem:[%s1 + $0x134] sm:$0xf]
        %v1148 = vld [vmem:[%s1 + $0x138] sm:$0xff]
        %v1149 = vld [vmem:[%s1 + $0x140] sm:$0xf]
        %v1150 = vld [vmem:[%s1 + $0x144] sm:$0xff]
        %v1151 = vld [vmem:[%s1 + $0x14c] sm:$0xf]
        %v1152 = vld [vmem:[%s1 + $0x150] sm:$0xff]
        %v1153 = vld [vmem:[%s1 + $0x158] sm:$0xf]
        %v1154 = vld [vmem:[%s1 + $0x15c] sm:$0xff]
        %v1155 = vld [vmem:[%s1 + $0x164] sm:$0xf]
        %v1156 = vld [vmem:[%s1 + $0x168] sm:$0xff]
        %v1157 = vld [vmem:[%s1 + $0x170] sm:$0xf]
        %v1158 = vld [vmem:[%s1 + $0x174] sm:$0xff]
        %v1159 = vld [vmem:[%s1 + $0x17c] sm:$0xf]
        %v1160 = vld [vmem:[%s1 + $0x180] sm:$0xff]
        %v1161 = vld [vmem:[%s1 + $0x188] sm:$0xf]
        %v1162 = vld [vmem:[%s1 + $0x18c] sm:$0xff]
        %v1163 = vld [vmem:[%s1 + $0x194] sm:$0xf]
        %v1164 = vld [vmem:[%s1 + $0x198] sm:$0xff]
        %v1165 = vld [vmem:[%s1 + $0x1a0] sm:$0xf]
        %v1166 = vld [vmem:[%s1 + $0x1a4] sm:$0xff]
        %v1167 = vld [vmem:[%s1 + $0x1ac] sm:$0xf]
        %v1168 = vld [vmem:[%s1 + $0x1b0] sm:$0xff]
        %v1169 = vld [vmem:[%s1 + $0x1b8] sm:$0xf]
        %v1170 = vld [vmem:[%s1 + $0x1bc] sm:$0xff]
        %v1171 = vld [vmem:[%s1 + $0x1c4] sm:$0xf]
        %v1172 = vld [vmem:[%s1 + $0x1c8] sm:$0xff]
        %v1173 = vld [vmem:[%s1 + $0x1d0] sm:$0xf]
        %v1174 = vld [vmem:[%s1 + $0x1d4] sm:$0xff]
        %v1175 = vld [vmem:[%s1 + $0x1dc] sm:$0xf]
        %v1176 = vld [vmem:[%s1 + $0x1e0] sm:$0xff]
        %v1177 = vld [vmem:[%s1 + $0x1e8] sm:$0xf]
        %v1178 = vld [vmem:[%s1 + $0x1ec] sm:$0xff]
        %v1179 = vld [vmem:[%s1 + $0x1f4] sm:$0xf]
        %v1180 = vld [vmem:[%s1 + $0x1f8] sm:$0xff]
        %v1181 = vld [vmem:[%s1 + $0x200] sm:$0xf]
        %v1182 = vld [vmem:[%s1 + $0x204] sm:$0xff]
        %v1183 = vld [vmem:[%s1 + $0x20c] sm:$0xf]
        %v1184 = vld [vmem:[%s1 + $0x210] sm:$0xff]
        %v1185 = vld [vmem:[%s1 + $0x218] sm:$0xf]
        %v1186 = vld [vmem:[%s1 + $0x21c] sm:$0xff]
        %v1187 = vld [vmem:[%s1 + $0x224] sm:$0xf]
        %v1188 = vld [vmem:[%s1 + $0x228] sm:$0xff]
        %v1189 = vld [vmem:[%s1 + $0x230] sm:$0xf]
        %v1190 = vld [vmem:[%s1 + $0x234] sm:$0xff]
        %v1191 = vld [vmem:[%s1 + $0x23c] sm:$0xf]
        %v1192 = vld [vmem:[%s1 + $0x240] sm:$0xff]
        %v1193 = vld [vmem:[%s1 + $0x248] sm:$0xf]
        %v1194 = vld [vmem:[%s1 + $0x24c] sm:$0xff]
        %v1195 = vld [vmem:[%s1 + $0x254] sm:$0xf]
        %v1196 = vld [vmem:[%s1 + $0x258] sm:$0xff]
        %v1197 = vld [vmem:[%s1 + $0x260] sm:$0xf]
        %v1198 = vld [vmem:[%s1 + $0x264] sm:$0xff]
        %v1199 = vld [vmem:[%s1 + $0x26c] sm:$0xf]
        %v1200 = vld [vmem:[%s1 + $0x270] sm:$0xff]
        %v1201 = vld [vmem:[%s1 + $0x278] sm:$0xf]
        %v1202 = vld [vmem:[%s1 + $0x27c] sm:$0xff]
        %v1203 = vld [vmem:[%s1 + $0x284] sm:$0xf]
        %v1204 = vld [vmem:[%s1 + $0x288] sm:$0xff]
        %v1205 = vld [vmem:[%s1 + $0x290] sm:$0xf]
        %v1206 = vld [vmem:[%s1 + $0x294] sm:$0xff]
        %v1207 = vld [vmem:[%s1 + $0x29c] sm:$0xf]
        %v1208 = vld [vmem:[%s1 + $0x2a0] sm:$0xff]
        %v1209 = vld [vmem:[%s1 + $0x2a8] sm:$0xf]
        %v1210 = vld [vmem:[%s1 + $0x2ac] sm:$0xff]
        %v1211 = vld [vmem:[%s1 + $0x2b4] sm:$0xf]
        %v1212 = vld [vmem:[%s1 + $0x2b8] sm:$0xff]
        %v1213 = vld [vmem:[%s1 + $0x2c0] sm:$0xf]
        %v1214 = vld [vmem:[%s1 + $0x2c4] sm:$0xff]
        %v1215 = vld [vmem:[%s1 + $0x2cc] sm:$0xf]
        %v1216 = vld [vmem:[%s1 + $0x2d0] sm:$0xff]
        %v1217 = vld [vmem:[%s1 + $0x2d8] sm:$0xf]
        %v1218 = vld [vmem:[%s1 + $0x2dc] sm:$0xff]
        %v1219 = vld [vmem:[%s1 + $0x2e4] sm:$0xf]
        %v1220 = vld [vmem:[%s1 + $0x2e8] sm:$0xff]
        %v1221 = vld [vmem:[%s1 + $0x2f0] sm:$0xf]
        %v1222 = vld [vmem:[%s1 + $0x2f4] sm:$0xff]
        %v1223 = vld [vmem:[%s1 + $0x2fc] sm:$0xf]
        %v1480 = vunpack.c.l.b16 %v840
        %v1481 = vunpack.c.h.b16 %v840
        %v1482 = vunpack.c.l.b16 %v841
        %v1483 = vunpack.c.h.b16 %v841
        %v1484 = vunpack.c.l.b16 %v842
        %v1485 = vunpack.c.h.b16 %v842
        %v1486 = vunpack.c.l.b16 %v843
        %v1487 = vunpack.c.h.b16 %v843
        %v1488 = vunpack.c.l.b16 %v844
        %v1489 = vunpack.c.h.b16 %v844
        %v1490 = vunpack.c.l.b16 %v845
        %v1491 = vunpack.c.h.b16 %v845
        %v1492 = vunpack.c.l.b16 %v846
        %v1493 = vunpack.c.h.b16 %v846
        %v1494 = vunpack.c.l.b16 %v847
        %v1495 = vunpack.c.h.b16 %v847
        %v1496 = vunpack.c.l.b16 %v848
        %v1497 = vunpack.c.h.b16 %v848
        %v1498 = vunpack.c.l.b16 %v849
        %v1499 = vunpack.c.h.b16 %v849
        %v1500 = vunpack.c.l.b16 %v850
        %v1501 = vunpack.c.h.b16 %v850
        %v1502 = vunpack.c.l.b16 %v851
        %v1503 = vunpack.c.h.b16 %v851
        %v1504 = vunpack.c.l.b16 %v852
        %v1505 = vunpack.c.h.b16 %v852
        %v1506 = vunpack.c.l.b16 %v853
        %v1507 = vunpack.c.h.b16 %v853
        %v1508 = vunpack.c.l.b16 %v854
        %v1509 = vunpack.c.h.b16 %v854
        %v1510 = vunpack.c.l.b16 %v855
        %v1511 = vunpack.c.h.b16 %v855
        %v1512 = vunpack.c.l.b16 %v856
        %v1513 = vunpack.c.h.b16 %v856
        %v1514 = vunpack.c.l.b16 %v857
        %v1515 = vunpack.c.h.b16 %v857
        %v1516 = vunpack.c.l.b16 %v858
        %v1517 = vunpack.c.h.b16 %v858
        %v1518 = vunpack.c.l.b16 %v859
        %v1519 = vunpack.c.h.b16 %v859
        %v1520 = vunpack.c.l.b16 %v860
        %v1521 = vunpack.c.h.b16 %v860
        %v1522 = vunpack.c.l.b16 %v861
        %v1523 = vunpack.c.h.b16 %v861
        %v1524 = vunpack.c.l.b16 %v862
        %v1525 = vunpack.c.h.b16 %v862
        %v1526 = vunpack.c.l.b16 %v863
        %v1527 = vunpack.c.h.b16 %v863
        %v1528 = vunpack.c.l.b16 %v864
        %v1529 = vunpack.c.h.b16 %v864
        %v1530 = vunpack.c.l.b16 %v865
        %v1531 = vunpack.c.h.b16 %v865
        %v1532 = vunpack.c.l.b16 %v866
        %v1533 = vunpack.c.h.b16 %v866
        %v1534 = vunpack.c.l.b16 %v867
        %v1535 = vunpack.c.h.b16 %v867
        %v1536 = vunpack.c.l.b16 %v868
        %v1537 = vunpack.c.h.b16 %v868
        %v1538 = vunpack.c.l.b16 %v869
        %v1539 = vunpack.c.h.b16 %v869
        %v1540 = vunpack.c.l.b16 %v870
        %v1541 = vunpack.c.h.b16 %v870
        %v1542 = vunpack.c.l.b16 %v871
        %v1543 = vunpack.c.h.b16 %v871
        %v1544 = vunpack.c.l.b16 %v872
        %v1545 = vunpack.c.h.b16 %v872
        %v1546 = vunpack.c.l.b16 %v873
        %v1547 = vunpack.c.h.b16 %v873
        %v1548 = vunpack.c.l.b16 %v874
        %v1549 = vunpack.c.h.b16 %v874
        %v1550 = vunpack.c.l.b16 %v875
        %v1551 = vunpack.c.h.b16 %v875
        %v1552 = vunpack.c.l.b16 %v876
        %v1553 = vunpack.c.h.b16 %v876
        %v1554 = vunpack.c.l.b16 %v877
        %v1555 = vunpack.c.h.b16 %v877
        %v1556 = vunpack.c.l.b16 %v878
        %v1557 = vunpack.c.h.b16 %v878
        %v1558 = vunpack.c.l.b16 %v879
        %v1559 = vunpack.c.h.b16 %v879
        %v1560 = vunpack.c.l.b16 %v880
        %v1561 = vunpack.c.h.b16 %v880
        %v1562 = vunpack.c.l.b16 %v881
        %v1563 = vunpack.c.h.b16 %v881
        %v1564 = vunpack.c.l.b16 %v882
        %v1565 = vunpack.c.h.b16 %v882
        %v1566 = vunpack.c.l.b16 %v883
        %v1567 = vunpack.c.h.b16 %v883
        %v1568 = vunpack.c.l.b16 %v884
        %v1569 = vunpack.c.h.b16 %v884
        %v1570 = vunpack.c.l.b16 %v885
        %v1571 = vunpack.c.h.b16 %v885
        %v1572 = vunpack.c.l.b16 %v886
        %v1573 = vunpack.c.h.b16 %v886
        %v1574 = vunpack.c.l.b16 %v887
        %v1575 = vunpack.c.h.b16 %v887
        %v1576 = vunpack.c.l.b16 %v888
        %v1577 = vunpack.c.h.b16 %v888
        %v1578 = vunpack.c.l.b16 %v889
        %v1579 = vunpack.c.h.b16 %v889
        %v1580 = vunpack.c.l.b16 %v890
        %v1581 = vunpack.c.h.b16 %v890
        %v1582 = vunpack.c.l.b16 %v891
        %v1583 = vunpack.c.h.b16 %v891
        %v1584 = vunpack.c.l.b16 %v892
        %v1585 = vunpack.c.h.b16 %v892
        %v1586 = vunpack.c.l.b16 %v893
        %v1587 = vunpack.c.h.b16 %v893
        %v1588 = vunpack.c.l.b16 %v894
        %v1589 = vunpack.c.h.b16 %v894
        %v1590 = vunpack.c.l.b16 %v895
        %v1591 = vunpack.c.h.b16 %v895
        %v1592 = vunpack.c.l.b16 %v896
        %v1593 = vunpack.c.h.b16 %v896
        %v1594 = vunpack.c.l.b16 %v897
        %v1595 = vunpack.c.h.b16 %v897
        %v1596 = vunpack.c.l.b16 %v898
        %v1597 = vunpack.c.h.b16 %v898
        %v1598 = vunpack.c.l.b16 %v899
        %v1599 = vunpack.c.h.b16 %v899
        %v1600 = vunpack.c.l.b16 %v900
        %v1601 = vunpack.c.h.b16 %v900
        %v1602 = vunpack.c.l.b16 %v901
        %v1603 = vunpack.c.h.b16 %v901
        %v1604 = vunpack.c.l.b16 %v902
        %v1605 = vunpack.c.h.b16 %v902
        %v1606 = vunpack.c.l.b16 %v903
        %v1607 = vunpack.c.h.b16 %v903
        %v1608 = vunpack.c.l.b16 %v904
        %v1609 = vunpack.c.h.b16 %v904
        %v1610 = vunpack.c.l.b16 %v905
        %v1611 = vunpack.c.h.b16 %v905
        %v1612 = vunpack.c.l.b16 %v906
        %v1613 = vunpack.c.h.b16 %v906
        %v1614 = vunpack.c.l.b16 %v907
        %v1615 = vunpack.c.h.b16 %v907
        %v1616 = vunpack.c.l.b16 %v908
        %v1617 = vunpack.c.h.b16 %v908
        %v1618 = vunpack.c.l.b16 %v909
        %v1619 = vunpack.c.h.b16 %v909
        %v1620 = vunpack.c.l.b16 %v910
        %v1621 = vunpack.c.h.b16 %v910
        %v1622 = vunpack.c.l.b16 %v911
        %v1623 = vunpack.c.h.b16 %v911
        %v1624 = vunpack.c.l.b16 %v912
        %v1625 = vunpack.c.h.b16 %v912
        %v1626 = vunpack.c.l.b16 %v913
        %v1627 = vunpack.c.h.b16 %v913
        %v1628 = vunpack.c.l.b16 %v914
        %v1629 = vunpack.c.h.b16 %v914
        %v1630 = vunpack.c.l.b16 %v915
        %v1631 = vunpack.c.h.b16 %v915
        %v1632 = vunpack.c.l.b16 %v916
        %v1633 = vunpack.c.h.b16 %v916
        %v1634 = vunpack.c.l.b16 %v917
        %v1635 = vunpack.c.h.b16 %v917
        %v1636 = vunpack.c.l.b16 %v918
        %v1637 = vunpack.c.h.b16 %v918
        %v1638 = vunpack.c.l.b16 %v919
        %v1639 = vunpack.c.h.b16 %v919
        %v1640 = vunpack.c.l.b16 %v920
        %v1641 = vunpack.c.h.b16 %v920
        %v1642 = vunpack.c.l.b16 %v921
        %v1643 = vunpack.c.h.b16 %v921
        %v1644 = vunpack.c.l.b16 %v922
        %v1645 = vunpack.c.h.b16 %v922
        %v1646 = vunpack.c.l.b16 %v923
        %v1647 = vunpack.c.h.b16 %v923
        %v1648 = vunpack.c.l.b16 %v924
        %v1649 = vunpack.c.h.b16 %v924
        %v1650 = vunpack.c.l.b16 %v925
        %v1651 = vunpack.c.h.b16 %v925
        %v1652 = vunpack.c.l.b16 %v926
        %v1653 = vunpack.c.h.b16 %v926
        %v1654 = vunpack.c.l.b16 %v927
        %v1655 = vunpack.c.h.b16 %v927
        %v1656 = vunpack.c.l.b16 %v928
        %v1657 = vunpack.c.h.b16 %v928
        %v1658 = vunpack.c.l.b16 %v929
        %v1659 = vunpack.c.h.b16 %v929
        %v1660 = vunpack.c.l.b16 %v930
        %v1661 = vunpack.c.h.b16 %v930
        %v1662 = vunpack.c.l.b16 %v931
        %v1663 = vunpack.c.h.b16 %v931
        %v1664 = vunpack.c.l.b16 %v932
        %v1665 = vunpack.c.h.b16 %v932
        %v1666 = vunpack.c.l.b16 %v933
        %v1667 = vunpack.c.h.b16 %v933
        %v1668 = vunpack.c.l.b16 %v934
        %v1669 = vunpack.c.h.b16 %v934
        %v1670 = vunpack.c.l.b16 %v935
        %v1671 = vunpack.c.h.b16 %v935
        %v1672 = vunpack.c.l.b16 %v936
        %v1673 = vunpack.c.h.b16 %v936
        %v1674 = vunpack.c.l.b16 %v937
        %v1675 = vunpack.c.h.b16 %v937
        %v1676 = vunpack.c.l.b16 %v938
        %v1677 = vunpack.c.h.b16 %v938
        %v1678 = vunpack.c.l.b16 %v939
        %v1679 = vunpack.c.h.b16 %v939
        %v1680 = vunpack.c.l.b16 %v940
        %v1681 = vunpack.c.h.b16 %v940
        %v1682 = vunpack.c.l.b16 %v941
        %v1683 = vunpack.c.h.b16 %v941
        %v1684 = vunpack.c.l.b16 %v942
        %v1685 = vunpack.c.h.b16 %v942
        %v1686 = vunpack.c.l.b16 %v943
        %v1687 = vunpack.c.h.b16 %v943
        %v1688 = vunpack.c.l.b16 %v944
        %v1689 = vunpack.c.h.b16 %v944
        %v1690 = vunpack.c.l.b16 %v945
        %v1691 = vunpack.c.h.b16 %v945
        %v1692 = vunpack.c.l.b16 %v946
        %v1693 = vunpack.c.h.b16 %v946
        %v1694 = vunpack.c.l.b16 %v947
        %v1695 = vunpack.c.h.b16 %v947
        %v1696 = vunpack.c.l.b16 %v948
        %v1697 = vunpack.c.h.b16 %v948
        %v1698 = vunpack.c.l.b16 %v949
        %v1699 = vunpack.c.h.b16 %v949
        %v1700 = vunpack.c.l.b16 %v950
        %v1701 = vunpack.c.h.b16 %v950
        %v1702 = vunpack.c.l.b16 %v951
        %v1703 = vunpack.c.h.b16 %v951
        %v1704 = vunpack.c.l.b16 %v952
        %v1705 = vunpack.c.h.b16 %v952
        %v1706 = vunpack.c.l.b16 %v953
        %v1707 = vunpack.c.h.b16 %v953
        %v1708 = vunpack.c.l.b16 %v954
        %v1709 = vunpack.c.h.b16 %v954
        %v1710 = vunpack.c.l.b16 %v955
        %v1711 = vunpack.c.h.b16 %v955
        %v1712 = vunpack.c.l.b16 %v956
        %v1713 = vunpack.c.h.b16 %v956
        %v1714 = vunpack.c.l.b16 %v957
        %v1715 = vunpack.c.h.b16 %v957
        %v1716 = vunpack.c.l.b16 %v958
        %v1717 = vunpack.c.h.b16 %v958
        %v1718 = vunpack.c.l.b16 %v959
        %v1719 = vunpack.c.h.b16 %v959
        %v1720 = vunpack.c.l.b16 %v960
        %v1721 = vunpack.c.h.b16 %v960
        %v1722 = vunpack.c.l.b16 %v961
        %v1723 = vunpack.c.h.b16 %v961
        %v1724 = vunpack.c.l.b16 %v962
        %v1725 = vunpack.c.h.b16 %v962
        %v1726 = vunpack.c.l.b16 %v963
        %v1727 = vunpack.c.h.b16 %v963
        %v1728 = vunpack.c.l.b16 %v964
        %v1729 = vunpack.c.h.b16 %v964
        %v1730 = vunpack.c.l.b16 %v965
        %v1731 = vunpack.c.h.b16 %v965
        %v1732 = vunpack.c.l.b16 %v966
        %v1733 = vunpack.c.h.b16 %v966
        %v1734 = vunpack.c.l.b16 %v967
        %v1735 = vunpack.c.h.b16 %v967
        %v1736 = vunpack.c.l.b16 %v968
        %v1737 = vunpack.c.h.b16 %v968
        %v1738 = vunpack.c.l.b16 %v969
        %v1739 = vunpack.c.h.b16 %v969
        %v1740 = vunpack.c.l.b16 %v970
        %v1741 = vunpack.c.h.b16 %v970
        %v1742 = vunpack.c.l.b16 %v971
        %v1743 = vunpack.c.h.b16 %v971
        %v1744 = vunpack.c.l.b16 %v972
        %v1745 = vunpack.c.h.b16 %v972
        %v1746 = vunpack.c.l.b16 %v973
        %v1747 = vunpack.c.h.b16 %v973
        %v1748 = vunpack.c.l.b16 %v974
        %v1749 = vunpack.c.h.b16 %v974
        %v1750 = vunpack.c.l.b16 %v975
        %v1751 = vunpack.c.h.b16 %v975
        %v1752 = vunpack.c.l.b16 %v976
        %v1753 = vunpack.c.h.b16 %v976
        %v1754 = vunpack.c.l.b16 %v977
        %v1755 = vunpack.c.h.b16 %v977
        %v1756 = vunpack.c.l.b16 %v978
        %v1757 = vunpack.c.h.b16 %v978
        %v1758 = vunpack.c.l.b16 %v979
        %v1759 = vunpack.c.h.b16 %v979
        %v1760 = vunpack.c.l.b16 %v980
        %v1761 = vunpack.c.h.b16 %v980
        %v1762 = vunpack.c.l.b16 %v981
        %v1763 = vunpack.c.h.b16 %v981
        %v1764 = vunpack.c.l.b16 %v982
        %v1765 = vunpack.c.h.b16 %v982
        %v1766 = vunpack.c.l.b16 %v983
        %v1767 = vunpack.c.h.b16 %v983
        %v1768 = vunpack.c.l.b16 %v984
        %v1769 = vunpack.c.h.b16 %v984
        %v1770 = vunpack.c.l.b16 %v985
        %v1771 = vunpack.c.h.b16 %v985
        %v1772 = vunpack.c.l.b16 %v986
        %v1773 = vunpack.c.h.b16 %v986
        %v1774 = vunpack.c.l.b16 %v987
        %v1775 = vunpack.c.h.b16 %v987
        %v1776 = vunpack.c.l.b16 %v988
        %v1777 = vunpack.c.h.b16 %v988
        %v1778 = vunpack.c.l.b16 %v989
        %v1779 = vunpack.c.h.b16 %v989
        %v1780 = vunpack.c.l.b16 %v990
        %v1781 = vunpack.c.h.b16 %v990
        %v1782 = vunpack.c.l.b16 %v991
        %v1783 = vunpack.c.h.b16 %v991
        %v1784 = vunpack.c.l.b16 %v992
        %v1785 = vunpack.c.h.b16 %v992
        %v1786 = vunpack.c.l.b16 %v993
        %v1787 = vunpack.c.h.b16 %v993
        %v1788 = vunpack.c.l.b16 %v994
        %v1789 = vunpack.c.h.b16 %v994
        %v1790 = vunpack.c.l.b16 %v995
        %v1791 = vunpack.c.h.b16 %v995
        %v1792 = vunpack.c.l.b16 %v996
        %v1793 = vunpack.c.h.b16 %v996
        %v1794 = vunpack.c.l.b16 %v997
        %v1795 = vunpack.c.h.b16 %v997
        %v1796 = vunpack.c.l.b16 %v998
        %v1797 = vunpack.c.h.b16 %v998
        %v1798 = vunpack.c.l.b16 %v999
        %v1799 = vunpack.c.h.b16 %v999
        %v1800 = vunpack.c.l.b16 %v1000
        %v1801 = vunpack.c.h.b16 %v1000
        %v1802 = vunpack.c.l.b16 %v1001
        %v1803 = vunpack.c.h.b16 %v1001
        %v1804 = vunpack.c.l.b16 %v1002
        %v1805 = vunpack.c.h.b16 %v1002
        %v1806 = vunpack.c.l.b16 %v1003
        %v1807 = vunpack.c.h.b16 %v1003
        %v1808 = vunpack.c.l.b16 %v1004
        %v1809 = vunpack.c.h.b16 %v1004
        %v1810 = vunpack.c.l.b16 %v1005
        %v1811 = vunpack.c.h.b16 %v1005
        %v1812 = vunpack.c.l.b16 %v1006
        %v1813 = vunpack.c.h.b16 %v1006
        %v1814 = vunpack.c.l.b16 %v1007
        %v1815 = vunpack.c.h.b16 %v1007
        %v1816 = vunpack.c.l.b16 %v1008
        %v1817 = vunpack.c.h.b16 %v1008
        %v1818 = vunpack.c.l.b16 %v1009
        %v1819 = vunpack.c.h.b16 %v1009
        %v1820 = vunpack.c.l.b16 %v1010
        %v1821 = vunpack.c.h.b16 %v1010
        %v1822 = vunpack.c.l.b16 %v1011
        %v1823 = vunpack.c.h.b16 %v1011
        %v1824 = vunpack.c.l.b16 %v1012
        %v1825 = vunpack.c.h.b16 %v1012
        %v1826 = vunpack.c.l.b16 %v1013
        %v1827 = vunpack.c.h.b16 %v1013
        %v1828 = vunpack.c.l.b16 %v1014
        %v1829 = vunpack.c.h.b16 %v1014
        %v1830 = vunpack.c.l.b16 %v1015
        %v1831 = vunpack.c.h.b16 %v1015
        %v1832 = vunpack.c.l.b16 %v1016
        %v1833 = vunpack.c.h.b16 %v1016
        %v1834 = vunpack.c.l.b16 %v1017
        %v1835 = vunpack.c.h.b16 %v1017
        %v1836 = vunpack.c.l.b16 %v1018
        %v1837 = vunpack.c.h.b16 %v1018
        %v1838 = vunpack.c.l.b16 %v1019
        %v1839 = vunpack.c.h.b16 %v1019
        %v1840 = vunpack.c.l.b16 %v1020
        %v1841 = vunpack.c.h.b16 %v1020
        %v1842 = vunpack.c.l.b16 %v1021
        %v1843 = vunpack.c.h.b16 %v1021
        %v1844 = vunpack.c.l.b16 %v1022
        %v1845 = vunpack.c.h.b16 %v1022
        %v1846 = vunpack.c.l.b16 %v1023
        %v1847 = vunpack.c.h.b16 %v1023
        %v1848 = vunpack.c.l.b16 %v1024
        %v1849 = vunpack.c.h.b16 %v1024
        %v1850 = vunpack.c.l.b16 %v1025
        %v1851 = vunpack.c.h.b16 %v1025
        %v1852 = vunpack.c.l.b16 %v1026
        %v1853 = vunpack.c.h.b16 %v1026
        %v1854 = vunpack.c.l.b16 %v1027
        %v1855 = vunpack.c.h.b16 %v1027
        %v1856 = vunpack.c.l.b16 %v1028
        %v1857 = vunpack.c.h.b16 %v1028
        %v1858 = vunpack.c.l.b16 %v1029
        %v1859 = vunpack.c.h.b16 %v1029
        %v1860 = vunpack.c.l.b16 %v1030
        %v1861 = vunpack.c.h.b16 %v1030
        %v1862 = vunpack.c.l.b16 %v1031
        %v1863 = vunpack.c.h.b16 %v1031
        %v1864 = vunpack.c.l.b16 %v1032
        %v1865 = vunpack.c.h.b16 %v1032
        %v1866 = vunpack.c.l.b16 %v1033
        %v1867 = vunpack.c.h.b16 %v1033
        %v1868 = vunpack.c.l.b16 %v1034
        %v1869 = vunpack.c.h.b16 %v1034
        %v1870 = vunpack.c.l.b16 %v1035
        %v1871 = vunpack.c.h.b16 %v1035
        %v1872 = vunpack.c.l.b16 %v1036
        %v1873 = vunpack.c.h.b16 %v1036
        %v1874 = vunpack.c.l.b16 %v1037
        %v1875 = vunpack.c.h.b16 %v1037
        %v1876 = vunpack.c.l.b16 %v1038
        %v1877 = vunpack.c.h.b16 %v1038
        %v1878 = vunpack.c.l.b16 %v1039
        %v1879 = vunpack.c.h.b16 %v1039
        %v1880 = vunpack.c.l.b16 %v1040
        %v1881 = vunpack.c.h.b16 %v1040
        %v1882 = vunpack.c.l.b16 %v1041
        %v1883 = vunpack.c.h.b16 %v1041
        %v1884 = vunpack.c.l.b16 %v1042
        %v1885 = vunpack.c.h.b16 %v1042
        %v1886 = vunpack.c.l.b16 %v1043
        %v1887 = vunpack.c.h.b16 %v1043
        %v1888 = vunpack.c.l.b16 %v1044
        %v1889 = vunpack.c.h.b16 %v1044
        %v1890 = vunpack.c.l.b16 %v1045
        %v1891 = vunpack.c.h.b16 %v1045
        %v1892 = vunpack.c.l.b16 %v1046
        %v1893 = vunpack.c.h.b16 %v1046
        %v1894 = vunpack.c.l.b16 %v1047
        %v1895 = vunpack.c.h.b16 %v1047
        %v1896 = vunpack.c.l.b16 %v1048
        %v1897 = vunpack.c.h.b16 %v1048
        %v1898 = vunpack.c.l.b16 %v1049
        %v1899 = vunpack.c.h.b16 %v1049
        %v1900 = vunpack.c.l.b16 %v1050
        %v1901 = vunpack.c.h.b16 %v1050
        %v1902 = vunpack.c.l.b16 %v1051
        %v1903 = vunpack.c.h.b16 %v1051
        %v1904 = vunpack.c.l.b16 %v1052
        %v1905 = vunpack.c.h.b16 %v1052
        %v1906 = vunpack.c.l.b16 %v1053
        %v1907 = vunpack.c.h.b16 %v1053
        %v1908 = vunpack.c.l.b16 %v1054
        %v1909 = vunpack.c.h.b16 %v1054
        %v1910 = vunpack.c.l.b16 %v1055
        %v1911 = vunpack.c.h.b16 %v1055
        %v1912 = vunpack.c.l.b16 %v1056
        %v1913 = vunpack.c.h.b16 %v1056
        %v1914 = vunpack.c.l.b16 %v1057
        %v1915 = vunpack.c.h.b16 %v1057
        %v1916 = vunpack.c.l.b16 %v1058
        %v1917 = vunpack.c.h.b16 %v1058
        %v1918 = vunpack.c.l.b16 %v1059
        %v1919 = vunpack.c.h.b16 %v1059
        %v1920 = vunpack.c.l.b16 %v1060
        %v1921 = vunpack.c.h.b16 %v1060
        %v1922 = vunpack.c.l.b16 %v1061
        %v1923 = vunpack.c.h.b16 %v1061
        %v1924 = vunpack.c.l.b16 %v1062
        %v1925 = vunpack.c.h.b16 %v1062
        %v1926 = vunpack.c.l.b16 %v1063
        %v1927 = vunpack.c.h.b16 %v1063
        %v1928 = vunpack.c.l.b16 %v1064
        %v1929 = vunpack.c.h.b16 %v1064
        %v1930 = vunpack.c.l.b16 %v1065
        %v1931 = vunpack.c.h.b16 %v1065
        %v1932 = vunpack.c.l.b16 %v1066
        %v1933 = vunpack.c.h.b16 %v1066
        %v1934 = vunpack.c.l.b16 %v1067
        %v1935 = vunpack.c.h.b16 %v1067
        %v1936 = vunpack.c.l.b16 %v1068
        %v1937 = vunpack.c.h.b16 %v1068
        %v1938 = vunpack.c.l.b16 %v1069
        %v1939 = vunpack.c.h.b16 %v1069
        %v1940 = vunpack.c.l.b16 %v1070
        %v1941 = vunpack.c.h.b16 %v1070
        %v1942 = vunpack.c.l.b16 %v1071
        %v1943 = vunpack.c.h.b16 %v1071
        %v1944 = vunpack.c.l.b16 %v1072
        %v1945 = vunpack.c.h.b16 %v1072
        %v1946 = vunpack.c.l.b16 %v1073
        %v1947 = vunpack.c.h.b16 %v1073
        %v1948 = vunpack.c.l.b16 %v1074
        %v1949 = vunpack.c.h.b16 %v1074
        %v1950 = vunpack.c.l.b16 %v1075
        %v1951 = vunpack.c.h.b16 %v1075
        %v1952 = vunpack.c.l.b16 %v1076
        %v1953 = vunpack.c.h.b16 %v1076
        %v1954 = vunpack.c.l.b16 %v1077
        %v1955 = vunpack.c.h.b16 %v1077
        %v1956 = vunpack.c.l.b16 %v1078
        %v1957 = vunpack.c.h.b16 %v1078
        %v1958 = vunpack.c.l.b16 %v1079
        %v1959 = vunpack.c.h.b16 %v1079
        %v1960 = vunpack.c.l.b16 %v1080
        %v1961 = vunpack.c.h.b16 %v1080
        %v1962 = vunpack.c.l.b16 %v1081
        %v1963 = vunpack.c.h.b16 %v1081
        %v1964 = vunpack.c.l.b16 %v1082
        %v1965 = vunpack.c.h.b16 %v1082
        %v1966 = vunpack.c.l.b16 %v1083
        %v1967 = vunpack.c.h.b16 %v1083
        %v1968 = vunpack.c.l.b16 %v1084
        %v1969 = vunpack.c.h.b16 %v1084
        %v1970 = vunpack.c.l.b16 %v1085
        %v1971 = vunpack.c.h.b16 %v1085
        %v1972 = vunpack.c.l.b16 %v1086
        %v1973 = vunpack.c.h.b16 %v1086
        %v1974 = vunpack.c.l.b16 %v1087
        %v1975 = vunpack.c.h.b16 %v1087
        %v1976 = vunpack.c.l.b16 %v1088
        %v1977 = vunpack.c.h.b16 %v1088
        %v1978 = vunpack.c.l.b16 %v1089
        %v1979 = vunpack.c.h.b16 %v1089
        %v1980 = vunpack.c.l.b16 %v1090
        %v1981 = vunpack.c.h.b16 %v1090
        %v1982 = vunpack.c.l.b16 %v1091
        %v1983 = vunpack.c.h.b16 %v1091
        %v1984 = vunpack.c.l.b16 %v1092
        %v1985 = vunpack.c.h.b16 %v1092
        %v1986 = vunpack.c.l.b16 %v1093
        %v1987 = vunpack.c.h.b16 %v1093
        %v1988 = vunpack.c.l.b16 %v1094
        %v1989 = vunpack.c.h.b16 %v1094
        %v1990 = vunpack.c.l.b16 %v1095
        %v1991 = vunpack.c.h.b16 %v1095
        %v1992 = vpack.c.b16 %v1484, %v1480
        %v1993 = vpack.c.b16 %v1485, %v1481
        %v1994 = vpack.c.b16 %v1486, %v1482
        %v1995 = vpack.c.b16 %v1487, %v1483
        %v1996 = vpack.c.b16 %v1492, %v1488
        %v1997 = vpack.c.b16 %v1493, %v1489
        %v1998 = vpack.c.b16 %v1494, %v1490
        %v1999 = vpack.c.b16 %v1495, %v1491
        %v2000 = vpack.c.b16 %v1500, %v1496
        %v2001 = vpack.c.b16 %v1501, %v1497
        %v2002 = vpack.c.b16 %v1502, %v1498
        %v2003 = vpack.c.b16 %v1503, %v1499
        %v2004 = vpack.c.b16 %v1508, %v1504
        %v2005 = vpack.c.b16 %v1509, %v1505
        %v2006 = vpack.c.b16 %v1510, %v1506
        %v2007 = vpack.c.b16 %v1511, %v1507
        %v2008 = vpack.c.b16 %v1516, %v1512
        %v2009 = vpack.c.b16 %v1517, %v1513
        %v2010 = vpack.c.b16 %v1518, %v1514
        %v2011 = vpack.c.b16 %v1519, %v1515
        %v2012 = vpack.c.b16 %v1524, %v1520
        %v2013 = vpack.c.b16 %v1525, %v1521
        %v2014 = vpack.c.b16 %v1526, %v1522
        %v2015 = vpack.c.b16 %v1527, %v1523
        %v2016 = vpack.c.b16 %v1532, %v1528
        %v2017 = vpack.c.b16 %v1533, %v1529
        %v2018 = vpack.c.b16 %v1534, %v1530
        %v2019 = vpack.c.b16 %v1535, %v1531
        %v2020 = vpack.c.b16 %v1540, %v1536
        %v2021 = vpack.c.b16 %v1541, %v1537
        %v2022 = vpack.c.b16 %v1542, %v1538
        %v2023 = vpack.c.b16 %v1543, %v1539
        %v2024 = vpack.c.b16 %v1548, %v1544
        %v2025 = vpack.c.b16 %v1549, %v1545
        %v2026 = vpack.c.b16 %v1550, %v1546
        %v2027 = vpack.c.b16 %v1551, %v1547
        %v2028 = vpack.c.b16 %v1556, %v1552
        %v2029 = vpack.c.b16 %v1557, %v1553
        %v2030 = vpack.c.b16 %v1558, %v1554
        %v2031 = vpack.c.b16 %v1559, %v1555
        %v2032 = vpack.c.b16 %v1564, %v1560
        %v2033 = vpack.c.b16 %v1565, %v1561
        %v2034 = vpack.c.b16 %v1566, %v1562
        %v2035 = vpack.c.b16 %v1567, %v1563
        %v2036 = vpack.c.b16 %v1572, %v1568
        %v2037 = vpack.c.b16 %v1573, %v1569
        %v2038 = vpack.c.b16 %v1574, %v1570
        %v2039 = vpack.c.b16 %v1575, %v1571
        %v2040 = vpack.c.b16 %v1580, %v1576
        %v2041 = vpack.c.b16 %v1581, %v1577
        %v2042 = vpack.c.b16 %v1582, %v1578
        %v2043 = vpack.c.b16 %v1583, %v1579
        %v2044 = vpack.c.b16 %v1588, %v1584
        %v2045 = vpack.c.b16 %v1589, %v1585
        %v2046 = vpack.c.b16 %v1590, %v1586
        %v2047 = vpack.c.b16 %v1591, %v1587
        %v2048 = vpack.c.b16 %v1596, %v1592
        %v2049 = vpack.c.b16 %v1597, %v1593
        %v2050 = vpack.c.b16 %v1598, %v1594
        %v2051 = vpack.c.b16 %v1599, %v1595
        %v2052 = vpack.c.b16 %v1604, %v1600
        %v2053 = vpack.c.b16 %v1605, %v1601
        %v2054 = vpack.c.b16 %v1606, %v1602
        %v2055 = vpack.c.b16 %v1607, %v1603
        %v2056 = vpack.c.b16 %v1612, %v1608
        %v2057 = vpack.c.b16 %v1613, %v1609
        %v2058 = vpack.c.b16 %v1614, %v1610
        %v2059 = vpack.c.b16 %v1615, %v1611
        %v2060 = vpack.c.b16 %v1620, %v1616
        %v2061 = vpack.c.b16 %v1621, %v1617
        %v2062 = vpack.c.b16 %v1622, %v1618
        %v2063 = vpack.c.b16 %v1623, %v1619
        %v2064 = vpack.c.b16 %v1628, %v1624
        %v2065 = vpack.c.b16 %v1629, %v1625
        %v2066 = vpack.c.b16 %v1630, %v1626
        %v2067 = vpack.c.b16 %v1631, %v1627
        %v2068 = vpack.c.b16 %v1636, %v1632
        %v2069 = vpack.c.b16 %v1637, %v1633
        %v2070 = vpack.c.b16 %v1638, %v1634
        %v2071 = vpack.c.b16 %v1639, %v1635
        %v2072 = vpack.c.b16 %v1644, %v1640
        %v2073 = vpack.c.b16 %v1645, %v1641
        %v2074 = vpack.c.b16 %v1646, %v1642
        %v2075 = vpack.c.b16 %v1647, %v1643
        %v2076 = vpack.c.b16 %v1652, %v1648
        %v2077 = vpack.c.b16 %v1653, %v1649
        %v2078 = vpack.c.b16 %v1654, %v1650
        %v2079 = vpack.c.b16 %v1655, %v1651
        %v2080 = vpack.c.b16 %v1660, %v1656
        %v2081 = vpack.c.b16 %v1661, %v1657
        %v2082 = vpack.c.b16 %v1662, %v1658
        %v2083 = vpack.c.b16 %v1663, %v1659
        %v2084 = vpack.c.b16 %v1668, %v1664
        %v2085 = vpack.c.b16 %v1669, %v1665
        %v2086 = vpack.c.b16 %v1670, %v1666
        %v2087 = vpack.c.b16 %v1671, %v1667
        %v2088 = vpack.c.b16 %v1676, %v1672
        %v2089 = vpack.c.b16 %v1677, %v1673
        %v2090 = vpack.c.b16 %v1678, %v1674
        %v2091 = vpack.c.b16 %v1679, %v1675
        %v2092 = vpack.c.b16 %v1684, %v1680
        %v2093 = vpack.c.b16 %v1685, %v1681
        %v2094 = vpack.c.b16 %v1686, %v1682
        %v2095 = vpack.c.b16 %v1687, %v1683
        %v2096 = vpack.c.b16 %v1692, %v1688
        %v2097 = vpack.c.b16 %v1693, %v1689
        %v2098 = vpack.c.b16 %v1694, %v1690
        %v2099 = vpack.c.b16 %v1695, %v1691
        %v2100 = vpack.c.b16 %v1700, %v1696
        %v2101 = vpack.c.b16 %v1701, %v1697
        %v2102 = vpack.c.b16 %v1702, %v1698
        %v2103 = vpack.c.b16 %v1703, %v1699
        %v2104 = vpack.c.b16 %v1708, %v1704
        %v2105 = vpack.c.b16 %v1709, %v1705
        %v2106 = vpack.c.b16 %v1710, %v1706
        %v2107 = vpack.c.b16 %v1711, %v1707
        %v2108 = vpack.c.b16 %v1716, %v1712
        %v2109 = vpack.c.b16 %v1717, %v1713
        %v2110 = vpack.c.b16 %v1718, %v1714
        %v2111 = vpack.c.b16 %v1719, %v1715
        %v2112 = vpack.c.b16 %v1724, %v1720
        %v2113 = vpack.c.b16 %v1725, %v1721
        %v2114 = vpack.c.b16 %v1726, %v1722
        %v2115 = vpack.c.b16 %v1727, %v1723
        %v2116 = vpack.c.b16 %v1732, %v1728
        %v2117 = vpack.c.b16 %v1733, %v1729
        %v2118 = vpack.c.b16 %v1734, %v1730
        %v2119 = vpack.c.b16 %v1735, %v1731
        %v2120 = vpack.c.b16 %v1740, %v1736
        %v2121 = vpack.c.b16 %v1741, %v1737
        %v2122 = vpack.c.b16 %v1742, %v1738
        %v2123 = vpack.c.b16 %v1743, %v1739
        %v2124 = vpack.c.b16 %v1748, %v1744
        %v2125 = vpack.c.b16 %v1749, %v1745
        %v2126 = vpack.c.b16 %v1750, %v1746
        %v2127 = vpack.c.b16 %v1751, %v1747
        %v2128 = vpack.c.b16 %v1756, %v1752
        %v2129 = vpack.c.b16 %v1757, %v1753
        %v2130 = vpack.c.b16 %v1758, %v1754
        %v2131 = vpack.c.b16 %v1759, %v1755
        %v2132 = vpack.c.b16 %v1764, %v1760
        %v2133 = vpack.c.b16 %v1765, %v1761
        %v2134 = vpack.c.b16 %v1766, %v1762
        %v2135 = vpack.c.b16 %v1767, %v1763
        %v2136 = vpack.c.b16 %v1772, %v1768
        %v2137 = vpack.c.b16 %v1773, %v1769
        %v2138 = vpack.c.b16 %v1774, %v1770
        %v2139 = vpack.c.b16 %v1775, %v1771
        %v2140 = vpack.c.b16 %v1780, %v1776
        %v2141 = vpack.c.b16 %v1781, %v1777
        %v2142 = vpack.c.b16 %v1782, %v1778
        %v2143 = vpack.c.b16 %v1783, %v1779
        %v2144 = vpack.c.b16 %v1788, %v1784
        %v2145 = vpack.c.b16 %v1789, %v1785
        %v2146 = vpack.c.b16 %v1790, %v1786
        %v2147 = vpack.c.b16 %v1791, %v1787
        %v2148 = vpack.c.b16 %v1796, %v1792
        %v2149 = vpack.c.b16 %v1797, %v1793
        %v2150 = vpack.c.b16 %v1798, %v1794
        %v2151 = vpack.c.b16 %v1799, %v1795
        %v2152 = vpack.c.b16 %v1804, %v1800
        %v2153 = vpack.c.b16 %v1805, %v1801
        %v2154 = vpack.c.b16 %v1806, %v1802
        %v2155 = vpack.c.b16 %v1807, %v1803
        %v2156 = vpack.c.b16 %v1812, %v1808
        %v2157 = vpack.c.b16 %v1813, %v1809
        %v2158 = vpack.c.b16 %v1814, %v1810
        %v2159 = vpack.c.b16 %v1815, %v1811
        %v2160 = vpack.c.b16 %v1820, %v1816
        %v2161 = vpack.c.b16 %v1821, %v1817
        %v2162 = vpack.c.b16 %v1822, %v1818
        %v2163 = vpack.c.b16 %v1823, %v1819
        %v2164 = vpack.c.b16 %v1828, %v1824
        %v2165 = vpack.c.b16 %v1829, %v1825
        %v2166 = vpack.c.b16 %v1830, %v1826
        %v2167 = vpack.c.b16 %v1831, %v1827
        %v2168 = vpack.c.b16 %v1836, %v1832
        %v2169 = vpack.c.b16 %v1837, %v1833
        %v2170 = vpack.c.b16 %v1838, %v1834
        %v2171 = vpack.c.b16 %v1839, %v1835
        %v2172 = vpack.c.b16 %v1844, %v1840
        %v2173 = vpack.c.b16 %v1845, %v1841
        %v2174 = vpack.c.b16 %v1846, %v1842
        %v2175 = vpack.c.b16 %v1847, %v1843
        %v2176 = vpack.c.b16 %v1852, %v1848
        %v2177 = vpack.c.b16 %v1853, %v1849
        %v2178 = vpack.c.b16 %v1854, %v1850
        %v2179 = vpack.c.b16 %v1855, %v1851
        %v2180 = vpack.c.b16 %v1860, %v1856
        %v2181 = vpack.c.b16 %v1861, %v1857
        %v2182 = vpack.c.b16 %v1862, %v1858
        %v2183 = vpack.c.b16 %v1863, %v1859
        %v2184 = vpack.c.b16 %v1868, %v1864
        %v2185 = vpack.c.b16 %v1869, %v1865
        %v2186 = vpack.c.b16 %v1870, %v1866
        %v2187 = vpack.c.b16 %v1871, %v1867
        %v2188 = vpack.c.b16 %v1876, %v1872
        %v2189 = vpack.c.b16 %v1877, %v1873
        %v2190 = vpack.c.b16 %v1878, %v1874
        %v2191 = vpack.c.b16 %v1879, %v1875
        %v2192 = vpack.c.b16 %v1884, %v1880
        %v2193 = vpack.c.b16 %v1885, %v1881
        %v2194 = vpack.c.b16 %v1886, %v1882
        %v2195 = vpack.c.b16 %v1887, %v1883
        %v2196 = vpack.c.b16 %v1892, %v1888
        %v2197 = vpack.c.b16 %v1893, %v1889
        %v2198 = vpack.c.b16 %v1894, %v1890
        %v2199 = vpack.c.b16 %v1895, %v1891
        %v2200 = vpack.c.b16 %v1900, %v1896
        %v2201 = vpack.c.b16 %v1901, %v1897
        %v2202 = vpack.c.b16 %v1902, %v1898
        %v2203 = vpack.c.b16 %v1903, %v1899
        %v2204 = vpack.c.b16 %v1908, %v1904
        %v2205 = vpack.c.b16 %v1909, %v1905
        %v2206 = vpack.c.b16 %v1910, %v1906
        %v2207 = vpack.c.b16 %v1911, %v1907
        %v2208 = vpack.c.b16 %v1916, %v1912
        %v2209 = vpack.c.b16 %v1917, %v1913
        %v2210 = vpack.c.b16 %v1918, %v1914
        %v2211 = vpack.c.b16 %v1919, %v1915
        %v2212 = vpack.c.b16 %v1924, %v1920
        %v2213 = vpack.c.b16 %v1925, %v1921
        %v2214 = vpack.c.b16 %v1926, %v1922
        %v2215 = vpack.c.b16 %v1927, %v1923
        %v2216 = vpack.c.b16 %v1932, %v1928
        %v2217 = vpack.c.b16 %v1933, %v1929
        %v2218 = vpack.c.b16 %v1934, %v1930
        %v2219 = vpack.c.b16 %v1935, %v1931
        %v2220 = vpack.c.b16 %v1940, %v1936
        %v2221 = vpack.c.b16 %v1941, %v1937
        %v2222 = vpack.c.b16 %v1942, %v1938
        %v2223 = vpack.c.b16 %v1943, %v1939
        %v2224 = vpack.c.b16 %v1948, %v1944
        %v2225 = vpack.c.b16 %v1949, %v1945
        %v2226 = vpack.c.b16 %v1950, %v1946
        %v2227 = vpack.c.b16 %v1951, %v1947
        %v2228 = vpack.c.b16 %v1956, %v1952
        %v2229 = vpack.c.b16 %v1957, %v1953
        %v2230 = vpack.c.b16 %v1958, %v1954
        %v2231 = vpack.c.b16 %v1959, %v1955
        %v2232 = vpack.c.b16 %v1964, %v1960
        %v2233 = vpack.c.b16 %v1965, %v1961
        %v2234 = vpack.c.b16 %v1966, %v1962
        %v2235 = vpack.c.b16 %v1967, %v1963
        %v2236 = vpack.c.b16 %v1972, %v1968
        %v2237 = vpack.c.b16 %v1973, %v1969
        %v2238 = vpack.c.b16 %v1974, %v1970
        %v2239 = vpack.c.b16 %v1975, %v1971
        %v2240 = vpack.c.b16 %v1980, %v1976
        %v2241 = vpack.c.b16 %v1981, %v1977
        %v2242 = vpack.c.b16 %v1982, %v1978
        %v2243 = vpack.c.b16 %v1983, %v1979
        %v2244 = vpack.c.b16 %v1988, %v1984
        %v2245 = vpack.c.b16 %v1989, %v1985
        %v2246 = vpack.c.b16 %v1990, %v1986
        %v2247 = vpack.c.b16 %v1991, %v1987
        %v2632 = vunpack.c.l.b16 %v1096
        %v2633 = vunpack.c.h.b16 %v1096
        %v2634 = vunpack.c.l.b16 %v1097
        %v2635 = vunpack.c.l.b16 %v1098
        %v2636 = vunpack.c.h.b16 %v1098
        %v2637 = vunpack.c.l.b16 %v1099
        %v2638 = vunpack.c.l.b16 %v1100
        %v2639 = vunpack.c.h.b16 %v1100
        %v2640 = vunpack.c.l.b16 %v1101
        %v2641 = vunpack.c.l.b16 %v1102
        %v2642 = vunpack.c.h.b16 %v1102
        %v2643 = vunpack.c.l.b16 %v1103
        %v2644 = vunpack.c.l.b16 %v1104
        %v2645 = vunpack.c.h.b16 %v1104
        %v2646 = vunpack.c.l.b16 %v1105
        %v2647 = vunpack.c.l.b16 %v1106
        %v2648 = vunpack.c.h.b16 %v1106
        %v2649 = vunpack.c.l.b16 %v1107
        %v2650 = vunpack.c.l.b16 %v1108
        %v2651 = vunpack.c.h.b16 %v1108
        %v2652 = vunpack.c.l.b16 %v1109
        %v2653 = vunpack.c.l.b16 %v1110
        %v2654 = vunpack.c.h.b16 %v1110
        %v2655 = vunpack.c.l.b16 %v1111
        %v2656 = vunpack.c.l.b16 %v1112
        %v2657 = vunpack.c.h.b16 %v1112
        %v2658 = vunpack.c.l.b16 %v1113
        %v2659 = vunpack.c.l.b16 %v1114
        %v2660 = vunpack.c.h.b16 %v1114
        %v2661 = vunpack.c.l.b16 %v1115
        %v2662 = vunpack.c.l.b16 %v1116
        %v2663 = vunpack.c.h.b16 %v1116
        %v2664 = vunpack.c.l.b16 %v1117
        %v2665 = vunpack.c.l.b16 %v1118
        %v2666 = vunpack.c.h.b16 %v1118
        %v2667 = vunpack.c.l.b16 %v1119
        %v2668 = vunpack.c.l.b16 %v1120
        %v2669 = vunpack.c.h.b16 %v1120
        %v2670 = vunpack.c.l.b16 %v1121
        %v2671 = vunpack.c.l.b16 %v1122
        %v2672 = vunpack.c.h.b16 %v1122
        %v2673 = vunpack.c.l.b16 %v1123
        %v2674 = vunpack.c.l.b16 %v1124
        %v2675 = vunpack.c.h.b16 %v1124
        %v2676 = vunpack.c.l.b16 %v1125
        %v2677 = vunpack.c.l.b16 %v1126
        %v2678 = vunpack.c.h.b16 %v1126
        %v2679 = vunpack.c.l.b16 %v1127
        %v2680 = vunpack.c.l.b16 %v1128
        %v2681 = vunpack.c.h.b16 %v1128
        %v2682 = vunpack.c.l.b16 %v1129
        %v2683 = vunpack.c.l.b16 %v1130
        %v2684 = vunpack.c.h.b16 %v1130
        %v2685 = vunpack.c.l.b16 %v1131
        %v2686 = vunpack.c.l.b16 %v1132
        %v2687 = vunpack.c.h.b16 %v1132
        %v2688 = vunpack.c.l.b16 %v1133
        %v2689 = vunpack.c.l.b16 %v1134
        %v2690 = vunpack.c.h.b16 %v1134
        %v2691 = vunpack.c.l.b16 %v1135
        %v2692 = vunpack.c.l.b16 %v1136
        %v2693 = vunpack.c.h.b16 %v1136
        %v2694 = vunpack.c.l.b16 %v1137
        %v2695 = vunpack.c.l.b16 %v1138
        %v2696 = vunpack.c.h.b16 %v1138
        %v2697 = vunpack.c.l.b16 %v1139
        %v2698 = vunpack.c.l.b16 %v1140
        %v2699 = vunpack.c.h.b16 %v1140
        %v2700 = vunpack.c.l.b16 %v1141
        %v2701 = vunpack.c.l.b16 %v1142
        %v2702 = vunpack.c.h.b16 %v1142
        %v2703 = vunpack.c.l.b16 %v1143
        %v2704 = vunpack.c.l.b16 %v1144
        %v2705 = vunpack.c.h.b16 %v1144
        %v2706 = vunpack.c.l.b16 %v1145
        %v2707 = vunpack.c.l.b16 %v1146
        %v2708 = vunpack.c.h.b16 %v1146
        %v2709 = vunpack.c.l.b16 %v1147
        %v2710 = vunpack.c.l.b16 %v1148
        %v2711 = vunpack.c.h.b16 %v1148
        %v2712 = vunpack.c.l.b16 %v1149
        %v2713 = vunpack.c.l.b16 %v1150
        %v2714 = vunpack.c.h.b16 %v1150
        %v2715 = vunpack.c.l.b16 %v1151
        %v2716 = vunpack.c.l.b16 %v1152
        %v2717 = vunpack.c.h.b16 %v1152
        %v2718 = vunpack.c.l.b16 %v1153
        %v2719 = vunpack.c.l.b16 %v1154
        %v2720 = vunpack.c.h.b16 %v1154
        %v2721 = vunpack.c.l.b16 %v1155
        %v2722 = vunpack.c.l.b16 %v1156
        %v2723 = vunpack.c.h.b16 %v1156
        %v2724 = vunpack.c.l.b16 %v1157
        %v2725 = vunpack.c.l.b16 %v1158
        %v2726 = vunpack.c.h.b16 %v1158
        %v2727 = vunpack.c.l.b16 %v1159
        %v2728 = vunpack.c.l.b16 %v1160
        %v2729 = vunpack.c.h.b16 %v1160
        %v2730 = vunpack.c.l.b16 %v1161
        %v2731 = vunpack.c.l.b16 %v1162
        %v2732 = vunpack.c.h.b16 %v1162
        %v2733 = vunpack.c.l.b16 %v1163
        %v2734 = vunpack.c.l.b16 %v1164
        %v2735 = vunpack.c.h.b16 %v1164
        %v2736 = vunpack.c.l.b16 %v1165
        %v2737 = vunpack.c.l.b16 %v1166
        %v2738 = vunpack.c.h.b16 %v1166
        %v2739 = vunpack.c.l.b16 %v1167
        %v2740 = vunpack.c.l.b16 %v1168
        %v2741 = vunpack.c.h.b16 %v1168
        %v2742 = vunpack.c.l.b16 %v1169
        %v2743 = vunpack.c.l.b16 %v1170
        %v2744 = vunpack.c.h.b16 %v1170
        %v2745 = vunpack.c.l.b16 %v1171
        %v2746 = vunpack.c.l.b16 %v1172
        %v2747 = vunpack.c.h.b16 %v1172
        %v2748 = vunpack.c.l.b16 %v1173
        %v2749 = vunpack.c.l.b16 %v1174
        %v2750 = vunpack.c.h.b16 %v1174
        %v2751 = vunpack.c.l.b16 %v1175
        %v2752 = vunpack.c.l.b16 %v1176
        %v2753 = vunpack.c.h.b16 %v1176
        %v2754 = vunpack.c.l.b16 %v1177
        %v2755 = vunpack.c.l.b16 %v1178
        %v2756 = vunpack.c.h.b16 %v1178
        %v2757 = vunpack.c.l.b16 %v1179
        %v2758 = vunpack.c.l.b16 %v1180
        %v2759 = vunpack.c.h.b16 %v1180
        %v2760 = vunpack.c.l.b16 %v1181
        %v2761 = vunpack.c.l.b16 %v1182
        %v2762 = vunpack.c.h.b16 %v1182
        %v2763 = vunpack.c.l.b16 %v1183
        %v2764 = vunpack.c.l.b16 %v1184
        %v2765 = vunpack.c.h.b16 %v1184
        %v2766 = vunpack.c.l.b16 %v1185
        %v2767 = vunpack.c.l.b16 %v1186
        %v2768 = vunpack.c.h.b16 %v1186
        %v2769 = vunpack.c.l.b16 %v1187
        %v2770 = vunpack.c.l.b16 %v1188
        %v2771 = vunpack.c.h.b16 %v1188
        %v2772 = vunpack.c.l.b16 %v1189
        %v2773 = vunpack.c.l.b16 %v1190
        %v2774 = vunpack.c.h.b16 %v1190
        %v2775 = vunpack.c.l.b16 %v1191
        %v2776 = vunpack.c.l.b16 %v1192
        %v2777 = vunpack.c.h.b16 %v1192
        %v2778 = vunpack.c.l.b16 %v1193
        %v2779 = vunpack.c.l.b16 %v1194
        %v2780 = vunpack.c.h.b16 %v1194
        %v2781 = vunpack.c.l.b16 %v1195
        %v2782 = vunpack.c.l.b16 %v1196
        %v2783 = vunpack.c.h.b16 %v1196
        %v2784 = vunpack.c.l.b16 %v1197
        %v2785 = vunpack.c.l.b16 %v1198
        %v2786 = vunpack.c.h.b16 %v1198
        %v2787 = vunpack.c.l.b16 %v1199
        %v2788 = vunpack.c.l.b16 %v1200
        %v2789 = vunpack.c.h.b16 %v1200
        %v2790 = vunpack.c.l.b16 %v1201
        %v2791 = vunpack.c.l.b16 %v1202
        %v2792 = vunpack.c.h.b16 %v1202
        %v2793 = vunpack.c.l.b16 %v1203
        %v2794 = vunpack.c.l.b16 %v1204
        %v2795 = vunpack.c.h.b16 %v1204
        %v2796 = vunpack.c.l.b16 %v1205
        %v2797 = vunpack.c.l.b16 %v1206
        %v2798 = vunpack.c.h.b16 %v1206
        %v2799 = vunpack.c.l.b16 %v1207
        %v2800 = vunpack.c.l.b16 %v1208
        %v2801 = vunpack.c.h.b16 %v1208
        %v2802 = vunpack.c.l.b16 %v1209
        %v2803 = vunpack.c.l.b16 %v1210
        %v2804 = vunpack.c.h.b16 %v1210
        %v2805 = vunpack.c.l.b16 %v1211
        %v2806 = vunpack.c.l.b16 %v1212
        %v2807 = vunpack.c.h.b16 %v1212
        %v2808 = vunpack.c.l.b16 %v1213
        %v2809 = vunpack.c.l.b16 %v1214
        %v2810 = vunpack.c.h.b16 %v1214
        %v2811 = vunpack.c.l.b16 %v1215
        %v2812 = vunpack.c.l.b16 %v1216
        %v2813 = vunpack.c.h.b16 %v1216
        %v2814 = vunpack.c.l.b16 %v1217
        %v2815 = vunpack.c.l.b16 %v1218
        %v2816 = vunpack.c.h.b16 %v1218
        %v2817 = vunpack.c.l.b16 %v1219
        %v2818 = vunpack.c.l.b16 %v1220
        %v2819 = vunpack.c.h.b16 %v1220
        %v2820 = vunpack.c.l.b16 %v1221
        %v2821 = vunpack.c.l.b16 %v1222
        %v2822 = vunpack.c.h.b16 %v1222
        %v2823 = vunpack.c.l.b16 %v1223
        %v2824 = vpack.c.b16 %v2635, %v2632
        %v2825 = vpack.c.b16 %v2636, %v2633
        %v2826 = vpack.c.b16 %v2637, %v2634
        %v2827 = vpack.c.b16 %v2641, %v2638
        %v2828 = vpack.c.b16 %v2642, %v2639
        %v2829 = vpack.c.b16 %v2643, %v2640
        %v2830 = vpack.c.b16 %v2647, %v2644
        %v2831 = vpack.c.b16 %v2648, %v2645
        %v2832 = vpack.c.b16 %v2649, %v2646
        %v2833 = vpack.c.b16 %v2653, %v2650
        %v2834 = vpack.c.b16 %v2654, %v2651
        %v2835 = vpack.c.b16 %v2655, %v2652
        %v2836 = vpack.c.b16 %v2659, %v2656
        %v2837 = vpack.c.b16 %v2660, %v2657
        %v2838 = vpack.c.b16 %v2661, %v2658
        %v2839 = vpack.c.b16 %v2665, %v2662
        %v2840 = vpack.c.b16 %v2666, %v2663
        %v2841 = vpack.c.b16 %v2667, %v2664
        %v2842 = vpack.c.b16 %v2671, %v2668
        %v2843 = vpack.c.b16 %v2672, %v2669
        %v2844 = vpack.c.b16 %v2673, %v2670
        %v2845 = vpack.c.b16 %v2677, %v2674
        %v2846 = vpack.c.b16 %v2678, %v2675
        %v2847 = vpack.c.b16 %v2679, %v2676
        %v2848 = vpack.c.b16 %v2683, %v2680
        %v2849 = vpack.c.b16 %v2684, %v2681
        %v2850 = vpack.c.b16 %v2685, %v2682
        %v2851 = vpack.c.b16 %v2689, %v2686
        %v2852 = vpack.c.b16 %v2690, %v2687
        %v2853 = vpack.c.b16 %v2691, %v2688
        %v2854 = vpack.c.b16 %v2695, %v2692
        %v2855 = vpack.c.b16 %v2696, %v2693
        %v2856 = vpack.c.b16 %v2697, %v2694
        %v2857 = vpack.c.b16 %v2701, %v2698
        %v2858 = vpack.c.b16 %v2702, %v2699
        %v2859 = vpack.c.b16 %v2703, %v2700
        %v2860 = vpack.c.b16 %v2707, %v2704
        %v2861 = vpack.c.b16 %v2708, %v2705
        %v2862 = vpack.c.b16 %v2709, %v2706
        %v2863 = vpack.c.b16 %v2713, %v2710
        %v2864 = vpack.c.b16 %v2714, %v2711
        %v2865 = vpack.c.b16 %v2715, %v2712
        %v2866 = vpack.c.b16 %v2719, %v2716
        %v2867 = vpack.c.b16 %v2720, %v2717
        %v2868 = vpack.c.b16 %v2721, %v2718
        %v2869 = vpack.c.b16 %v2725, %v2722
        %v2870 = vpack.c.b16 %v2726, %v2723
        %v2871 = vpack.c.b16 %v2727, %v2724
        %v2872 = vpack.c.b16 %v2731, %v2728
        %v2873 = vpack.c.b16 %v2732, %v2729
        %v2874 = vpack.c.b16 %v2733, %v2730
        %v2875 = vpack.c.b16 %v2737, %v2734
        %v2876 = vpack.c.b16 %v2738, %v2735
        %v2877 = vpack.c.b16 %v2739, %v2736
        %v2878 = vpack.c.b16 %v2743, %v2740
        %v2879 = vpack.c.b16 %v2744, %v2741
        %v2880 = vpack.c.b16 %v2745, %v2742
        %v2881 = vpack.c.b16 %v2749, %v2746
        %v2882 = vpack.c.b16 %v2750, %v2747
        %v2883 = vpack.c.b16 %v2751, %v2748
        %v2884 = vpack.c.b16 %v2755, %v2752
        %v2885 = vpack.c.b16 %v2756, %v2753
        %v2886 = vpack.c.b16 %v2757, %v2754
        %v2887 = vpack.c.b16 %v2761, %v2758
        %v2888 = vpack.c.b16 %v2762, %v2759
        %v2889 = vpack.c.b16 %v2763, %v2760
        %v2890 = vpack.c.b16 %v2767, %v2764
        %v2891 = vpack.c.b16 %v2768, %v2765
        %v2892 = vpack.c.b16 %v2769, %v2766
        %v2893 = vpack.c.b16 %v2773, %v2770
        %v2894 = vpack.c.b16 %v2774, %v2771
        %v2895 = vpack.c.b16 %v2775, %v2772
        %v2896 = vpack.c.b16 %v2779, %v2776
        %v2897 = vpack.c.b16 %v2780, %v2777
        %v2898 = vpack.c.b16 %v2781, %v2778
        %v2899 = vpack.c.b16 %v2785, %v2782
        %v2900 = vpack.c.b16 %v2786, %v2783
        %v2901 = vpack.c.b16 %v2787, %v2784
        %v2902 = vpack.c.b16 %v2791, %v2788
        %v2903 = vpack.c.b16 %v2792, %v2789
        %v2904 = vpack.c.b16 %v2793, %v2790
        %v2905 = vpack.c.b16 %v2797, %v2794
        %v2906 = vpack.c.b16 %v2798, %v2795
        %v2907 = vpack.c.b16 %v2799, %v2796
        %v2908 = vpack.c.b16 %v2803, %v2800
        %v2909 = vpack.c.b16 %v2804, %v2801
        %v2910 = vpack.c.b16 %v2805, %v2802
        %v2911 = vpack.c.b16 %v2809, %v2806
        %v2912 = vpack.c.b16 %v2810, %v2807
        %v2913 = vpack.c.b16 %v2811, %v2808
        %v2914 = vpack.c.b16 %v2815, %v2812
        %v2915 = vpack.c.b16 %v2816, %v2813
        %v2916 = vpack.c.b16 %v2817, %v2814
        %v2917 = vpack.c.b16 %v2821, %v2818
        %v2918 = vpack.c.b16 %v2822, %v2819
        %v2919 = vpack.c.b16 %v2823, %v2820
        %3016 = vmatprep.subr.bf16.mxu0 %v2846
        %3017 = vmatpush1.bf16.msra.mxu0 %v2845
        %3018 = vmatprep.subr.bf16.mxu0 %v2843
        %3019 = vmatpush1.bf16.msra.mxu0 %v2842
        %3020 = vmatprep.subr.bf16.mxu0 %v2840
        %3021 = vmatpush1.bf16.msra.mxu0 %v2839
        %3022 = vmatprep.subr.bf16.mxu0 %v2837
        %3023 = vmatpush1.bf16.msra.mxu0 %v2836
        %3024 = vmatprep.subr.bf16.mxu0 %v2834
        %3025 = vmatpush1.bf16.msra.mxu0 %v2833
        %3026 = vmatprep.subr.bf16.mxu0 %v2831
        %3027 = vmatpush1.bf16.msra.mxu0 %v2830
        %3028 = vmatprep.subr.bf16.mxu0 %v2828
        %3029 = vmatpush1.bf16.msra.mxu0 %v2827
        %3030 = vmatprep.subr.bf16.mxu0 %v2825
        %3031 = vmatpush1.bf16.msra.mxu0 %v2824
        %3032 = vmatprep.subr.bf16.mxu0 %v2870
        %3033 = vmatpush2.bf16.msra.mxu0 %v2869
        %3034 = vmatprep.subr.bf16.mxu0 %v2867
        %3035 = vmatpush2.bf16.msra.mxu0 %v2866
        %3036 = vmatprep.subr.bf16.mxu0 %v2864
        %3037 = vmatpush2.bf16.msra.mxu0 %v2863
        %3038 = vmatprep.subr.bf16.mxu0 %v2861
        %3039 = vmatpush2.bf16.msra.mxu0 %v2860
        %3040 = vmatprep.subr.bf16.mxu0 %v2858
        %3041 = vmatpush2.bf16.msra.mxu0 %v2857
        %3042 = vmatprep.subr.bf16.mxu0 %v2855
        %3043 = vmatpush2.bf16.msra.mxu0 %v2854
        %3044 = vmatprep.subr.bf16.mxu0 %v2852
        %3045 = vmatpush2.bf16.msra.mxu0 %v2851
        %3046 = vmatprep.subr.bf16.mxu0 %v2849
        %3047 = vmatpush2.bf16.msra.mxu0 %v2848
        %3048 = vmatprep.mubr.bf16.mxu0 %v1993
        %3049 = vmatmul.mubr.bf16.gmra.mxu0 %v1992
        %v3050 = vpop.f32.mrf.mxu0
        %v3051 = vadd.f32 0.0, %v3050
        %v3052 = vpop.f32.mrf.mxu0
        %v3053 = vadd.f32 0.0, %v3052
        %v3054 = vpop.f32.mrf.mxu0
        %v3055 = vadd.f32 0.0, %v3054
        %v3056 = vpop.f32.mrf.mxu0
        %v3057 = vadd.f32 0.0, %v3056
        %3058 = vmatprep.mubr.bf16.mxu0 %v1997
        %3059 = vmatmul.mubr.bf16.gmra.mxu0 %v1996
        %v3060 = vpop.f32.mrf.mxu0
        %v3061 = vadd.f32 0.0, %v3060
        %v3062 = vpop.f32.mrf.mxu0
        %v3063 = vadd.f32 0.0, %v3062
        %v3064 = vpop.f32.mrf.mxu0
        %v3065 = vadd.f32 0.0, %v3064
        %v3066 = vpop.f32.mrf.mxu0
        %v3067 = vadd.f32 0.0, %v3066
        %3068 = vmatprep.mubr.bf16.mxu0 %v2001
        %3069 = vmatmul.mubr.bf16.gmra.mxu0 %v2000
        %v3070 = vpop.f32.mrf.mxu0
        %v3071 = vadd.f32 0.0, %v3070
        %v3072 = vpop.f32.mrf.mxu0
        %v3073 = vadd.f32 0.0, %v3072
        %v3074 = vpop.f32.mrf.mxu0
        %v3075 = vadd.f32 0.0, %v3074
        %v3076 = vpop.f32.mrf.mxu0
        %v3077 = vadd.f32 0.0, %v3076
        %3078 = vmatprep.mubr.bf16.mxu0 %v2005
        %3079 = vmatmul.mubr.bf16.gmra.mxu0 %v2004
        %v3080 = vpop.f32.mrf.mxu0
        %v3081 = vadd.f32 0.0, %v3080
        %v3082 = vpop.f32.mrf.mxu0
        %v3083 = vadd.f32 0.0, %v3082
        %v3084 = vpop.f32.mrf.mxu0
        %v3085 = vadd.f32 0.0, %v3084
        %v3086 = vpop.f32.mrf.mxu0
        %v3087 = vadd.f32 0.0, %v3086
        %3088 = vmatprep.mubr.bf16.mxu0 %v2009
        %3089 = vmatmul.mubr.bf16.gmra.mxu0 %v2008
        %v3090 = vpop.f32.mrf.mxu0
        %v3091 = vadd.f32 0.0, %v3090
        %v3092 = vpop.f32.mrf.mxu0
        %v3093 = vadd.f32 0.0, %v3092
        %v3094 = vpop.f32.mrf.mxu0
        %v3095 = vadd.f32 0.0, %v3094
        %v3096 = vpop.f32.mrf.mxu0
        %v3097 = vadd.f32 0.0, %v3096
        %3098 = vmatprep.mubr.bf16.mxu0 %v2013
        %3099 = vmatmul.mubr.bf16.gmra.mxu0 %v2012
        %v3100 = vpop.f32.mrf.mxu0
        %v3101 = vadd.f32 0.0, %v3100
        %v3102 = vpop.f32.mrf.mxu0
        %v3103 = vadd.f32 0.0, %v3102
        %v3104 = vpop.f32.mrf.mxu0
        %v3105 = vadd.f32 0.0, %v3104
        %v3106 = vpop.f32.mrf.mxu0
        %v3107 = vadd.f32 0.0, %v3106
        %3108 = vmatprep.mubr.bf16.mxu0 %v2017
        %3109 = vmatmul.mubr.bf16.gmra.mxu0 %v2016
        %v3110 = vpop.f32.mrf.mxu0
        %v3111 = vadd.f32 0.0, %v3110
        %v3112 = vpop.f32.mrf.mxu0
        %v3113 = vadd.f32 0.0, %v3112
        %v3114 = vpop.f32.mrf.mxu0
        %v3115 = vadd.f32 0.0, %v3114
        %v3116 = vpop.f32.mrf.mxu0
        %v3117 = vadd.f32 0.0, %v3116
        %3118 = vmatprep.mubr.bf16.mxu0 %v2021
        %3119 = vmatmul.mubr.bf16.gmra.mxu0 %v2020
        %v3120 = vpop.f32.mrf.mxu0
        %v3121 = vadd.f32 0.0, %v3120
        %v3122 = vpop.f32.mrf.mxu0
        %v3123 = vadd.f32 0.0, %v3122
        %v3124 = vpop.f32.mrf.mxu0
        %v3125 = vadd.f32 0.0, %v3124
        %v3126 = vpop.f32.mrf.mxu0
        %v3127 = vadd.f32 0.0, %v3126
        %3128 = vmatprep.mubr.bf16.mxu0 %v2025
        %3129 = vmatmul.mubr.bf16.gmra.mxu0 %v2024
        %v3130 = vpop.f32.mrf.mxu0
        %v3131 = vadd.f32 0.0, %v3130
        %v3132 = vpop.f32.mrf.mxu0
        %v3133 = vadd.f32 0.0, %v3132
        %v3134 = vpop.f32.mrf.mxu0
        %v3135 = vadd.f32 0.0, %v3134
        %v3136 = vpop.f32.mrf.mxu0
        %v3137 = vadd.f32 0.0, %v3136
        %3138 = vmatprep.mubr.bf16.mxu0 %v2029
        %3139 = vmatmul.mubr.bf16.gmra.mxu0 %v2028
        %v3140 = vpop.f32.mrf.mxu0
        %v3141 = vadd.f32 0.0, %v3140
        %v3142 = vpop.f32.mrf.mxu0
        %v3143 = vadd.f32 0.0, %v3142
        %v3144 = vpop.f32.mrf.mxu0
        %v3145 = vadd.f32 0.0, %v3144
        %v3146 = vpop.f32.mrf.mxu0
        %v3147 = vadd.f32 0.0, %v3146
        %3148 = vmatprep.mubr.bf16.mxu0 %v2033
        %3149 = vmatmul.mubr.bf16.gmra.mxu0 %v2032
        %v3150 = vpop.f32.mrf.mxu0
        %v3151 = vadd.f32 0.0, %v3150
        %v3152 = vpop.f32.mrf.mxu0
        %v3153 = vadd.f32 0.0, %v3152
        %v3154 = vpop.f32.mrf.mxu0
        %v3155 = vadd.f32 0.0, %v3154
        %v3156 = vpop.f32.mrf.mxu0
        %v3157 = vadd.f32 0.0, %v3156
        %3158 = vmatprep.mubr.bf16.mxu0 %v2037
        %3159 = vmatmul.mubr.bf16.gmra.mxu0 %v2036
        %v3160 = vpop.f32.mrf.mxu0
        %v3161 = vadd.f32 0.0, %v3160
        %v3162 = vpop.f32.mrf.mxu0
        %v3163 = vadd.f32 0.0, %v3162
        %v3164 = vpop.f32.mrf.mxu0
        %v3165 = vadd.f32 0.0, %v3164
        %v3166 = vpop.f32.mrf.mxu0
        %v3167 = vadd.f32 0.0, %v3166
        %3168 = vmatprep.mubr.bf16.mxu0 %v2041
        %3169 = vmatmul.mubr.bf16.gmra.mxu0 %v2040
        %v3170 = vpop.f32.mrf.mxu0
        %v3171 = vadd.f32 0.0, %v3170
        %v3172 = vpop.f32.mrf.mxu0
        %v3173 = vadd.f32 0.0, %v3172
        %v3174 = vpop.f32.mrf.mxu0
        %v3175 = vadd.f32 0.0, %v3174
        %v3176 = vpop.f32.mrf.mxu0
        %v3177 = vadd.f32 0.0, %v3176
        %3178 = vmatprep.mubr.bf16.mxu0 %v2045
        %3179 = vmatmul.mubr.bf16.gmra.mxu0 %v2044
        %v3180 = vpop.f32.mrf.mxu0
        %v3181 = vadd.f32 0.0, %v3180
        %v3182 = vpop.f32.mrf.mxu0
        %v3183 = vadd.f32 0.0, %v3182
        %v3184 = vpop.f32.mrf.mxu0
        %v3185 = vadd.f32 0.0, %v3184
        %v3186 = vpop.f32.mrf.mxu0
        %v3187 = vadd.f32 0.0, %v3186
        %3188 = vmatprep.mubr.bf16.mxu0 %v2049
        %3189 = vmatmul.mubr.bf16.gmra.mxu0 %v2048
        %v3190 = vpop.f32.mrf.mxu0
        %v3191 = vadd.f32 0.0, %v3190
        %v3192 = vpop.f32.mrf.mxu0
        %v3193 = vadd.f32 0.0, %v3192
        %v3194 = vpop.f32.mrf.mxu0
        %v3195 = vadd.f32 0.0, %v3194
        %v3196 = vpop.f32.mrf.mxu0
        %v3197 = vadd.f32 0.0, %v3196
        %3198 = vmatprep.mubr.bf16.mxu0 %v2053
        %3199 = vmatmul.mubr.bf16.gmra.mxu0 %v2052
        %v3200 = vpop.f32.mrf.mxu0
        %v3201 = vadd.f32 0.0, %v3200
        %v3202 = vpop.f32.mrf.mxu0
        %v3203 = vadd.f32 0.0, %v3202
        %v3204 = vpop.f32.mrf.mxu0
        %v3205 = vadd.f32 0.0, %v3204
        %v3206 = vpop.f32.mrf.mxu0
        %v3207 = vadd.f32 0.0, %v3206
        %3208 = vmatprep.mubr.bf16.mxu0 %v2057
        %3209 = vmatmul.mubr.bf16.gmra.mxu0 %v2056
        %v3210 = vpop.f32.mrf.mxu0
        %v3211 = vadd.f32 0.0, %v3210
        %v3212 = vpop.f32.mrf.mxu0
        %v3213 = vadd.f32 0.0, %v3212
        %v3214 = vpop.f32.mrf.mxu0
        %v3215 = vadd.f32 0.0, %v3214
        %v3216 = vpop.f32.mrf.mxu0
        %v3217 = vadd.f32 0.0, %v3216
        %3218 = vmatprep.mubr.bf16.mxu0 %v2061
        %3219 = vmatmul.mubr.bf16.gmra.mxu0 %v2060
        %v3220 = vpop.f32.mrf.mxu0
        %v3221 = vadd.f32 0.0, %v3220
        %v3222 = vpop.f32.mrf.mxu0
        %v3223 = vadd.f32 0.0, %v3222
        %v3224 = vpop.f32.mrf.mxu0
        %v3225 = vadd.f32 0.0, %v3224
        %v3226 = vpop.f32.mrf.mxu0
        %v3227 = vadd.f32 0.0, %v3226
        %3228 = vmatprep.mubr.bf16.mxu0 %v2065
        %3229 = vmatmul.mubr.bf16.gmra.mxu0 %v2064
        %v3230 = vpop.f32.mrf.mxu0
        %v3231 = vadd.f32 0.0, %v3230
        %v3232 = vpop.f32.mrf.mxu0
        %v3233 = vadd.f32 0.0, %v3232
        %v3234 = vpop.f32.mrf.mxu0
        %v3235 = vadd.f32 0.0, %v3234
        %v3236 = vpop.f32.mrf.mxu0
        %v3237 = vadd.f32 0.0, %v3236
        %3238 = vmatprep.mubr.bf16.mxu0 %v2069
        %3239 = vmatmul.mubr.bf16.gmra.mxu0 %v2068
        %v3240 = vpop.f32.mrf.mxu0
        %v3241 = vadd.f32 0.0, %v3240
        %v3242 = vpop.f32.mrf.mxu0
        %v3243 = vadd.f32 0.0, %v3242
        %v3244 = vpop.f32.mrf.mxu0
        %v3245 = vadd.f32 0.0, %v3244
        %v3246 = vpop.f32.mrf.mxu0
        %v3247 = vadd.f32 0.0, %v3246
        %3248 = vmatprep.mubr.bf16.mxu0 %v2073
        %3249 = vmatmul.mubr.bf16.gmra.mxu0 %v2072
        %v3250 = vpop.f32.mrf.mxu0
        %v3251 = vadd.f32 0.0, %v3250
        %v3252 = vpop.f32.mrf.mxu0
        %v3253 = vadd.f32 0.0, %v3252
        %v3254 = vpop.f32.mrf.mxu0
        %v3255 = vadd.f32 0.0, %v3254
        %v3256 = vpop.f32.mrf.mxu0
        %v3257 = vadd.f32 0.0, %v3256
        %3258 = vmatprep.mubr.bf16.mxu0 %v2077
        %3259 = vmatmul.mubr.bf16.gmra.mxu0 %v2076
        %v3260 = vpop.f32.mrf.mxu0
        %v3261 = vadd.f32 0.0, %v3260
        %v3262 = vpop.f32.mrf.mxu0
        %v3263 = vadd.f32 0.0, %v3262
        %v3264 = vpop.f32.mrf.mxu0
        %v3265 = vadd.f32 0.0, %v3264
        %v3266 = vpop.f32.mrf.mxu0
        %v3267 = vadd.f32 0.0, %v3266
        %3268 = vmatprep.mubr.bf16.mxu0 %v2081
        %3269 = vmatmul.mubr.bf16.gmra.mxu0 %v2080
        %v3270 = vpop.f32.mrf.mxu0
        %v3271 = vadd.f32 0.0, %v3270
        %v3272 = vpop.f32.mrf.mxu0
        %v3273 = vadd.f32 0.0, %v3272
        %v3274 = vpop.f32.mrf.mxu0
        %v3275 = vadd.f32 0.0, %v3274
        %v3276 = vpop.f32.mrf.mxu0
        %v3277 = vadd.f32 0.0, %v3276
        %3278 = vmatprep.mubr.bf16.mxu0 %v2085
        %3279 = vmatmul.mubr.bf16.gmra.mxu0 %v2084
        %v3280 = vpop.f32.mrf.mxu0
        %v3281 = vadd.f32 0.0, %v3280
        %v3282 = vpop.f32.mrf.mxu0
        %v3283 = vadd.f32 0.0, %v3282
        %v3284 = vpop.f32.mrf.mxu0
        %v3285 = vadd.f32 0.0, %v3284
        %v3286 = vpop.f32.mrf.mxu0
        %v3287 = vadd.f32 0.0, %v3286
        %3288 = vmatprep.mubr.bf16.mxu0 %v2089
        %3289 = vmatmul.mubr.bf16.gmra.mxu0 %v2088
        %v3290 = vpop.f32.mrf.mxu0
        %v3291 = vadd.f32 0.0, %v3290
        %v3292 = vpop.f32.mrf.mxu0
        %v3293 = vadd.f32 0.0, %v3292
        %v3294 = vpop.f32.mrf.mxu0
        %v3295 = vadd.f32 0.0, %v3294
        %v3296 = vpop.f32.mrf.mxu0
        %v3297 = vadd.f32 0.0, %v3296
        %3298 = vmatprep.mubr.bf16.mxu0 %v2093
        %3299 = vmatmul.mubr.bf16.gmra.mxu0 %v2092
        %v3300 = vpop.f32.mrf.mxu0
        %v3301 = vadd.f32 0.0, %v3300
        %v3302 = vpop.f32.mrf.mxu0
        %v3303 = vadd.f32 0.0, %v3302
        %v3304 = vpop.f32.mrf.mxu0
        %v3305 = vadd.f32 0.0, %v3304
        %v3306 = vpop.f32.mrf.mxu0
        %v3307 = vadd.f32 0.0, %v3306
        %3308 = vmatprep.mubr.bf16.mxu0 %v2097
        %3309 = vmatmul.mubr.bf16.gmra.mxu0 %v2096
        %v3310 = vpop.f32.mrf.mxu0
        %v3311 = vadd.f32 0.0, %v3310
        %v3312 = vpop.f32.mrf.mxu0
        %v3313 = vadd.f32 0.0, %v3312
        %v3314 = vpop.f32.mrf.mxu0
        %v3315 = vadd.f32 0.0, %v3314
        %v3316 = vpop.f32.mrf.mxu0
        %v3317 = vadd.f32 0.0, %v3316
        %3318 = vmatprep.mubr.bf16.mxu0 %v2101
        %3319 = vmatmul.mubr.bf16.gmra.mxu0 %v2100
        %v3320 = vpop.f32.mrf.mxu0
        %v3321 = vadd.f32 0.0, %v3320
        %v3322 = vpop.f32.mrf.mxu0
        %v3323 = vadd.f32 0.0, %v3322
        %v3324 = vpop.f32.mrf.mxu0
        %v3325 = vadd.f32 0.0, %v3324
        %v3326 = vpop.f32.mrf.mxu0
        %v3327 = vadd.f32 0.0, %v3326
        %3328 = vmatprep.mubr.bf16.mxu0 %v2105
        %3329 = vmatmul.mubr.bf16.gmra.mxu0 %v2104
        %v3330 = vpop.f32.mrf.mxu0
        %v3331 = vadd.f32 0.0, %v3330
        %v3332 = vpop.f32.mrf.mxu0
        %v3333 = vadd.f32 0.0, %v3332
        %v3334 = vpop.f32.mrf.mxu0
        %v3335 = vadd.f32 0.0, %v3334
        %v3336 = vpop.f32.mrf.mxu0
        %v3337 = vadd.f32 0.0, %v3336
        %3338 = vmatprep.mubr.bf16.mxu0 %v2109
        %3339 = vmatmul.mubr.bf16.gmra.mxu0 %v2108
        %v3340 = vpop.f32.mrf.mxu0
        %v3341 = vadd.f32 0.0, %v3340
        %v3342 = vpop.f32.mrf.mxu0
        %v3343 = vadd.f32 0.0, %v3342
        %v3344 = vpop.f32.mrf.mxu0
        %v3345 = vadd.f32 0.0, %v3344
        %v3346 = vpop.f32.mrf.mxu0
        %v3347 = vadd.f32 0.0, %v3346
        %3348 = vmatprep.mubr.bf16.mxu0 %v2113
        %3349 = vmatmul.mubr.bf16.gmra.mxu0 %v2112
        %v3350 = vpop.f32.mrf.mxu0
        %v3351 = vadd.f32 0.0, %v3350
        %v3352 = vpop.f32.mrf.mxu0
        %v3353 = vadd.f32 0.0, %v3352
        %v3354 = vpop.f32.mrf.mxu0
        %v3355 = vadd.f32 0.0, %v3354
        %v3356 = vpop.f32.mrf.mxu0
        %v3357 = vadd.f32 0.0, %v3356
        %3358 = vmatprep.mubr.bf16.mxu0 %v2117
        %3359 = vmatmul.mubr.bf16.gmra.mxu0 %v2116
        %v3360 = vpop.f32.mrf.mxu0
        %v3361 = vadd.f32 0.0, %v3360
        %v3362 = vpop.f32.mrf.mxu0
        %v3363 = vadd.f32 0.0, %v3362
        %v3364 = vpop.f32.mrf.mxu0
        %v3365 = vadd.f32 0.0, %v3364
        %v3366 = vpop.f32.mrf.mxu0
        %v3367 = vadd.f32 0.0, %v3366
        %3368 = vmatprep.mubr.bf16.mxu0 %v2121
        %3369 = vmatmul.mubr.bf16.gmra.mxu0 %v2120
        %v3370 = vpop.f32.mrf.mxu0
        %v3371 = vadd.f32 0.0, %v3370
        %v3372 = vpop.f32.mrf.mxu0
        %v3373 = vadd.f32 0.0, %v3372
        %v3374 = vpop.f32.mrf.mxu0
        %v3375 = vadd.f32 0.0, %v3374
        %v3376 = vpop.f32.mrf.mxu0
        %v3377 = vadd.f32 0.0, %v3376
        %3378 = vmatprep.mubr.bf16.mxu0 %v2125
        %3379 = vmatmul.mubr.bf16.gmra.mxu0 %v2124
        %v3380 = vpop.f32.mrf.mxu0
        %v3381 = vadd.f32 0.0, %v3380
        %v3382 = vpop.f32.mrf.mxu0
        %v3383 = vadd.f32 0.0, %v3382
        %v3384 = vpop.f32.mrf.mxu0
        %v3385 = vadd.f32 0.0, %v3384
        %v3386 = vpop.f32.mrf.mxu0
        %v3387 = vadd.f32 0.0, %v3386
        %3388 = vmatprep.mubr.bf16.mxu0 %v2129
        %3389 = vmatmul.mubr.bf16.gmra.mxu0 %v2128
        %v3390 = vpop.f32.mrf.mxu0
        %v3391 = vadd.f32 0.0, %v3390
        %v3392 = vpop.f32.mrf.mxu0
        %v3393 = vadd.f32 0.0, %v3392
        %v3394 = vpop.f32.mrf.mxu0
        %v3395 = vadd.f32 0.0, %v3394
        %v3396 = vpop.f32.mrf.mxu0
        %v3397 = vadd.f32 0.0, %v3396
        %3398 = vmatprep.mubr.bf16.mxu0 %v2133
        %3399 = vmatmul.mubr.bf16.gmra.mxu0 %v2132
        %v3400 = vpop.f32.mrf.mxu0
        %v3401 = vadd.f32 0.0, %v3400
        %v3402 = vpop.f32.mrf.mxu0
        %v3403 = vadd.f32 0.0, %v3402
        %v3404 = vpop.f32.mrf.mxu0
        %v3405 = vadd.f32 0.0, %v3404
        %v3406 = vpop.f32.mrf.mxu0
        %v3407 = vadd.f32 0.0, %v3406
        %3408 = vmatprep.mubr.bf16.mxu0 %v2137
        %3409 = vmatmul.mubr.bf16.gmra.mxu0 %v2136
        %v3410 = vpop.f32.mrf.mxu0
        %v3411 = vadd.f32 0.0, %v3410
        %v3412 = vpop.f32.mrf.mxu0
        %v3413 = vadd.f32 0.0, %v3412
        %v3414 = vpop.f32.mrf.mxu0
        %v3415 = vadd.f32 0.0, %v3414
        %v3416 = vpop.f32.mrf.mxu0
        %v3417 = vadd.f32 0.0, %v3416
        %3418 = vmatprep.mubr.bf16.mxu0 %v2141
        %3419 = vmatmul.mubr.bf16.gmra.mxu0 %v2140
        %v3420 = vpop.f32.mrf.mxu0
        %v3421 = vadd.f32 0.0, %v3420
        %v3422 = vpop.f32.mrf.mxu0
        %v3423 = vadd.f32 0.0, %v3422
        %v3424 = vpop.f32.mrf.mxu0
        %v3425 = vadd.f32 0.0, %v3424
        %v3426 = vpop.f32.mrf.mxu0
        %v3427 = vadd.f32 0.0, %v3426
        %3428 = vmatprep.mubr.bf16.mxu0 %v2145
        %3429 = vmatmul.mubr.bf16.gmra.mxu0 %v2144
        %v3430 = vpop.f32.mrf.mxu0
        %v3431 = vadd.f32 0.0, %v3430
        %v3432 = vpop.f32.mrf.mxu0
        %v3433 = vadd.f32 0.0, %v3432
        %v3434 = vpop.f32.mrf.mxu0
        %v3435 = vadd.f32 0.0, %v3434
        %v3436 = vpop.f32.mrf.mxu0
        %v3437 = vadd.f32 0.0, %v3436
        %3438 = vmatprep.mubr.bf16.mxu0 %v2149
        %3439 = vmatmul.mubr.bf16.gmra.mxu0 %v2148
        %v3440 = vpop.f32.mrf.mxu0
        %v3441 = vadd.f32 0.0, %v3440
        %v3442 = vpop.f32.mrf.mxu0
        %v3443 = vadd.f32 0.0, %v3442
        %v3444 = vpop.f32.mrf.mxu0
        %v3445 = vadd.f32 0.0, %v3444
        %v3446 = vpop.f32.mrf.mxu0
        %v3447 = vadd.f32 0.0, %v3446
        %3448 = vmatprep.mubr.bf16.mxu0 %v2153
        %3449 = vmatmul.mubr.bf16.gmra.mxu0 %v2152
        %v3450 = vpop.f32.mrf.mxu0
        %v3451 = vadd.f32 0.0, %v3450
        %v3452 = vpop.f32.mrf.mxu0
        %v3453 = vadd.f32 0.0, %v3452
        %v3454 = vpop.f32.mrf.mxu0
        %v3455 = vadd.f32 0.0, %v3454
        %v3456 = vpop.f32.mrf.mxu0
        %v3457 = vadd.f32 0.0, %v3456
        %3458 = vmatprep.mubr.bf16.mxu0 %v2157
        %3459 = vmatmul.mubr.bf16.gmra.mxu0 %v2156
        %v3460 = vpop.f32.mrf.mxu0
        %v3461 = vadd.f32 0.0, %v3460
        %v3462 = vpop.f32.mrf.mxu0
        %v3463 = vadd.f32 0.0, %v3462
        %v3464 = vpop.f32.mrf.mxu0
        %v3465 = vadd.f32 0.0, %v3464
        %v3466 = vpop.f32.mrf.mxu0
        %v3467 = vadd.f32 0.0, %v3466
        %3468 = vmatprep.mubr.bf16.mxu0 %v2161
        %3469 = vmatmul.mubr.bf16.gmra.mxu0 %v2160
        %v3470 = vpop.f32.mrf.mxu0
        %v3471 = vadd.f32 0.0, %v3470
        %v3472 = vpop.f32.mrf.mxu0
        %v3473 = vadd.f32 0.0, %v3472
        %v3474 = vpop.f32.mrf.mxu0
        %v3475 = vadd.f32 0.0, %v3474
        %v3476 = vpop.f32.mrf.mxu0
        %v3477 = vadd.f32 0.0, %v3476
        %3478 = vmatprep.mubr.bf16.mxu0 %v2165
        %3479 = vmatmul.mubr.bf16.gmra.mxu0 %v2164
        %v3480 = vpop.f32.mrf.mxu0
        %v3481 = vadd.f32 0.0, %v3480
        %v3482 = vpop.f32.mrf.mxu0
        %v3483 = vadd.f32 0.0, %v3482
        %v3484 = vpop.f32.mrf.mxu0
        %v3485 = vadd.f32 0.0, %v3484
        %v3486 = vpop.f32.mrf.mxu0
        %v3487 = vadd.f32 0.0, %v3486
        %3488 = vmatprep.mubr.bf16.mxu0 %v2169
        %3489 = vmatmul.mubr.bf16.gmra.mxu0 %v2168
        %v3490 = vpop.f32.mrf.mxu0
        %v3491 = vadd.f32 0.0, %v3490
        %v3492 = vpop.f32.mrf.mxu0
        %v3493 = vadd.f32 0.0, %v3492
        %v3494 = vpop.f32.mrf.mxu0
        %v3495 = vadd.f32 0.0, %v3494
        %v3496 = vpop.f32.mrf.mxu0
        %v3497 = vadd.f32 0.0, %v3496
        %3498 = vmatprep.mubr.bf16.mxu0 %v2173
        %3499 = vmatmul.mubr.bf16.gmra.mxu0 %v2172
        %v3500 = vpop.f32.mrf.mxu0
        %v3501 = vadd.f32 0.0, %v3500
        %v3502 = vpop.f32.mrf.mxu0
        %v3503 = vadd.f32 0.0, %v3502
        %v3504 = vpop.f32.mrf.mxu0
        %v3505 = vadd.f32 0.0, %v3504
        %v3506 = vpop.f32.mrf.mxu0
        %v3507 = vadd.f32 0.0, %v3506
        %3508 = vmatprep.mubr.bf16.mxu0 %v2177
        %3509 = vmatmul.mubr.bf16.gmra.mxu0 %v2176
        %v3510 = vpop.f32.mrf.mxu0
        %v3511 = vadd.f32 0.0, %v3510
        %v3512 = vpop.f32.mrf.mxu0
        %v3513 = vadd.f32 0.0, %v3512
        %v3514 = vpop.f32.mrf.mxu0
        %v3515 = vadd.f32 0.0, %v3514
        %v3516 = vpop.f32.mrf.mxu0
        %v3517 = vadd.f32 0.0, %v3516
        %3518 = vmatprep.mubr.bf16.mxu0 %v2181
        %3519 = vmatmul.mubr.bf16.gmra.mxu0 %v2180
        %v3520 = vpop.f32.mrf.mxu0
        %v3521 = vadd.f32 0.0, %v3520
        %v3522 = vpop.f32.mrf.mxu0
        %v3523 = vadd.f32 0.0, %v3522
        %v3524 = vpop.f32.mrf.mxu0
        %v3525 = vadd.f32 0.0, %v3524
        %v3526 = vpop.f32.mrf.mxu0
        %v3527 = vadd.f32 0.0, %v3526
        %3528 = vmatprep.mubr.bf16.mxu0 %v2185
        %3529 = vmatmul.mubr.bf16.gmra.mxu0 %v2184
        %v3530 = vpop.f32.mrf.mxu0
        %v3531 = vadd.f32 0.0, %v3530
        %v3532 = vpop.f32.mrf.mxu0
        %v3533 = vadd.f32 0.0, %v3532
        %v3534 = vpop.f32.mrf.mxu0
        %v3535 = vadd.f32 0.0, %v3534
        %v3536 = vpop.f32.mrf.mxu0
        %v3537 = vadd.f32 0.0, %v3536
        %3538 = vmatprep.mubr.bf16.mxu0 %v2189
        %3539 = vmatmul.mubr.bf16.gmra.mxu0 %v2188
        %v3540 = vpop.f32.mrf.mxu0
        %v3541 = vadd.f32 0.0, %v3540
        %v3542 = vpop.f32.mrf.mxu0
        %v3543 = vadd.f32 0.0, %v3542
        %v3544 = vpop.f32.mrf.mxu0
        %v3545 = vadd.f32 0.0, %v3544
        %v3546 = vpop.f32.mrf.mxu0
        %v3547 = vadd.f32 0.0, %v3546
        %3548 = vmatprep.mubr.bf16.mxu0 %v2193
        %3549 = vmatmul.mubr.bf16.gmra.mxu0 %v2192
        %v3550 = vpop.f32.mrf.mxu0
        %v3551 = vadd.f32 0.0, %v3550
        %v3552 = vpop.f32.mrf.mxu0
        %v3553 = vadd.f32 0.0, %v3552
        %v3554 = vpop.f32.mrf.mxu0
        %v3555 = vadd.f32 0.0, %v3554
        %v3556 = vpop.f32.mrf.mxu0
        %v3557 = vadd.f32 0.0, %v3556
        %3558 = vmatprep.mubr.bf16.mxu0 %v2197
        %3559 = vmatmul.mubr.bf16.gmra.mxu0 %v2196
        %v3560 = vpop.f32.mrf.mxu0
        %v3561 = vadd.f32 0.0, %v3560
        %v3562 = vpop.f32.mrf.mxu0
        %v3563 = vadd.f32 0.0, %v3562
        %v3564 = vpop.f32.mrf.mxu0
        %v3565 = vadd.f32 0.0, %v3564
        %v3566 = vpop.f32.mrf.mxu0
        %v3567 = vadd.f32 0.0, %v3566
        %3568 = vmatprep.mubr.bf16.mxu0 %v2201
        %3569 = vmatmul.mubr.bf16.gmra.mxu0 %v2200
        %v3570 = vpop.f32.mrf.mxu0
        %v3571 = vadd.f32 0.0, %v3570
        %v3572 = vpop.f32.mrf.mxu0
        %v3573 = vadd.f32 0.0, %v3572
        %v3574 = vpop.f32.mrf.mxu0
        %v3575 = vadd.f32 0.0, %v3574
        %v3576 = vpop.f32.mrf.mxu0
        %v3577 = vadd.f32 0.0, %v3576
        %3578 = vmatprep.mubr.bf16.mxu0 %v2205
        %3579 = vmatmul.mubr.bf16.gmra.mxu0 %v2204
        %v3580 = vpop.f32.mrf.mxu0
        %v3581 = vadd.f32 0.0, %v3580
        %v3582 = vpop.f32.mrf.mxu0
        %v3583 = vadd.f32 0.0, %v3582
        %v3584 = vpop.f32.mrf.mxu0
        %v3585 = vadd.f32 0.0, %v3584
        %v3586 = vpop.f32.mrf.mxu0
        %v3587 = vadd.f32 0.0, %v3586
        %3588 = vmatprep.mubr.bf16.mxu0 %v2209
        %3589 = vmatmul.mubr.bf16.gmra.mxu0 %v2208
        %v3590 = vpop.f32.mrf.mxu0
        %v3591 = vadd.f32 0.0, %v3590
        %v3592 = vpop.f32.mrf.mxu0
        %v3593 = vadd.f32 0.0, %v3592
        %v3594 = vpop.f32.mrf.mxu0
        %v3595 = vadd.f32 0.0, %v3594
        %v3596 = vpop.f32.mrf.mxu0
        %v3597 = vadd.f32 0.0, %v3596
        %3598 = vmatprep.mubr.bf16.mxu0 %v2213
        %3599 = vmatmul.mubr.bf16.gmra.mxu0 %v2212
        %v3600 = vpop.f32.mrf.mxu0
        %v3601 = vadd.f32 0.0, %v3600
        %v3602 = vpop.f32.mrf.mxu0
        %v3603 = vadd.f32 0.0, %v3602
        %v3604 = vpop.f32.mrf.mxu0
        %v3605 = vadd.f32 0.0, %v3604
        %v3606 = vpop.f32.mrf.mxu0
        %v3607 = vadd.f32 0.0, %v3606
        %3608 = vmatprep.mubr.bf16.mxu0 %v2217
        %3609 = vmatmul.mubr.bf16.gmra.mxu0 %v2216
        %v3610 = vpop.f32.mrf.mxu0
        %v3611 = vadd.f32 0.0, %v3610
        %v3612 = vpop.f32.mrf.mxu0
        %v3613 = vadd.f32 0.0, %v3612
        %v3614 = vpop.f32.mrf.mxu0
        %v3615 = vadd.f32 0.0, %v3614
        %v3616 = vpop.f32.mrf.mxu0
        %v3617 = vadd.f32 0.0, %v3616
        %3618 = vmatprep.mubr.bf16.mxu0 %v2221
        %3619 = vmatmul.mubr.bf16.gmra.mxu0 %v2220
        %v3620 = vpop.f32.mrf.mxu0
        %v3621 = vadd.f32 0.0, %v3620
        %v3622 = vpop.f32.mrf.mxu0
        %v3623 = vadd.f32 0.0, %v3622
        %v3624 = vpop.f32.mrf.mxu0
        %v3625 = vadd.f32 0.0, %v3624
        %v3626 = vpop.f32.mrf.mxu0
        %v3627 = vadd.f32 0.0, %v3626
        %3628 = vmatprep.mubr.bf16.mxu0 %v2225
        %3629 = vmatmul.mubr.bf16.gmra.mxu0 %v2224
        %v3630 = vpop.f32.mrf.mxu0
        %v3631 = vadd.f32 0.0, %v3630
        %v3632 = vpop.f32.mrf.mxu0
        %v3633 = vadd.f32 0.0, %v3632
        %v3634 = vpop.f32.mrf.mxu0
        %v3635 = vadd.f32 0.0, %v3634
        %v3636 = vpop.f32.mrf.mxu0
        %v3637 = vadd.f32 0.0, %v3636
        %3638 = vmatprep.mubr.bf16.mxu0 %v2229
        %3639 = vmatmul.mubr.bf16.gmra.mxu0 %v2228
        %v3640 = vpop.f32.mrf.mxu0
        %v3641 = vadd.f32 0.0, %v3640
        %v3642 = vpop.f32.mrf.mxu0
        %v3643 = vadd.f32 0.0, %v3642
        %v3644 = vpop.f32.mrf.mxu0
        %v3645 = vadd.f32 0.0, %v3644
        %v3646 = vpop.f32.mrf.mxu0
        %v3647 = vadd.f32 0.0, %v3646
        %3648 = vmatprep.mubr.bf16.mxu0 %v2233
        %3649 = vmatmul.mubr.bf16.gmra.mxu0 %v2232
        %v3650 = vpop.f32.mrf.mxu0
        %v3651 = vadd.f32 0.0, %v3650
        %v3652 = vpop.f32.mrf.mxu0
        %v3653 = vadd.f32 0.0, %v3652
        %v3654 = vpop.f32.mrf.mxu0
        %v3655 = vadd.f32 0.0, %v3654
        %v3656 = vpop.f32.mrf.mxu0
        %v3657 = vadd.f32 0.0, %v3656
        %3658 = vmatprep.mubr.bf16.mxu0 %v2237
        %3659 = vmatmul.mubr.bf16.gmra.mxu0 %v2236
        %v3660 = vpop.f32.mrf.mxu0
        %v3661 = vadd.f32 0.0, %v3660
        %v3662 = vpop.f32.mrf.mxu0
        %v3663 = vadd.f32 0.0, %v3662
        %v3664 = vpop.f32.mrf.mxu0
        %v3665 = vadd.f32 0.0, %v3664
        %v3666 = vpop.f32.mrf.mxu0
        %v3667 = vadd.f32 0.0, %v3666
        %3668 = vmatprep.mubr.bf16.mxu0 %v2241
        %3669 = vmatmul.mubr.bf16.gmra.mxu0 %v2240
        %v3670 = vpop.f32.mrf.mxu0
        %v3671 = vadd.f32 0.0, %v3670
        %v3672 = vpop.f32.mrf.mxu0
        %v3673 = vadd.f32 0.0, %v3672
        %v3674 = vpop.f32.mrf.mxu0
        %v3675 = vadd.f32 0.0, %v3674
        %v3676 = vpop.f32.mrf.mxu0
        %v3677 = vadd.f32 0.0, %v3676
        %3678 = vmatprep.mubr.bf16.mxu0 %v2245
        %3679 = vmatmul.mubr.bf16.gmra.mxu0 %v2244
        %v3680 = vpop.f32.mrf.mxu0
        %v3681 = vadd.f32 0.0, %v3680
        %v3682 = vpop.f32.mrf.mxu0
        %v3683 = vadd.f32 0.0, %v3682
        %v3684 = vpop.f32.mrf.mxu0
        %v3685 = vadd.f32 0.0, %v3684
        %v3686 = vpop.f32.mrf.mxu0
        %v3687 = vadd.f32 0.0, %v3686
        %3688 = vdwg.mxu0
        %3689 = vmatprep.subr.bf16.mxu0 %v2894
        %3690 = vmatpush1.bf16.msra.mxu0 %v2893
        %3691 = vmatprep.subr.bf16.mxu0 %v2891
        %3692 = vmatpush1.bf16.msra.mxu0 %v2890
        %3693 = vmatprep.subr.bf16.mxu0 %v2888
        %3694 = vmatpush1.bf16.msra.mxu0 %v2887
        %3695 = vmatprep.subr.bf16.mxu0 %v2885
        %3696 = vmatpush1.bf16.msra.mxu0 %v2884
        %3697 = vmatprep.subr.bf16.mxu0 %v2882
        %3698 = vmatpush1.bf16.msra.mxu0 %v2881
        %3699 = vmatprep.subr.bf16.mxu0 %v2879
        %3700 = vmatpush1.bf16.msra.mxu0 %v2878
        %3701 = vmatprep.subr.bf16.mxu0 %v2876
        %3702 = vmatpush1.bf16.msra.mxu0 %v2875
        %3703 = vmatprep.subr.bf16.mxu0 %v2873
        %3704 = vmatpush1.bf16.msra.mxu0 %v2872
        %3705 = vmatprep.subr.bf16.mxu0 %v2918
        %3706 = vmatpush2.bf16.msra.mxu0 %v2917
        %3707 = vmatprep.subr.bf16.mxu0 %v2915
        %3708 = vmatpush2.bf16.msra.mxu0 %v2914
        %3709 = vmatprep.subr.bf16.mxu0 %v2912
        %3710 = vmatpush2.bf16.msra.mxu0 %v2911
        %3711 = vmatprep.subr.bf16.mxu0 %v2909
        %3712 = vmatpush2.bf16.msra.mxu0 %v2908
        %3713 = vmatprep.subr.bf16.mxu0 %v2906
        %3714 = vmatpush2.bf16.msra.mxu0 %v2905
        %3715 = vmatprep.subr.bf16.mxu0 %v2903
        %3716 = vmatpush2.bf16.msra.mxu0 %v2902
        %3717 = vmatprep.subr.bf16.mxu0 %v2900
        %3718 = vmatpush2.bf16.msra.mxu0 %v2899
        %3719 = vmatprep.subr.bf16.mxu0 %v2897
        %3720 = vmatpush2.bf16.msra.mxu0 %v2896
        %3721 = vmatprep.mubr.bf16.mxu0 %v1995
        %3722 = vmatmul.mubr.bf16.gmra.mxu0 %v1994
        %v3723 = vpop.f32.mrf.mxu0
        %v3724 = vadd.f32 %v3051, %v3723
        %v3725 = vpop.f32.mrf.mxu0
        %v3726 = vadd.f32 %v3053, %v3725
        %v3727 = vpop.f32.mrf.mxu0
        %v3728 = vadd.f32 %v3055, %v3727
        %v3729 = vpop.f32.mrf.mxu0
        %v3730 = vadd.f32 %v3057, %v3729
        %3731 = vmatprep.mubr.bf16.mxu0 %v1999
        %3732 = vmatmul.mubr.bf16.gmra.mxu0 %v1998
        %v3733 = vpop.f32.mrf.mxu0
        %v3734 = vadd.f32 %v3061, %v3733
        %v3735 = vpop.f32.mrf.mxu0
        %v3736 = vadd.f32 %v3063, %v3735
        %v3737 = vpop.f32.mrf.mxu0
        %v3738 = vadd.f32 %v3065, %v3737
        %v3739 = vpop.f32.mrf.mxu0
        %v3740 = vadd.f32 %v3067, %v3739
        %3741 = vmatprep.mubr.bf16.mxu0 %v2003
        %3742 = vmatmul.mubr.bf16.gmra.mxu0 %v2002
        %v3743 = vpop.f32.mrf.mxu0
        %v3744 = vadd.f32 %v3071, %v3743
        %v3745 = vpop.f32.mrf.mxu0
        %v3746 = vadd.f32 %v3073, %v3745
        %v3747 = vpop.f32.mrf.mxu0
        %v3748 = vadd.f32 %v3075, %v3747
        %v3749 = vpop.f32.mrf.mxu0
        %v3750 = vadd.f32 %v3077, %v3749
        %3751 = vmatprep.mubr.bf16.mxu0 %v2007
        %3752 = vmatmul.mubr.bf16.gmra.mxu0 %v2006
        %v3753 = vpop.f32.mrf.mxu0
        %v3754 = vadd.f32 %v3081, %v3753
        %v3755 = vpop.f32.mrf.mxu0
        %v3756 = vadd.f32 %v3083, %v3755
        %v3757 = vpop.f32.mrf.mxu0
        %v3758 = vadd.f32 %v3085, %v3757
        %v3759 = vpop.f32.mrf.mxu0
        %v3760 = vadd.f32 %v3087, %v3759
        %3761 = vmatprep.mubr.bf16.mxu0 %v2011
        %3762 = vmatmul.mubr.bf16.gmra.mxu0 %v2010
        %v3763 = vpop.f32.mrf.mxu0
        %v3764 = vadd.f32 %v3091, %v3763
        %v3765 = vpop.f32.mrf.mxu0
        %v3766 = vadd.f32 %v3093, %v3765
        %v3767 = vpop.f32.mrf.mxu0
        %v3768 = vadd.f32 %v3095, %v3767
        %v3769 = vpop.f32.mrf.mxu0
        %v3770 = vadd.f32 %v3097, %v3769
        %3771 = vmatprep.mubr.bf16.mxu0 %v2015
        %3772 = vmatmul.mubr.bf16.gmra.mxu0 %v2014
        %v3773 = vpop.f32.mrf.mxu0
        %v3774 = vadd.f32 %v3101, %v3773
        %v3775 = vpop.f32.mrf.mxu0
        %v3776 = vadd.f32 %v3103, %v3775
        %v3777 = vpop.f32.mrf.mxu0
        %v3778 = vadd.f32 %v3105, %v3777
        %v3779 = vpop.f32.mrf.mxu0
        %v3780 = vadd.f32 %v3107, %v3779
        %3781 = vmatprep.mubr.bf16.mxu0 %v2019
        %3782 = vmatmul.mubr.bf16.gmra.mxu0 %v2018
        %v3783 = vpop.f32.mrf.mxu0
        %v3784 = vadd.f32 %v3111, %v3783
        %v3785 = vpop.f32.mrf.mxu0
        %v3786 = vadd.f32 %v3113, %v3785
        %v3787 = vpop.f32.mrf.mxu0
        %v3788 = vadd.f32 %v3115, %v3787
        %v3789 = vpop.f32.mrf.mxu0
        %v3790 = vadd.f32 %v3117, %v3789
        %3791 = vmatprep.mubr.bf16.mxu0 %v2023
        %3792 = vmatmul.mubr.bf16.gmra.mxu0 %v2022
        %v3793 = vpop.f32.mrf.mxu0
        %v3794 = vadd.f32 %v3121, %v3793
        %v3795 = vpop.f32.mrf.mxu0
        %v3796 = vadd.f32 %v3123, %v3795
        %v3797 = vpop.f32.mrf.mxu0
        %v3798 = vadd.f32 %v3125, %v3797
        %v3799 = vpop.f32.mrf.mxu0
        %v3800 = vadd.f32 %v3127, %v3799
        %3801 = vmatprep.mubr.bf16.mxu0 %v2027
        %3802 = vmatmul.mubr.bf16.gmra.mxu0 %v2026
        %v3803 = vpop.f32.mrf.mxu0
        %v3804 = vadd.f32 %v3131, %v3803
        %v3805 = vpop.f32.mrf.mxu0
        %v3806 = vadd.f32 %v3133, %v3805
        %v3807 = vpop.f32.mrf.mxu0
        %v3808 = vadd.f32 %v3135, %v3807
        %v3809 = vpop.f32.mrf.mxu0
        %v3810 = vadd.f32 %v3137, %v3809
        %3811 = vmatprep.mubr.bf16.mxu0 %v2031
        %3812 = vmatmul.mubr.bf16.gmra.mxu0 %v2030
        %v3813 = vpop.f32.mrf.mxu0
        %v3814 = vadd.f32 %v3141, %v3813
        %v3815 = vpop.f32.mrf.mxu0
        %v3816 = vadd.f32 %v3143, %v3815
        %v3817 = vpop.f32.mrf.mxu0
        %v3818 = vadd.f32 %v3145, %v3817
        %v3819 = vpop.f32.mrf.mxu0
        %v3820 = vadd.f32 %v3147, %v3819
        %3821 = vmatprep.mubr.bf16.mxu0 %v2035
        %3822 = vmatmul.mubr.bf16.gmra.mxu0 %v2034
        %v3823 = vpop.f32.mrf.mxu0
        %v3824 = vadd.f32 %v3151, %v3823
        %v3825 = vpop.f32.mrf.mxu0
        %v3826 = vadd.f32 %v3153, %v3825
        %v3827 = vpop.f32.mrf.mxu0
        %v3828 = vadd.f32 %v3155, %v3827
        %v3829 = vpop.f32.mrf.mxu0
        %v3830 = vadd.f32 %v3157, %v3829
        %3831 = vmatprep.mubr.bf16.mxu0 %v2039
        %3832 = vmatmul.mubr.bf16.gmra.mxu0 %v2038
        %v3833 = vpop.f32.mrf.mxu0
        %v3834 = vadd.f32 %v3161, %v3833
        %v3835 = vpop.f32.mrf.mxu0
        %v3836 = vadd.f32 %v3163, %v3835
        %v3837 = vpop.f32.mrf.mxu0
        %v3838 = vadd.f32 %v3165, %v3837
        %v3839 = vpop.f32.mrf.mxu0
        %v3840 = vadd.f32 %v3167, %v3839
        %3841 = vmatprep.mubr.bf16.mxu0 %v2043
        %3842 = vmatmul.mubr.bf16.gmra.mxu0 %v2042
        %v3843 = vpop.f32.mrf.mxu0
        %v3844 = vadd.f32 %v3171, %v3843
        %v3845 = vpop.f32.mrf.mxu0
        %v3846 = vadd.f32 %v3173, %v3845
        %v3847 = vpop.f32.mrf.mxu0
        %v3848 = vadd.f32 %v3175, %v3847
        %v3849 = vpop.f32.mrf.mxu0
        %v3850 = vadd.f32 %v3177, %v3849
        %3851 = vmatprep.mubr.bf16.mxu0 %v2047
        %3852 = vmatmul.mubr.bf16.gmra.mxu0 %v2046
        %v3853 = vpop.f32.mrf.mxu0
        %v3854 = vadd.f32 %v3181, %v3853
        %v3855 = vpop.f32.mrf.mxu0
        %v3856 = vadd.f32 %v3183, %v3855
        %v3857 = vpop.f32.mrf.mxu0
        %v3858 = vadd.f32 %v3185, %v3857
        %v3859 = vpop.f32.mrf.mxu0
        %v3860 = vadd.f32 %v3187, %v3859
        %3861 = vmatprep.mubr.bf16.mxu0 %v2051
        %3862 = vmatmul.mubr.bf16.gmra.mxu0 %v2050
        %v3863 = vpop.f32.mrf.mxu0
        %v3864 = vadd.f32 %v3191, %v3863
        %v3865 = vpop.f32.mrf.mxu0
        %v3866 = vadd.f32 %v3193, %v3865
        %v3867 = vpop.f32.mrf.mxu0
        %v3868 = vadd.f32 %v3195, %v3867
        %v3869 = vpop.f32.mrf.mxu0
        %v3870 = vadd.f32 %v3197, %v3869
        %3871 = vmatprep.mubr.bf16.mxu0 %v2055
        %3872 = vmatmul.mubr.bf16.gmra.mxu0 %v2054
        %v3873 = vpop.f32.mrf.mxu0
        %v3874 = vadd.f32 %v3201, %v3873
        %v3875 = vpop.f32.mrf.mxu0
        %v3876 = vadd.f32 %v3203, %v3875
        %v3877 = vpop.f32.mrf.mxu0
        %v3878 = vadd.f32 %v3205, %v3877
        %v3879 = vpop.f32.mrf.mxu0
        %v3880 = vadd.f32 %v3207, %v3879
        %3881 = vmatprep.mubr.bf16.mxu0 %v2059
        %3882 = vmatmul.mubr.bf16.gmra.mxu0 %v2058
        %v3883 = vpop.f32.mrf.mxu0
        %v3884 = vadd.f32 %v3211, %v3883
        %v3885 = vpop.f32.mrf.mxu0
        %v3886 = vadd.f32 %v3213, %v3885
        %v3887 = vpop.f32.mrf.mxu0
        %v3888 = vadd.f32 %v3215, %v3887
        %v3889 = vpop.f32.mrf.mxu0
        %v3890 = vadd.f32 %v3217, %v3889
        %3891 = vmatprep.mubr.bf16.mxu0 %v2063
        %3892 = vmatmul.mubr.bf16.gmra.mxu0 %v2062
        %v3893 = vpop.f32.mrf.mxu0
        %v3894 = vadd.f32 %v3221, %v3893
        %v3895 = vpop.f32.mrf.mxu0
        %v3896 = vadd.f32 %v3223, %v3895
        %v3897 = vpop.f32.mrf.mxu0
        %v3898 = vadd.f32 %v3225, %v3897
        %v3899 = vpop.f32.mrf.mxu0
        %v3900 = vadd.f32 %v3227, %v3899
        %3901 = vmatprep.mubr.bf16.mxu0 %v2067
        %3902 = vmatmul.mubr.bf16.gmra.mxu0 %v2066
        %v3903 = vpop.f32.mrf.mxu0
        %v3904 = vadd.f32 %v3231, %v3903
        %v3905 = vpop.f32.mrf.mxu0
        %v3906 = vadd.f32 %v3233, %v3905
        %v3907 = vpop.f32.mrf.mxu0
        %v3908 = vadd.f32 %v3235, %v3907
        %v3909 = vpop.f32.mrf.mxu0
        %v3910 = vadd.f32 %v3237, %v3909
        %3911 = vmatprep.mubr.bf16.mxu0 %v2071
        %3912 = vmatmul.mubr.bf16.gmra.mxu0 %v2070
        %v3913 = vpop.f32.mrf.mxu0
        %v3914 = vadd.f32 %v3241, %v3913
        %v3915 = vpop.f32.mrf.mxu0
        %v3916 = vadd.f32 %v3243, %v3915
        %v3917 = vpop.f32.mrf.mxu0
        %v3918 = vadd.f32 %v3245, %v3917
        %v3919 = vpop.f32.mrf.mxu0
        %v3920 = vadd.f32 %v3247, %v3919
        %3921 = vmatprep.mubr.bf16.mxu0 %v2075
        %3922 = vmatmul.mubr.bf16.gmra.mxu0 %v2074
        %v3923 = vpop.f32.mrf.mxu0
        %v3924 = vadd.f32 %v3251, %v3923
        %v3925 = vpop.f32.mrf.mxu0
        %v3926 = vadd.f32 %v3253, %v3925
        %v3927 = vpop.f32.mrf.mxu0
        %v3928 = vadd.f32 %v3255, %v3927
        %v3929 = vpop.f32.mrf.mxu0
        %v3930 = vadd.f32 %v3257, %v3929
        %3931 = vmatprep.mubr.bf16.mxu0 %v2079
        %3932 = vmatmul.mubr.bf16.gmra.mxu0 %v2078
        %v3933 = vpop.f32.mrf.mxu0
        %v3934 = vadd.f32 %v3261, %v3933
        %v3935 = vpop.f32.mrf.mxu0
        %v3936 = vadd.f32 %v3263, %v3935
        %v3937 = vpop.f32.mrf.mxu0
        %v3938 = vadd.f32 %v3265, %v3937
        %v3939 = vpop.f32.mrf.mxu0
        %v3940 = vadd.f32 %v3267, %v3939
        %3941 = vmatprep.mubr.bf16.mxu0 %v2083
        %3942 = vmatmul.mubr.bf16.gmra.mxu0 %v2082
        %v3943 = vpop.f32.mrf.mxu0
        %v3944 = vadd.f32 %v3271, %v3943
        %v3945 = vpop.f32.mrf.mxu0
        %v3946 = vadd.f32 %v3273, %v3945
        %v3947 = vpop.f32.mrf.mxu0
        %v3948 = vadd.f32 %v3275, %v3947
        %v3949 = vpop.f32.mrf.mxu0
        %v3950 = vadd.f32 %v3277, %v3949
        %3951 = vmatprep.mubr.bf16.mxu0 %v2087
        %3952 = vmatmul.mubr.bf16.gmra.mxu0 %v2086
        %v3953 = vpop.f32.mrf.mxu0
        %v3954 = vadd.f32 %v3281, %v3953
        %v3955 = vpop.f32.mrf.mxu0
        %v3956 = vadd.f32 %v3283, %v3955
        %v3957 = vpop.f32.mrf.mxu0
        %v3958 = vadd.f32 %v3285, %v3957
        %v3959 = vpop.f32.mrf.mxu0
        %v3960 = vadd.f32 %v3287, %v3959
        %3961 = vmatprep.mubr.bf16.mxu0 %v2091
        %3962 = vmatmul.mubr.bf16.gmra.mxu0 %v2090
        %v3963 = vpop.f32.mrf.mxu0
        %v3964 = vadd.f32 %v3291, %v3963
        %v3965 = vpop.f32.mrf.mxu0
        %v3966 = vadd.f32 %v3293, %v3965
        %v3967 = vpop.f32.mrf.mxu0
        %v3968 = vadd.f32 %v3295, %v3967
        %v3969 = vpop.f32.mrf.mxu0
        %v3970 = vadd.f32 %v3297, %v3969
        %3971 = vmatprep.mubr.bf16.mxu0 %v2095
        %3972 = vmatmul.mubr.bf16.gmra.mxu0 %v2094
        %v3973 = vpop.f32.mrf.mxu0
        %v3974 = vadd.f32 %v3301, %v3973
        %v3975 = vpop.f32.mrf.mxu0
        %v3976 = vadd.f32 %v3303, %v3975
        %v3977 = vpop.f32.mrf.mxu0
        %v3978 = vadd.f32 %v3305, %v3977
        %v3979 = vpop.f32.mrf.mxu0
        %v3980 = vadd.f32 %v3307, %v3979
        %3981 = vmatprep.mubr.bf16.mxu0 %v2099
        %3982 = vmatmul.mubr.bf16.gmra.mxu0 %v2098
        %v3983 = vpop.f32.mrf.mxu0
        %v3984 = vadd.f32 %v3311, %v3983
        %v3985 = vpop.f32.mrf.mxu0
        %v3986 = vadd.f32 %v3313, %v3985
        %v3987 = vpop.f32.mrf.mxu0
        %v3988 = vadd.f32 %v3315, %v3987
        %v3989 = vpop.f32.mrf.mxu0
        %v3990 = vadd.f32 %v3317, %v3989
        %3991 = vmatprep.mubr.bf16.mxu0 %v2103
        %3992 = vmatmul.mubr.bf16.gmra.mxu0 %v2102
        %v3993 = vpop.f32.mrf.mxu0
        %v3994 = vadd.f32 %v3321, %v3993
        %v3995 = vpop.f32.mrf.mxu0
        %v3996 = vadd.f32 %v3323, %v3995
        %v3997 = vpop.f32.mrf.mxu0
        %v3998 = vadd.f32 %v3325, %v3997
        %v3999 = vpop.f32.mrf.mxu0
        %v4000 = vadd.f32 %v3327, %v3999
        %4001 = vmatprep.mubr.bf16.mxu0 %v2107
        %4002 = vmatmul.mubr.bf16.gmra.mxu0 %v2106
        %v4003 = vpop.f32.mrf.mxu0
        %v4004 = vadd.f32 %v3331, %v4003
        %v4005 = vpop.f32.mrf.mxu0
        %v4006 = vadd.f32 %v3333, %v4005
        %v4007 = vpop.f32.mrf.mxu0
        %v4008 = vadd.f32 %v3335, %v4007
        %v4009 = vpop.f32.mrf.mxu0
        %v4010 = vadd.f32 %v3337, %v4009
        %4011 = vmatprep.mubr.bf16.mxu0 %v2111
        %4012 = vmatmul.mubr.bf16.gmra.mxu0 %v2110
        %v4013 = vpop.f32.mrf.mxu0
        %v4014 = vadd.f32 %v3341, %v4013
        %v4015 = vpop.f32.mrf.mxu0
        %v4016 = vadd.f32 %v3343, %v4015
        %v4017 = vpop.f32.mrf.mxu0
        %v4018 = vadd.f32 %v3345, %v4017
        %v4019 = vpop.f32.mrf.mxu0
        %v4020 = vadd.f32 %v3347, %v4019
        %4021 = vmatprep.mubr.bf16.mxu0 %v2115
        %4022 = vmatmul.mubr.bf16.gmra.mxu0 %v2114
        %v4023 = vpop.f32.mrf.mxu0
        %v4024 = vadd.f32 %v3351, %v4023
        %v4025 = vpop.f32.mrf.mxu0
        %v4026 = vadd.f32 %v3353, %v4025
        %v4027 = vpop.f32.mrf.mxu0
        %v4028 = vadd.f32 %v3355, %v4027
        %v4029 = vpop.f32.mrf.mxu0
        %v4030 = vadd.f32 %v3357, %v4029
        %4031 = vmatprep.mubr.bf16.mxu0 %v2119
        %4032 = vmatmul.mubr.bf16.gmra.mxu0 %v2118
        %v4033 = vpop.f32.mrf.mxu0
        %v4034 = vadd.f32 %v3361, %v4033
        %v4035 = vpop.f32.mrf.mxu0
        %v4036 = vadd.f32 %v3363, %v4035
        %v4037 = vpop.f32.mrf.mxu0
        %v4038 = vadd.f32 %v3365, %v4037
        %v4039 = vpop.f32.mrf.mxu0
        %v4040 = vadd.f32 %v3367, %v4039
        %4041 = vmatprep.mubr.bf16.mxu0 %v2123
        %4042 = vmatmul.mubr.bf16.gmra.mxu0 %v2122
        %v4043 = vpop.f32.mrf.mxu0
        %v4044 = vadd.f32 %v3371, %v4043
        %v4045 = vpop.f32.mrf.mxu0
        %v4046 = vadd.f32 %v3373, %v4045
        %v4047 = vpop.f32.mrf.mxu0
        %v4048 = vadd.f32 %v3375, %v4047
        %v4049 = vpop.f32.mrf.mxu0
        %v4050 = vadd.f32 %v3377, %v4049
        %4051 = vmatprep.mubr.bf16.mxu0 %v2127
        %4052 = vmatmul.mubr.bf16.gmra.mxu0 %v2126
        %v4053 = vpop.f32.mrf.mxu0
        %v4054 = vadd.f32 %v3381, %v4053
        %v4055 = vpop.f32.mrf.mxu0
        %v4056 = vadd.f32 %v3383, %v4055
        %v4057 = vpop.f32.mrf.mxu0
        %v4058 = vadd.f32 %v3385, %v4057
        %v4059 = vpop.f32.mrf.mxu0
        %v4060 = vadd.f32 %v3387, %v4059
        %4061 = vmatprep.mubr.bf16.mxu0 %v2131
        %4062 = vmatmul.mubr.bf16.gmra.mxu0 %v2130
        %v4063 = vpop.f32.mrf.mxu0
        %v4064 = vadd.f32 %v3391, %v4063
        %v4065 = vpop.f32.mrf.mxu0
        %v4066 = vadd.f32 %v3393, %v4065
        %v4067 = vpop.f32.mrf.mxu0
        %v4068 = vadd.f32 %v3395, %v4067
        %v4069 = vpop.f32.mrf.mxu0
        %v4070 = vadd.f32 %v3397, %v4069
        %4071 = vmatprep.mubr.bf16.mxu0 %v2135
        %4072 = vmatmul.mubr.bf16.gmra.mxu0 %v2134
        %v4073 = vpop.f32.mrf.mxu0
        %v4074 = vadd.f32 %v3401, %v4073
        %v4075 = vpop.f32.mrf.mxu0
        %v4076 = vadd.f32 %v3403, %v4075
        %v4077 = vpop.f32.mrf.mxu0
        %v4078 = vadd.f32 %v3405, %v4077
        %v4079 = vpop.f32.mrf.mxu0
        %v4080 = vadd.f32 %v3407, %v4079
        %4081 = vmatprep.mubr.bf16.mxu0 %v2139
        %4082 = vmatmul.mubr.bf16.gmra.mxu0 %v2138
        %v4083 = vpop.f32.mrf.mxu0
        %v4084 = vadd.f32 %v3411, %v4083
        %v4085 = vpop.f32.mrf.mxu0
        %v4086 = vadd.f32 %v3413, %v4085
        %v4087 = vpop.f32.mrf.mxu0
        %v4088 = vadd.f32 %v3415, %v4087
        %v4089 = vpop.f32.mrf.mxu0
        %v4090 = vadd.f32 %v3417, %v4089
        %4091 = vmatprep.mubr.bf16.mxu0 %v2143
        %4092 = vmatmul.mubr.bf16.gmra.mxu0 %v2142
        %v4093 = vpop.f32.mrf.mxu0
        %v4094 = vadd.f32 %v3421, %v4093
        %v4095 = vpop.f32.mrf.mxu0
        %v4096 = vadd.f32 %v3423, %v4095
        %v4097 = vpop.f32.mrf.mxu0
        %v4098 = vadd.f32 %v3425, %v4097
        %v4099 = vpop.f32.mrf.mxu0
        %v4100 = vadd.f32 %v3427, %v4099
        %4101 = vmatprep.mubr.bf16.mxu0 %v2147
        %4102 = vmatmul.mubr.bf16.gmra.mxu0 %v2146
        %v4103 = vpop.f32.mrf.mxu0
        %v4104 = vadd.f32 %v3431, %v4103
        %v4105 = vpop.f32.mrf.mxu0
        %v4106 = vadd.f32 %v3433, %v4105
        %v4107 = vpop.f32.mrf.mxu0
        %v4108 = vadd.f32 %v3435, %v4107
        %v4109 = vpop.f32.mrf.mxu0
        %v4110 = vadd.f32 %v3437, %v4109
        %4111 = vmatprep.mubr.bf16.mxu0 %v2151
        %4112 = vmatmul.mubr.bf16.gmra.mxu0 %v2150
        %v4113 = vpop.f32.mrf.mxu0
        %v4114 = vadd.f32 %v3441, %v4113
        %v4115 = vpop.f32.mrf.mxu0
        %v4116 = vadd.f32 %v3443, %v4115
        %v4117 = vpop.f32.mrf.mxu0
        %v4118 = vadd.f32 %v3445, %v4117
        %v4119 = vpop.f32.mrf.mxu0
        %v4120 = vadd.f32 %v3447, %v4119
        %4121 = vmatprep.mubr.bf16.mxu0 %v2155
        %4122 = vmatmul.mubr.bf16.gmra.mxu0 %v2154
        %v4123 = vpop.f32.mrf.mxu0
        %v4124 = vadd.f32 %v3451, %v4123
        %v4125 = vpop.f32.mrf.mxu0
        %v4126 = vadd.f32 %v3453, %v4125
        %v4127 = vpop.f32.mrf.mxu0
        %v4128 = vadd.f32 %v3455, %v4127
        %v4129 = vpop.f32.mrf.mxu0
        %v4130 = vadd.f32 %v3457, %v4129
        %4131 = vmatprep.mubr.bf16.mxu0 %v2159
        %4132 = vmatmul.mubr.bf16.gmra.mxu0 %v2158
        %v4133 = vpop.f32.mrf.mxu0
        %v4134 = vadd.f32 %v3461, %v4133
        %v4135 = vpop.f32.mrf.mxu0
        %v4136 = vadd.f32 %v3463, %v4135
        %v4137 = vpop.f32.mrf.mxu0
        %v4138 = vadd.f32 %v3465, %v4137
        %v4139 = vpop.f32.mrf.mxu0
        %v4140 = vadd.f32 %v3467, %v4139
        %4141 = vmatprep.mubr.bf16.mxu0 %v2163
        %4142 = vmatmul.mubr.bf16.gmra.mxu0 %v2162
        %v4143 = vpop.f32.mrf.mxu0
        %v4144 = vadd.f32 %v3471, %v4143
        %v4145 = vpop.f32.mrf.mxu0
        %v4146 = vadd.f32 %v3473, %v4145
        %v4147 = vpop.f32.mrf.mxu0
        %v4148 = vadd.f32 %v3475, %v4147
        %v4149 = vpop.f32.mrf.mxu0
        %v4150 = vadd.f32 %v3477, %v4149
        %4151 = vmatprep.mubr.bf16.mxu0 %v2167
        %4152 = vmatmul.mubr.bf16.gmra.mxu0 %v2166
        %v4153 = vpop.f32.mrf.mxu0
        %v4154 = vadd.f32 %v3481, %v4153
        %v4155 = vpop.f32.mrf.mxu0
        %v4156 = vadd.f32 %v3483, %v4155
        %v4157 = vpop.f32.mrf.mxu0
        %v4158 = vadd.f32 %v3485, %v4157
        %v4159 = vpop.f32.mrf.mxu0
        %v4160 = vadd.f32 %v3487, %v4159
        %4161 = vmatprep.mubr.bf16.mxu0 %v2171
        %4162 = vmatmul.mubr.bf16.gmra.mxu0 %v2170
        %v4163 = vpop.f32.mrf.mxu0
        %v4164 = vadd.f32 %v3491, %v4163
        %v4165 = vpop.f32.mrf.mxu0
        %v4166 = vadd.f32 %v3493, %v4165
        %v4167 = vpop.f32.mrf.mxu0
        %v4168 = vadd.f32 %v3495, %v4167
        %v4169 = vpop.f32.mrf.mxu0
        %v4170 = vadd.f32 %v3497, %v4169
        %4171 = vmatprep.mubr.bf16.mxu0 %v2175
        %4172 = vmatmul.mubr.bf16.gmra.mxu0 %v2174
        %v4173 = vpop.f32.mrf.mxu0
        %v4174 = vadd.f32 %v3501, %v4173
        %v4175 = vpop.f32.mrf.mxu0
        %v4176 = vadd.f32 %v3503, %v4175
        %v4177 = vpop.f32.mrf.mxu0
        %v4178 = vadd.f32 %v3505, %v4177
        %v4179 = vpop.f32.mrf.mxu0
        %v4180 = vadd.f32 %v3507, %v4179
        %4181 = vmatprep.mubr.bf16.mxu0 %v2179
        %4182 = vmatmul.mubr.bf16.gmra.mxu0 %v2178
        %v4183 = vpop.f32.mrf.mxu0
        %v4184 = vadd.f32 %v3511, %v4183
        %v4185 = vpop.f32.mrf.mxu0
        %v4186 = vadd.f32 %v3513, %v4185
        %v4187 = vpop.f32.mrf.mxu0
        %v4188 = vadd.f32 %v3515, %v4187
        %v4189 = vpop.f32.mrf.mxu0
        %v4190 = vadd.f32 %v3517, %v4189
        %4191 = vmatprep.mubr.bf16.mxu0 %v2183
        %4192 = vmatmul.mubr.bf16.gmra.mxu0 %v2182
        %v4193 = vpop.f32.mrf.mxu0
        %v4194 = vadd.f32 %v3521, %v4193
        %v4195 = vpop.f32.mrf.mxu0
        %v4196 = vadd.f32 %v3523, %v4195
        %v4197 = vpop.f32.mrf.mxu0
        %v4198 = vadd.f32 %v3525, %v4197
        %v4199 = vpop.f32.mrf.mxu0
        %v4200 = vadd.f32 %v3527, %v4199
        %4201 = vmatprep.mubr.bf16.mxu0 %v2187
        %4202 = vmatmul.mubr.bf16.gmra.mxu0 %v2186
        %v4203 = vpop.f32.mrf.mxu0
        %v4204 = vadd.f32 %v3531, %v4203
        %v4205 = vpop.f32.mrf.mxu0
        %v4206 = vadd.f32 %v3533, %v4205
        %v4207 = vpop.f32.mrf.mxu0
        %v4208 = vadd.f32 %v3535, %v4207
        %v4209 = vpop.f32.mrf.mxu0
        %v4210 = vadd.f32 %v3537, %v4209
        %4211 = vmatprep.mubr.bf16.mxu0 %v2191
        %4212 = vmatmul.mubr.bf16.gmra.mxu0 %v2190
        %v4213 = vpop.f32.mrf.mxu0
        %v4214 = vadd.f32 %v3541, %v4213
        %v4215 = vpop.f32.mrf.mxu0
        %v4216 = vadd.f32 %v3543, %v4215
        %v4217 = vpop.f32.mrf.mxu0
        %v4218 = vadd.f32 %v3545, %v4217
        %v4219 = vpop.f32.mrf.mxu0
        %v4220 = vadd.f32 %v3547, %v4219
        %4221 = vmatprep.mubr.bf16.mxu0 %v2195
        %4222 = vmatmul.mubr.bf16.gmra.mxu0 %v2194
        %v4223 = vpop.f32.mrf.mxu0
        %v4224 = vadd.f32 %v3551, %v4223
        %v4225 = vpop.f32.mrf.mxu0
        %v4226 = vadd.f32 %v3553, %v4225
        %v4227 = vpop.f32.mrf.mxu0
        %v4228 = vadd.f32 %v3555, %v4227
        %v4229 = vpop.f32.mrf.mxu0
        %v4230 = vadd.f32 %v3557, %v4229
        %4231 = vmatprep.mubr.bf16.mxu0 %v2199
        %4232 = vmatmul.mubr.bf16.gmra.mxu0 %v2198
        %v4233 = vpop.f32.mrf.mxu0
        %v4234 = vadd.f32 %v3561, %v4233
        %v4235 = vpop.f32.mrf.mxu0
        %v4236 = vadd.f32 %v3563, %v4235
        %v4237 = vpop.f32.mrf.mxu0
        %v4238 = vadd.f32 %v3565, %v4237
        %v4239 = vpop.f32.mrf.mxu0
        %v4240 = vadd.f32 %v3567, %v4239
        %4241 = vmatprep.mubr.bf16.mxu0 %v2203
        %4242 = vmatmul.mubr.bf16.gmra.mxu0 %v2202
        %v4243 = vpop.f32.mrf.mxu0
        %v4244 = vadd.f32 %v3571, %v4243
        %v4245 = vpop.f32.mrf.mxu0
        %v4246 = vadd.f32 %v3573, %v4245
        %v4247 = vpop.f32.mrf.mxu0
        %v4248 = vadd.f32 %v3575, %v4247
        %v4249 = vpop.f32.mrf.mxu0
        %v4250 = vadd.f32 %v3577, %v4249
        %4251 = vmatprep.mubr.bf16.mxu0 %v2207
        %4252 = vmatmul.mubr.bf16.gmra.mxu0 %v2206
        %v4253 = vpop.f32.mrf.mxu0
        %v4254 = vadd.f32 %v3581, %v4253
        %v4255 = vpop.f32.mrf.mxu0
        %v4256 = vadd.f32 %v3583, %v4255
        %v4257 = vpop.f32.mrf.mxu0
        %v4258 = vadd.f32 %v3585, %v4257
        %v4259 = vpop.f32.mrf.mxu0
        %v4260 = vadd.f32 %v3587, %v4259
        %4261 = vmatprep.mubr.bf16.mxu0 %v2211
        %4262 = vmatmul.mubr.bf16.gmra.mxu0 %v2210
        %v4263 = vpop.f32.mrf.mxu0
        %v4264 = vadd.f32 %v3591, %v4263
        %v4265 = vpop.f32.mrf.mxu0
        %v4266 = vadd.f32 %v3593, %v4265
        %v4267 = vpop.f32.mrf.mxu0
        %v4268 = vadd.f32 %v3595, %v4267
        %v4269 = vpop.f32.mrf.mxu0
        %v4270 = vadd.f32 %v3597, %v4269
        %4271 = vmatprep.mubr.bf16.mxu0 %v2215
        %4272 = vmatmul.mubr.bf16.gmra.mxu0 %v2214
        %v4273 = vpop.f32.mrf.mxu0
        %v4274 = vadd.f32 %v3601, %v4273
        %v4275 = vpop.f32.mrf.mxu0
        %v4276 = vadd.f32 %v3603, %v4275
        %v4277 = vpop.f32.mrf.mxu0
        %v4278 = vadd.f32 %v3605, %v4277
        %v4279 = vpop.f32.mrf.mxu0
        %v4280 = vadd.f32 %v3607, %v4279
        %4281 = vmatprep.mubr.bf16.mxu0 %v2219
        %4282 = vmatmul.mubr.bf16.gmra.mxu0 %v2218
        %v4283 = vpop.f32.mrf.mxu0
        %v4284 = vadd.f32 %v3611, %v4283
        %v4285 = vpop.f32.mrf.mxu0
        %v4286 = vadd.f32 %v3613, %v4285
        %v4287 = vpop.f32.mrf.mxu0
        %v4288 = vadd.f32 %v3615, %v4287
        %v4289 = vpop.f32.mrf.mxu0
        %v4290 = vadd.f32 %v3617, %v4289
        %4291 = vmatprep.mubr.bf16.mxu0 %v2223
        %4292 = vmatmul.mubr.bf16.gmra.mxu0 %v2222
        %v4293 = vpop.f32.mrf.mxu0
        %v4294 = vadd.f32 %v3621, %v4293
        %v4295 = vpop.f32.mrf.mxu0
        %v4296 = vadd.f32 %v3623, %v4295
        %v4297 = vpop.f32.mrf.mxu0
        %v4298 = vadd.f32 %v3625, %v4297
        %v4299 = vpop.f32.mrf.mxu0
        %v4300 = vadd.f32 %v3627, %v4299
        %4301 = vmatprep.mubr.bf16.mxu0 %v2227
        %4302 = vmatmul.mubr.bf16.gmra.mxu0 %v2226
        %v4303 = vpop.f32.mrf.mxu0
        %v4304 = vadd.f32 %v3631, %v4303
        %v4305 = vpop.f32.mrf.mxu0
        %v4306 = vadd.f32 %v3633, %v4305
        %v4307 = vpop.f32.mrf.mxu0
        %v4308 = vadd.f32 %v3635, %v4307
        %v4309 = vpop.f32.mrf.mxu0
        %v4310 = vadd.f32 %v3637, %v4309
        %4311 = vmatprep.mubr.bf16.mxu0 %v2231
        %4312 = vmatmul.mubr.bf16.gmra.mxu0 %v2230
        %v4313 = vpop.f32.mrf.mxu0
        %v4314 = vadd.f32 %v3641, %v4313
        %v4315 = vpop.f32.mrf.mxu0
        %v4316 = vadd.f32 %v3643, %v4315
        %v4317 = vpop.f32.mrf.mxu0
        %v4318 = vadd.f32 %v3645, %v4317
        %v4319 = vpop.f32.mrf.mxu0
        %v4320 = vadd.f32 %v3647, %v4319
        %4321 = vmatprep.mubr.bf16.mxu0 %v2235
        %4322 = vmatmul.mubr.bf16.gmra.mxu0 %v2234
        %v4323 = vpop.f32.mrf.mxu0
        %v4324 = vadd.f32 %v3651, %v4323
        %v4325 = vpop.f32.mrf.mxu0
        %v4326 = vadd.f32 %v3653, %v4325
        %v4327 = vpop.f32.mrf.mxu0
        %v4328 = vadd.f32 %v3655, %v4327
        %v4329 = vpop.f32.mrf.mxu0
        %v4330 = vadd.f32 %v3657, %v4329
        %4331 = vmatprep.mubr.bf16.mxu0 %v2239
        %4332 = vmatmul.mubr.bf16.gmra.mxu0 %v2238
        %v4333 = vpop.f32.mrf.mxu0
        %v4334 = vadd.f32 %v3661, %v4333
        %v4335 = vpop.f32.mrf.mxu0
        %v4336 = vadd.f32 %v3663, %v4335
        %v4337 = vpop.f32.mrf.mxu0
        %v4338 = vadd.f32 %v3665, %v4337
        %v4339 = vpop.f32.mrf.mxu0
        %v4340 = vadd.f32 %v3667, %v4339
        %4341 = vmatprep.mubr.bf16.mxu0 %v2243
        %4342 = vmatmul.mubr.bf16.gmra.mxu0 %v2242
        %v4343 = vpop.f32.mrf.mxu0
        %v4344 = vadd.f32 %v3671, %v4343
        %v4345 = vpop.f32.mrf.mxu0
        %v4346 = vadd.f32 %v3673, %v4345
        %v4347 = vpop.f32.mrf.mxu0
        %v4348 = vadd.f32 %v3675, %v4347
        %v4349 = vpop.f32.mrf.mxu0
        %v4350 = vadd.f32 %v3677, %v4349
        %4351 = vmatprep.mubr.bf16.mxu0 %v2247
        %4352 = vmatmul.mubr.bf16.gmra.mxu0 %v2246
        %v4353 = vpop.f32.mrf.mxu0
        %v4354 = vadd.f32 %v3681, %v4353
        %v4355 = vpop.f32.mrf.mxu0
        %v4356 = vadd.f32 %v3683, %v4355
        %v4357 = vpop.f32.mrf.mxu0
        %v4358 = vadd.f32 %v3685, %v4357
        %v4359 = vpop.f32.mrf.mxu0
        %v4360 = vadd.f32 %v3687, %v4359
        %4361 = vdwg.mxu0
        %4362 = vmatprep.subr.bf16.mxu0 0
        %4363 = vmatpush1.bf16.msra.mxu0 %v2847
        %4364 = vmatprep.subr.bf16.mxu0 0
        %4365 = vmatpush1.bf16.msra.mxu0 %v2844
        %4366 = vmatprep.subr.bf16.mxu0 0
        %4367 = vmatpush1.bf16.msra.mxu0 %v2841
        %4368 = vmatprep.subr.bf16.mxu0 0
        %4369 = vmatpush1.bf16.msra.mxu0 %v2838
        %4370 = vmatprep.subr.bf16.mxu0 0
        %4371 = vmatpush1.bf16.msra.mxu0 %v2835
        %4372 = vmatprep.subr.bf16.mxu0 0
        %4373 = vmatpush1.bf16.msra.mxu0 %v2832
        %4374 = vmatprep.subr.bf16.mxu0 0
        %4375 = vmatpush1.bf16.msra.mxu0 %v2829
        %4376 = vmatprep.subr.bf16.mxu0 0
        %4377 = vmatpush1.bf16.msra.mxu0 %v2826
        %4378 = vmatprep.subr.bf16.mxu0 0
        %4379 = vmatpush2.bf16.msra.mxu0 %v2871
        %4380 = vmatprep.subr.bf16.mxu0 0
        %4381 = vmatpush2.bf16.msra.mxu0 %v2868
        %4382 = vmatprep.subr.bf16.mxu0 0
        %4383 = vmatpush2.bf16.msra.mxu0 %v2865
        %4384 = vmatprep.subr.bf16.mxu0 0
        %4385 = vmatpush2.bf16.msra.mxu0 %v2862
        %4386 = vmatprep.subr.bf16.mxu0 0
        %4387 = vmatpush2.bf16.msra.mxu0 %v2859
        %4388 = vmatprep.subr.bf16.mxu0 0
        %4389 = vmatpush2.bf16.msra.mxu0 %v2856
        %4390 = vmatprep.subr.bf16.mxu0 0
        %4391 = vmatpush2.bf16.msra.mxu0 %v2853
        %4392 = vmatprep.subr.bf16.mxu0 0
        %4393 = vmatpush2.bf16.msra.mxu0 %v2850
        %4394 = vmatprep.mubr.bf16.mxu0 %v1993
        %4395 = vmatmul.mubr.bf16.gmra.mxu0 %v1992
        %v4396 = vpop.f32.mrf.mxu0
        %v4397 = vadd.f32 0.0, %v4396
        %v4398 = vpop.f32.mrf.mxu0
        %v4399 = vpop.f32.mrf.mxu0
        %v4400 = vadd.f32 0.0, %v4399
        %v4401 = vpop.f32.mrf.mxu0
        %4402 = vmatprep.mubr.bf16.mxu0 %v1997
        %4403 = vmatmul.mubr.bf16.gmra.mxu0 %v1996
        %v4404 = vpop.f32.mrf.mxu0
        %v4405 = vadd.f32 0.0, %v4404
        %v4406 = vpop.f32.mrf.mxu0
        %v4407 = vpop.f32.mrf.mxu0
        %v4408 = vadd.f32 0.0, %v4407
        %v4409 = vpop.f32.mrf.mxu0
        %4410 = vmatprep.mubr.bf16.mxu0 %v2001
        %4411 = vmatmul.mubr.bf16.gmra.mxu0 %v2000
        %v4412 = vpop.f32.mrf.mxu0
        %v4413 = vadd.f32 0.0, %v4412
        %v4414 = vpop.f32.mrf.mxu0
        %v4415 = vpop.f32.mrf.mxu0
        %v4416 = vadd.f32 0.0, %v4415
        %v4417 = vpop.f32.mrf.mxu0
        %4418 = vmatprep.mubr.bf16.mxu0 %v2005
        %4419 = vmatmul.mubr.bf16.gmra.mxu0 %v2004
        %v4420 = vpop.f32.mrf.mxu0
        %v4421 = vadd.f32 0.0, %v4420
        %v4422 = vpop.f32.mrf.mxu0
        %v4423 = vpop.f32.mrf.mxu0
        %v4424 = vadd.f32 0.0, %v4423
        %v4425 = vpop.f32.mrf.mxu0
        %4426 = vmatprep.mubr.bf16.mxu0 %v2009
        %4427 = vmatmul.mubr.bf16.gmra.mxu0 %v2008
        %v4428 = vpop.f32.mrf.mxu0
        %v4429 = vadd.f32 0.0, %v4428
        %v4430 = vpop.f32.mrf.mxu0
        %v4431 = vpop.f32.mrf.mxu0
        %v4432 = vadd.f32 0.0, %v4431
        %v4433 = vpop.f32.mrf.mxu0
        %4434 = vmatprep.mubr.bf16.mxu0 %v2013
        %4435 = vmatmul.mubr.bf16.gmra.mxu0 %v2012
        %v4436 = vpop.f32.mrf.mxu0
        %v4437 = vadd.f32 0.0, %v4436
        %v4438 = vpop.f32.mrf.mxu0
        %v4439 = vpop.f32.mrf.mxu0
        %v4440 = vadd.f32 0.0, %v4439
        %v4441 = vpop.f32.mrf.mxu0
        %4442 = vmatprep.mubr.bf16.mxu0 %v2017
        %4443 = vmatmul.mubr.bf16.gmra.mxu0 %v2016
        %v4444 = vpop.f32.mrf.mxu0
        %v4445 = vadd.f32 0.0, %v4444
        %v4446 = vpop.f32.mrf.mxu0
        %v4447 = vpop.f32.mrf.mxu0
        %v4448 = vadd.f32 0.0, %v4447
        %v4449 = vpop.f32.mrf.mxu0
        %4450 = vmatprep.mubr.bf16.mxu0 %v2021
        %4451 = vmatmul.mubr.bf16.gmra.mxu0 %v2020
        %v4452 = vpop.f32.mrf.mxu0
        %v4453 = vadd.f32 0.0, %v4452
        %v4454 = vpop.f32.mrf.mxu0
        %v4455 = vpop.f32.mrf.mxu0
        %v4456 = vadd.f32 0.0, %v4455
        %v4457 = vpop.f32.mrf.mxu0
        %4458 = vmatprep.mubr.bf16.mxu0 %v2025
        %4459 = vmatmul.mubr.bf16.gmra.mxu0 %v2024
        %v4460 = vpop.f32.mrf.mxu0
        %v4461 = vadd.f32 0.0, %v4460
        %v4462 = vpop.f32.mrf.mxu0
        %v4463 = vpop.f32.mrf.mxu0
        %v4464 = vadd.f32 0.0, %v4463
        %v4465 = vpop.f32.mrf.mxu0
        %4466 = vmatprep.mubr.bf16.mxu0 %v2029
        %4467 = vmatmul.mubr.bf16.gmra.mxu0 %v2028
        %v4468 = vpop.f32.mrf.mxu0
        %v4469 = vadd.f32 0.0, %v4468
        %v4470 = vpop.f32.mrf.mxu0
        %v4471 = vpop.f32.mrf.mxu0
        %v4472 = vadd.f32 0.0, %v4471
        %v4473 = vpop.f32.mrf.mxu0
        %4474 = vmatprep.mubr.bf16.mxu0 %v2033
        %4475 = vmatmul.mubr.bf16.gmra.mxu0 %v2032
        %v4476 = vpop.f32.mrf.mxu0
        %v4477 = vadd.f32 0.0, %v4476
        %v4478 = vpop.f32.mrf.mxu0
        %v4479 = vpop.f32.mrf.mxu0
        %v4480 = vadd.f32 0.0, %v4479
        %v4481 = vpop.f32.mrf.mxu0
        %4482 = vmatprep.mubr.bf16.mxu0 %v2037
        %4483 = vmatmul.mubr.bf16.gmra.mxu0 %v2036
        %v4484 = vpop.f32.mrf.mxu0
        %v4485 = vadd.f32 0.0, %v4484
        %v4486 = vpop.f32.mrf.mxu0
        %v4487 = vpop.f32.mrf.mxu0
        %v4488 = vadd.f32 0.0, %v4487
        %v4489 = vpop.f32.mrf.mxu0
        %4490 = vmatprep.mubr.bf16.mxu0 %v2041
        %4491 = vmatmul.mubr.bf16.gmra.mxu0 %v2040
        %v4492 = vpop.f32.mrf.mxu0
        %v4493 = vadd.f32 0.0, %v4492
        %v4494 = vpop.f32.mrf.mxu0
        %v4495 = vpop.f32.mrf.mxu0
        %v4496 = vadd.f32 0.0, %v4495
        %v4497 = vpop.f32.mrf.mxu0
        %4498 = vmatprep.mubr.bf16.mxu0 %v2045
        %4499 = vmatmul.mubr.bf16.gmra.mxu0 %v2044
        %v4500 = vpop.f32.mrf.mxu0
        %v4501 = vadd.f32 0.0, %v4500
        %v4502 = vpop.f32.mrf.mxu0
        %v4503 = vpop.f32.mrf.mxu0
        %v4504 = vadd.f32 0.0, %v4503
        %v4505 = vpop.f32.mrf.mxu0
        %4506 = vmatprep.mubr.bf16.mxu0 %v2049
        %4507 = vmatmul.mubr.bf16.gmra.mxu0 %v2048
        %v4508 = vpop.f32.mrf.mxu0
        %v4509 = vadd.f32 0.0, %v4508
        %v4510 = vpop.f32.mrf.mxu0
        %v4511 = vpop.f32.mrf.mxu0
        %v4512 = vadd.f32 0.0, %v4511
        %v4513 = vpop.f32.mrf.mxu0
        %4514 = vmatprep.mubr.bf16.mxu0 %v2053
        %4515 = vmatmul.mubr.bf16.gmra.mxu0 %v2052
        %v4516 = vpop.f32.mrf.mxu0
        %v4517 = vadd.f32 0.0, %v4516
        %v4518 = vpop.f32.mrf.mxu0
        %v4519 = vpop.f32.mrf.mxu0
        %v4520 = vadd.f32 0.0, %v4519
        %v4521 = vpop.f32.mrf.mxu0
        %4522 = vmatprep.mubr.bf16.mxu0 %v2057
        %4523 = vmatmul.mubr.bf16.gmra.mxu0 %v2056
        %v4524 = vpop.f32.mrf.mxu0
        %v4525 = vadd.f32 0.0, %v4524
        %v4526 = vpop.f32.mrf.mxu0
        %v4527 = vpop.f32.mrf.mxu0
        %v4528 = vadd.f32 0.0, %v4527
        %v4529 = vpop.f32.mrf.mxu0
        %4530 = vmatprep.mubr.bf16.mxu0 %v2061
        %4531 = vmatmul.mubr.bf16.gmra.mxu0 %v2060
        %v4532 = vpop.f32.mrf.mxu0
        %v4533 = vadd.f32 0.0, %v4532
        %v4534 = vpop.f32.mrf.mxu0
        %v4535 = vpop.f32.mrf.mxu0
        %v4536 = vadd.f32 0.0, %v4535
        %v4537 = vpop.f32.mrf.mxu0
        %4538 = vmatprep.mubr.bf16.mxu0 %v2065
        %4539 = vmatmul.mubr.bf16.gmra.mxu0 %v2064
        %v4540 = vpop.f32.mrf.mxu0
        %v4541 = vadd.f32 0.0, %v4540
        %v4542 = vpop.f32.mrf.mxu0
        %v4543 = vpop.f32.mrf.mxu0
        %v4544 = vadd.f32 0.0, %v4543
        %v4545 = vpop.f32.mrf.mxu0
        %4546 = vmatprep.mubr.bf16.mxu0 %v2069
        %4547 = vmatmul.mubr.bf16.gmra.mxu0 %v2068
        %v4548 = vpop.f32.mrf.mxu0
        %v4549 = vadd.f32 0.0, %v4548
        %v4550 = vpop.f32.mrf.mxu0
        %v4551 = vpop.f32.mrf.mxu0
        %v4552 = vadd.f32 0.0, %v4551
        %v4553 = vpop.f32.mrf.mxu0
        %4554 = vmatprep.mubr.bf16.mxu0 %v2073
        %4555 = vmatmul.mubr.bf16.gmra.mxu0 %v2072
        %v4556 = vpop.f32.mrf.mxu0
        %v4557 = vadd.f32 0.0, %v4556
        %v4558 = vpop.f32.mrf.mxu0
        %v4559 = vpop.f32.mrf.mxu0
        %v4560 = vadd.f32 0.0, %v4559
        %v4561 = vpop.f32.mrf.mxu0
        %4562 = vmatprep.mubr.bf16.mxu0 %v2077
        %4563 = vmatmul.mubr.bf16.gmra.mxu0 %v2076
        %v4564 = vpop.f32.mrf.mxu0
        %v4565 = vadd.f32 0.0, %v4564
        %v4566 = vpop.f32.mrf.mxu0
        %v4567 = vpop.f32.mrf.mxu0
        %v4568 = vadd.f32 0.0, %v4567
        %v4569 = vpop.f32.mrf.mxu0
        %4570 = vmatprep.mubr.bf16.mxu0 %v2081
        %4571 = vmatmul.mubr.bf16.gmra.mxu0 %v2080
        %v4572 = vpop.f32.mrf.mxu0
        %v4573 = vadd.f32 0.0, %v4572
        %v4574 = vpop.f32.mrf.mxu0
        %v4575 = vpop.f32.mrf.mxu0
        %v4576 = vadd.f32 0.0, %v4575
        %v4577 = vpop.f32.mrf.mxu0
        %4578 = vmatprep.mubr.bf16.mxu0 %v2085
        %4579 = vmatmul.mubr.bf16.gmra.mxu0 %v2084
        %v4580 = vpop.f32.mrf.mxu0
        %v4581 = vadd.f32 0.0, %v4580
        %v4582 = vpop.f32.mrf.mxu0
        %v4583 = vpop.f32.mrf.mxu0
        %v4584 = vadd.f32 0.0, %v4583
        %v4585 = vpop.f32.mrf.mxu0
        %4586 = vmatprep.mubr.bf16.mxu0 %v2089
        %4587 = vmatmul.mubr.bf16.gmra.mxu0 %v2088
        %v4588 = vpop.f32.mrf.mxu0
        %v4589 = vadd.f32 0.0, %v4588
        %v4590 = vpop.f32.mrf.mxu0
        %v4591 = vpop.f32.mrf.mxu0
        %v4592 = vadd.f32 0.0, %v4591
        %v4593 = vpop.f32.mrf.mxu0
        %4594 = vmatprep.mubr.bf16.mxu0 %v2093
        %4595 = vmatmul.mubr.bf16.gmra.mxu0 %v2092
        %v4596 = vpop.f32.mrf.mxu0
        %v4597 = vadd.f32 0.0, %v4596
        %v4598 = vpop.f32.mrf.mxu0
        %v4599 = vpop.f32.mrf.mxu0
        %v4600 = vadd.f32 0.0, %v4599
        %v4601 = vpop.f32.mrf.mxu0
        %4602 = vmatprep.mubr.bf16.mxu0 %v2097
        %4603 = vmatmul.mubr.bf16.gmra.mxu0 %v2096
        %v4604 = vpop.f32.mrf.mxu0
        %v4605 = vadd.f32 0.0, %v4604
        %v4606 = vpop.f32.mrf.mxu0
        %v4607 = vpop.f32.mrf.mxu0
        %v4608 = vadd.f32 0.0, %v4607
        %v4609 = vpop.f32.mrf.mxu0
        %4610 = vmatprep.mubr.bf16.mxu0 %v2101
        %4611 = vmatmul.mubr.bf16.gmra.mxu0 %v2100
        %v4612 = vpop.f32.mrf.mxu0
        %v4613 = vadd.f32 0.0, %v4612
        %v4614 = vpop.f32.mrf.mxu0
        %v4615 = vpop.f32.mrf.mxu0
        %v4616 = vadd.f32 0.0, %v4615
        %v4617 = vpop.f32.mrf.mxu0
        %4618 = vmatprep.mubr.bf16.mxu0 %v2105
        %4619 = vmatmul.mubr.bf16.gmra.mxu0 %v2104
        %v4620 = vpop.f32.mrf.mxu0
        %v4621 = vadd.f32 0.0, %v4620
        %v4622 = vpop.f32.mrf.mxu0
        %v4623 = vpop.f32.mrf.mxu0
        %v4624 = vadd.f32 0.0, %v4623
        %v4625 = vpop.f32.mrf.mxu0
        %4626 = vmatprep.mubr.bf16.mxu0 %v2109
        %4627 = vmatmul.mubr.bf16.gmra.mxu0 %v2108
        %v4628 = vpop.f32.mrf.mxu0
        %v4629 = vadd.f32 0.0, %v4628
        %v4630 = vpop.f32.mrf.mxu0
        %v4631 = vpop.f32.mrf.mxu0
        %v4632 = vadd.f32 0.0, %v4631
        %v4633 = vpop.f32.mrf.mxu0
        %4634 = vmatprep.mubr.bf16.mxu0 %v2113
        %4635 = vmatmul.mubr.bf16.gmra.mxu0 %v2112
        %v4636 = vpop.f32.mrf.mxu0
        %v4637 = vadd.f32 0.0, %v4636
        %v4638 = vpop.f32.mrf.mxu0
        %v4639 = vpop.f32.mrf.mxu0
        %v4640 = vadd.f32 0.0, %v4639
        %v4641 = vpop.f32.mrf.mxu0
        %4642 = vmatprep.mubr.bf16.mxu0 %v2117
        %4643 = vmatmul.mubr.bf16.gmra.mxu0 %v2116
        %v4644 = vpop.f32.mrf.mxu0
        %v4645 = vadd.f32 0.0, %v4644
        %v4646 = vpop.f32.mrf.mxu0
        %v4647 = vpop.f32.mrf.mxu0
        %v4648 = vadd.f32 0.0, %v4647
        %v4649 = vpop.f32.mrf.mxu0
        %4650 = vmatprep.mubr.bf16.mxu0 %v2121
        %4651 = vmatmul.mubr.bf16.gmra.mxu0 %v2120
        %v4652 = vpop.f32.mrf.mxu0
        %v4653 = vadd.f32 0.0, %v4652
        %v4654 = vpop.f32.mrf.mxu0
        %v4655 = vpop.f32.mrf.mxu0
        %v4656 = vadd.f32 0.0, %v4655
        %v4657 = vpop.f32.mrf.mxu0
        %4658 = vmatprep.mubr.bf16.mxu0 %v2125
        %4659 = vmatmul.mubr.bf16.gmra.mxu0 %v2124
        %v4660 = vpop.f32.mrf.mxu0
        %v4661 = vadd.f32 0.0, %v4660
        %v4662 = vpop.f32.mrf.mxu0
        %v4663 = vpop.f32.mrf.mxu0
        %v4664 = vadd.f32 0.0, %v4663
        %v4665 = vpop.f32.mrf.mxu0
        %4666 = vmatprep.mubr.bf16.mxu0 %v2129
        %4667 = vmatmul.mubr.bf16.gmra.mxu0 %v2128
        %v4668 = vpop.f32.mrf.mxu0
        %v4669 = vadd.f32 0.0, %v4668
        %v4670 = vpop.f32.mrf.mxu0
        %v4671 = vpop.f32.mrf.mxu0
        %v4672 = vadd.f32 0.0, %v4671
        %v4673 = vpop.f32.mrf.mxu0
        %4674 = vmatprep.mubr.bf16.mxu0 %v2133
        %4675 = vmatmul.mubr.bf16.gmra.mxu0 %v2132
        %v4676 = vpop.f32.mrf.mxu0
        %v4677 = vadd.f32 0.0, %v4676
        %v4678 = vpop.f32.mrf.mxu0
        %v4679 = vpop.f32.mrf.mxu0
        %v4680 = vadd.f32 0.0, %v4679
        %v4681 = vpop.f32.mrf.mxu0
        %4682 = vmatprep.mubr.bf16.mxu0 %v2137
        %4683 = vmatmul.mubr.bf16.gmra.mxu0 %v2136
        %v4684 = vpop.f32.mrf.mxu0
        %v4685 = vadd.f32 0.0, %v4684
        %v4686 = vpop.f32.mrf.mxu0
        %v4687 = vpop.f32.mrf.mxu0
        %v4688 = vadd.f32 0.0, %v4687
        %v4689 = vpop.f32.mrf.mxu0
        %4690 = vmatprep.mubr.bf16.mxu0 %v2141
        %4691 = vmatmul.mubr.bf16.gmra.mxu0 %v2140
        %v4692 = vpop.f32.mrf.mxu0
        %v4693 = vadd.f32 0.0, %v4692
        %v4694 = vpop.f32.mrf.mxu0
        %v4695 = vpop.f32.mrf.mxu0
        %v4696 = vadd.f32 0.0, %v4695
        %v4697 = vpop.f32.mrf.mxu0
        %4698 = vmatprep.mubr.bf16.mxu0 %v2145
        %4699 = vmatmul.mubr.bf16.gmra.mxu0 %v2144
        %v4700 = vpop.f32.mrf.mxu0
        %v4701 = vadd.f32 0.0, %v4700
        %v4702 = vpop.f32.mrf.mxu0
        %v4703 = vpop.f32.mrf.mxu0
        %v4704 = vadd.f32 0.0, %v4703
        %v4705 = vpop.f32.mrf.mxu0
        %4706 = vmatprep.mubr.bf16.mxu0 %v2149
        %4707 = vmatmul.mubr.bf16.gmra.mxu0 %v2148
        %v4708 = vpop.f32.mrf.mxu0
        %v4709 = vadd.f32 0.0, %v4708
        %v4710 = vpop.f32.mrf.mxu0
        %v4711 = vpop.f32.mrf.mxu0
        %v4712 = vadd.f32 0.0, %v4711
        %v4713 = vpop.f32.mrf.mxu0
        %4714 = vmatprep.mubr.bf16.mxu0 %v2153
        %4715 = vmatmul.mubr.bf16.gmra.mxu0 %v2152
        %v4716 = vpop.f32.mrf.mxu0
        %v4717 = vadd.f32 0.0, %v4716
        %v4718 = vpop.f32.mrf.mxu0
        %v4719 = vpop.f32.mrf.mxu0
        %v4720 = vadd.f32 0.0, %v4719
        %v4721 = vpop.f32.mrf.mxu0
        %4722 = vmatprep.mubr.bf16.mxu0 %v2157
        %4723 = vmatmul.mubr.bf16.gmra.mxu0 %v2156
        %v4724 = vpop.f32.mrf.mxu0
        %v4725 = vadd.f32 0.0, %v4724
        %v4726 = vpop.f32.mrf.mxu0
        %v4727 = vpop.f32.mrf.mxu0
        %v4728 = vadd.f32 0.0, %v4727
        %v4729 = vpop.f32.mrf.mxu0
        %4730 = vmatprep.mubr.bf16.mxu0 %v2161
        %4731 = vmatmul.mubr.bf16.gmra.mxu0 %v2160
        %v4732 = vpop.f32.mrf.mxu0
        %v4733 = vadd.f32 0.0, %v4732
        %v4734 = vpop.f32.mrf.mxu0
        %v4735 = vpop.f32.mrf.mxu0
        %v4736 = vadd.f32 0.0, %v4735
        %v4737 = vpop.f32.mrf.mxu0
        %4738 = vmatprep.mubr.bf16.mxu0 %v2165
        %4739 = vmatmul.mubr.bf16.gmra.mxu0 %v2164
        %v4740 = vpop.f32.mrf.mxu0
        %v4741 = vadd.f32 0.0, %v4740
        %v4742 = vpop.f32.mrf.mxu0
        %v4743 = vpop.f32.mrf.mxu0
        %v4744 = vadd.f32 0.0, %v4743
        %v4745 = vpop.f32.mrf.mxu0
        %4746 = vmatprep.mubr.bf16.mxu0 %v2169
        %4747 = vmatmul.mubr.bf16.gmra.mxu0 %v2168
        %v4748 = vpop.f32.mrf.mxu0
        %v4749 = vadd.f32 0.0, %v4748
        %v4750 = vpop.f32.mrf.mxu0
        %v4751 = vpop.f32.mrf.mxu0
        %v4752 = vadd.f32 0.0, %v4751
        %v4753 = vpop.f32.mrf.mxu0
        %4754 = vmatprep.mubr.bf16.mxu0 %v2173
        %4755 = vmatmul.mubr.bf16.gmra.mxu0 %v2172
        %v4756 = vpop.f32.mrf.mxu0
        %v4757 = vadd.f32 0.0, %v4756
        %v4758 = vpop.f32.mrf.mxu0
        %v4759 = vpop.f32.mrf.mxu0
        %v4760 = vadd.f32 0.0, %v4759
        %v4761 = vpop.f32.mrf.mxu0
        %4762 = vmatprep.mubr.bf16.mxu0 %v2177
        %4763 = vmatmul.mubr.bf16.gmra.mxu0 %v2176
        %v4764 = vpop.f32.mrf.mxu0
        %v4765 = vadd.f32 0.0, %v4764
        %v4766 = vpop.f32.mrf.mxu0
        %v4767 = vpop.f32.mrf.mxu0
        %v4768 = vadd.f32 0.0, %v4767
        %v4769 = vpop.f32.mrf.mxu0
        %4770 = vmatprep.mubr.bf16.mxu0 %v2181
        %4771 = vmatmul.mubr.bf16.gmra.mxu0 %v2180
        %v4772 = vpop.f32.mrf.mxu0
        %v4773 = vadd.f32 0.0, %v4772
        %v4774 = vpop.f32.mrf.mxu0
        %v4775 = vpop.f32.mrf.mxu0
        %v4776 = vadd.f32 0.0, %v4775
        %v4777 = vpop.f32.mrf.mxu0
        %4778 = vmatprep.mubr.bf16.mxu0 %v2185
        %4779 = vmatmul.mubr.bf16.gmra.mxu0 %v2184
        %v4780 = vpop.f32.mrf.mxu0
        %v4781 = vadd.f32 0.0, %v4780
        %v4782 = vpop.f32.mrf.mxu0
        %v4783 = vpop.f32.mrf.mxu0
        %v4784 = vadd.f32 0.0, %v4783
        %v4785 = vpop.f32.mrf.mxu0
        %4786 = vmatprep.mubr.bf16.mxu0 %v2189
        %4787 = vmatmul.mubr.bf16.gmra.mxu0 %v2188
        %v4788 = vpop.f32.mrf.mxu0
        %v4789 = vadd.f32 0.0, %v4788
        %v4790 = vpop.f32.mrf.mxu0
        %v4791 = vpop.f32.mrf.mxu0
        %v4792 = vadd.f32 0.0, %v4791
        %v4793 = vpop.f32.mrf.mxu0
        %4794 = vmatprep.mubr.bf16.mxu0 %v2193
        %4795 = vmatmul.mubr.bf16.gmra.mxu0 %v2192
        %v4796 = vpop.f32.mrf.mxu0
        %v4797 = vadd.f32 0.0, %v4796
        %v4798 = vpop.f32.mrf.mxu0
        %v4799 = vpop.f32.mrf.mxu0
        %v4800 = vadd.f32 0.0, %v4799
        %v4801 = vpop.f32.mrf.mxu0
        %4802 = vmatprep.mubr.bf16.mxu0 %v2197
        %4803 = vmatmul.mubr.bf16.gmra.mxu0 %v2196
        %v4804 = vpop.f32.mrf.mxu0
        %v4805 = vadd.f32 0.0, %v4804
        %v4806 = vpop.f32.mrf.mxu0
        %v4807 = vpop.f32.mrf.mxu0
        %v4808 = vadd.f32 0.0, %v4807
        %v4809 = vpop.f32.mrf.mxu0
        %4810 = vmatprep.mubr.bf16.mxu0 %v2201
        %4811 = vmatmul.mubr.bf16.gmra.mxu0 %v2200
        %v4812 = vpop.f32.mrf.mxu0
        %v4813 = vadd.f32 0.0, %v4812
        %v4814 = vpop.f32.mrf.mxu0
        %v4815 = vpop.f32.mrf.mxu0
        %v4816 = vadd.f32 0.0, %v4815
        %v4817 = vpop.f32.mrf.mxu0
        %4818 = vmatprep.mubr.bf16.mxu0 %v2205
        %4819 = vmatmul.mubr.bf16.gmra.mxu0 %v2204
        %v4820 = vpop.f32.mrf.mxu0
        %v4821 = vadd.f32 0.0, %v4820
        %v4822 = vpop.f32.mrf.mxu0
        %v4823 = vpop.f32.mrf.mxu0
        %v4824 = vadd.f32 0.0, %v4823
        %v4825 = vpop.f32.mrf.mxu0
        %4826 = vmatprep.mubr.bf16.mxu0 %v2209
        %4827 = vmatmul.mubr.bf16.gmra.mxu0 %v2208
        %v4828 = vpop.f32.mrf.mxu0
        %v4829 = vadd.f32 0.0, %v4828
        %v4830 = vpop.f32.mrf.mxu0
        %v4831 = vpop.f32.mrf.mxu0
        %v4832 = vadd.f32 0.0, %v4831
        %v4833 = vpop.f32.mrf.mxu0
        %4834 = vmatprep.mubr.bf16.mxu0 %v2213
        %4835 = vmatmul.mubr.bf16.gmra.mxu0 %v2212
        %v4836 = vpop.f32.mrf.mxu0
        %v4837 = vadd.f32 0.0, %v4836
        %v4838 = vpop.f32.mrf.mxu0
        %v4839 = vpop.f32.mrf.mxu0
        %v4840 = vadd.f32 0.0, %v4839
        %v4841 = vpop.f32.mrf.mxu0
        %4842 = vmatprep.mubr.bf16.mxu0 %v2217
        %4843 = vmatmul.mubr.bf16.gmra.mxu0 %v2216
        %v4844 = vpop.f32.mrf.mxu0
        %v4845 = vadd.f32 0.0, %v4844
        %v4846 = vpop.f32.mrf.mxu0
        %v4847 = vpop.f32.mrf.mxu0
        %v4848 = vadd.f32 0.0, %v4847
        %v4849 = vpop.f32.mrf.mxu0
        %4850 = vmatprep.mubr.bf16.mxu0 %v2221
        %4851 = vmatmul.mubr.bf16.gmra.mxu0 %v2220
        %v4852 = vpop.f32.mrf.mxu0
        %v4853 = vadd.f32 0.0, %v4852
        %v4854 = vpop.f32.mrf.mxu0
        %v4855 = vpop.f32.mrf.mxu0
        %v4856 = vadd.f32 0.0, %v4855
        %v4857 = vpop.f32.mrf.mxu0
        %4858 = vmatprep.mubr.bf16.mxu0 %v2225
        %4859 = vmatmul.mubr.bf16.gmra.mxu0 %v2224
        %v4860 = vpop.f32.mrf.mxu0
        %v4861 = vadd.f32 0.0, %v4860
        %v4862 = vpop.f32.mrf.mxu0
        %v4863 = vpop.f32.mrf.mxu0
        %v4864 = vadd.f32 0.0, %v4863
        %v4865 = vpop.f32.mrf.mxu0
        %4866 = vmatprep.mubr.bf16.mxu0 %v2229
        %4867 = vmatmul.mubr.bf16.gmra.mxu0 %v2228
        %v4868 = vpop.f32.mrf.mxu0
        %v4869 = vadd.f32 0.0, %v4868
        %v4870 = vpop.f32.mrf.mxu0
        %v4871 = vpop.f32.mrf.mxu0
        %v4872 = vadd.f32 0.0, %v4871
        %v4873 = vpop.f32.mrf.mxu0
        %4874 = vmatprep.mubr.bf16.mxu0 %v2233
        %4875 = vmatmul.mubr.bf16.gmra.mxu0 %v2232
        %v4876 = vpop.f32.mrf.mxu0
        %v4877 = vadd.f32 0.0, %v4876
        %v4878 = vpop.f32.mrf.mxu0
        %v4879 = vpop.f32.mrf.mxu0
        %v4880 = vadd.f32 0.0, %v4879
        %v4881 = vpop.f32.mrf.mxu0
        %4882 = vmatprep.mubr.bf16.mxu0 %v2237
        %4883 = vmatmul.mubr.bf16.gmra.mxu0 %v2236
        %v4884 = vpop.f32.mrf.mxu0
        %v4885 = vadd.f32 0.0, %v4884
        %v4886 = vpop.f32.mrf.mxu0
        %v4887 = vpop.f32.mrf.mxu0
        %v4888 = vadd.f32 0.0, %v4887
        %v4889 = vpop.f32.mrf.mxu0
        %4890 = vmatprep.mubr.bf16.mxu0 %v2241
        %4891 = vmatmul.mubr.bf16.gmra.mxu0 %v2240
        %v4892 = vpop.f32.mrf.mxu0
        %v4893 = vadd.f32 0.0, %v4892
        %v4894 = vpop.f32.mrf.mxu0
        %v4895 = vpop.f32.mrf.mxu0
        %v4896 = vadd.f32 0.0, %v4895
        %v4897 = vpop.f32.mrf.mxu0
        %4898 = vmatprep.mubr.bf16.mxu0 %v2245
        %4899 = vmatmul.mubr.bf16.gmra.mxu0 %v2244
        %v4900 = vpop.f32.mrf.mxu0
        %v4901 = vadd.f32 0.0, %v4900
        %v4902 = vpop.f32.mrf.mxu0
        %v4903 = vpop.f32.mrf.mxu0
        %v4904 = vadd.f32 0.0, %v4903
        %v4905 = vpop.f32.mrf.mxu0
        %4906 = vdwg.mxu0
        %4907 = vmatprep.subr.bf16.mxu0 0
        %4908 = vmatpush1.bf16.msra.mxu0 %v2895
        %4909 = vmatprep.subr.bf16.mxu0 0
        %4910 = vmatpush1.bf16.msra.mxu0 %v2892
        %4911 = vmatprep.subr.bf16.mxu0 0
        %4912 = vmatpush1.bf16.msra.mxu0 %v2889
        %4913 = vmatprep.subr.bf16.mxu0 0
        %4914 = vmatpush1.bf16.msra.mxu0 %v2886
        %4915 = vmatprep.subr.bf16.mxu0 0
        %4916 = vmatpush1.bf16.msra.mxu0 %v2883
        %4917 = vmatprep.subr.bf16.mxu0 0
        %4918 = vmatpush1.bf16.msra.mxu0 %v2880
        %4919 = vmatprep.subr.bf16.mxu0 0
        %4920 = vmatpush1.bf16.msra.mxu0 %v2877
        %4921 = vmatprep.subr.bf16.mxu0 0
        %4922 = vmatpush1.bf16.msra.mxu0 %v2874
        %4923 = vmatprep.subr.bf16.mxu0 0
        %4924 = vmatpush2.bf16.msra.mxu0 %v2919
        %4925 = vmatprep.subr.bf16.mxu0 0
        %4926 = vmatpush2.bf16.msra.mxu0 %v2916
        %4927 = vmatprep.subr.bf16.mxu0 0
        %4928 = vmatpush2.bf16.msra.mxu0 %v2913
        %4929 = vmatprep.subr.bf16.mxu0 0
        %4930 = vmatpush2.bf16.msra.mxu0 %v2910
        %4931 = vmatprep.subr.bf16.mxu0 0
        %4932 = vmatpush2.bf16.msra.mxu0 %v2907
        %4933 = vmatprep.subr.bf16.mxu0 0
        %4934 = vmatpush2.bf16.msra.mxu0 %v2904
        %4935 = vmatprep.subr.bf16.mxu0 0
        %4936 = vmatpush2.bf16.msra.mxu0 %v2901
        %4937 = vmatprep.subr.bf16.mxu0 0
        %4938 = vmatpush2.bf16.msra.mxu0 %v2898
        %4939 = vmatprep.mubr.bf16.mxu0 %v1995
        %4940 = vmatmul.mubr.bf16.gmra.mxu0 %v1994
        %v4941 = vpop.f32.mrf.mxu0
        %v4942 = vadd.f32 %v4397, %v4941
        %v4943 = vpop.f32.mrf.mxu0
        %v4944 = vpop.f32.mrf.mxu0
        %v4945 = vadd.f32 %v4400, %v4944
        %v4946 = vpop.f32.mrf.mxu0
        %4947 = vmatprep.mubr.bf16.mxu0 %v1999
        %4948 = vmatmul.mubr.bf16.gmra.mxu0 %v1998
        %v4949 = vpop.f32.mrf.mxu0
        %v4950 = vadd.f32 %v4405, %v4949
        %v4951 = vpop.f32.mrf.mxu0
        %v4952 = vpop.f32.mrf.mxu0
        %v4953 = vadd.f32 %v4408, %v4952
        %v4954 = vpop.f32.mrf.mxu0
        %4955 = vmatprep.mubr.bf16.mxu0 %v2003
        %4956 = vmatmul.mubr.bf16.gmra.mxu0 %v2002
        %v4957 = vpop.f32.mrf.mxu0
        %v4958 = vadd.f32 %v4413, %v4957
        %v4959 = vpop.f32.mrf.mxu0
        %v4960 = vpop.f32.mrf.mxu0
        %v4961 = vadd.f32 %v4416, %v4960
        %v4962 = vpop.f32.mrf.mxu0
        %4963 = vmatprep.mubr.bf16.mxu0 %v2007
        %4964 = vmatmul.mubr.bf16.gmra.mxu0 %v2006
        %v4965 = vpop.f32.mrf.mxu0
        %v4966 = vadd.f32 %v4421, %v4965
        %v4967 = vpop.f32.mrf.mxu0
        %v4968 = vpop.f32.mrf.mxu0
        %v4969 = vadd.f32 %v4424, %v4968
        %v4970 = vpop.f32.mrf.mxu0
        %4971 = vmatprep.mubr.bf16.mxu0 %v2011
        %4972 = vmatmul.mubr.bf16.gmra.mxu0 %v2010
        %v4973 = vpop.f32.mrf.mxu0
        %v4974 = vadd.f32 %v4429, %v4973
        %v4975 = vpop.f32.mrf.mxu0
        %v4976 = vpop.f32.mrf.mxu0
        %v4977 = vadd.f32 %v4432, %v4976
        %v4978 = vpop.f32.mrf.mxu0
        %4979 = vmatprep.mubr.bf16.mxu0 %v2015
        %4980 = vmatmul.mubr.bf16.gmra.mxu0 %v2014
        %v4981 = vpop.f32.mrf.mxu0
        %v4982 = vadd.f32 %v4437, %v4981
        %v4983 = vpop.f32.mrf.mxu0
        %v4984 = vpop.f32.mrf.mxu0
        %v4985 = vadd.f32 %v4440, %v4984
        %v4986 = vpop.f32.mrf.mxu0
        %4987 = vmatprep.mubr.bf16.mxu0 %v2019
        %4988 = vmatmul.mubr.bf16.gmra.mxu0 %v2018
        %v4989 = vpop.f32.mrf.mxu0
        %v4990 = vadd.f32 %v4445, %v4989
        %v4991 = vpop.f32.mrf.mxu0
        %v4992 = vpop.f32.mrf.mxu0
        %v4993 = vadd.f32 %v4448, %v4992
        %v4994 = vpop.f32.mrf.mxu0
        %4995 = vmatprep.mubr.bf16.mxu0 %v2023
        %4996 = vmatmul.mubr.bf16.gmra.mxu0 %v2022
        %v4997 = vpop.f32.mrf.mxu0
        %v4998 = vadd.f32 %v4453, %v4997
        %v4999 = vpop.f32.mrf.mxu0
        %v5000 = vpop.f32.mrf.mxu0
        %v5001 = vadd.f32 %v4456, %v5000
        %v5002 = vpop.f32.mrf.mxu0
        %5003 = vmatprep.mubr.bf16.mxu0 %v2027
        %5004 = vmatmul.mubr.bf16.gmra.mxu0 %v2026
        %v5005 = vpop.f32.mrf.mxu0
        %v5006 = vadd.f32 %v4461, %v5005
        %v5007 = vpop.f32.mrf.mxu0
        %v5008 = vpop.f32.mrf.mxu0
        %v5009 = vadd.f32 %v4464, %v5008
        %v5010 = vpop.f32.mrf.mxu0
        %5011 = vmatprep.mubr.bf16.mxu0 %v2031
        %5012 = vmatmul.mubr.bf16.gmra.mxu0 %v2030
        %v5013 = vpop.f32.mrf.mxu0
        %v5014 = vadd.f32 %v4469, %v5013
        %v5015 = vpop.f32.mrf.mxu0
        %v5016 = vpop.f32.mrf.mxu0
        %v5017 = vadd.f32 %v4472, %v5016
        %v5018 = vpop.f32.mrf.mxu0
        %5019 = vmatprep.mubr.bf16.mxu0 %v2035
        %5020 = vmatmul.mubr.bf16.gmra.mxu0 %v2034
        %v5021 = vpop.f32.mrf.mxu0
        %v5022 = vadd.f32 %v4477, %v5021
        %v5023 = vpop.f32.mrf.mxu0
        %v5024 = vpop.f32.mrf.mxu0
        %v5025 = vadd.f32 %v4480, %v5024
        %v5026 = vpop.f32.mrf.mxu0
        %5027 = vmatprep.mubr.bf16.mxu0 %v2039
        %5028 = vmatmul.mubr.bf16.gmra.mxu0 %v2038
        %v5029 = vpop.f32.mrf.mxu0
        %v5030 = vadd.f32 %v4485, %v5029
        %v5031 = vpop.f32.mrf.mxu0
        %v5032 = vpop.f32.mrf.mxu0
        %v5033 = vadd.f32 %v4488, %v5032
        %v5034 = vpop.f32.mrf.mxu0
        %5035 = vmatprep.mubr.bf16.mxu0 %v2043
        %5036 = vmatmul.mubr.bf16.gmra.mxu0 %v2042
        %v5037 = vpop.f32.mrf.mxu0
        %v5038 = vadd.f32 %v4493, %v5037
        %v5039 = vpop.f32.mrf.mxu0
        %v5040 = vpop.f32.mrf.mxu0
        %v5041 = vadd.f32 %v4496, %v5040
        %v5042 = vpop.f32.mrf.mxu0
        %5043 = vmatprep.mubr.bf16.mxu0 %v2047
        %5044 = vmatmul.mubr.bf16.gmra.mxu0 %v2046
        %v5045 = vpop.f32.mrf.mxu0
        %v5046 = vadd.f32 %v4501, %v5045
        %v5047 = vpop.f32.mrf.mxu0
        %v5048 = vpop.f32.mrf.mxu0
        %v5049 = vadd.f32 %v4504, %v5048
        %v5050 = vpop.f32.mrf.mxu0
        %5051 = vmatprep.mubr.bf16.mxu0 %v2051
        %5052 = vmatmul.mubr.bf16.gmra.mxu0 %v2050
        %v5053 = vpop.f32.mrf.mxu0
        %v5054 = vadd.f32 %v4509, %v5053
        %v5055 = vpop.f32.mrf.mxu0
        %v5056 = vpop.f32.mrf.mxu0
        %v5057 = vadd.f32 %v4512, %v5056
        %v5058 = vpop.f32.mrf.mxu0
        %5059 = vmatprep.mubr.bf16.mxu0 %v2055
        %5060 = vmatmul.mubr.bf16.gmra.mxu0 %v2054
        %v5061 = vpop.f32.mrf.mxu0
        %v5062 = vadd.f32 %v4517, %v5061
        %v5063 = vpop.f32.mrf.mxu0
        %v5064 = vpop.f32.mrf.mxu0
        %v5065 = vadd.f32 %v4520, %v5064
        %v5066 = vpop.f32.mrf.mxu0
        %5067 = vmatprep.mubr.bf16.mxu0 %v2059
        %5068 = vmatmul.mubr.bf16.gmra.mxu0 %v2058
        %v5069 = vpop.f32.mrf.mxu0
        %v5070 = vadd.f32 %v4525, %v5069
        %v5071 = vpop.f32.mrf.mxu0
        %v5072 = vpop.f32.mrf.mxu0
        %v5073 = vadd.f32 %v4528, %v5072
        %v5074 = vpop.f32.mrf.mxu0
        %5075 = vmatprep.mubr.bf16.mxu0 %v2063
        %5076 = vmatmul.mubr.bf16.gmra.mxu0 %v2062
        %v5077 = vpop.f32.mrf.mxu0
        %v5078 = vadd.f32 %v4533, %v5077
        %v5079 = vpop.f32.mrf.mxu0
        %v5080 = vpop.f32.mrf.mxu0
        %v5081 = vadd.f32 %v4536, %v5080
        %v5082 = vpop.f32.mrf.mxu0
        %5083 = vmatprep.mubr.bf16.mxu0 %v2067
        %5084 = vmatmul.mubr.bf16.gmra.mxu0 %v2066
        %v5085 = vpop.f32.mrf.mxu0
        %v5086 = vadd.f32 %v4541, %v5085
        %v5087 = vpop.f32.mrf.mxu0
        %v5088 = vpop.f32.mrf.mxu0
        %v5089 = vadd.f32 %v4544, %v5088
        %v5090 = vpop.f32.mrf.mxu0
        %5091 = vmatprep.mubr.bf16.mxu0 %v2071
        %5092 = vmatmul.mubr.bf16.gmra.mxu0 %v2070
        %v5093 = vpop.f32.mrf.mxu0
        %v5094 = vadd.f32 %v4549, %v5093
        %v5095 = vpop.f32.mrf.mxu0
        %v5096 = vpop.f32.mrf.mxu0
        %v5097 = vadd.f32 %v4552, %v5096
        %v5098 = vpop.f32.mrf.mxu0
        %5099 = vmatprep.mubr.bf16.mxu0 %v2075
        %5100 = vmatmul.mubr.bf16.gmra.mxu0 %v2074
        %v5101 = vpop.f32.mrf.mxu0
        %v5102 = vadd.f32 %v4557, %v5101
        %v5103 = vpop.f32.mrf.mxu0
        %v5104 = vpop.f32.mrf.mxu0
        %v5105 = vadd.f32 %v4560, %v5104
        %v5106 = vpop.f32.mrf.mxu0
        %5107 = vmatprep.mubr.bf16.mxu0 %v2079
        %5108 = vmatmul.mubr.bf16.gmra.mxu0 %v2078
        %v5109 = vpop.f32.mrf.mxu0
        %v5110 = vadd.f32 %v4565, %v5109
        %v5111 = vpop.f32.mrf.mxu0
        %v5112 = vpop.f32.mrf.mxu0
        %v5113 = vadd.f32 %v4568, %v5112
        %v5114 = vpop.f32.mrf.mxu0
        %5115 = vmatprep.mubr.bf16.mxu0 %v2083
        %5116 = vmatmul.mubr.bf16.gmra.mxu0 %v2082
        %v5117 = vpop.f32.mrf.mxu0
        %v5118 = vadd.f32 %v4573, %v5117
        %v5119 = vpop.f32.mrf.mxu0
        %v5120 = vpop.f32.mrf.mxu0
        %v5121 = vadd.f32 %v4576, %v5120
        %v5122 = vpop.f32.mrf.mxu0
        %5123 = vmatprep.mubr.bf16.mxu0 %v2087
        %5124 = vmatmul.mubr.bf16.gmra.mxu0 %v2086
        %v5125 = vpop.f32.mrf.mxu0
        %v5126 = vadd.f32 %v4581, %v5125
        %v5127 = vpop.f32.mrf.mxu0
        %v5128 = vpop.f32.mrf.mxu0
        %v5129 = vadd.f32 %v4584, %v5128
        %v5130 = vpop.f32.mrf.mxu0
        %5131 = vmatprep.mubr.bf16.mxu0 %v2091
        %5132 = vmatmul.mubr.bf16.gmra.mxu0 %v2090
        %v5133 = vpop.f32.mrf.mxu0
        %v5134 = vadd.f32 %v4589, %v5133
        %v5135 = vpop.f32.mrf.mxu0
        %v5136 = vpop.f32.mrf.mxu0
        %v5137 = vadd.f32 %v4592, %v5136
        %v5138 = vpop.f32.mrf.mxu0
        %5139 = vmatprep.mubr.bf16.mxu0 %v2095
        %5140 = vmatmul.mubr.bf16.gmra.mxu0 %v2094
        %v5141 = vpop.f32.mrf.mxu0
        %v5142 = vadd.f32 %v4597, %v5141
        %v5143 = vpop.f32.mrf.mxu0
        %v5144 = vpop.f32.mrf.mxu0
        %v5145 = vadd.f32 %v4600, %v5144
        %v5146 = vpop.f32.mrf.mxu0
        %5147 = vmatprep.mubr.bf16.mxu0 %v2099
        %5148 = vmatmul.mubr.bf16.gmra.mxu0 %v2098
        %v5149 = vpop.f32.mrf.mxu0
        %v5150 = vadd.f32 %v4605, %v5149
        %v5151 = vpop.f32.mrf.mxu0
        %v5152 = vpop.f32.mrf.mxu0
        %v5153 = vadd.f32 %v4608, %v5152
        %v5154 = vpop.f32.mrf.mxu0
        %5155 = vmatprep.mubr.bf16.mxu0 %v2103
        %5156 = vmatmul.mubr.bf16.gmra.mxu0 %v2102
        %v5157 = vpop.f32.mrf.mxu0
        %v5158 = vadd.f32 %v4613, %v5157
        %v5159 = vpop.f32.mrf.mxu0
        %v5160 = vpop.f32.mrf.mxu0
        %v5161 = vadd.f32 %v4616, %v5160
        %v5162 = vpop.f32.mrf.mxu0
        %5163 = vmatprep.mubr.bf16.mxu0 %v2107
        %5164 = vmatmul.mubr.bf16.gmra.mxu0 %v2106
        %v5165 = vpop.f32.mrf.mxu0
        %v5166 = vadd.f32 %v4621, %v5165
        %v5167 = vpop.f32.mrf.mxu0
        %v5168 = vpop.f32.mrf.mxu0
        %v5169 = vadd.f32 %v4624, %v5168
        %v5170 = vpop.f32.mrf.mxu0
        %5171 = vmatprep.mubr.bf16.mxu0 %v2111
        %5172 = vmatmul.mubr.bf16.gmra.mxu0 %v2110
        %v5173 = vpop.f32.mrf.mxu0
        %v5174 = vadd.f32 %v4629, %v5173
        %v5175 = vpop.f32.mrf.mxu0
        %v5176 = vpop.f32.mrf.mxu0
        %v5177 = vadd.f32 %v4632, %v5176
        %v5178 = vpop.f32.mrf.mxu0
        %5179 = vmatprep.mubr.bf16.mxu0 %v2115
        %5180 = vmatmul.mubr.bf16.gmra.mxu0 %v2114
        %v5181 = vpop.f32.mrf.mxu0
        %v5182 = vadd.f32 %v4637, %v5181
        %v5183 = vpop.f32.mrf.mxu0
        %v5184 = vpop.f32.mrf.mxu0
        %v5185 = vadd.f32 %v4640, %v5184
        %v5186 = vpop.f32.mrf.mxu0
        %5187 = vmatprep.mubr.bf16.mxu0 %v2119
        %5188 = vmatmul.mubr.bf16.gmra.mxu0 %v2118
        %v5189 = vpop.f32.mrf.mxu0
        %v5190 = vadd.f32 %v4645, %v5189
        %v5191 = vpop.f32.mrf.mxu0
        %v5192 = vpop.f32.mrf.mxu0
        %v5193 = vadd.f32 %v4648, %v5192
        %v5194 = vpop.f32.mrf.mxu0
        %5195 = vmatprep.mubr.bf16.mxu0 %v2123
        %5196 = vmatmul.mubr.bf16.gmra.mxu0 %v2122
        %v5197 = vpop.f32.mrf.mxu0
        %v5198 = vadd.f32 %v4653, %v5197
        %v5199 = vpop.f32.mrf.mxu0
        %v5200 = vpop.f32.mrf.mxu0
        %v5201 = vadd.f32 %v4656, %v5200
        %v5202 = vpop.f32.mrf.mxu0
        %5203 = vmatprep.mubr.bf16.mxu0 %v2127
        %5204 = vmatmul.mubr.bf16.gmra.mxu0 %v2126
        %v5205 = vpop.f32.mrf.mxu0
        %v5206 = vadd.f32 %v4661, %v5205
        %v5207 = vpop.f32.mrf.mxu0
        %v5208 = vpop.f32.mrf.mxu0
        %v5209 = vadd.f32 %v4664, %v5208
        %v5210 = vpop.f32.mrf.mxu0
        %5211 = vmatprep.mubr.bf16.mxu0 %v2131
        %5212 = vmatmul.mubr.bf16.gmra.mxu0 %v2130
        %v5213 = vpop.f32.mrf.mxu0
        %v5214 = vadd.f32 %v4669, %v5213
        %v5215 = vpop.f32.mrf.mxu0
        %v5216 = vpop.f32.mrf.mxu0
        %v5217 = vadd.f32 %v4672, %v5216
        %v5218 = vpop.f32.mrf.mxu0
        %5219 = vmatprep.mubr.bf16.mxu0 %v2135
        %5220 = vmatmul.mubr.bf16.gmra.mxu0 %v2134
        %v5221 = vpop.f32.mrf.mxu0
        %v5222 = vadd.f32 %v4677, %v5221
        %v5223 = vpop.f32.mrf.mxu0
        %v5224 = vpop.f32.mrf.mxu0
        %v5225 = vadd.f32 %v4680, %v5224
        %v5226 = vpop.f32.mrf.mxu0
        %5227 = vmatprep.mubr.bf16.mxu0 %v2139
        %5228 = vmatmul.mubr.bf16.gmra.mxu0 %v2138
        %v5229 = vpop.f32.mrf.mxu0
        %v5230 = vadd.f32 %v4685, %v5229
        %v5231 = vpop.f32.mrf.mxu0
        %v5232 = vpop.f32.mrf.mxu0
        %v5233 = vadd.f32 %v4688, %v5232
        %v5234 = vpop.f32.mrf.mxu0
        %5235 = vmatprep.mubr.bf16.mxu0 %v2143
        %5236 = vmatmul.mubr.bf16.gmra.mxu0 %v2142
        %v5237 = vpop.f32.mrf.mxu0
        %v5238 = vadd.f32 %v4693, %v5237
        %v5239 = vpop.f32.mrf.mxu0
        %v5240 = vpop.f32.mrf.mxu0
        %v5241 = vadd.f32 %v4696, %v5240
        %v5242 = vpop.f32.mrf.mxu0
        %5243 = vmatprep.mubr.bf16.mxu0 %v2147
        %5244 = vmatmul.mubr.bf16.gmra.mxu0 %v2146
        %v5245 = vpop.f32.mrf.mxu0
        %v5246 = vadd.f32 %v4701, %v5245
        %v5247 = vpop.f32.mrf.mxu0
        %v5248 = vpop.f32.mrf.mxu0
        %v5249 = vadd.f32 %v4704, %v5248
        %v5250 = vpop.f32.mrf.mxu0
        %5251 = vmatprep.mubr.bf16.mxu0 %v2151
        %5252 = vmatmul.mubr.bf16.gmra.mxu0 %v2150
        %v5253 = vpop.f32.mrf.mxu0
        %v5254 = vadd.f32 %v4709, %v5253
        %v5255 = vpop.f32.mrf.mxu0
        %v5256 = vpop.f32.mrf.mxu0
        %v5257 = vadd.f32 %v4712, %v5256
        %v5258 = vpop.f32.mrf.mxu0
        %5259 = vmatprep.mubr.bf16.mxu0 %v2155
        %5260 = vmatmul.mubr.bf16.gmra.mxu0 %v2154
        %v5261 = vpop.f32.mrf.mxu0
        %v5262 = vadd.f32 %v4717, %v5261
        %v5263 = vpop.f32.mrf.mxu0
        %v5264 = vpop.f32.mrf.mxu0
        %v5265 = vadd.f32 %v4720, %v5264
        %v5266 = vpop.f32.mrf.mxu0
        %5267 = vmatprep.mubr.bf16.mxu0 %v2159
        %5268 = vmatmul.mubr.bf16.gmra.mxu0 %v2158
        %v5269 = vpop.f32.mrf.mxu0
        %v5270 = vadd.f32 %v4725, %v5269
        %v5271 = vpop.f32.mrf.mxu0
        %v5272 = vpop.f32.mrf.mxu0
        %v5273 = vadd.f32 %v4728, %v5272
        %v5274 = vpop.f32.mrf.mxu0
        %5275 = vmatprep.mubr.bf16.mxu0 %v2163
        %5276 = vmatmul.mubr.bf16.gmra.mxu0 %v2162
        %v5277 = vpop.f32.mrf.mxu0
        %v5278 = vadd.f32 %v4733, %v5277
        %v5279 = vpop.f32.mrf.mxu0
        %v5280 = vpop.f32.mrf.mxu0
        %v5281 = vadd.f32 %v4736, %v5280
        %v5282 = vpop.f32.mrf.mxu0
        %5283 = vmatprep.mubr.bf16.mxu0 %v2167
        %5284 = vmatmul.mubr.bf16.gmra.mxu0 %v2166
        %v5285 = vpop.f32.mrf.mxu0
        %v5286 = vadd.f32 %v4741, %v5285
        %v5287 = vpop.f32.mrf.mxu0
        %v5288 = vpop.f32.mrf.mxu0
        %v5289 = vadd.f32 %v4744, %v5288
        %v5290 = vpop.f32.mrf.mxu0
        %5291 = vmatprep.mubr.bf16.mxu0 %v2171
        %5292 = vmatmul.mubr.bf16.gmra.mxu0 %v2170
        %v5293 = vpop.f32.mrf.mxu0
        %v5294 = vadd.f32 %v4749, %v5293
        %v5295 = vpop.f32.mrf.mxu0
        %v5296 = vpop.f32.mrf.mxu0
        %v5297 = vadd.f32 %v4752, %v5296
        %v5298 = vpop.f32.mrf.mxu0
        %5299 = vmatprep.mubr.bf16.mxu0 %v2175
        %5300 = vmatmul.mubr.bf16.gmra.mxu0 %v2174
        %v5301 = vpop.f32.mrf.mxu0
        %v5302 = vadd.f32 %v4757, %v5301
        %v5303 = vpop.f32.mrf.mxu0
        %v5304 = vpop.f32.mrf.mxu0
        %v5305 = vadd.f32 %v4760, %v5304
        %v5306 = vpop.f32.mrf.mxu0
        %5307 = vmatprep.mubr.bf16.mxu0 %v2179
        %5308 = vmatmul.mubr.bf16.gmra.mxu0 %v2178
        %v5309 = vpop.f32.mrf.mxu0
        %v5310 = vadd.f32 %v4765, %v5309
        %v5311 = vpop.f32.mrf.mxu0
        %v5312 = vpop.f32.mrf.mxu0
        %v5313 = vadd.f32 %v4768, %v5312
        %v5314 = vpop.f32.mrf.mxu0
        %5315 = vmatprep.mubr.bf16.mxu0 %v2183
        %5316 = vmatmul.mubr.bf16.gmra.mxu0 %v2182
        %v5317 = vpop.f32.mrf.mxu0
        %v5318 = vadd.f32 %v4773, %v5317
        %v5319 = vpop.f32.mrf.mxu0
        %v5320 = vpop.f32.mrf.mxu0
        %v5321 = vadd.f32 %v4776, %v5320
        %v5322 = vpop.f32.mrf.mxu0
        %5323 = vmatprep.mubr.bf16.mxu0 %v2187
        %5324 = vmatmul.mubr.bf16.gmra.mxu0 %v2186
        %v5325 = vpop.f32.mrf.mxu0
        %v5326 = vadd.f32 %v4781, %v5325
        %v5327 = vpop.f32.mrf.mxu0
        %v5328 = vpop.f32.mrf.mxu0
        %v5329 = vadd.f32 %v4784, %v5328
        %v5330 = vpop.f32.mrf.mxu0
        %5331 = vmatprep.mubr.bf16.mxu0 %v2191
        %5332 = vmatmul.mubr.bf16.gmra.mxu0 %v2190
        %v5333 = vpop.f32.mrf.mxu0
        %v5334 = vadd.f32 %v4789, %v5333
        %v5335 = vpop.f32.mrf.mxu0
        %v5336 = vpop.f32.mrf.mxu0
        %v5337 = vadd.f32 %v4792, %v5336
        %v5338 = vpop.f32.mrf.mxu0
        %5339 = vmatprep.mubr.bf16.mxu0 %v2195
        %5340 = vmatmul.mubr.bf16.gmra.mxu0 %v2194
        %v5341 = vpop.f32.mrf.mxu0
        %v5342 = vadd.f32 %v4797, %v5341
        %v5343 = vpop.f32.mrf.mxu0
        %v5344 = vpop.f32.mrf.mxu0
        %v5345 = vadd.f32 %v4800, %v5344
        %v5346 = vpop.f32.mrf.mxu0
        %5347 = vmatprep.mubr.bf16.mxu0 %v2199
        %5348 = vmatmul.mubr.bf16.gmra.mxu0 %v2198
        %v5349 = vpop.f32.mrf.mxu0
        %v5350 = vadd.f32 %v4805, %v5349
        %v5351 = vpop.f32.mrf.mxu0
        %v5352 = vpop.f32.mrf.mxu0
        %v5353 = vadd.f32 %v4808, %v5352
        %v5354 = vpop.f32.mrf.mxu0
        %5355 = vmatprep.mubr.bf16.mxu0 %v2203
        %5356 = vmatmul.mubr.bf16.gmra.mxu0 %v2202
        %v5357 = vpop.f32.mrf.mxu0
        %v5358 = vadd.f32 %v4813, %v5357
        %v5359 = vpop.f32.mrf.mxu0
        %v5360 = vpop.f32.mrf.mxu0
        %v5361 = vadd.f32 %v4816, %v5360
        %v5362 = vpop.f32.mrf.mxu0
        %5363 = vmatprep.mubr.bf16.mxu0 %v2207
        %5364 = vmatmul.mubr.bf16.gmra.mxu0 %v2206
        %v5365 = vpop.f32.mrf.mxu0
        %v5366 = vadd.f32 %v4821, %v5365
        %v5367 = vpop.f32.mrf.mxu0
        %v5368 = vpop.f32.mrf.mxu0
        %v5369 = vadd.f32 %v4824, %v5368
        %v5370 = vpop.f32.mrf.mxu0
        %5371 = vmatprep.mubr.bf16.mxu0 %v2211
        %5372 = vmatmul.mubr.bf16.gmra.mxu0 %v2210
        %v5373 = vpop.f32.mrf.mxu0
        %v5374 = vadd.f32 %v4829, %v5373
        %v5375 = vpop.f32.mrf.mxu0
        %v5376 = vpop.f32.mrf.mxu0
        %v5377 = vadd.f32 %v4832, %v5376
        %v5378 = vpop.f32.mrf.mxu0
        %5379 = vmatprep.mubr.bf16.mxu0 %v2215
        %5380 = vmatmul.mubr.bf16.gmra.mxu0 %v2214
        %v5381 = vpop.f32.mrf.mxu0
        %v5382 = vadd.f32 %v4837, %v5381
        %v5383 = vpop.f32.mrf.mxu0
        %v5384 = vpop.f32.mrf.mxu0
        %v5385 = vadd.f32 %v4840, %v5384
        %v5386 = vpop.f32.mrf.mxu0
        %5387 = vmatprep.mubr.bf16.mxu0 %v2219
        %5388 = vmatmul.mubr.bf16.gmra.mxu0 %v2218
        %v5389 = vpop.f32.mrf.mxu0
        %v5390 = vadd.f32 %v4845, %v5389
        %v5391 = vpop.f32.mrf.mxu0
        %v5392 = vpop.f32.mrf.mxu0
        %v5393 = vadd.f32 %v4848, %v5392
        %v5394 = vpop.f32.mrf.mxu0
        %5395 = vmatprep.mubr.bf16.mxu0 %v2223
        %5396 = vmatmul.mubr.bf16.gmra.mxu0 %v2222
        %v5397 = vpop.f32.mrf.mxu0
        %v5398 = vadd.f32 %v4853, %v5397
        %v5399 = vpop.f32.mrf.mxu0
        %v5400 = vpop.f32.mrf.mxu0
        %v5401 = vadd.f32 %v4856, %v5400
        %v5402 = vpop.f32.mrf.mxu0
        %5403 = vmatprep.mubr.bf16.mxu0 %v2227
        %5404 = vmatmul.mubr.bf16.gmra.mxu0 %v2226
        %v5405 = vpop.f32.mrf.mxu0
        %v5406 = vadd.f32 %v4861, %v5405
        %v5407 = vpop.f32.mrf.mxu0
        %v5408 = vpop.f32.mrf.mxu0
        %v5409 = vadd.f32 %v4864, %v5408
        %v5410 = vpop.f32.mrf.mxu0
        %5411 = vmatprep.mubr.bf16.mxu0 %v2231
        %5412 = vmatmul.mubr.bf16.gmra.mxu0 %v2230
        %v5413 = vpop.f32.mrf.mxu0
        %v5414 = vadd.f32 %v4869, %v5413
        %v5415 = vpop.f32.mrf.mxu0
        %v5416 = vpop.f32.mrf.mxu0
        %v5417 = vadd.f32 %v4872, %v5416
        %v5418 = vpop.f32.mrf.mxu0
        %5419 = vmatprep.mubr.bf16.mxu0 %v2235
        %5420 = vmatmul.mubr.bf16.gmra.mxu0 %v2234
        %v5421 = vpop.f32.mrf.mxu0
        %v5422 = vadd.f32 %v4877, %v5421
        %v5423 = vpop.f32.mrf.mxu0
        %v5424 = vpop.f32.mrf.mxu0
        %v5425 = vadd.f32 %v4880, %v5424
        %v5426 = vpop.f32.mrf.mxu0
        %5427 = vmatprep.mubr.bf16.mxu0 %v2239
        %5428 = vmatmul.mubr.bf16.gmra.mxu0 %v2238
        %v5429 = vpop.f32.mrf.mxu0
        %v5430 = vadd.f32 %v4885, %v5429
        %v5431 = vpop.f32.mrf.mxu0
        %v5432 = vpop.f32.mrf.mxu0
        %v5433 = vadd.f32 %v4888, %v5432
        %v5434 = vpop.f32.mrf.mxu0
        %5435 = vmatprep.mubr.bf16.mxu0 %v2243
        %5436 = vmatmul.mubr.bf16.gmra.mxu0 %v2242
        %v5437 = vpop.f32.mrf.mxu0
        %v5438 = vadd.f32 %v4893, %v5437
        %v5439 = vpop.f32.mrf.mxu0
        %v5440 = vpop.f32.mrf.mxu0
        %v5441 = vadd.f32 %v4896, %v5440
        %v5442 = vpop.f32.mrf.mxu0
        %5443 = vmatprep.mubr.bf16.mxu0 %v2247
        %5444 = vmatmul.mubr.bf16.gmra.mxu0 %v2246
        %v5445 = vpop.f32.mrf.mxu0
        %v5446 = vadd.f32 %v4901, %v5445
        %v5447 = vpop.f32.mrf.mxu0
        %v5448 = vpop.f32.mrf.mxu0
        %v5449 = vadd.f32 %v4904, %v5448
        %v5450 = vpop.f32.mrf.mxu0
        %5451 = vdwg.mxu0
        %v5452 = vand.u32 2147483647, %v3724
        %v5453 = vand.u32 2147483647, %v3726
        %v5454 = vand.u32 2147483647, %v4942
        %v5455 = vand.u32 2147483647, %v3728
        %v5456 = vand.u32 2147483647, %v3730
        %v5457 = vand.u32 2147483647, %v4945
        %v5458 = vand.u32 2147483647, %v3734
        %v5459 = vand.u32 2147483647, %v3736
        %v5460 = vand.u32 2147483647, %v4950
        %v5461 = vand.u32 2147483647, %v3738
        %v5462 = vand.u32 2147483647, %v3740
        %v5463 = vand.u32 2147483647, %v4953
        %v5464 = vand.u32 2147483647, %v3744
        %v5465 = vand.u32 2147483647, %v3746
        %v5466 = vand.u32 2147483647, %v4958
        %v5467 = vand.u32 2147483647, %v3748
        %v5468 = vand.u32 2147483647, %v3750
        %v5469 = vand.u32 2147483647, %v4961
        %v5470 = vand.u32 2147483647, %v3754
        %v5471 = vand.u32 2147483647, %v3756
        %v5472 = vand.u32 2147483647, %v4966
        %v5473 = vand.u32 2147483647, %v3758
        %v5474 = vand.u32 2147483647, %v3760
        %v5475 = vand.u32 2147483647, %v4969
        %v5476 = vand.u32 2147483647, %v3764
        %v5477 = vand.u32 2147483647, %v3766
        %v5478 = vand.u32 2147483647, %v4974
        %v5479 = vand.u32 2147483647, %v3768
        %v5480 = vand.u32 2147483647, %v3770
        %v5481 = vand.u32 2147483647, %v4977
        %v5482 = vand.u32 2147483647, %v3774
        %v5483 = vand.u32 2147483647, %v3776
        %v5484 = vand.u32 2147483647, %v4982
        %v5485 = vand.u32 2147483647, %v3778
        %v5486 = vand.u32 2147483647, %v3780
        %v5487 = vand.u32 2147483647, %v4985
        %v5488 = vand.u32 2147483647, %v3784
        %v5489 = vand.u32 2147483647, %v3786
        %v5490 = vand.u32 2147483647, %v4990
        %v5491 = vand.u32 2147483647, %v3788
        %v5492 = vand.u32 2147483647, %v3790
        %v5493 = vand.u32 2147483647, %v4993
        %v5494 = vand.u32 2147483647, %v3794
        %v5495 = vand.u32 2147483647, %v3796
        %v5496 = vand.u32 2147483647, %v4998
        %v5497 = vand.u32 2147483647, %v3798
        %v5498 = vand.u32 2147483647, %v3800
        %v5499 = vand.u32 2147483647, %v5001
        %v5500 = vand.u32 2147483647, %v3804
        %v5501 = vand.u32 2147483647, %v3806
        %v5502 = vand.u32 2147483647, %v5006
        %v5503 = vand.u32 2147483647, %v3808
        %v5504 = vand.u32 2147483647, %v3810
        %v5505 = vand.u32 2147483647, %v5009
        %v5506 = vand.u32 2147483647, %v3814
        %v5507 = vand.u32 2147483647, %v3816
        %v5508 = vand.u32 2147483647, %v5014
        %v5509 = vand.u32 2147483647, %v3818
        %v5510 = vand.u32 2147483647, %v3820
        %v5511 = vand.u32 2147483647, %v5017
        %v5512 = vand.u32 2147483647, %v3824
        %v5513 = vand.u32 2147483647, %v3826
        %v5514 = vand.u32 2147483647, %v5022
        %v5515 = vand.u32 2147483647, %v3828
        %v5516 = vand.u32 2147483647, %v3830
        %v5517 = vand.u32 2147483647, %v5025
        %v5518 = vand.u32 2147483647, %v3834
        %v5519 = vand.u32 2147483647, %v3836
        %v5520 = vand.u32 2147483647, %v5030
        %v5521 = vand.u32 2147483647, %v3838
        %v5522 = vand.u32 2147483647, %v3840
        %v5523 = vand.u32 2147483647, %v5033
        %v5524 = vand.u32 2147483647, %v3844
        %v5525 = vand.u32 2147483647, %v3846
        %v5526 = vand.u32 2147483647, %v5038
        %v5527 = vand.u32 2147483647, %v3848
        %v5528 = vand.u32 2147483647, %v3850
        %v5529 = vand.u32 2147483647, %v5041
        %v5530 = vand.u32 2147483647, %v3854
        %v5531 = vand.u32 2147483647, %v3856
        %v5532 = vand.u32 2147483647, %v5046
        %v5533 = vand.u32 2147483647, %v3858
        %v5534 = vand.u32 2147483647, %v3860
        %v5535 = vand.u32 2147483647, %v5049
        %v5536 = vand.u32 2147483647, %v3864
        %v5537 = vand.u32 2147483647, %v3866
        %v5538 = vand.u32 2147483647, %v5054
        %v5539 = vand.u32 2147483647, %v3868
        %v5540 = vand.u32 2147483647, %v3870
        %v5541 = vand.u32 2147483647, %v5057
        %v5542 = vand.u32 2147483647, %v3874
        %v5543 = vand.u32 2147483647, %v3876
        %v5544 = vand.u32 2147483647, %v5062
        %v5545 = vand.u32 2147483647, %v3878
        %v5546 = vand.u32 2147483647, %v3880
        %v5547 = vand.u32 2147483647, %v5065
        %v5548 = vand.u32 2147483647, %v3884
        %v5549 = vand.u32 2147483647, %v3886
        %v5550 = vand.u32 2147483647, %v5070
        %v5551 = vand.u32 2147483647, %v3888
        %v5552 = vand.u32 2147483647, %v3890
        %v5553 = vand.u32 2147483647, %v5073
        %v5554 = vand.u32 2147483647, %v3894
        %v5555 = vand.u32 2147483647, %v3896
        %v5556 = vand.u32 2147483647, %v5078
        %v5557 = vand.u32 2147483647, %v3898
        %v5558 = vand.u32 2147483647, %v3900
        %v5559 = vand.u32 2147483647, %v5081
        %v5560 = vand.u32 2147483647, %v3904
        %v5561 = vand.u32 2147483647, %v3906
        %v5562 = vand.u32 2147483647, %v5086
        %v5563 = vand.u32 2147483647, %v3908
        %v5564 = vand.u32 2147483647, %v3910
        %v5565 = vand.u32 2147483647, %v5089
        %v5566 = vand.u32 2147483647, %v3914
        %v5567 = vand.u32 2147483647, %v3916
        %v5568 = vand.u32 2147483647, %v5094
        %v5569 = vand.u32 2147483647, %v3918
        %v5570 = vand.u32 2147483647, %v3920
        %v5571 = vand.u32 2147483647, %v5097
        %v5572 = vand.u32 2147483647, %v3924
        %v5573 = vand.u32 2147483647, %v3926
        %v5574 = vand.u32 2147483647, %v5102
        %v5575 = vand.u32 2147483647, %v3928
        %v5576 = vand.u32 2147483647, %v3930
        %v5577 = vand.u32 2147483647, %v5105
        %v5578 = vand.u32 2147483647, %v3934
        %v5579 = vand.u32 2147483647, %v3936
        %v5580 = vand.u32 2147483647, %v5110
        %v5581 = vand.u32 2147483647, %v3938
        %v5582 = vand.u32 2147483647, %v3940
        %v5583 = vand.u32 2147483647, %v5113
        %v5584 = vand.u32 2147483647, %v3944
        %v5585 = vand.u32 2147483647, %v3946
        %v5586 = vand.u32 2147483647, %v5118
        %v5587 = vand.u32 2147483647, %v3948
        %v5588 = vand.u32 2147483647, %v3950
        %v5589 = vand.u32 2147483647, %v5121
        %v5590 = vand.u32 2147483647, %v3954
        %v5591 = vand.u32 2147483647, %v3956
        %v5592 = vand.u32 2147483647, %v5126
        %v5593 = vand.u32 2147483647, %v3958
        %v5594 = vand.u32 2147483647, %v3960
        %v5595 = vand.u32 2147483647, %v5129
        %v5596 = vand.u32 2147483647, %v3964
        %v5597 = vand.u32 2147483647, %v3966
        %v5598 = vand.u32 2147483647, %v5134
        %v5599 = vand.u32 2147483647, %v3968
        %v5600 = vand.u32 2147483647, %v3970
        %v5601 = vand.u32 2147483647, %v5137
        %v5602 = vand.u32 2147483647, %v3974
        %v5603 = vand.u32 2147483647, %v3976
        %v5604 = vand.u32 2147483647, %v5142
        %v5605 = vand.u32 2147483647, %v3978
        %v5606 = vand.u32 2147483647, %v3980
        %v5607 = vand.u32 2147483647, %v5145
        %v5608 = vand.u32 2147483647, %v3984
        %v5609 = vand.u32 2147483647, %v3986
        %v5610 = vand.u32 2147483647, %v5150
        %v5611 = vand.u32 2147483647, %v3988
        %v5612 = vand.u32 2147483647, %v3990
        %v5613 = vand.u32 2147483647, %v5153
        %v5614 = vand.u32 2147483647, %v3994
        %v5615 = vand.u32 2147483647, %v3996
        %v5616 = vand.u32 2147483647, %v5158
        %v5617 = vand.u32 2147483647, %v3998
        %v5618 = vand.u32 2147483647, %v4000
        %v5619 = vand.u32 2147483647, %v5161
        %v5620 = vand.u32 2147483647, %v4004
        %v5621 = vand.u32 2147483647, %v4006
        %v5622 = vand.u32 2147483647, %v5166
        %v5623 = vand.u32 2147483647, %v4008
        %v5624 = vand.u32 2147483647, %v4010
        %v5625 = vand.u32 2147483647, %v5169
        %v5626 = vand.u32 2147483647, %v4014
        %v5627 = vand.u32 2147483647, %v4016
        %v5628 = vand.u32 2147483647, %v5174
        %v5629 = vand.u32 2147483647, %v4018
        %v5630 = vand.u32 2147483647, %v4020
        %v5631 = vand.u32 2147483647, %v5177
        %v5632 = vand.u32 2147483647, %v4024
        %v5633 = vand.u32 2147483647, %v4026
        %v5634 = vand.u32 2147483647, %v5182
        %v5635 = vand.u32 2147483647, %v4028
        %v5636 = vand.u32 2147483647, %v4030
        %v5637 = vand.u32 2147483647, %v5185
        %v5638 = vand.u32 2147483647, %v4034
        %v5639 = vand.u32 2147483647, %v4036
        %v5640 = vand.u32 2147483647, %v5190
        %v5641 = vand.u32 2147483647, %v4038
        %v5642 = vand.u32 2147483647, %v4040
        %v5643 = vand.u32 2147483647, %v5193
        %v5644 = vand.u32 2147483647, %v4044
        %v5645 = vand.u32 2147483647, %v4046
        %v5646 = vand.u32 2147483647, %v5198
        %v5647 = vand.u32 2147483647, %v4048
        %v5648 = vand.u32 2147483647, %v4050
        %v5649 = vand.u32 2147483647, %v5201
        %v5650 = vand.u32 2147483647, %v4054
        %v5651 = vand.u32 2147483647, %v4056
        %v5652 = vand.u32 2147483647, %v5206
        %v5653 = vand.u32 2147483647, %v4058
        %v5654 = vand.u32 2147483647, %v4060
        %v5655 = vand.u32 2147483647, %v5209
        %v5656 = vand.u32 2147483647, %v4064
        %v5657 = vand.u32 2147483647, %v4066
        %v5658 = vand.u32 2147483647, %v5214
        %v5659 = vand.u32 2147483647, %v4068
        %v5660 = vand.u32 2147483647, %v4070
        %v5661 = vand.u32 2147483647, %v5217
        %v5662 = vand.u32 2147483647, %v4074
        %v5663 = vand.u32 2147483647, %v4076
        %v5664 = vand.u32 2147483647, %v5222
        %v5665 = vand.u32 2147483647, %v4078
        %v5666 = vand.u32 2147483647, %v4080
        %v5667 = vand.u32 2147483647, %v5225
        %v5668 = vand.u32 2147483647, %v4084
        %v5669 = vand.u32 2147483647, %v4086
        %v5670 = vand.u32 2147483647, %v5230
        %v5671 = vand.u32 2147483647, %v4088
        %v5672 = vand.u32 2147483647, %v4090
        %v5673 = vand.u32 2147483647, %v5233
        %v5674 = vand.u32 2147483647, %v4094
        %v5675 = vand.u32 2147483647, %v4096
        %v5676 = vand.u32 2147483647, %v5238
        %v5677 = vand.u32 2147483647, %v4098
        %v5678 = vand.u32 2147483647, %v4100
        %v5679 = vand.u32 2147483647, %v5241
        %v5680 = vand.u32 2147483647, %v4104
        %v5681 = vand.u32 2147483647, %v4106
        %v5682 = vand.u32 2147483647, %v5246
        %v5683 = vand.u32 2147483647, %v4108
        %v5684 = vand.u32 2147483647, %v4110
        %v5685 = vand.u32 2147483647, %v5249
        %v5686 = vand.u32 2147483647, %v4114
        %v5687 = vand.u32 2147483647, %v4116
        %v5688 = vand.u32 2147483647, %v5254
        %v5689 = vand.u32 2147483647, %v4118
        %v5690 = vand.u32 2147483647, %v4120
        %v5691 = vand.u32 2147483647, %v5257
        %v5692 = vand.u32 2147483647, %v4124
        %v5693 = vand.u32 2147483647, %v4126
        %v5694 = vand.u32 2147483647, %v5262
        %v5695 = vand.u32 2147483647, %v4128
        %v5696 = vand.u32 2147483647, %v4130
        %v5697 = vand.u32 2147483647, %v5265
        %v5698 = vand.u32 2147483647, %v4134
        %v5699 = vand.u32 2147483647, %v4136
        %v5700 = vand.u32 2147483647, %v5270
        %v5701 = vand.u32 2147483647, %v4138
        %v5702 = vand.u32 2147483647, %v4140
        %v5703 = vand.u32 2147483647, %v5273
        %v5704 = vand.u32 2147483647, %v4144
        %v5705 = vand.u32 2147483647, %v4146
        %v5706 = vand.u32 2147483647, %v5278
        %v5707 = vand.u32 2147483647, %v4148
        %v5708 = vand.u32 2147483647, %v4150
        %v5709 = vand.u32 2147483647, %v5281
        %v5710 = vand.u32 2147483647, %v4154
        %v5711 = vand.u32 2147483647, %v4156
        %v5712 = vand.u32 2147483647, %v5286
        %v5713 = vand.u32 2147483647, %v4158
        %v5714 = vand.u32 2147483647, %v4160
        %v5715 = vand.u32 2147483647, %v5289
        %v5716 = vand.u32 2147483647, %v4164
        %v5717 = vand.u32 2147483647, %v4166
        %v5718 = vand.u32 2147483647, %v5294
        %v5719 = vand.u32 2147483647, %v4168
        %v5720 = vand.u32 2147483647, %v4170
        %v5721 = vand.u32 2147483647, %v5297
        %v5722 = vand.u32 2147483647, %v4174
        %v5723 = vand.u32 2147483647, %v4176
        %v5724 = vand.u32 2147483647, %v5302
        %v5725 = vand.u32 2147483647, %v4178
        %v5726 = vand.u32 2147483647, %v4180
        %v5727 = vand.u32 2147483647, %v5305
        %v5728 = vand.u32 2147483647, %v4184
        %v5729 = vand.u32 2147483647, %v4186
        %v5730 = vand.u32 2147483647, %v5310
        %v5731 = vand.u32 2147483647, %v4188
        %v5732 = vand.u32 2147483647, %v4190
        %v5733 = vand.u32 2147483647, %v5313
        %v5734 = vand.u32 2147483647, %v4194
        %v5735 = vand.u32 2147483647, %v4196
        %v5736 = vand.u32 2147483647, %v5318
        %v5737 = vand.u32 2147483647, %v4198
        %v5738 = vand.u32 2147483647, %v4200
        %v5739 = vand.u32 2147483647, %v5321
        %v5740 = vand.u32 2147483647, %v4204
        %v5741 = vand.u32 2147483647, %v4206
        %v5742 = vand.u32 2147483647, %v5326
        %v5743 = vand.u32 2147483647, %v4208
        %v5744 = vand.u32 2147483647, %v4210
        %v5745 = vand.u32 2147483647, %v5329
        %v5746 = vand.u32 2147483647, %v4214
        %v5747 = vand.u32 2147483647, %v4216
        %v5748 = vand.u32 2147483647, %v5334
        %v5749 = vand.u32 2147483647, %v4218
        %v5750 = vand.u32 2147483647, %v4220
        %v5751 = vand.u32 2147483647, %v5337
        %v5752 = vand.u32 2147483647, %v4224
        %v5753 = vand.u32 2147483647, %v4226
        %v5754 = vand.u32 2147483647, %v5342
        %v5755 = vand.u32 2147483647, %v4228
        %v5756 = vand.u32 2147483647, %v4230
        %v5757 = vand.u32 2147483647, %v5345
        %v5758 = vand.u32 2147483647, %v4234
        %v5759 = vand.u32 2147483647, %v4236
        %v5760 = vand.u32 2147483647, %v5350
        %v5761 = vand.u32 2147483647, %v4238
        %v5762 = vand.u32 2147483647, %v4240
        %v5763 = vand.u32 2147483647, %v5353
        %v5764 = vand.u32 2147483647, %v4244
        %v5765 = vand.u32 2147483647, %v4246
        %v5766 = vand.u32 2147483647, %v5358
        %v5767 = vand.u32 2147483647, %v4248
        %v5768 = vand.u32 2147483647, %v4250
        %v5769 = vand.u32 2147483647, %v5361
        %v5770 = vand.u32 2147483647, %v4254
        %v5771 = vand.u32 2147483647, %v4256
        %v5772 = vand.u32 2147483647, %v5366
        %v5773 = vand.u32 2147483647, %v4258
        %v5774 = vand.u32 2147483647, %v4260
        %v5775 = vand.u32 2147483647, %v5369
        %v5776 = vand.u32 2147483647, %v4264
        %v5777 = vand.u32 2147483647, %v4266
        %v5778 = vand.u32 2147483647, %v5374
        %v5779 = vand.u32 2147483647, %v4268
        %v5780 = vand.u32 2147483647, %v4270
        %v5781 = vand.u32 2147483647, %v5377
        %v5782 = vand.u32 2147483647, %v4274
        %v5783 = vand.u32 2147483647, %v4276
        %v5784 = vand.u32 2147483647, %v5382
        %v5785 = vand.u32 2147483647, %v4278
        %v5786 = vand.u32 2147483647, %v4280
        %v5787 = vand.u32 2147483647, %v5385
        %v5788 = vand.u32 2147483647, %v4284
        %v5789 = vand.u32 2147483647, %v4286
        %v5790 = vand.u32 2147483647, %v5390
        %v5791 = vand.u32 2147483647, %v4288
        %v5792 = vand.u32 2147483647, %v4290
        %v5793 = vand.u32 2147483647, %v5393
        %v5794 = vand.u32 2147483647, %v4294
        %v5795 = vand.u32 2147483647, %v4296
        %v5796 = vand.u32 2147483647, %v5398
        %v5797 = vand.u32 2147483647, %v4298
        %v5798 = vand.u32 2147483647, %v4300
        %v5799 = vand.u32 2147483647, %v5401
        %v5800 = vand.u32 2147483647, %v4304
        %v5801 = vand.u32 2147483647, %v4306
        %v5802 = vand.u32 2147483647, %v5406
        %v5803 = vand.u32 2147483647, %v4308
        %v5804 = vand.u32 2147483647, %v4310
        %v5805 = vand.u32 2147483647, %v5409
        %v5806 = vand.u32 2147483647, %v4314
        %v5807 = vand.u32 2147483647, %v4316
        %v5808 = vand.u32 2147483647, %v5414
        %v5809 = vand.u32 2147483647, %v4318
        %v5810 = vand.u32 2147483647, %v4320
        %v5811 = vand.u32 2147483647, %v5417
        %v5812 = vand.u32 2147483647, %v4324
        %v5813 = vand.u32 2147483647, %v4326
        %v5814 = vand.u32 2147483647, %v5422
        %v5815 = vand.u32 2147483647, %v4328
        %v5816 = vand.u32 2147483647, %v4330
        %v5817 = vand.u32 2147483647, %v5425
        %v5818 = vand.u32 2147483647, %v4334
        %v5819 = vand.u32 2147483647, %v4336
        %v5820 = vand.u32 2147483647, %v5430
        %v5821 = vand.u32 2147483647, %v4338
        %v5822 = vand.u32 2147483647, %v4340
        %v5823 = vand.u32 2147483647, %v5433
        %v5824 = vand.u32 2147483647, %v4344
        %v5825 = vand.u32 2147483647, %v4346
        %v5826 = vand.u32 2147483647, %v5438
        %v5827 = vand.u32 2147483647, %v4348
        %v5828 = vand.u32 2147483647, %v4350
        %v5829 = vand.u32 2147483647, %v5441
        %v5830 = vand.u32 2147483647, %v4354
        %v5831 = vand.u32 2147483647, %v4356
        %v5832 = vand.u32 2147483647, %v5446
        %v5833 = vand.u32 2147483647, %v4358
        %v5834 = vand.u32 2147483647, %v4360
        %v5835 = vand.u32 2147483647, %v5449
        %v5836 = vmul.f32 %v5452, 5.0
        %v5837 = vmul.f32 %v5453, 5.0
        %v5838 = vmul.f32 %v5454, 5.0
        %v5839 = vmul.f32 %v5455, 5.0
        %v5840 = vmul.f32 %v5456, 5.0
        %v5841 = vmul.f32 %v5457, 5.0
        %v5842 = vmul.f32 %v5458, 5.0
        %v5843 = vmul.f32 %v5459, 5.0
        %v5844 = vmul.f32 %v5460, 5.0
        %v5845 = vmul.f32 %v5461, 5.0
        %v5846 = vmul.f32 %v5462, 5.0
        %v5847 = vmul.f32 %v5463, 5.0
        %v5848 = vmul.f32 %v5464, 5.0
        %v5849 = vmul.f32 %v5465, 5.0
        %v5850 = vmul.f32 %v5466, 5.0
        %v5851 = vmul.f32 %v5467, 5.0
        %v5852 = vmul.f32 %v5468, 5.0
        %v5853 = vmul.f32 %v5469, 5.0
        %v5854 = vmul.f32 %v5470, 5.0
        %v5855 = vmul.f32 %v5471, 5.0
        %v5856 = vmul.f32 %v5472, 5.0
        %v5857 = vmul.f32 %v5473, 5.0
        %v5858 = vmul.f32 %v5474, 5.0
        %v5859 = vmul.f32 %v5475, 5.0
        %v5860 = vmul.f32 %v5476, 5.0
        %v5861 = vmul.f32 %v5477, 5.0
        %v5862 = vmul.f32 %v5478, 5.0
        %v5863 = vmul.f32 %v5479, 5.0
        %v5864 = vmul.f32 %v5480, 5.0
        %v5865 = vmul.f32 %v5481, 5.0
        %v5866 = vmul.f32 %v5482, 5.0
        %v5867 = vmul.f32 %v5483, 5.0
        %v5868 = vmul.f32 %v5484, 5.0
        %v5869 = vmul.f32 %v5485, 5.0
        %v5870 = vmul.f32 %v5486, 5.0
        %v5871 = vmul.f32 %v5487, 5.0
        %v5872 = vmul.f32 %v5488, 5.0
        %v5873 = vmul.f32 %v5489, 5.0
        %v5874 = vmul.f32 %v5490, 5.0
        %v5875 = vmul.f32 %v5491, 5.0
        %v5876 = vmul.f32 %v5492, 5.0
        %v5877 = vmul.f32 %v5493, 5.0
        %v5878 = vmul.f32 %v5494, 5.0
        %v5879 = vmul.f32 %v5495, 5.0
        %v5880 = vmul.f32 %v5496, 5.0
        %v5881 = vmul.f32 %v5497, 5.0
        %v5882 = vmul.f32 %v5498, 5.0
        %v5883 = vmul.f32 %v5499, 5.0
        %v5884 = vmul.f32 %v5500, 5.0
        %v5885 = vmul.f32 %v5501, 5.0
        %v5886 = vmul.f32 %v5502, 5.0
        %v5887 = vmul.f32 %v5503, 5.0
        %v5888 = vmul.f32 %v5504, 5.0
        %v5889 = vmul.f32 %v5505, 5.0
        %v5890 = vmul.f32 %v5506, 5.0
        %v5891 = vmul.f32 %v5507, 5.0
        %v5892 = vmul.f32 %v5508, 5.0
        %v5893 = vmul.f32 %v5509, 5.0
        %v5894 = vmul.f32 %v5510, 5.0
        %v5895 = vmul.f32 %v5511, 5.0
        %v5896 = vmul.f32 %v5512, 5.0
        %v5897 = vmul.f32 %v5513, 5.0
        %v5898 = vmul.f32 %v5514, 5.0
        %v5899 = vmul.f32 %v5515, 5.0
        %v5900 = vmul.f32 %v5516, 5.0
        %v5901 = vmul.f32 %v5517, 5.0
        %v5902 = vmul.f32 %v5518, 5.0
        %v5903 = vmul.f32 %v5519, 5.0
        %v5904 = vmul.f32 %v5520, 5.0
        %v5905 = vmul.f32 %v5521, 5.0
        %v5906 = vmul.f32 %v5522, 5.0
        %v5907 = vmul.f32 %v5523, 5.0
        %v5908 = vmul.f32 %v5524, 5.0
        %v5909 = vmul.f32 %v5525, 5.0
        %v5910 = vmul.f32 %v5526, 5.0
        %v5911 = vmul.f32 %v5527, 5.0
        %v5912 = vmul.f32 %v5528, 5.0
        %v5913 = vmul.f32 %v5529, 5.0
        %v5914 = vmul.f32 %v5530, 5.0
        %v5915 = vmul.f32 %v5531, 5.0
        %v5916 = vmul.f32 %v5532, 5.0
        %v5917 = vmul.f32 %v5533, 5.0
        %v5918 = vmul.f32 %v5534, 5.0
        %v5919 = vmul.f32 %v5535, 5.0
        %v5920 = vmul.f32 %v5536, 5.0
        %v5921 = vmul.f32 %v5537, 5.0
        %v5922 = vmul.f32 %v5538, 5.0
        %v5923 = vmul.f32 %v5539, 5.0
        %v5924 = vmul.f32 %v5540, 5.0
        %v5925 = vmul.f32 %v5541, 5.0
        %v5926 = vmul.f32 %v5542, 5.0
        %v5927 = vmul.f32 %v5543, 5.0
        %v5928 = vmul.f32 %v5544, 5.0
        %v5929 = vmul.f32 %v5545, 5.0
        %v5930 = vmul.f32 %v5546, 5.0
        %v5931 = vmul.f32 %v5547, 5.0
        %v5932 = vmul.f32 %v5548, 5.0
        %v5933 = vmul.f32 %v5549, 5.0
        %v5934 = vmul.f32 %v5550, 5.0
        %v5935 = vmul.f32 %v5551, 5.0
        %v5936 = vmul.f32 %v5552, 5.0
        %v5937 = vmul.f32 %v5553, 5.0
        %v5938 = vmul.f32 %v5554, 5.0
        %v5939 = vmul.f32 %v5555, 5.0
        %v5940 = vmul.f32 %v5556, 5.0
        %v5941 = vmul.f32 %v5557, 5.0
        %v5942 = vmul.f32 %v5558, 5.0
        %v5943 = vmul.f32 %v5559, 5.0
        %v5944 = vmul.f32 %v5560, 5.0
        %v5945 = vmul.f32 %v5561, 5.0
        %v5946 = vmul.f32 %v5562, 5.0
        %v5947 = vmul.f32 %v5563, 5.0
        %v5948 = vmul.f32 %v5564, 5.0
        %v5949 = vmul.f32 %v5565, 5.0
        %v5950 = vmul.f32 %v5566, 5.0
        %v5951 = vmul.f32 %v5567, 5.0
        %v5952 = vmul.f32 %v5568, 5.0
        %v5953 = vmul.f32 %v5569, 5.0
        %v5954 = vmul.f32 %v5570, 5.0
        %v5955 = vmul.f32 %v5571, 5.0
        %v5956 = vmul.f32 %v5572, 5.0
        %v5957 = vmul.f32 %v5573, 5.0
        %v5958 = vmul.f32 %v5574, 5.0
        %v5959 = vmul.f32 %v5575, 5.0
        %v5960 = vmul.f32 %v5576, 5.0
        %v5961 = vmul.f32 %v5577, 5.0
        %v5962 = vmul.f32 %v5578, 5.0
        %v5963 = vmul.f32 %v5579, 5.0
        %v5964 = vmul.f32 %v5580, 5.0
        %v5965 = vmul.f32 %v5581, 5.0
        %v5966 = vmul.f32 %v5582, 5.0
        %v5967 = vmul.f32 %v5583, 5.0
        %v5968 = vmul.f32 %v5584, 5.0
        %v5969 = vmul.f32 %v5585, 5.0
        %v5970 = vmul.f32 %v5586, 5.0
        %v5971 = vmul.f32 %v5587, 5.0
        %v5972 = vmul.f32 %v5588, 5.0
        %v5973 = vmul.f32 %v5589, 5.0
        %v5974 = vmul.f32 %v5590, 5.0
        %v5975 = vmul.f32 %v5591, 5.0
        %v5976 = vmul.f32 %v5592, 5.0
        %v5977 = vmul.f32 %v5593, 5.0
        %v5978 = vmul.f32 %v5594, 5.0
        %v5979 = vmul.f32 %v5595, 5.0
        %v5980 = vmul.f32 %v5596, 5.0
        %v5981 = vmul.f32 %v5597, 5.0
        %v5982 = vmul.f32 %v5598, 5.0
        %v5983 = vmul.f32 %v5599, 5.0
        %v5984 = vmul.f32 %v5600, 5.0
        %v5985 = vmul.f32 %v5601, 5.0
        %v5986 = vmul.f32 %v5602, 5.0
        %v5987 = vmul.f32 %v5603, 5.0
        %v5988 = vmul.f32 %v5604, 5.0
        %v5989 = vmul.f32 %v5605, 5.0
        %v5990 = vmul.f32 %v5606, 5.0
        %v5991 = vmul.f32 %v5607, 5.0
        %v5992 = vmul.f32 %v5608, 5.0
        %v5993 = vmul.f32 %v5609, 5.0
        %v5994 = vmul.f32 %v5610, 5.0
        %v5995 = vmul.f32 %v5611, 5.0
        %v5996 = vmul.f32 %v5612, 5.0
        %v5997 = vmul.f32 %v5613, 5.0
        %v5998 = vmul.f32 %v5614, 5.0
        %v5999 = vmul.f32 %v5615, 5.0
        %v6000 = vmul.f32 %v5616, 5.0
        %v6001 = vmul.f32 %v5617, 5.0
        %v6002 = vmul.f32 %v5618, 5.0
        %v6003 = vmul.f32 %v5619, 5.0
        %v6004 = vmul.f32 %v5620, 5.0
        %v6005 = vmul.f32 %v5621, 5.0
        %v6006 = vmul.f32 %v5622, 5.0
        %v6007 = vmul.f32 %v5623, 5.0
        %v6008 = vmul.f32 %v5624, 5.0
        %v6009 = vmul.f32 %v5625, 5.0
        %v6010 = vmul.f32 %v5626, 5.0
        %v6011 = vmul.f32 %v5627, 5.0
        %v6012 = vmul.f32 %v5628, 5.0
        %v6013 = vmul.f32 %v5629, 5.0
        %v6014 = vmul.f32 %v5630, 5.0
        %v6015 = vmul.f32 %v5631, 5.0
        %v6016 = vmul.f32 %v5632, 5.0
        %v6017 = vmul.f32 %v5633, 5.0
        %v6018 = vmul.f32 %v5634, 5.0
        %v6019 = vmul.f32 %v5635, 5.0
        %v6020 = vmul.f32 %v5636, 5.0
        %v6021 = vmul.f32 %v5637, 5.0
        %v6022 = vmul.f32 %v5638, 5.0
        %v6023 = vmul.f32 %v5639, 5.0
        %v6024 = vmul.f32 %v5640, 5.0
        %v6025 = vmul.f32 %v5641, 5.0
        %v6026 = vmul.f32 %v5642, 5.0
        %v6027 = vmul.f32 %v5643, 5.0
        %v6028 = vmul.f32 %v5644, 5.0
        %v6029 = vmul.f32 %v5645, 5.0
        %v6030 = vmul.f32 %v5646, 5.0
        %v6031 = vmul.f32 %v5647, 5.0
        %v6032 = vmul.f32 %v5648, 5.0
        %v6033 = vmul.f32 %v5649, 5.0
        %v6034 = vmul.f32 %v5650, 5.0
        %v6035 = vmul.f32 %v5651, 5.0
        %v6036 = vmul.f32 %v5652, 5.0
        %v6037 = vmul.f32 %v5653, 5.0
        %v6038 = vmul.f32 %v5654, 5.0
        %v6039 = vmul.f32 %v5655, 5.0
        %v6040 = vmul.f32 %v5656, 5.0
        %v6041 = vmul.f32 %v5657, 5.0
        %v6042 = vmul.f32 %v5658, 5.0
        %v6043 = vmul.f32 %v5659, 5.0
        %v6044 = vmul.f32 %v5660, 5.0
        %v6045 = vmul.f32 %v5661, 5.0
        %v6046 = vmul.f32 %v5662, 5.0
        %v6047 = vmul.f32 %v5663, 5.0
        %v6048 = vmul.f32 %v5664, 5.0
        %v6049 = vmul.f32 %v5665, 5.0
        %v6050 = vmul.f32 %v5666, 5.0
        %v6051 = vmul.f32 %v5667, 5.0
        %v6052 = vmul.f32 %v5668, 5.0
        %v6053 = vmul.f32 %v5669, 5.0
        %v6054 = vmul.f32 %v5670, 5.0
        %v6055 = vmul.f32 %v5671, 5.0
        %v6056 = vmul.f32 %v5672, 5.0
        %v6057 = vmul.f32 %v5673, 5.0
        %v6058 = vmul.f32 %v5674, 5.0
        %v6059 = vmul.f32 %v5675, 5.0
        %v6060 = vmul.f32 %v5676, 5.0
        %v6061 = vmul.f32 %v5677, 5.0
        %v6062 = vmul.f32 %v5678, 5.0
        %v6063 = vmul.f32 %v5679, 5.0
        %v6064 = vmul.f32 %v5680, 5.0
        %v6065 = vmul.f32 %v5681, 5.0
        %v6066 = vmul.f32 %v5682, 5.0
        %v6067 = vmul.f32 %v5683, 5.0
        %v6068 = vmul.f32 %v5684, 5.0
        %v6069 = vmul.f32 %v5685, 5.0
        %v6070 = vmul.f32 %v5686, 5.0
        %v6071 = vmul.f32 %v5687, 5.0
        %v6072 = vmul.f32 %v5688, 5.0
        %v6073 = vmul.f32 %v5689, 5.0
        %v6074 = vmul.f32 %v5690, 5.0
        %v6075 = vmul.f32 %v5691, 5.0
        %v6076 = vmul.f32 %v5692, 5.0
        %v6077 = vmul.f32 %v5693, 5.0
        %v6078 = vmul.f32 %v5694, 5.0
        %v6079 = vmul.f32 %v5695, 5.0
        %v6080 = vmul.f32 %v5696, 5.0
        %v6081 = vmul.f32 %v5697, 5.0
        %v6082 = vmul.f32 %v5698, 5.0
        %v6083 = vmul.f32 %v5699, 5.0
        %v6084 = vmul.f32 %v5700, 5.0
        %v6085 = vmul.f32 %v5701, 5.0
        %v6086 = vmul.f32 %v5702, 5.0
        %v6087 = vmul.f32 %v5703, 5.0
        %v6088 = vmul.f32 %v5704, 5.0
        %v6089 = vmul.f32 %v5705, 5.0
        %v6090 = vmul.f32 %v5706, 5.0
        %v6091 = vmul.f32 %v5707, 5.0
        %v6092 = vmul.f32 %v5708, 5.0
        %v6093 = vmul.f32 %v5709, 5.0
        %v6094 = vmul.f32 %v5710, 5.0
        %v6095 = vmul.f32 %v5711, 5.0
        %v6096 = vmul.f32 %v5712, 5.0
        %v6097 = vmul.f32 %v5713, 5.0
        %v6098 = vmul.f32 %v5714, 5.0
        %v6099 = vmul.f32 %v5715, 5.0
        %v6100 = vmul.f32 %v5716, 5.0
        %v6101 = vmul.f32 %v5717, 5.0
        %v6102 = vmul.f32 %v5718, 5.0
        %v6103 = vmul.f32 %v5719, 5.0
        %v6104 = vmul.f32 %v5720, 5.0
        %v6105 = vmul.f32 %v5721, 5.0
        %v6106 = vmul.f32 %v5722, 5.0
        %v6107 = vmul.f32 %v5723, 5.0
        %v6108 = vmul.f32 %v5724, 5.0
        %v6109 = vmul.f32 %v5725, 5.0
        %v6110 = vmul.f32 %v5726, 5.0
        %v6111 = vmul.f32 %v5727, 5.0
        %v6112 = vmul.f32 %v5728, 5.0
        %v6113 = vmul.f32 %v5729, 5.0
        %v6114 = vmul.f32 %v5730, 5.0
        %v6115 = vmul.f32 %v5731, 5.0
        %v6116 = vmul.f32 %v5732, 5.0
        %v6117 = vmul.f32 %v5733, 5.0
        %v6118 = vmul.f32 %v5734, 5.0
        %v6119 = vmul.f32 %v5735, 5.0
        %v6120 = vmul.f32 %v5736, 5.0
        %v6121 = vmul.f32 %v5737, 5.0
        %v6122 = vmul.f32 %v5738, 5.0
        %v6123 = vmul.f32 %v5739, 5.0
        %v6124 = vmul.f32 %v5740, 5.0
        %v6125 = vmul.f32 %v5741, 5.0
        %v6126 = vmul.f32 %v5742, 5.0
        %v6127 = vmul.f32 %v5743, 5.0
        %v6128 = vmul.f32 %v5744, 5.0
        %v6129 = vmul.f32 %v5745, 5.0
        %v6130 = vmul.f32 %v5746, 5.0
        %v6131 = vmul.f32 %v5747, 5.0
        %v6132 = vmul.f32 %v5748, 5.0
        %v6133 = vmul.f32 %v5749, 5.0
        %v6134 = vmul.f32 %v5750, 5.0
        %v6135 = vmul.f32 %v5751, 5.0
        %v6136 = vmul.f32 %v5752, 5.0
        %v6137 = vmul.f32 %v5753, 5.0
        %v6138 = vmul.f32 %v5754, 5.0
        %v6139 = vmul.f32 %v5755, 5.0
        %v6140 = vmul.f32 %v5756, 5.0
        %v6141 = vmul.f32 %v5757, 5.0
        %v6142 = vmul.f32 %v5758, 5.0
        %v6143 = vmul.f32 %v5759, 5.0
        %v6144 = vmul.f32 %v5760, 5.0
        %v6145 = vmul.f32 %v5761, 5.0
        %v6146 = vmul.f32 %v5762, 5.0
        %v6147 = vmul.f32 %v5763, 5.0
        %v6148 = vmul.f32 %v5764, 5.0
        %v6149 = vmul.f32 %v5765, 5.0
        %v6150 = vmul.f32 %v5766, 5.0
        %v6151 = vmul.f32 %v5767, 5.0
        %v6152 = vmul.f32 %v5768, 5.0
        %v6153 = vmul.f32 %v5769, 5.0
        %v6154 = vmul.f32 %v5770, 5.0
        %v6155 = vmul.f32 %v5771, 5.0
        %v6156 = vmul.f32 %v5772, 5.0
        %v6157 = vmul.f32 %v5773, 5.0
        %v6158 = vmul.f32 %v5774, 5.0
        %v6159 = vmul.f32 %v5775, 5.0
        %v6160 = vmul.f32 %v5776, 5.0
        %v6161 = vmul.f32 %v5777, 5.0
        %v6162 = vmul.f32 %v5778, 5.0
        %v6163 = vmul.f32 %v5779, 5.0
        %v6164 = vmul.f32 %v5780, 5.0
        %v6165 = vmul.f32 %v5781, 5.0
        %v6166 = vmul.f32 %v5782, 5.0
        %v6167 = vmul.f32 %v5783, 5.0
        %v6168 = vmul.f32 %v5784, 5.0
        %v6169 = vmul.f32 %v5785, 5.0
        %v6170 = vmul.f32 %v5786, 5.0
        %v6171 = vmul.f32 %v5787, 5.0
        %v6172 = vmul.f32 %v5788, 5.0
        %v6173 = vmul.f32 %v5789, 5.0
        %v6174 = vmul.f32 %v5790, 5.0
        %v6175 = vmul.f32 %v5791, 5.0
        %v6176 = vmul.f32 %v5792, 5.0
        %v6177 = vmul.f32 %v5793, 5.0
        %v6178 = vmul.f32 %v5794, 5.0
        %v6179 = vmul.f32 %v5795, 5.0
        %v6180 = vmul.f32 %v5796, 5.0
        %v6181 = vmul.f32 %v5797, 5.0
        %v6182 = vmul.f32 %v5798, 5.0
        %v6183 = vmul.f32 %v5799, 5.0
        %v6184 = vmul.f32 %v5800, 5.0
        %v6185 = vmul.f32 %v5801, 5.0
        %v6186 = vmul.f32 %v5802, 5.0
        %v6187 = vmul.f32 %v5803, 5.0
        %v6188 = vmul.f32 %v5804, 5.0
        %v6189 = vmul.f32 %v5805, 5.0
        %v6190 = vmul.f32 %v5806, 5.0
        %v6191 = vmul.f32 %v5807, 5.0
        %v6192 = vmul.f32 %v5808, 5.0
        %v6193 = vmul.f32 %v5809, 5.0
        %v6194 = vmul.f32 %v5810, 5.0
        %v6195 = vmul.f32 %v5811, 5.0
        %v6196 = vmul.f32 %v5812, 5.0
        %v6197 = vmul.f32 %v5813, 5.0
        %v6198 = vmul.f32 %v5814, 5.0
        %v6199 = vmul.f32 %v5815, 5.0
        %v6200 = vmul.f32 %v5816, 5.0
        %v6201 = vmul.f32 %v5817, 5.0
        %v6202 = vmul.f32 %v5818, 5.0
        %v6203 = vmul.f32 %v5819, 5.0
        %v6204 = vmul.f32 %v5820, 5.0
        %v6205 = vmul.f32 %v5821, 5.0
        %v6206 = vmul.f32 %v5822, 5.0
        %v6207 = vmul.f32 %v5823, 5.0
        %v6208 = vmul.f32 %v5824, 5.0
        %v6209 = vmul.f32 %v5825, 5.0
        %v6210 = vmul.f32 %v5826, 5.0
        %v6211 = vmul.f32 %v5827, 5.0
        %v6212 = vmul.f32 %v5828, 5.0
        %v6213 = vmul.f32 %v5829, 5.0
        %v6214 = vmul.f32 %v5830, 5.0
        %v6215 = vmul.f32 %v5831, 5.0
        %v6216 = vmul.f32 %v5832, 5.0
        %v6217 = vmul.f32 %v5833, 5.0
        %v6218 = vmul.f32 %v5834, 5.0
        %v6219 = vmul.f32 %v5835, 5.0
        %v6220 = vpack.c.bf16 %v5839, %v5836
        %v6221 = vpack.c.bf16 %v5840, %v5837
        %v6222 = vpack.c.bf16 %v5841, %v5838
        %v6223 = vpack.c.bf16 %v5845, %v5842
        %v6224 = vpack.c.bf16 %v5846, %v5843
        %v6225 = vpack.c.bf16 %v5847, %v5844
        %v6226 = vpack.c.bf16 %v5851, %v5848
        %v6227 = vpack.c.bf16 %v5852, %v5849
        %v6228 = vpack.c.bf16 %v5853, %v5850
        %v6229 = vpack.c.bf16 %v5857, %v5854
        %v6230 = vpack.c.bf16 %v5858, %v5855
        %v6231 = vpack.c.bf16 %v5859, %v5856
        %v6232 = vpack.c.bf16 %v5863, %v5860
        %v6233 = vpack.c.bf16 %v5864, %v5861
        %v6234 = vpack.c.bf16 %v5865, %v5862
        %v6235 = vpack.c.bf16 %v5869, %v5866
        %v6236 = vpack.c.bf16 %v5870, %v5867
        %v6237 = vpack.c.bf16 %v5871, %v5868
        %v6238 = vpack.c.bf16 %v5875, %v5872
        %v6239 = vpack.c.bf16 %v5876, %v5873
        %v6240 = vpack.c.bf16 %v5877, %v5874
        %v6241 = vpack.c.bf16 %v5881, %v5878
        %v6242 = vpack.c.bf16 %v5882, %v5879
        %v6243 = vpack.c.bf16 %v5883, %v5880
        %v6244 = vpack.c.bf16 %v5887, %v5884
        %v6245 = vpack.c.bf16 %v5888, %v5885
        %v6246 = vpack.c.bf16 %v5889, %v5886
        %v6247 = vpack.c.bf16 %v5893, %v5890
        %v6248 = vpack.c.bf16 %v5894, %v5891
        %v6249 = vpack.c.bf16 %v5895, %v5892
        %v6250 = vpack.c.bf16 %v5899, %v5896
        %v6251 = vpack.c.bf16 %v5900, %v5897
        %v6252 = vpack.c.bf16 %v5901, %v5898
        %v6253 = vpack.c.bf16 %v5905, %v5902
        %v6254 = vpack.c.bf16 %v5906, %v5903
        %v6255 = vpack.c.bf16 %v5907, %v5904
        %v6256 = vpack.c.bf16 %v5911, %v5908
        %v6257 = vpack.c.bf16 %v5912, %v5909
        %v6258 = vpack.c.bf16 %v5913, %v5910
        %v6259 = vpack.c.bf16 %v5917, %v5914
        %v6260 = vpack.c.bf16 %v5918, %v5915
        %v6261 = vpack.c.bf16 %v5919, %v5916
        %v6262 = vpack.c.bf16 %v5923, %v5920
        %v6263 = vpack.c.bf16 %v5924, %v5921
        %v6264 = vpack.c.bf16 %v5925, %v5922
        %v6265 = vpack.c.bf16 %v5929, %v5926
        %v6266 = vpack.c.bf16 %v5930, %v5927
        %v6267 = vpack.c.bf16 %v5931, %v5928
        %v6268 = vpack.c.bf16 %v5935, %v5932
        %v6269 = vpack.c.bf16 %v5936, %v5933
        %v6270 = vpack.c.bf16 %v5937, %v5934
        %v6271 = vpack.c.bf16 %v5941, %v5938
        %v6272 = vpack.c.bf16 %v5942, %v5939
        %v6273 = vpack.c.bf16 %v5943, %v5940
        %v6274 = vpack.c.bf16 %v5947, %v5944
        %v6275 = vpack.c.bf16 %v5948, %v5945
        %v6276 = vpack.c.bf16 %v5949, %v5946
        %v6277 = vpack.c.bf16 %v5953, %v5950
        %v6278 = vpack.c.bf16 %v5954, %v5951
        %v6279 = vpack.c.bf16 %v5955, %v5952
        %v6280 = vpack.c.bf16 %v5959, %v5956
        %v6281 = vpack.c.bf16 %v5960, %v5957
        %v6282 = vpack.c.bf16 %v5961, %v5958
        %v6283 = vpack.c.bf16 %v5965, %v5962
        %v6284 = vpack.c.bf16 %v5966, %v5963
        %v6285 = vpack.c.bf16 %v5967, %v5964
        %v6286 = vpack.c.bf16 %v5971, %v5968
        %v6287 = vpack.c.bf16 %v5972, %v5969
        %v6288 = vpack.c.bf16 %v5973, %v5970
        %v6289 = vpack.c.bf16 %v5977, %v5974
        %v6290 = vpack.c.bf16 %v5978, %v5975
        %v6291 = vpack.c.bf16 %v5979, %v5976
        %v6292 = vpack.c.bf16 %v5983, %v5980
        %v6293 = vpack.c.bf16 %v5984, %v5981
        %v6294 = vpack.c.bf16 %v5985, %v5982
        %v6295 = vpack.c.bf16 %v5989, %v5986
        %v6296 = vpack.c.bf16 %v5990, %v5987
        %v6297 = vpack.c.bf16 %v5991, %v5988
        %v6298 = vpack.c.bf16 %v5995, %v5992
        %v6299 = vpack.c.bf16 %v5996, %v5993
        %v6300 = vpack.c.bf16 %v5997, %v5994
        %v6301 = vpack.c.bf16 %v6001, %v5998
        %v6302 = vpack.c.bf16 %v6002, %v5999
        %v6303 = vpack.c.bf16 %v6003, %v6000
        %v6304 = vpack.c.bf16 %v6007, %v6004
        %v6305 = vpack.c.bf16 %v6008, %v6005
        %v6306 = vpack.c.bf16 %v6009, %v6006
        %v6307 = vpack.c.bf16 %v6013, %v6010
        %v6308 = vpack.c.bf16 %v6014, %v6011
        %v6309 = vpack.c.bf16 %v6015, %v6012
        %v6310 = vpack.c.bf16 %v6019, %v6016
        %v6311 = vpack.c.bf16 %v6020, %v6017
        %v6312 = vpack.c.bf16 %v6021, %v6018
        %v6313 = vpack.c.bf16 %v6025, %v6022
        %v6314 = vpack.c.bf16 %v6026, %v6023
        %v6315 = vpack.c.bf16 %v6027, %v6024
        %v6316 = vpack.c.bf16 %v6031, %v6028
        %v6317 = vpack.c.bf16 %v6032, %v6029
        %v6318 = vpack.c.bf16 %v6033, %v6030
        %v6319 = vpack.c.bf16 %v6037, %v6034
        %v6320 = vpack.c.bf16 %v6038, %v6035
        %v6321 = vpack.c.bf16 %v6039, %v6036
        %v6322 = vpack.c.bf16 %v6043, %v6040
        %v6323 = vpack.c.bf16 %v6044, %v6041
        %v6324 = vpack.c.bf16 %v6045, %v6042
        %v6325 = vpack.c.bf16 %v6049, %v6046
        %v6326 = vpack.c.bf16 %v6050, %v6047
        %v6327 = vpack.c.bf16 %v6051, %v6048
        %v6328 = vpack.c.bf16 %v6055, %v6052
        %v6329 = vpack.c.bf16 %v6056, %v6053
        %v6330 = vpack.c.bf16 %v6057, %v6054
        %v6331 = vpack.c.bf16 %v6061, %v6058
        %v6332 = vpack.c.bf16 %v6062, %v6059
        %v6333 = vpack.c.bf16 %v6063, %v6060
        %v6334 = vpack.c.bf16 %v6067, %v6064
        %v6335 = vpack.c.bf16 %v6068, %v6065
        %v6336 = vpack.c.bf16 %v6069, %v6066
        %v6337 = vpack.c.bf16 %v6073, %v6070
        %v6338 = vpack.c.bf16 %v6074, %v6071
        %v6339 = vpack.c.bf16 %v6075, %v6072
        %v6340 = vpack.c.bf16 %v6079, %v6076
        %v6341 = vpack.c.bf16 %v6080, %v6077
        %v6342 = vpack.c.bf16 %v6081, %v6078
        %v6343 = vpack.c.bf16 %v6085, %v6082
        %v6344 = vpack.c.bf16 %v6086, %v6083
        %v6345 = vpack.c.bf16 %v6087, %v6084
        %v6346 = vpack.c.bf16 %v6091, %v6088
        %v6347 = vpack.c.bf16 %v6092, %v6089
        %v6348 = vpack.c.bf16 %v6093, %v6090
        %v6349 = vpack.c.bf16 %v6097, %v6094
        %v6350 = vpack.c.bf16 %v6098, %v6095
        %v6351 = vpack.c.bf16 %v6099, %v6096
        %v6352 = vpack.c.bf16 %v6103, %v6100
        %v6353 = vpack.c.bf16 %v6104, %v6101
        %v6354 = vpack.c.bf16 %v6105, %v6102
        %v6355 = vpack.c.bf16 %v6109, %v6106
        %v6356 = vpack.c.bf16 %v6110, %v6107
        %v6357 = vpack.c.bf16 %v6111, %v6108
        %v6358 = vpack.c.bf16 %v6115, %v6112
        %v6359 = vpack.c.bf16 %v6116, %v6113
        %v6360 = vpack.c.bf16 %v6117, %v6114
        %v6361 = vpack.c.bf16 %v6121, %v6118
        %v6362 = vpack.c.bf16 %v6122, %v6119
        %v6363 = vpack.c.bf16 %v6123, %v6120
        %v6364 = vpack.c.bf16 %v6127, %v6124
        %v6365 = vpack.c.bf16 %v6128, %v6125
        %v6366 = vpack.c.bf16 %v6129, %v6126
        %v6367 = vpack.c.bf16 %v6133, %v6130
        %v6368 = vpack.c.bf16 %v6134, %v6131
        %v6369 = vpack.c.bf16 %v6135, %v6132
        %v6370 = vpack.c.bf16 %v6139, %v6136
        %v6371 = vpack.c.bf16 %v6140, %v6137
        %v6372 = vpack.c.bf16 %v6141, %v6138
        %v6373 = vpack.c.bf16 %v6145, %v6142
        %v6374 = vpack.c.bf16 %v6146, %v6143
        %v6375 = vpack.c.bf16 %v6147, %v6144
        %v6376 = vpack.c.bf16 %v6151, %v6148
        %v6377 = vpack.c.bf16 %v6152, %v6149
        %v6378 = vpack.c.bf16 %v6153, %v6150
        %v6379 = vpack.c.bf16 %v6157, %v6154
        %v6380 = vpack.c.bf16 %v6158, %v6155
        %v6381 = vpack.c.bf16 %v6159, %v6156
        %v6382 = vpack.c.bf16 %v6163, %v6160
        %v6383 = vpack.c.bf16 %v6164, %v6161
        %v6384 = vpack.c.bf16 %v6165, %v6162
        %v6385 = vpack.c.bf16 %v6169, %v6166
        %v6386 = vpack.c.bf16 %v6170, %v6167
        %v6387 = vpack.c.bf16 %v6171, %v6168
        %v6388 = vpack.c.bf16 %v6175, %v6172
        %v6389 = vpack.c.bf16 %v6176, %v6173
        %v6390 = vpack.c.bf16 %v6177, %v6174
        %v6391 = vpack.c.bf16 %v6181, %v6178
        %v6392 = vpack.c.bf16 %v6182, %v6179
        %v6393 = vpack.c.bf16 %v6183, %v6180
        %v6394 = vpack.c.bf16 %v6187, %v6184
        %v6395 = vpack.c.bf16 %v6188, %v6185
        %v6396 = vpack.c.bf16 %v6189, %v6186
        %v6397 = vpack.c.bf16 %v6193, %v6190
        %v6398 = vpack.c.bf16 %v6194, %v6191
        %v6399 = vpack.c.bf16 %v6195, %v6192
        %v6400 = vpack.c.bf16 %v6199, %v6196
        %v6401 = vpack.c.bf16 %v6200, %v6197
        %v6402 = vpack.c.bf16 %v6201, %v6198
        %v6403 = vpack.c.bf16 %v6205, %v6202
        %v6404 = vpack.c.bf16 %v6206, %v6203
        %v6405 = vpack.c.bf16 %v6207, %v6204
        %v6406 = vpack.c.bf16 %v6211, %v6208
        %v6407 = vpack.c.bf16 %v6212, %v6209
        %v6408 = vpack.c.bf16 %v6213, %v6210
        %v6409 = vpack.c.bf16 %v6217, %v6214
        %v6410 = vpack.c.bf16 %v6218, %v6215
        %v6411 = vpack.c.bf16 %v6219, %v6216
        %v6412 = vld [vmem:[%s2] sm:$0xf]
        %v6413 = vld [vmem:[%s2 + $0x4] sm:$0xf]
        %v6414 = vld [vmem:[%s2 + $0x8] sm:$0xf]
        %v6415 = vld [vmem:[%s2 + $0xc] sm:$0xf]
        %v6416 = vld [vmem:[%s2 + $0x10] sm:$0xf]
        %v6417 = vld [vmem:[%s2 + $0x14] sm:$0xf]
        %v6418 = vld [vmem:[%s2 + $0x18] sm:$0xf]
        %v6419 = vld [vmem:[%s2 + $0x1c] sm:$0xf]
        %v6420 = vld [vmem:[%s2 + $0x20] sm:$0xf]
        %v6421 = vld [vmem:[%s2 + $0x24] sm:$0xf]
        %v6422 = vld [vmem:[%s2 + $0x28] sm:$0xf]
        %v6423 = vld [vmem:[%s2 + $0x2c] sm:$0xf]
        %v6424 = vld [vmem:[%s2 + $0x30] sm:$0xf]
        %v6425 = vld [vmem:[%s2 + $0x34] sm:$0xf]
        %v6426 = vld [vmem:[%s2 + $0x38] sm:$0xf]
        %v6427 = vld [vmem:[%s2 + $0x3c] sm:$0xf]
        %v6428 = vld [vmem:[%s2 + $0x40] sm:$0xf]
        %v6429 = vld [vmem:[%s2 + $0x44] sm:$0xf]
        %v6430 = vld [vmem:[%s2 + $0x48] sm:$0xf]
        %v6431 = vld [vmem:[%s2 + $0x4c] sm:$0xf]
        %v6432 = vld [vmem:[%s2 + $0x50] sm:$0xf]
        %v6433 = vld [vmem:[%s2 + $0x54] sm:$0xf]
        %v6434 = vld [vmem:[%s2 + $0x58] sm:$0xf]
        %v6435 = vld [vmem:[%s2 + $0x5c] sm:$0xf]
        %v6436 = vld [vmem:[%s2 + $0x60] sm:$0xf]
        %v6437 = vld [vmem:[%s2 + $0x64] sm:$0xf]
        %v6438 = vld [vmem:[%s2 + $0x68] sm:$0xf]
        %v6439 = vld [vmem:[%s2 + $0x6c] sm:$0xf]
        %v6440 = vld [vmem:[%s2 + $0x70] sm:$0xf]
        %v6441 = vld [vmem:[%s2 + $0x74] sm:$0xf]
        %v6442 = vld [vmem:[%s2 + $0x78] sm:$0xf]
        %v6443 = vld [vmem:[%s2 + $0x7c] sm:$0xf]
        %v6444 = vld [vmem:[%s2 + $0x80] sm:$0xf]
        %v6445 = vld [vmem:[%s2 + $0x84] sm:$0xf]
        %v6446 = vld [vmem:[%s2 + $0x88] sm:$0xf]
        %v6447 = vld [vmem:[%s2 + $0x8c] sm:$0xf]
        %v6448 = vld [vmem:[%s2 + $0x90] sm:$0xf]
        %v6449 = vld [vmem:[%s2 + $0x94] sm:$0xf]
        %v6450 = vld [vmem:[%s2 + $0x98] sm:$0xf]
        %v6451 = vld [vmem:[%s2 + $0x9c] sm:$0xf]
        %v6452 = vld [vmem:[%s2 + $0xa0] sm:$0xf]
        %v6453 = vld [vmem:[%s2 + $0xa4] sm:$0xf]
        %v6454 = vld [vmem:[%s2 + $0xa8] sm:$0xf]
        %v6455 = vld [vmem:[%s2 + $0xac] sm:$0xf]
        %v6456 = vld [vmem:[%s2 + $0xb0] sm:$0xf]
        %v6457 = vld [vmem:[%s2 + $0xb4] sm:$0xf]
        %v6458 = vld [vmem:[%s2 + $0xb8] sm:$0xf]
        %v6459 = vld [vmem:[%s2 + $0xbc] sm:$0xf]
        %v6460 = vld [vmem:[%s3] sm:$0x1]
        %v6462 = vlaneseq
        %v6463 = vshrl.u32 %v6462, 7
        %v6464 = vsub.s32 0, %v6463
        %v6465 = vrot.slane %v6460, %v6464
        %v6515 = vunpack.c.l.b16 %v6412
        %v6516 = vunpack.c.l.b16 %v6413
        %v6517 = vunpack.c.l.b16 %v6414
        %v6518 = vunpack.c.l.b16 %v6415
        %v6519 = vunpack.c.l.b16 %v6416
        %v6520 = vunpack.c.l.b16 %v6417
        %v6521 = vunpack.c.l.b16 %v6418
        %v6522 = vunpack.c.l.b16 %v6419
        %v6523 = vunpack.c.l.b16 %v6420
        %v6524 = vunpack.c.l.b16 %v6421
        %v6525 = vunpack.c.l.b16 %v6422
        %v6526 = vunpack.c.l.b16 %v6423
        %v6527 = vunpack.c.l.b16 %v6424
        %v6528 = vunpack.c.l.b16 %v6425
        %v6529 = vunpack.c.l.b16 %v6426
        %v6530 = vunpack.c.l.b16 %v6427
        %v6531 = vunpack.c.l.b16 %v6428
        %v6532 = vunpack.c.l.b16 %v6429
        %v6533 = vunpack.c.l.b16 %v6430
        %v6534 = vunpack.c.l.b16 %v6431
        %v6535 = vunpack.c.l.b16 %v6432
        %v6536 = vunpack.c.l.b16 %v6433
        %v6537 = vunpack.c.l.b16 %v6434
        %v6538 = vunpack.c.l.b16 %v6435
        %v6539 = vunpack.c.l.b16 %v6436
        %v6540 = vunpack.c.l.b16 %v6437
        %v6541 = vunpack.c.l.b16 %v6438
        %v6542 = vunpack.c.l.b16 %v6439
        %v6543 = vunpack.c.l.b16 %v6440
        %v6544 = vunpack.c.l.b16 %v6441
        %v6545 = vunpack.c.l.b16 %v6442
        %v6546 = vunpack.c.l.b16 %v6443
        %v6547 = vunpack.c.l.b16 %v6444
        %v6548 = vunpack.c.l.b16 %v6445
        %v6549 = vunpack.c.l.b16 %v6446
        %v6550 = vunpack.c.l.b16 %v6447
        %v6551 = vunpack.c.l.b16 %v6448
        %v6552 = vunpack.c.l.b16 %v6449
        %v6553 = vunpack.c.l.b16 %v6450
        %v6554 = vunpack.c.l.b16 %v6451
        %v6555 = vunpack.c.l.b16 %v6452
        %v6556 = vunpack.c.l.b16 %v6453
        %v6557 = vunpack.c.l.b16 %v6454
        %v6558 = vunpack.c.l.b16 %v6455
        %v6559 = vunpack.c.l.b16 %v6456
        %v6560 = vunpack.c.l.b16 %v6457
        %v6561 = vunpack.c.l.b16 %v6458
        %v6562 = vunpack.c.l.b16 %v6459
        %v6563 = vpack.c.b16 %v6516, %v6515
        %v6564 = vpack.c.b16 %v6518, %v6517
        %v6565 = vpack.c.b16 %v6520, %v6519
        %v6566 = vpack.c.b16 %v6522, %v6521
        %v6567 = vpack.c.b16 %v6524, %v6523
        %v6568 = vpack.c.b16 %v6526, %v6525
        %v6569 = vpack.c.b16 %v6528, %v6527
        %v6570 = vpack.c.b16 %v6530, %v6529
        %v6571 = vpack.c.b16 %v6532, %v6531
        %v6572 = vpack.c.b16 %v6534, %v6533
        %v6573 = vpack.c.b16 %v6536, %v6535
        %v6574 = vpack.c.b16 %v6538, %v6537
        %v6575 = vpack.c.b16 %v6540, %v6539
        %v6576 = vpack.c.b16 %v6542, %v6541
        %v6577 = vpack.c.b16 %v6544, %v6543
        %v6578 = vpack.c.b16 %v6546, %v6545
        %v6579 = vpack.c.b16 %v6548, %v6547
        %v6580 = vpack.c.b16 %v6550, %v6549
        %v6581 = vpack.c.b16 %v6552, %v6551
        %v6582 = vpack.c.b16 %v6554, %v6553
        %v6583 = vpack.c.b16 %v6556, %v6555
        %v6584 = vpack.c.b16 %v6558, %v6557
        %v6585 = vpack.c.b16 %v6560, %v6559
        %v6586 = vpack.c.b16 %v6562, %v6561
        %6611 = vmatprep.subr.bf16.mxu0 0
        %6612 = vmatpush1.bf16.msra.mxu0 %v6570
        %6613 = vmatprep.subr.bf16.mxu0 0
        %6614 = vmatpush1.bf16.msra.mxu0 %v6569
        %6615 = vmatprep.subr.bf16.mxu0 0
        %6616 = vmatpush1.bf16.msra.mxu0 %v6568
        %6617 = vmatprep.subr.bf16.mxu0 0
        %6618 = vmatpush1.bf16.msra.mxu0 %v6567
        %6619 = vmatprep.subr.bf16.mxu0 0
        %6620 = vmatpush1.bf16.msra.mxu0 %v6566
        %6621 = vmatprep.subr.bf16.mxu0 0
        %6622 = vmatpush1.bf16.msra.mxu0 %v6565
        %6623 = vmatprep.subr.bf16.mxu0 0
        %6624 = vmatpush1.bf16.msra.mxu0 %v6564
        %6625 = vmatprep.subr.bf16.mxu0 0
        %6626 = vmatpush1.bf16.msra.mxu0 %v6563
        %6627 = vmatprep.subr.bf16.mxu0 0
        %6628 = vmatpush2.bf16.msra.mxu0 %v6578
        %6629 = vmatprep.subr.bf16.mxu0 0
        %6630 = vmatpush2.bf16.msra.mxu0 %v6577
        %6631 = vmatprep.subr.bf16.mxu0 0
        %6632 = vmatpush2.bf16.msra.mxu0 %v6576
        %6633 = vmatprep.subr.bf16.mxu0 0
        %6634 = vmatpush2.bf16.msra.mxu0 %v6575
        %6635 = vmatprep.subr.bf16.mxu0 0
        %6636 = vmatpush2.bf16.msra.mxu0 %v6574
        %6637 = vmatprep.subr.bf16.mxu0 0
        %6638 = vmatpush2.bf16.msra.mxu0 %v6573
        %6639 = vmatprep.subr.bf16.mxu0 0
        %6640 = vmatpush2.bf16.msra.mxu0 %v6572
        %6641 = vmatprep.subr.bf16.mxu0 0
        %6642 = vmatpush2.bf16.msra.mxu0 %v6571
        %6643 = vmatprep.mubr.bf16.mxu0 %v6221
        %6644 = vmatmul.mubr.bf16.gmra.mxu0 %v6220
        %v6645 = vpop.f32.mrf.mxu0
        %v6646 = vadd.f32 %v6465, %v6645
        %v6647 = vpop.f32.mrf.mxu0
        %v6648 = vpop.f32.mrf.mxu0
        %v6649 = vadd.f32 %v6465, %v6648
        %v6650 = vpop.f32.mrf.mxu0
        %6651 = vmatprep.mubr.bf16.mxu0 %v6224
        %6652 = vmatmul.mubr.bf16.gmra.mxu0 %v6223
        %v6653 = vpop.f32.mrf.mxu0
        %v6654 = vadd.f32 %v6465, %v6653
        %v6655 = vpop.f32.mrf.mxu0
        %v6656 = vpop.f32.mrf.mxu0
        %v6657 = vadd.f32 %v6465, %v6656
        %v6658 = vpop.f32.mrf.mxu0
        %6659 = vmatprep.mubr.bf16.mxu0 %v6227
        %6660 = vmatmul.mubr.bf16.gmra.mxu0 %v6226
        %v6661 = vpop.f32.mrf.mxu0
        %v6662 = vadd.f32 %v6465, %v6661
        %v6663 = vpop.f32.mrf.mxu0
        %v6664 = vpop.f32.mrf.mxu0
        %v6665 = vadd.f32 %v6465, %v6664
        %v6666 = vpop.f32.mrf.mxu0
        %6667 = vmatprep.mubr.bf16.mxu0 %v6230
        %6668 = vmatmul.mubr.bf16.gmra.mxu0 %v6229
        %v6669 = vpop.f32.mrf.mxu0
        %v6670 = vadd.f32 %v6465, %v6669
        %v6671 = vpop.f32.mrf.mxu0
        %v6672 = vpop.f32.mrf.mxu0
        %v6673 = vadd.f32 %v6465, %v6672
        %v6674 = vpop.f32.mrf.mxu0
        %6675 = vmatprep.mubr.bf16.mxu0 %v6233
        %6676 = vmatmul.mubr.bf16.gmra.mxu0 %v6232
        %v6677 = vpop.f32.mrf.mxu0
        %v6678 = vadd.f32 %v6465, %v6677
        %v6679 = vpop.f32.mrf.mxu0
        %v6680 = vpop.f32.mrf.mxu0
        %v6681 = vadd.f32 %v6465, %v6680
        %v6682 = vpop.f32.mrf.mxu0
        %6683 = vmatprep.mubr.bf16.mxu0 %v6236
        %6684 = vmatmul.mubr.bf16.gmra.mxu0 %v6235
        %v6685 = vpop.f32.mrf.mxu0
        %v6686 = vadd.f32 %v6465, %v6685
        %v6687 = vpop.f32.mrf.mxu0
        %v6688 = vpop.f32.mrf.mxu0
        %v6689 = vadd.f32 %v6465, %v6688
        %v6690 = vpop.f32.mrf.mxu0
        %6691 = vmatprep.mubr.bf16.mxu0 %v6239
        %6692 = vmatmul.mubr.bf16.gmra.mxu0 %v6238
        %v6693 = vpop.f32.mrf.mxu0
        %v6694 = vadd.f32 %v6465, %v6693
        %v6695 = vpop.f32.mrf.mxu0
        %v6696 = vpop.f32.mrf.mxu0
        %v6697 = vadd.f32 %v6465, %v6696
        %v6698 = vpop.f32.mrf.mxu0
        %6699 = vmatprep.mubr.bf16.mxu0 %v6242
        %6700 = vmatmul.mubr.bf16.gmra.mxu0 %v6241
        %v6701 = vpop.f32.mrf.mxu0
        %v6702 = vadd.f32 %v6465, %v6701
        %v6703 = vpop.f32.mrf.mxu0
        %v6704 = vpop.f32.mrf.mxu0
        %v6705 = vadd.f32 %v6465, %v6704
        %v6706 = vpop.f32.mrf.mxu0
        %6707 = vmatprep.mubr.bf16.mxu0 %v6245
        %6708 = vmatmul.mubr.bf16.gmra.mxu0 %v6244
        %v6709 = vpop.f32.mrf.mxu0
        %v6710 = vadd.f32 %v6465, %v6709
        %v6711 = vpop.f32.mrf.mxu0
        %v6712 = vpop.f32.mrf.mxu0
        %v6713 = vadd.f32 %v6465, %v6712
        %v6714 = vpop.f32.mrf.mxu0
        %6715 = vmatprep.mubr.bf16.mxu0 %v6248
        %6716 = vmatmul.mubr.bf16.gmra.mxu0 %v6247
        %v6717 = vpop.f32.mrf.mxu0
        %v6718 = vadd.f32 %v6465, %v6717
        %v6719 = vpop.f32.mrf.mxu0
        %v6720 = vpop.f32.mrf.mxu0
        %v6721 = vadd.f32 %v6465, %v6720
        %v6722 = vpop.f32.mrf.mxu0
        %6723 = vmatprep.mubr.bf16.mxu0 %v6251
        %6724 = vmatmul.mubr.bf16.gmra.mxu0 %v6250
        %v6725 = vpop.f32.mrf.mxu0
        %v6726 = vadd.f32 %v6465, %v6725
        %v6727 = vpop.f32.mrf.mxu0
        %v6728 = vpop.f32.mrf.mxu0
        %v6729 = vadd.f32 %v6465, %v6728
        %v6730 = vpop.f32.mrf.mxu0
        %6731 = vmatprep.mubr.bf16.mxu0 %v6254
        %6732 = vmatmul.mubr.bf16.gmra.mxu0 %v6253
        %v6733 = vpop.f32.mrf.mxu0
        %v6734 = vadd.f32 %v6465, %v6733
        %v6735 = vpop.f32.mrf.mxu0
        %v6736 = vpop.f32.mrf.mxu0
        %v6737 = vadd.f32 %v6465, %v6736
        %v6738 = vpop.f32.mrf.mxu0
        %6739 = vmatprep.mubr.bf16.mxu0 %v6257
        %6740 = vmatmul.mubr.bf16.gmra.mxu0 %v6256
        %v6741 = vpop.f32.mrf.mxu0
        %v6742 = vadd.f32 %v6465, %v6741
        %v6743 = vpop.f32.mrf.mxu0
        %v6744 = vpop.f32.mrf.mxu0
        %v6745 = vadd.f32 %v6465, %v6744
        %v6746 = vpop.f32.mrf.mxu0
        %6747 = vmatprep.mubr.bf16.mxu0 %v6260
        %6748 = vmatmul.mubr.bf16.gmra.mxu0 %v6259
        %v6749 = vpop.f32.mrf.mxu0
        %v6750 = vadd.f32 %v6465, %v6749
        %v6751 = vpop.f32.mrf.mxu0
        %v6752 = vpop.f32.mrf.mxu0
        %v6753 = vadd.f32 %v6465, %v6752
        %v6754 = vpop.f32.mrf.mxu0
        %6755 = vmatprep.mubr.bf16.mxu0 %v6263
        %6756 = vmatmul.mubr.bf16.gmra.mxu0 %v6262
        %v6757 = vpop.f32.mrf.mxu0
        %v6758 = vadd.f32 %v6465, %v6757
        %v6759 = vpop.f32.mrf.mxu0
        %v6760 = vpop.f32.mrf.mxu0
        %v6761 = vadd.f32 %v6465, %v6760
        %v6762 = vpop.f32.mrf.mxu0
        %6763 = vmatprep.mubr.bf16.mxu0 %v6266
        %6764 = vmatmul.mubr.bf16.gmra.mxu0 %v6265
        %v6765 = vpop.f32.mrf.mxu0
        %v6766 = vadd.f32 %v6465, %v6765
        %v6767 = vpop.f32.mrf.mxu0
        %v6768 = vpop.f32.mrf.mxu0
        %v6769 = vadd.f32 %v6465, %v6768
        %v6770 = vpop.f32.mrf.mxu0
        %6771 = vmatprep.mubr.bf16.mxu0 %v6269
        %6772 = vmatmul.mubr.bf16.gmra.mxu0 %v6268
        %v6773 = vpop.f32.mrf.mxu0
        %v6774 = vadd.f32 %v6465, %v6773
        %v6775 = vpop.f32.mrf.mxu0
        %v6776 = vpop.f32.mrf.mxu0
        %v6777 = vadd.f32 %v6465, %v6776
        %v6778 = vpop.f32.mrf.mxu0
        %6779 = vmatprep.mubr.bf16.mxu0 %v6272
        %6780 = vmatmul.mubr.bf16.gmra.mxu0 %v6271
        %v6781 = vpop.f32.mrf.mxu0
        %v6782 = vadd.f32 %v6465, %v6781
        %v6783 = vpop.f32.mrf.mxu0
        %v6784 = vpop.f32.mrf.mxu0
        %v6785 = vadd.f32 %v6465, %v6784
        %v6786 = vpop.f32.mrf.mxu0
        %6787 = vmatprep.mubr.bf16.mxu0 %v6275
        %6788 = vmatmul.mubr.bf16.gmra.mxu0 %v6274
        %v6789 = vpop.f32.mrf.mxu0
        %v6790 = vadd.f32 %v6465, %v6789
        %v6791 = vpop.f32.mrf.mxu0
        %v6792 = vpop.f32.mrf.mxu0
        %v6793 = vadd.f32 %v6465, %v6792
        %v6794 = vpop.f32.mrf.mxu0
        %6795 = vmatprep.mubr.bf16.mxu0 %v6278
        %6796 = vmatmul.mubr.bf16.gmra.mxu0 %v6277
        %v6797 = vpop.f32.mrf.mxu0
        %v6798 = vadd.f32 %v6465, %v6797
        %v6799 = vpop.f32.mrf.mxu0
        %v6800 = vpop.f32.mrf.mxu0
        %v6801 = vadd.f32 %v6465, %v6800
        %v6802 = vpop.f32.mrf.mxu0
        %6803 = vmatprep.mubr.bf16.mxu0 %v6281
        %6804 = vmatmul.mubr.bf16.gmra.mxu0 %v6280
        %v6805 = vpop.f32.mrf.mxu0
        %v6806 = vadd.f32 %v6465, %v6805
        %v6807 = vpop.f32.mrf.mxu0
        %v6808 = vpop.f32.mrf.mxu0
        %v6809 = vadd.f32 %v6465, %v6808
        %v6810 = vpop.f32.mrf.mxu0
        %6811 = vmatprep.mubr.bf16.mxu0 %v6284
        %6812 = vmatmul.mubr.bf16.gmra.mxu0 %v6283
        %v6813 = vpop.f32.mrf.mxu0
        %v6814 = vadd.f32 %v6465, %v6813
        %v6815 = vpop.f32.mrf.mxu0
        %v6816 = vpop.f32.mrf.mxu0
        %v6817 = vadd.f32 %v6465, %v6816
        %v6818 = vpop.f32.mrf.mxu0
        %6819 = vmatprep.mubr.bf16.mxu0 %v6287
        %6820 = vmatmul.mubr.bf16.gmra.mxu0 %v6286
        %v6821 = vpop.f32.mrf.mxu0
        %v6822 = vadd.f32 %v6465, %v6821
        %v6823 = vpop.f32.mrf.mxu0
        %v6824 = vpop.f32.mrf.mxu0
        %v6825 = vadd.f32 %v6465, %v6824
        %v6826 = vpop.f32.mrf.mxu0
        %6827 = vmatprep.mubr.bf16.mxu0 %v6290
        %6828 = vmatmul.mubr.bf16.gmra.mxu0 %v6289
        %v6829 = vpop.f32.mrf.mxu0
        %v6830 = vadd.f32 %v6465, %v6829
        %v6831 = vpop.f32.mrf.mxu0
        %v6832 = vpop.f32.mrf.mxu0
        %v6833 = vadd.f32 %v6465, %v6832
        %v6834 = vpop.f32.mrf.mxu0
        %6835 = vmatprep.mubr.bf16.mxu0 %v6293
        %6836 = vmatmul.mubr.bf16.gmra.mxu0 %v6292
        %v6837 = vpop.f32.mrf.mxu0
        %v6838 = vadd.f32 %v6465, %v6837
        %v6839 = vpop.f32.mrf.mxu0
        %v6840 = vpop.f32.mrf.mxu0
        %v6841 = vadd.f32 %v6465, %v6840
        %v6842 = vpop.f32.mrf.mxu0
        %6843 = vmatprep.mubr.bf16.mxu0 %v6296
        %6844 = vmatmul.mubr.bf16.gmra.mxu0 %v6295
        %v6845 = vpop.f32.mrf.mxu0
        %v6846 = vadd.f32 %v6465, %v6845
        %v6847 = vpop.f32.mrf.mxu0
        %v6848 = vpop.f32.mrf.mxu0
        %v6849 = vadd.f32 %v6465, %v6848
        %v6850 = vpop.f32.mrf.mxu0
        %6851 = vmatprep.mubr.bf16.mxu0 %v6299
        %6852 = vmatmul.mubr.bf16.gmra.mxu0 %v6298
        %v6853 = vpop.f32.mrf.mxu0
        %v6854 = vadd.f32 %v6465, %v6853
        %v6855 = vpop.f32.mrf.mxu0
        %v6856 = vpop.f32.mrf.mxu0
        %v6857 = vadd.f32 %v6465, %v6856
        %v6858 = vpop.f32.mrf.mxu0
        %6859 = vmatprep.mubr.bf16.mxu0 %v6302
        %6860 = vmatmul.mubr.bf16.gmra.mxu0 %v6301
        %v6861 = vpop.f32.mrf.mxu0
        %v6862 = vadd.f32 %v6465, %v6861
        %v6863 = vpop.f32.mrf.mxu0
        %v6864 = vpop.f32.mrf.mxu0
        %v6865 = vadd.f32 %v6465, %v6864
        %v6866 = vpop.f32.mrf.mxu0
        %6867 = vmatprep.mubr.bf16.mxu0 %v6305
        %6868 = vmatmul.mubr.bf16.gmra.mxu0 %v6304
        %v6869 = vpop.f32.mrf.mxu0
        %v6870 = vadd.f32 %v6465, %v6869
        %v6871 = vpop.f32.mrf.mxu0
        %v6872 = vpop.f32.mrf.mxu0
        %v6873 = vadd.f32 %v6465, %v6872
        %v6874 = vpop.f32.mrf.mxu0
        %6875 = vmatprep.mubr.bf16.mxu0 %v6308
        %6876 = vmatmul.mubr.bf16.gmra.mxu0 %v6307
        %v6877 = vpop.f32.mrf.mxu0
        %v6878 = vadd.f32 %v6465, %v6877
        %v6879 = vpop.f32.mrf.mxu0
        %v6880 = vpop.f32.mrf.mxu0
        %v6881 = vadd.f32 %v6465, %v6880
        %v6882 = vpop.f32.mrf.mxu0
        %6883 = vmatprep.mubr.bf16.mxu0 %v6311
        %6884 = vmatmul.mubr.bf16.gmra.mxu0 %v6310
        %v6885 = vpop.f32.mrf.mxu0
        %v6886 = vadd.f32 %v6465, %v6885
        %v6887 = vpop.f32.mrf.mxu0
        %v6888 = vpop.f32.mrf.mxu0
        %v6889 = vadd.f32 %v6465, %v6888
        %v6890 = vpop.f32.mrf.mxu0
        %6891 = vmatprep.mubr.bf16.mxu0 %v6314
        %6892 = vmatmul.mubr.bf16.gmra.mxu0 %v6313
        %v6893 = vpop.f32.mrf.mxu0
        %v6894 = vadd.f32 %v6465, %v6893
        %v6895 = vpop.f32.mrf.mxu0
        %v6896 = vpop.f32.mrf.mxu0
        %v6897 = vadd.f32 %v6465, %v6896
        %v6898 = vpop.f32.mrf.mxu0
        %6899 = vmatprep.mubr.bf16.mxu0 %v6317
        %6900 = vmatmul.mubr.bf16.gmra.mxu0 %v6316
        %v6901 = vpop.f32.mrf.mxu0
        %v6902 = vadd.f32 %v6465, %v6901
        %v6903 = vpop.f32.mrf.mxu0
        %v6904 = vpop.f32.mrf.mxu0
        %v6905 = vadd.f32 %v6465, %v6904
        %v6906 = vpop.f32.mrf.mxu0
        %6907 = vmatprep.mubr.bf16.mxu0 %v6320
        %6908 = vmatmul.mubr.bf16.gmra.mxu0 %v6319
        %v6909 = vpop.f32.mrf.mxu0
        %v6910 = vadd.f32 %v6465, %v6909
        %v6911 = vpop.f32.mrf.mxu0
        %v6912 = vpop.f32.mrf.mxu0
        %v6913 = vadd.f32 %v6465, %v6912
        %v6914 = vpop.f32.mrf.mxu0
        %6915 = vmatprep.mubr.bf16.mxu0 %v6323
        %6916 = vmatmul.mubr.bf16.gmra.mxu0 %v6322
        %v6917 = vpop.f32.mrf.mxu0
        %v6918 = vadd.f32 %v6465, %v6917
        %v6919 = vpop.f32.mrf.mxu0
        %v6920 = vpop.f32.mrf.mxu0
        %v6921 = vadd.f32 %v6465, %v6920
        %v6922 = vpop.f32.mrf.mxu0
        %6923 = vmatprep.mubr.bf16.mxu0 %v6326
        %6924 = vmatmul.mubr.bf16.gmra.mxu0 %v6325
        %v6925 = vpop.f32.mrf.mxu0
        %v6926 = vadd.f32 %v6465, %v6925
        %v6927 = vpop.f32.mrf.mxu0
        %v6928 = vpop.f32.mrf.mxu0
        %v6929 = vadd.f32 %v6465, %v6928
        %v6930 = vpop.f32.mrf.mxu0
        %6931 = vmatprep.mubr.bf16.mxu0 %v6329
        %6932 = vmatmul.mubr.bf16.gmra.mxu0 %v6328
        %v6933 = vpop.f32.mrf.mxu0
        %v6934 = vadd.f32 %v6465, %v6933
        %v6935 = vpop.f32.mrf.mxu0
        %v6936 = vpop.f32.mrf.mxu0
        %v6937 = vadd.f32 %v6465, %v6936
        %v6938 = vpop.f32.mrf.mxu0
        %6939 = vmatprep.mubr.bf16.mxu0 %v6332
        %6940 = vmatmul.mubr.bf16.gmra.mxu0 %v6331
        %v6941 = vpop.f32.mrf.mxu0
        %v6942 = vadd.f32 %v6465, %v6941
        %v6943 = vpop.f32.mrf.mxu0
        %v6944 = vpop.f32.mrf.mxu0
        %v6945 = vadd.f32 %v6465, %v6944
        %v6946 = vpop.f32.mrf.mxu0
        %6947 = vmatprep.mubr.bf16.mxu0 %v6335
        %6948 = vmatmul.mubr.bf16.gmra.mxu0 %v6334
        %v6949 = vpop.f32.mrf.mxu0
        %v6950 = vadd.f32 %v6465, %v6949
        %v6951 = vpop.f32.mrf.mxu0
        %v6952 = vpop.f32.mrf.mxu0
        %v6953 = vadd.f32 %v6465, %v6952
        %v6954 = vpop.f32.mrf.mxu0
        %6955 = vmatprep.mubr.bf16.mxu0 %v6338
        %6956 = vmatmul.mubr.bf16.gmra.mxu0 %v6337
        %v6957 = vpop.f32.mrf.mxu0
        %v6958 = vadd.f32 %v6465, %v6957
        %v6959 = vpop.f32.mrf.mxu0
        %v6960 = vpop.f32.mrf.mxu0
        %v6961 = vadd.f32 %v6465, %v6960
        %v6962 = vpop.f32.mrf.mxu0
        %6963 = vmatprep.mubr.bf16.mxu0 %v6341
        %6964 = vmatmul.mubr.bf16.gmra.mxu0 %v6340
        %v6965 = vpop.f32.mrf.mxu0
        %v6966 = vadd.f32 %v6465, %v6965
        %v6967 = vpop.f32.mrf.mxu0
        %v6968 = vpop.f32.mrf.mxu0
        %v6969 = vadd.f32 %v6465, %v6968
        %v6970 = vpop.f32.mrf.mxu0
        %6971 = vmatprep.mubr.bf16.mxu0 %v6344
        %6972 = vmatmul.mubr.bf16.gmra.mxu0 %v6343
        %v6973 = vpop.f32.mrf.mxu0
        %v6974 = vadd.f32 %v6465, %v6973
        %v6975 = vpop.f32.mrf.mxu0
        %v6976 = vpop.f32.mrf.mxu0
        %v6977 = vadd.f32 %v6465, %v6976
        %v6978 = vpop.f32.mrf.mxu0
        %6979 = vmatprep.mubr.bf16.mxu0 %v6347
        %6980 = vmatmul.mubr.bf16.gmra.mxu0 %v6346
        %v6981 = vpop.f32.mrf.mxu0
        %v6982 = vadd.f32 %v6465, %v6981
        %v6983 = vpop.f32.mrf.mxu0
        %v6984 = vpop.f32.mrf.mxu0
        %v6985 = vadd.f32 %v6465, %v6984
        %v6986 = vpop.f32.mrf.mxu0
        %6987 = vmatprep.mubr.bf16.mxu0 %v6350
        %6988 = vmatmul.mubr.bf16.gmra.mxu0 %v6349
        %v6989 = vpop.f32.mrf.mxu0
        %v6990 = vadd.f32 %v6465, %v6989
        %v6991 = vpop.f32.mrf.mxu0
        %v6992 = vpop.f32.mrf.mxu0
        %v6993 = vadd.f32 %v6465, %v6992
        %v6994 = vpop.f32.mrf.mxu0
        %6995 = vmatprep.mubr.bf16.mxu0 %v6353
        %6996 = vmatmul.mubr.bf16.gmra.mxu0 %v6352
        %v6997 = vpop.f32.mrf.mxu0
        %v6998 = vadd.f32 %v6465, %v6997
        %v6999 = vpop.f32.mrf.mxu0
        %v7000 = vpop.f32.mrf.mxu0
        %v7001 = vadd.f32 %v6465, %v7000
        %v7002 = vpop.f32.mrf.mxu0
        %7003 = vmatprep.mubr.bf16.mxu0 %v6356
        %7004 = vmatmul.mubr.bf16.gmra.mxu0 %v6355
        %v7005 = vpop.f32.mrf.mxu0
        %v7006 = vadd.f32 %v6465, %v7005
        %v7007 = vpop.f32.mrf.mxu0
        %v7008 = vpop.f32.mrf.mxu0
        %v7009 = vadd.f32 %v6465, %v7008
        %v7010 = vpop.f32.mrf.mxu0
        %7011 = vmatprep.mubr.bf16.mxu0 %v6359
        %7012 = vmatmul.mubr.bf16.gmra.mxu0 %v6358
        %v7013 = vpop.f32.mrf.mxu0
        %v7014 = vadd.f32 %v6465, %v7013
        %v7015 = vpop.f32.mrf.mxu0
        %v7016 = vpop.f32.mrf.mxu0
        %v7017 = vadd.f32 %v6465, %v7016
        %v7018 = vpop.f32.mrf.mxu0
        %7019 = vmatprep.mubr.bf16.mxu0 %v6362
        %7020 = vmatmul.mubr.bf16.gmra.mxu0 %v6361
        %v7021 = vpop.f32.mrf.mxu0
        %v7022 = vadd.f32 %v6465, %v7021
        %v7023 = vpop.f32.mrf.mxu0
        %v7024 = vpop.f32.mrf.mxu0
        %v7025 = vadd.f32 %v6465, %v7024
        %v7026 = vpop.f32.mrf.mxu0
        %7027 = vmatprep.mubr.bf16.mxu0 %v6365
        %7028 = vmatmul.mubr.bf16.gmra.mxu0 %v6364
        %v7029 = vpop.f32.mrf.mxu0
        %v7030 = vadd.f32 %v6465, %v7029
        %v7031 = vpop.f32.mrf.mxu0
        %v7032 = vpop.f32.mrf.mxu0
        %v7033 = vadd.f32 %v6465, %v7032
        %v7034 = vpop.f32.mrf.mxu0
        %7035 = vmatprep.mubr.bf16.mxu0 %v6368
        %7036 = vmatmul.mubr.bf16.gmra.mxu0 %v6367
        %v7037 = vpop.f32.mrf.mxu0
        %v7038 = vadd.f32 %v6465, %v7037
        %v7039 = vpop.f32.mrf.mxu0
        %v7040 = vpop.f32.mrf.mxu0
        %v7041 = vadd.f32 %v6465, %v7040
        %v7042 = vpop.f32.mrf.mxu0
        %7043 = vmatprep.mubr.bf16.mxu0 %v6371
        %7044 = vmatmul.mubr.bf16.gmra.mxu0 %v6370
        %v7045 = vpop.f32.mrf.mxu0
        %v7046 = vadd.f32 %v6465, %v7045
        %v7047 = vpop.f32.mrf.mxu0
        %v7048 = vpop.f32.mrf.mxu0
        %v7049 = vadd.f32 %v6465, %v7048
        %v7050 = vpop.f32.mrf.mxu0
        %7051 = vmatprep.mubr.bf16.mxu0 %v6374
        %7052 = vmatmul.mubr.bf16.gmra.mxu0 %v6373
        %v7053 = vpop.f32.mrf.mxu0
        %v7054 = vadd.f32 %v6465, %v7053
        %v7055 = vpop.f32.mrf.mxu0
        %v7056 = vpop.f32.mrf.mxu0
        %v7057 = vadd.f32 %v6465, %v7056
        %v7058 = vpop.f32.mrf.mxu0
        %7059 = vmatprep.mubr.bf16.mxu0 %v6377
        %7060 = vmatmul.mubr.bf16.gmra.mxu0 %v6376
        %v7061 = vpop.f32.mrf.mxu0
        %v7062 = vadd.f32 %v6465, %v7061
        %v7063 = vpop.f32.mrf.mxu0
        %v7064 = vpop.f32.mrf.mxu0
        %v7065 = vadd.f32 %v6465, %v7064
        %v7066 = vpop.f32.mrf.mxu0
        %7067 = vmatprep.mubr.bf16.mxu0 %v6380
        %7068 = vmatmul.mubr.bf16.gmra.mxu0 %v6379
        %v7069 = vpop.f32.mrf.mxu0
        %v7070 = vadd.f32 %v6465, %v7069
        %v7071 = vpop.f32.mrf.mxu0
        %v7072 = vpop.f32.mrf.mxu0
        %v7073 = vadd.f32 %v6465, %v7072
        %v7074 = vpop.f32.mrf.mxu0
        %7075 = vmatprep.mubr.bf16.mxu0 %v6383
        %7076 = vmatmul.mubr.bf16.gmra.mxu0 %v6382
        %v7077 = vpop.f32.mrf.mxu0
        %v7078 = vadd.f32 %v6465, %v7077
        %v7079 = vpop.f32.mrf.mxu0
        %v7080 = vpop.f32.mrf.mxu0
        %v7081 = vadd.f32 %v6465, %v7080
        %v7082 = vpop.f32.mrf.mxu0
        %7083 = vmatprep.mubr.bf16.mxu0 %v6386
        %7084 = vmatmul.mubr.bf16.gmra.mxu0 %v6385
        %v7085 = vpop.f32.mrf.mxu0
        %v7086 = vadd.f32 %v6465, %v7085
        %v7087 = vpop.f32.mrf.mxu0
        %v7088 = vpop.f32.mrf.mxu0
        %v7089 = vadd.f32 %v6465, %v7088
        %v7090 = vpop.f32.mrf.mxu0
        %7091 = vmatprep.mubr.bf16.mxu0 %v6389
        %7092 = vmatmul.mubr.bf16.gmra.mxu0 %v6388
        %v7093 = vpop.f32.mrf.mxu0
        %v7094 = vadd.f32 %v6465, %v7093
        %v7095 = vpop.f32.mrf.mxu0
        %v7096 = vpop.f32.mrf.mxu0
        %v7097 = vadd.f32 %v6465, %v7096
        %v7098 = vpop.f32.mrf.mxu0
        %7099 = vmatprep.mubr.bf16.mxu0 %v6392
        %7100 = vmatmul.mubr.bf16.gmra.mxu0 %v6391
        %v7101 = vpop.f32.mrf.mxu0
        %v7102 = vadd.f32 %v6465, %v7101
        %v7103 = vpop.f32.mrf.mxu0
        %v7104 = vpop.f32.mrf.mxu0
        %v7105 = vadd.f32 %v6465, %v7104
        %v7106 = vpop.f32.mrf.mxu0
        %7107 = vmatprep.mubr.bf16.mxu0 %v6395
        %7108 = vmatmul.mubr.bf16.gmra.mxu0 %v6394
        %v7109 = vpop.f32.mrf.mxu0
        %v7110 = vadd.f32 %v6465, %v7109
        %v7111 = vpop.f32.mrf.mxu0
        %v7112 = vpop.f32.mrf.mxu0
        %v7113 = vadd.f32 %v6465, %v7112
        %v7114 = vpop.f32.mrf.mxu0
        %7115 = vmatprep.mubr.bf16.mxu0 %v6398
        %7116 = vmatmul.mubr.bf16.gmra.mxu0 %v6397
        %v7117 = vpop.f32.mrf.mxu0
        %v7118 = vadd.f32 %v6465, %v7117
        %v7119 = vpop.f32.mrf.mxu0
        %v7120 = vpop.f32.mrf.mxu0
        %v7121 = vadd.f32 %v6465, %v7120
        %v7122 = vpop.f32.mrf.mxu0
        %7123 = vmatprep.mubr.bf16.mxu0 %v6401
        %7124 = vmatmul.mubr.bf16.gmra.mxu0 %v6400
        %v7125 = vpop.f32.mrf.mxu0
        %v7126 = vadd.f32 %v6465, %v7125
        %v7127 = vpop.f32.mrf.mxu0
        %v7128 = vpop.f32.mrf.mxu0
        %v7129 = vadd.f32 %v6465, %v7128
        %v7130 = vpop.f32.mrf.mxu0
        %7131 = vmatprep.mubr.bf16.mxu0 %v6404
        %7132 = vmatmul.mubr.bf16.gmra.mxu0 %v6403
        %v7133 = vpop.f32.mrf.mxu0
        %v7134 = vadd.f32 %v6465, %v7133
        %v7135 = vpop.f32.mrf.mxu0
        %v7136 = vpop.f32.mrf.mxu0
        %v7137 = vadd.f32 %v6465, %v7136
        %v7138 = vpop.f32.mrf.mxu0
        %7139 = vmatprep.mubr.bf16.mxu0 %v6407
        %7140 = vmatmul.mubr.bf16.gmra.mxu0 %v6406
        %v7141 = vpop.f32.mrf.mxu0
        %v7142 = vadd.f32 %v6465, %v7141
        %v7143 = vpop.f32.mrf.mxu0
        %v7144 = vpop.f32.mrf.mxu0
        %v7145 = vadd.f32 %v6465, %v7144
        %v7146 = vpop.f32.mrf.mxu0
        %7147 = vmatprep.mubr.bf16.mxu0 %v6410
        %7148 = vmatmul.mubr.bf16.gmra.mxu0 %v6409
        %v7149 = vpop.f32.mrf.mxu0
        %v7150 = vadd.f32 %v6465, %v7149
        %v7151 = vpop.f32.mrf.mxu0
        %v7152 = vpop.f32.mrf.mxu0
        %v7153 = vadd.f32 %v6465, %v7152
        %v7154 = vpop.f32.mrf.mxu0
        %7155 = vdwg.mxu0
        %7156 = vmatprep.subr.bf16.mxu0 0
        %7157 = vmatpush1.bf16.msra.mxu0 %v6586
        %7158 = vmatprep.subr.bf16.mxu0 0
        %7159 = vmatpush1.bf16.msra.mxu0 %v6585
        %7160 = vmatprep.subr.bf16.mxu0 0
        %7161 = vmatpush1.bf16.msra.mxu0 %v6584
        %7162 = vmatprep.subr.bf16.mxu0 0
        %7163 = vmatpush1.bf16.msra.mxu0 %v6583
        %7164 = vmatprep.subr.bf16.mxu0 0
        %7165 = vmatpush1.bf16.msra.mxu0 %v6582
        %7166 = vmatprep.subr.bf16.mxu0 0
        %7167 = vmatpush1.bf16.msra.mxu0 %v6581
        %7168 = vmatprep.subr.bf16.mxu0 0
        %7169 = vmatpush1.bf16.msra.mxu0 %v6580
        %7170 = vmatprep.subr.bf16.mxu0 0
        %7171 = vmatpush1.bf16.msra.mxu0 %v6579
        %7172 = vmatprep.subr.bf16.mxu0 0
        %7173 = vmatpush2.bf16.msra.mxu0 0
        %7174 = vmatprep.subr.bf16.mxu0 0
        %7175 = vmatpush2.bf16.msra.mxu0 0
        %7176 = vmatprep.subr.bf16.mxu0 0
        %7177 = vmatpush2.bf16.msra.mxu0 0
        %7178 = vmatprep.subr.bf16.mxu0 0
        %7179 = vmatpush2.bf16.msra.mxu0 0
        %7180 = vmatprep.subr.bf16.mxu0 0
        %7181 = vmatpush2.bf16.msra.mxu0 0
        %7182 = vmatprep.subr.bf16.mxu0 0
        %7183 = vmatpush2.bf16.msra.mxu0 0
        %7184 = vmatprep.subr.bf16.mxu0 0
        %7185 = vmatpush2.bf16.msra.mxu0 0
        %7186 = vmatprep.subr.bf16.mxu0 0
        %7187 = vmatpush2.bf16.msra.mxu0 0
        %7188 = vmatprep.mubr.bf16.mxu0 0
        %7189 = vmatmul.mubr.bf16.gmra.mxu0 %v6222
        %v7190 = vpop.f32.mrf.mxu0
        %v7191 = vadd.f32 %v6646, %v7190
        %v7192 = vpop.f32.mrf.mxu0
        %v7193 = vpop.f32.mrf.mxu0
        %v7194 = vadd.f32 %v6649, %v7193
        %v7195 = vpop.f32.mrf.mxu0
        %7196 = vmatprep.mubr.bf16.mxu0 0
        %7197 = vmatmul.mubr.bf16.gmra.mxu0 %v6225
        %v7198 = vpop.f32.mrf.mxu0
        %v7199 = vadd.f32 %v6654, %v7198
        %v7200 = vpop.f32.mrf.mxu0
        %v7201 = vpop.f32.mrf.mxu0
        %v7202 = vadd.f32 %v6657, %v7201
        %v7203 = vpop.f32.mrf.mxu0
        %7204 = vmatprep.mubr.bf16.mxu0 0
        %7205 = vmatmul.mubr.bf16.gmra.mxu0 %v6228
        %v7206 = vpop.f32.mrf.mxu0
        %v7207 = vadd.f32 %v6662, %v7206
        %v7208 = vpop.f32.mrf.mxu0
        %v7209 = vpop.f32.mrf.mxu0
        %v7210 = vadd.f32 %v6665, %v7209
        %v7211 = vpop.f32.mrf.mxu0
        %7212 = vmatprep.mubr.bf16.mxu0 0
        %7213 = vmatmul.mubr.bf16.gmra.mxu0 %v6231
        %v7214 = vpop.f32.mrf.mxu0
        %v7215 = vadd.f32 %v6670, %v7214
        %v7216 = vpop.f32.mrf.mxu0
        %v7217 = vpop.f32.mrf.mxu0
        %v7218 = vadd.f32 %v6673, %v7217
        %v7219 = vpop.f32.mrf.mxu0
        %7220 = vmatprep.mubr.bf16.mxu0 0
        %7221 = vmatmul.mubr.bf16.gmra.mxu0 %v6234
        %v7222 = vpop.f32.mrf.mxu0
        %v7223 = vadd.f32 %v6678, %v7222
        %v7224 = vpop.f32.mrf.mxu0
        %v7225 = vpop.f32.mrf.mxu0
        %v7226 = vadd.f32 %v6681, %v7225
        %v7227 = vpop.f32.mrf.mxu0
        %7228 = vmatprep.mubr.bf16.mxu0 0
        %7229 = vmatmul.mubr.bf16.gmra.mxu0 %v6237
        %v7230 = vpop.f32.mrf.mxu0
        %v7231 = vadd.f32 %v6686, %v7230
        %v7232 = vpop.f32.mrf.mxu0
        %v7233 = vpop.f32.mrf.mxu0
        %v7234 = vadd.f32 %v6689, %v7233
        %v7235 = vpop.f32.mrf.mxu0
        %7236 = vmatprep.mubr.bf16.mxu0 0
        %7237 = vmatmul.mubr.bf16.gmra.mxu0 %v6240
        %v7238 = vpop.f32.mrf.mxu0
        %v7239 = vadd.f32 %v6694, %v7238
        %v7240 = vpop.f32.mrf.mxu0
        %v7241 = vpop.f32.mrf.mxu0
        %v7242 = vadd.f32 %v6697, %v7241
        %v7243 = vpop.f32.mrf.mxu0
        %7244 = vmatprep.mubr.bf16.mxu0 0
        %7245 = vmatmul.mubr.bf16.gmra.mxu0 %v6243
        %v7246 = vpop.f32.mrf.mxu0
        %v7247 = vadd.f32 %v6702, %v7246
        %v7248 = vpop.f32.mrf.mxu0
        %v7249 = vpop.f32.mrf.mxu0
        %v7250 = vadd.f32 %v6705, %v7249
        %v7251 = vpop.f32.mrf.mxu0
        %7252 = vmatprep.mubr.bf16.mxu0 0
        %7253 = vmatmul.mubr.bf16.gmra.mxu0 %v6246
        %v7254 = vpop.f32.mrf.mxu0
        %v7255 = vadd.f32 %v6710, %v7254
        %v7256 = vpop.f32.mrf.mxu0
        %v7257 = vpop.f32.mrf.mxu0
        %v7258 = vadd.f32 %v6713, %v7257
        %v7259 = vpop.f32.mrf.mxu0
        %7260 = vmatprep.mubr.bf16.mxu0 0
        %7261 = vmatmul.mubr.bf16.gmra.mxu0 %v6249
        %v7262 = vpop.f32.mrf.mxu0
        %v7263 = vadd.f32 %v6718, %v7262
        %v7264 = vpop.f32.mrf.mxu0
        %v7265 = vpop.f32.mrf.mxu0
        %v7266 = vadd.f32 %v6721, %v7265
        %v7267 = vpop.f32.mrf.mxu0
        %7268 = vmatprep.mubr.bf16.mxu0 0
        %7269 = vmatmul.mubr.bf16.gmra.mxu0 %v6252
        %v7270 = vpop.f32.mrf.mxu0
        %v7271 = vadd.f32 %v6726, %v7270
        %v7272 = vpop.f32.mrf.mxu0
        %v7273 = vpop.f32.mrf.mxu0
        %v7274 = vadd.f32 %v6729, %v7273
        %v7275 = vpop.f32.mrf.mxu0
        %7276 = vmatprep.mubr.bf16.mxu0 0
        %7277 = vmatmul.mubr.bf16.gmra.mxu0 %v6255
        %v7278 = vpop.f32.mrf.mxu0
        %v7279 = vadd.f32 %v6734, %v7278
        %v7280 = vpop.f32.mrf.mxu0
        %v7281 = vpop.f32.mrf.mxu0
        %v7282 = vadd.f32 %v6737, %v7281
        %v7283 = vpop.f32.mrf.mxu0
        %7284 = vmatprep.mubr.bf16.mxu0 0
        %7285 = vmatmul.mubr.bf16.gmra.mxu0 %v6258
        %v7286 = vpop.f32.mrf.mxu0
        %v7287 = vadd.f32 %v6742, %v7286
        %v7288 = vpop.f32.mrf.mxu0
        %v7289 = vpop.f32.mrf.mxu0
        %v7290 = vadd.f32 %v6745, %v7289
        %v7291 = vpop.f32.mrf.mxu0
        %7292 = vmatprep.mubr.bf16.mxu0 0
        %7293 = vmatmul.mubr.bf16.gmra.mxu0 %v6261
        %v7294 = vpop.f32.mrf.mxu0
        %v7295 = vadd.f32 %v6750, %v7294
        %v7296 = vpop.f32.mrf.mxu0
        %v7297 = vpop.f32.mrf.mxu0
        %v7298 = vadd.f32 %v6753, %v7297
        %v7299 = vpop.f32.mrf.mxu0
        %7300 = vmatprep.mubr.bf16.mxu0 0
        %7301 = vmatmul.mubr.bf16.gmra.mxu0 %v6264
        %v7302 = vpop.f32.mrf.mxu0
        %v7303 = vadd.f32 %v6758, %v7302
        %v7304 = vpop.f32.mrf.mxu0
        %v7305 = vpop.f32.mrf.mxu0
        %v7306 = vadd.f32 %v6761, %v7305
        %v7307 = vpop.f32.mrf.mxu0
        %7308 = vmatprep.mubr.bf16.mxu0 0
        %7309 = vmatmul.mubr.bf16.gmra.mxu0 %v6267
        %v7310 = vpop.f32.mrf.mxu0
        %v7311 = vadd.f32 %v6766, %v7310
        %v7312 = vpop.f32.mrf.mxu0
        %v7313 = vpop.f32.mrf.mxu0
        %v7314 = vadd.f32 %v6769, %v7313
        %v7315 = vpop.f32.mrf.mxu0
        %7316 = vmatprep.mubr.bf16.mxu0 0
        %7317 = vmatmul.mubr.bf16.gmra.mxu0 %v6270
        %v7318 = vpop.f32.mrf.mxu0
        %v7319 = vadd.f32 %v6774, %v7318
        %v7320 = vpop.f32.mrf.mxu0
        %v7321 = vpop.f32.mrf.mxu0
        %v7322 = vadd.f32 %v6777, %v7321
        %v7323 = vpop.f32.mrf.mxu0
        %7324 = vmatprep.mubr.bf16.mxu0 0
        %7325 = vmatmul.mubr.bf16.gmra.mxu0 %v6273
        %v7326 = vpop.f32.mrf.mxu0
        %v7327 = vadd.f32 %v6782, %v7326
        %v7328 = vpop.f32.mrf.mxu0
        %v7329 = vpop.f32.mrf.mxu0
        %v7330 = vadd.f32 %v6785, %v7329
        %v7331 = vpop.f32.mrf.mxu0
        %7332 = vmatprep.mubr.bf16.mxu0 0
        %7333 = vmatmul.mubr.bf16.gmra.mxu0 %v6276
        %v7334 = vpop.f32.mrf.mxu0
        %v7335 = vadd.f32 %v6790, %v7334
        %v7336 = vpop.f32.mrf.mxu0
        %v7337 = vpop.f32.mrf.mxu0
        %v7338 = vadd.f32 %v6793, %v7337
        %v7339 = vpop.f32.mrf.mxu0
        %7340 = vmatprep.mubr.bf16.mxu0 0
        %7341 = vmatmul.mubr.bf16.gmra.mxu0 %v6279
        %v7342 = vpop.f32.mrf.mxu0
        %v7343 = vadd.f32 %v6798, %v7342
        %v7344 = vpop.f32.mrf.mxu0
        %v7345 = vpop.f32.mrf.mxu0
        %v7346 = vadd.f32 %v6801, %v7345
        %v7347 = vpop.f32.mrf.mxu0
        %7348 = vmatprep.mubr.bf16.mxu0 0
        %7349 = vmatmul.mubr.bf16.gmra.mxu0 %v6282
        %v7350 = vpop.f32.mrf.mxu0
        %v7351 = vadd.f32 %v6806, %v7350
        %v7352 = vpop.f32.mrf.mxu0
        %v7353 = vpop.f32.mrf.mxu0
        %v7354 = vadd.f32 %v6809, %v7353
        %v7355 = vpop.f32.mrf.mxu0
        %7356 = vmatprep.mubr.bf16.mxu0 0
        %7357 = vmatmul.mubr.bf16.gmra.mxu0 %v6285
        %v7358 = vpop.f32.mrf.mxu0
        %v7359 = vadd.f32 %v6814, %v7358
        %v7360 = vpop.f32.mrf.mxu0
        %v7361 = vpop.f32.mrf.mxu0
        %v7362 = vadd.f32 %v6817, %v7361
        %v7363 = vpop.f32.mrf.mxu0
        %7364 = vmatprep.mubr.bf16.mxu0 0
        %7365 = vmatmul.mubr.bf16.gmra.mxu0 %v6288
        %v7366 = vpop.f32.mrf.mxu0
        %v7367 = vadd.f32 %v6822, %v7366
        %v7368 = vpop.f32.mrf.mxu0
        %v7369 = vpop.f32.mrf.mxu0
        %v7370 = vadd.f32 %v6825, %v7369
        %v7371 = vpop.f32.mrf.mxu0
        %7372 = vmatprep.mubr.bf16.mxu0 0
        %7373 = vmatmul.mubr.bf16.gmra.mxu0 %v6291
        %v7374 = vpop.f32.mrf.mxu0
        %v7375 = vadd.f32 %v6830, %v7374
        %v7376 = vpop.f32.mrf.mxu0
        %v7377 = vpop.f32.mrf.mxu0
        %v7378 = vadd.f32 %v6833, %v7377
        %v7379 = vpop.f32.mrf.mxu0
        %7380 = vmatprep.mubr.bf16.mxu0 0
        %7381 = vmatmul.mubr.bf16.gmra.mxu0 %v6294
        %v7382 = vpop.f32.mrf.mxu0
        %v7383 = vadd.f32 %v6838, %v7382
        %v7384 = vpop.f32.mrf.mxu0
        %v7385 = vpop.f32.mrf.mxu0
        %v7386 = vadd.f32 %v6841, %v7385
        %v7387 = vpop.f32.mrf.mxu0
        %7388 = vmatprep.mubr.bf16.mxu0 0
        %7389 = vmatmul.mubr.bf16.gmra.mxu0 %v6297
        %v7390 = vpop.f32.mrf.mxu0
        %v7391 = vadd.f32 %v6846, %v7390
        %v7392 = vpop.f32.mrf.mxu0
        %v7393 = vpop.f32.mrf.mxu0
        %v7394 = vadd.f32 %v6849, %v7393
        %v7395 = vpop.f32.mrf.mxu0
        %7396 = vmatprep.mubr.bf16.mxu0 0
        %7397 = vmatmul.mubr.bf16.gmra.mxu0 %v6300
        %v7398 = vpop.f32.mrf.mxu0
        %v7399 = vadd.f32 %v6854, %v7398
        %v7400 = vpop.f32.mrf.mxu0
        %v7401 = vpop.f32.mrf.mxu0
        %v7402 = vadd.f32 %v6857, %v7401
        %v7403 = vpop.f32.mrf.mxu0
        %7404 = vmatprep.mubr.bf16.mxu0 0
        %7405 = vmatmul.mubr.bf16.gmra.mxu0 %v6303
        %v7406 = vpop.f32.mrf.mxu0
        %v7407 = vadd.f32 %v6862, %v7406
        %v7408 = vpop.f32.mrf.mxu0
        %v7409 = vpop.f32.mrf.mxu0
        %v7410 = vadd.f32 %v6865, %v7409
        %v7411 = vpop.f32.mrf.mxu0
        %7412 = vmatprep.mubr.bf16.mxu0 0
        %7413 = vmatmul.mubr.bf16.gmra.mxu0 %v6306
        %v7414 = vpop.f32.mrf.mxu0
        %v7415 = vadd.f32 %v6870, %v7414
        %v7416 = vpop.f32.mrf.mxu0
        %v7417 = vpop.f32.mrf.mxu0
        %v7418 = vadd.f32 %v6873, %v7417
        %v7419 = vpop.f32.mrf.mxu0
        %7420 = vmatprep.mubr.bf16.mxu0 0
        %7421 = vmatmul.mubr.bf16.gmra.mxu0 %v6309
        %v7422 = vpop.f32.mrf.mxu0
        %v7423 = vadd.f32 %v6878, %v7422
        %v7424 = vpop.f32.mrf.mxu0
        %v7425 = vpop.f32.mrf.mxu0
        %v7426 = vadd.f32 %v6881, %v7425
        %v7427 = vpop.f32.mrf.mxu0
        %7428 = vmatprep.mubr.bf16.mxu0 0
        %7429 = vmatmul.mubr.bf16.gmra.mxu0 %v6312
        %v7430 = vpop.f32.mrf.mxu0
        %v7431 = vadd.f32 %v6886, %v7430
        %v7432 = vpop.f32.mrf.mxu0
        %v7433 = vpop.f32.mrf.mxu0
        %v7434 = vadd.f32 %v6889, %v7433
        %v7435 = vpop.f32.mrf.mxu0
        %7436 = vmatprep.mubr.bf16.mxu0 0
        %7437 = vmatmul.mubr.bf16.gmra.mxu0 %v6315
        %v7438 = vpop.f32.mrf.mxu0
        %v7439 = vadd.f32 %v6894, %v7438
        %v7440 = vpop.f32.mrf.mxu0
        %v7441 = vpop.f32.mrf.mxu0
        %v7442 = vadd.f32 %v6897, %v7441
        %v7443 = vpop.f32.mrf.mxu0
        %7444 = vmatprep.mubr.bf16.mxu0 0
        %7445 = vmatmul.mubr.bf16.gmra.mxu0 %v6318
        %v7446 = vpop.f32.mrf.mxu0
        %v7447 = vadd.f32 %v6902, %v7446
        %v7448 = vpop.f32.mrf.mxu0
        %v7449 = vpop.f32.mrf.mxu0
        %v7450 = vadd.f32 %v6905, %v7449
        %v7451 = vpop.f32.mrf.mxu0
        %7452 = vmatprep.mubr.bf16.mxu0 0
        %7453 = vmatmul.mubr.bf16.gmra.mxu0 %v6321
        %v7454 = vpop.f32.mrf.mxu0
        %v7455 = vadd.f32 %v6910, %v7454
        %v7456 = vpop.f32.mrf.mxu0
        %v7457 = vpop.f32.mrf.mxu0
        %v7458 = vadd.f32 %v6913, %v7457
        %v7459 = vpop.f32.mrf.mxu0
        %7460 = vmatprep.mubr.bf16.mxu0 0
        %7461 = vmatmul.mubr.bf16.gmra.mxu0 %v6324
        %v7462 = vpop.f32.mrf.mxu0
        %v7463 = vadd.f32 %v6918, %v7462
        %v7464 = vpop.f32.mrf.mxu0
        %v7465 = vpop.f32.mrf.mxu0
        %v7466 = vadd.f32 %v6921, %v7465
        %v7467 = vpop.f32.mrf.mxu0
        %7468 = vmatprep.mubr.bf16.mxu0 0
        %7469 = vmatmul.mubr.bf16.gmra.mxu0 %v6327
        %v7470 = vpop.f32.mrf.mxu0
        %v7471 = vadd.f32 %v6926, %v7470
        %v7472 = vpop.f32.mrf.mxu0
        %v7473 = vpop.f32.mrf.mxu0
        %v7474 = vadd.f32 %v6929, %v7473
        %v7475 = vpop.f32.mrf.mxu0
        %7476 = vmatprep.mubr.bf16.mxu0 0
        %7477 = vmatmul.mubr.bf16.gmra.mxu0 %v6330
        %v7478 = vpop.f32.mrf.mxu0
        %v7479 = vadd.f32 %v6934, %v7478
        %v7480 = vpop.f32.mrf.mxu0
        %v7481 = vpop.f32.mrf.mxu0
        %v7482 = vadd.f32 %v6937, %v7481
        %v7483 = vpop.f32.mrf.mxu0
        %7484 = vmatprep.mubr.bf16.mxu0 0
        %7485 = vmatmul.mubr.bf16.gmra.mxu0 %v6333
        %v7486 = vpop.f32.mrf.mxu0
        %v7487 = vadd.f32 %v6942, %v7486
        %v7488 = vpop.f32.mrf.mxu0
        %v7489 = vpop.f32.mrf.mxu0
        %v7490 = vadd.f32 %v6945, %v7489
        %v7491 = vpop.f32.mrf.mxu0
        %7492 = vmatprep.mubr.bf16.mxu0 0
        %7493 = vmatmul.mubr.bf16.gmra.mxu0 %v6336
        %v7494 = vpop.f32.mrf.mxu0
        %v7495 = vadd.f32 %v6950, %v7494
        %v7496 = vpop.f32.mrf.mxu0
        %v7497 = vpop.f32.mrf.mxu0
        %v7498 = vadd.f32 %v6953, %v7497
        %v7499 = vpop.f32.mrf.mxu0
        %7500 = vmatprep.mubr.bf16.mxu0 0
        %7501 = vmatmul.mubr.bf16.gmra.mxu0 %v6339
        %v7502 = vpop.f32.mrf.mxu0
        %v7503 = vadd.f32 %v6958, %v7502
        %v7504 = vpop.f32.mrf.mxu0
        %v7505 = vpop.f32.mrf.mxu0
        %v7506 = vadd.f32 %v6961, %v7505
        %v7507 = vpop.f32.mrf.mxu0
        %7508 = vmatprep.mubr.bf16.mxu0 0
        %7509 = vmatmul.mubr.bf16.gmra.mxu0 %v6342
        %v7510 = vpop.f32.mrf.mxu0
        %v7511 = vadd.f32 %v6966, %v7510
        %v7512 = vpop.f32.mrf.mxu0
        %v7513 = vpop.f32.mrf.mxu0
        %v7514 = vadd.f32 %v6969, %v7513
        %v7515 = vpop.f32.mrf.mxu0
        %7516 = vmatprep.mubr.bf16.mxu0 0
        %7517 = vmatmul.mubr.bf16.gmra.mxu0 %v6345
        %v7518 = vpop.f32.mrf.mxu0
        %v7519 = vadd.f32 %v6974, %v7518
        %v7520 = vpop.f32.mrf.mxu0
        %v7521 = vpop.f32.mrf.mxu0
        %v7522 = vadd.f32 %v6977, %v7521
        %v7523 = vpop.f32.mrf.mxu0
        %7524 = vmatprep.mubr.bf16.mxu0 0
        %7525 = vmatmul.mubr.bf16.gmra.mxu0 %v6348
        %v7526 = vpop.f32.mrf.mxu0
        %v7527 = vadd.f32 %v6982, %v7526
        %v7528 = vpop.f32.mrf.mxu0
        %v7529 = vpop.f32.mrf.mxu0
        %v7530 = vadd.f32 %v6985, %v7529
        %v7531 = vpop.f32.mrf.mxu0
        %7532 = vmatprep.mubr.bf16.mxu0 0
        %7533 = vmatmul.mubr.bf16.gmra.mxu0 %v6351
        %v7534 = vpop.f32.mrf.mxu0
        %v7535 = vadd.f32 %v6990, %v7534
        %v7536 = vpop.f32.mrf.mxu0
        %v7537 = vpop.f32.mrf.mxu0
        %v7538 = vadd.f32 %v6993, %v7537
        %v7539 = vpop.f32.mrf.mxu0
        %7540 = vmatprep.mubr.bf16.mxu0 0
        %7541 = vmatmul.mubr.bf16.gmra.mxu0 %v6354
        %v7542 = vpop.f32.mrf.mxu0
        %v7543 = vadd.f32 %v6998, %v7542
        %v7544 = vpop.f32.mrf.mxu0
        %v7545 = vpop.f32.mrf.mxu0
        %v7546 = vadd.f32 %v7001, %v7545
        %v7547 = vpop.f32.mrf.mxu0
        %7548 = vmatprep.mubr.bf16.mxu0 0
        %7549 = vmatmul.mubr.bf16.gmra.mxu0 %v6357
        %v7550 = vpop.f32.mrf.mxu0
        %v7551 = vadd.f32 %v7006, %v7550
        %v7552 = vpop.f32.mrf.mxu0
        %v7553 = vpop.f32.mrf.mxu0
        %v7554 = vadd.f32 %v7009, %v7553
        %v7555 = vpop.f32.mrf.mxu0
        %7556 = vmatprep.mubr.bf16.mxu0 0
        %7557 = vmatmul.mubr.bf16.gmra.mxu0 %v6360
        %v7558 = vpop.f32.mrf.mxu0
        %v7559 = vadd.f32 %v7014, %v7558
        %v7560 = vpop.f32.mrf.mxu0
        %v7561 = vpop.f32.mrf.mxu0
        %v7562 = vadd.f32 %v7017, %v7561
        %v7563 = vpop.f32.mrf.mxu0
        %7564 = vmatprep.mubr.bf16.mxu0 0
        %7565 = vmatmul.mubr.bf16.gmra.mxu0 %v6363
        %v7566 = vpop.f32.mrf.mxu0
        %v7567 = vadd.f32 %v7022, %v7566
        %v7568 = vpop.f32.mrf.mxu0
        %v7569 = vpop.f32.mrf.mxu0
        %v7570 = vadd.f32 %v7025, %v7569
        %v7571 = vpop.f32.mrf.mxu0
        %7572 = vmatprep.mubr.bf16.mxu0 0
        %7573 = vmatmul.mubr.bf16.gmra.mxu0 %v6366
        %v7574 = vpop.f32.mrf.mxu0
        %v7575 = vadd.f32 %v7030, %v7574
        %v7576 = vpop.f32.mrf.mxu0
        %v7577 = vpop.f32.mrf.mxu0
        %v7578 = vadd.f32 %v7033, %v7577
        %v7579 = vpop.f32.mrf.mxu0
        %7580 = vmatprep.mubr.bf16.mxu0 0
        %7581 = vmatmul.mubr.bf16.gmra.mxu0 %v6369
        %v7582 = vpop.f32.mrf.mxu0
        %v7583 = vadd.f32 %v7038, %v7582
        %v7584 = vpop.f32.mrf.mxu0
        %v7585 = vpop.f32.mrf.mxu0
        %v7586 = vadd.f32 %v7041, %v7585
        %v7587 = vpop.f32.mrf.mxu0
        %7588 = vmatprep.mubr.bf16.mxu0 0
        %7589 = vmatmul.mubr.bf16.gmra.mxu0 %v6372
        %v7590 = vpop.f32.mrf.mxu0
        %v7591 = vadd.f32 %v7046, %v7590
        %v7592 = vpop.f32.mrf.mxu0
        %v7593 = vpop.f32.mrf.mxu0
        %v7594 = vadd.f32 %v7049, %v7593
        %v7595 = vpop.f32.mrf.mxu0
        %7596 = vmatprep.mubr.bf16.mxu0 0
        %7597 = vmatmul.mubr.bf16.gmra.mxu0 %v6375
        %v7598 = vpop.f32.mrf.mxu0
        %v7599 = vadd.f32 %v7054, %v7598
        %v7600 = vpop.f32.mrf.mxu0
        %v7601 = vpop.f32.mrf.mxu0
        %v7602 = vadd.f32 %v7057, %v7601
        %v7603 = vpop.f32.mrf.mxu0
        %7604 = vmatprep.mubr.bf16.mxu0 0
        %7605 = vmatmul.mubr.bf16.gmra.mxu0 %v6378
        %v7606 = vpop.f32.mrf.mxu0
        %v7607 = vadd.f32 %v7062, %v7606
        %v7608 = vpop.f32.mrf.mxu0
        %v7609 = vpop.f32.mrf.mxu0
        %v7610 = vadd.f32 %v7065, %v7609
        %v7611 = vpop.f32.mrf.mxu0
        %7612 = vmatprep.mubr.bf16.mxu0 0
        %7613 = vmatmul.mubr.bf16.gmra.mxu0 %v6381
        %v7614 = vpop.f32.mrf.mxu0
        %v7615 = vadd.f32 %v7070, %v7614
        %v7616 = vpop.f32.mrf.mxu0
        %v7617 = vpop.f32.mrf.mxu0
        %v7618 = vadd.f32 %v7073, %v7617
        %v7619 = vpop.f32.mrf.mxu0
        %7620 = vmatprep.mubr.bf16.mxu0 0
        %7621 = vmatmul.mubr.bf16.gmra.mxu0 %v6384
        %v7622 = vpop.f32.mrf.mxu0
        %v7623 = vadd.f32 %v7078, %v7622
        %v7624 = vpop.f32.mrf.mxu0
        %v7625 = vpop.f32.mrf.mxu0
        %v7626 = vadd.f32 %v7081, %v7625
        %v7627 = vpop.f32.mrf.mxu0
        %7628 = vmatprep.mubr.bf16.mxu0 0
        %7629 = vmatmul.mubr.bf16.gmra.mxu0 %v6387
        %v7630 = vpop.f32.mrf.mxu0
        %v7631 = vadd.f32 %v7086, %v7630
        %v7632 = vpop.f32.mrf.mxu0
        %v7633 = vpop.f32.mrf.mxu0
        %v7634 = vadd.f32 %v7089, %v7633
        %v7635 = vpop.f32.mrf.mxu0
        %7636 = vmatprep.mubr.bf16.mxu0 0
        %7637 = vmatmul.mubr.bf16.gmra.mxu0 %v6390
        %v7638 = vpop.f32.mrf.mxu0
        %v7639 = vadd.f32 %v7094, %v7638
        %v7640 = vpop.f32.mrf.mxu0
        %v7641 = vpop.f32.mrf.mxu0
        %v7642 = vadd.f32 %v7097, %v7641
        %v7643 = vpop.f32.mrf.mxu0
        %7644 = vmatprep.mubr.bf16.mxu0 0
        %7645 = vmatmul.mubr.bf16.gmra.mxu0 %v6393
        %v7646 = vpop.f32.mrf.mxu0
        %v7647 = vadd.f32 %v7102, %v7646
        %v7648 = vpop.f32.mrf.mxu0
        %v7649 = vpop.f32.mrf.mxu0
        %v7650 = vadd.f32 %v7105, %v7649
        %v7651 = vpop.f32.mrf.mxu0
        %7652 = vmatprep.mubr.bf16.mxu0 0
        %7653 = vmatmul.mubr.bf16.gmra.mxu0 %v6396
        %v7654 = vpop.f32.mrf.mxu0
        %v7655 = vadd.f32 %v7110, %v7654
        %v7656 = vpop.f32.mrf.mxu0
        %v7657 = vpop.f32.mrf.mxu0
        %v7658 = vadd.f32 %v7113, %v7657
        %v7659 = vpop.f32.mrf.mxu0
        %7660 = vmatprep.mubr.bf16.mxu0 0
        %7661 = vmatmul.mubr.bf16.gmra.mxu0 %v6399
        %v7662 = vpop.f32.mrf.mxu0
        %v7663 = vadd.f32 %v7118, %v7662
        %v7664 = vpop.f32.mrf.mxu0
        %v7665 = vpop.f32.mrf.mxu0
        %v7666 = vadd.f32 %v7121, %v7665
        %v7667 = vpop.f32.mrf.mxu0
        %7668 = vmatprep.mubr.bf16.mxu0 0
        %7669 = vmatmul.mubr.bf16.gmra.mxu0 %v6402
        %v7670 = vpop.f32.mrf.mxu0
        %v7671 = vadd.f32 %v7126, %v7670
        %v7672 = vpop.f32.mrf.mxu0
        %v7673 = vpop.f32.mrf.mxu0
        %v7674 = vadd.f32 %v7129, %v7673
        %v7675 = vpop.f32.mrf.mxu0
        %7676 = vmatprep.mubr.bf16.mxu0 0
        %7677 = vmatmul.mubr.bf16.gmra.mxu0 %v6405
        %v7678 = vpop.f32.mrf.mxu0
        %v7679 = vadd.f32 %v7134, %v7678
        %v7680 = vpop.f32.mrf.mxu0
        %v7681 = vpop.f32.mrf.mxu0
        %v7682 = vadd.f32 %v7137, %v7681
        %v7683 = vpop.f32.mrf.mxu0
        %7684 = vmatprep.mubr.bf16.mxu0 0
        %7685 = vmatmul.mubr.bf16.gmra.mxu0 %v6408
        %v7686 = vpop.f32.mrf.mxu0
        %v7687 = vadd.f32 %v7142, %v7686
        %v7688 = vpop.f32.mrf.mxu0
        %v7689 = vpop.f32.mrf.mxu0
        %v7690 = vadd.f32 %v7145, %v7689
        %v7691 = vpop.f32.mrf.mxu0
        %7692 = vmatprep.mubr.bf16.mxu0 0
        %7693 = vmatmul.mubr.bf16.gmra.mxu0 %v6411
        %v7694 = vpop.f32.mrf.mxu0
        %v7695 = vadd.f32 %v7150, %v7694
        %v7696 = vpop.f32.mrf.mxu0
        %v7697 = vpop.f32.mrf.mxu0
        %v7698 = vadd.f32 %v7153, %v7697
        %v7699 = vpop.f32.mrf.mxu0
        %7700 = vdwg.mxu0
        %v7701 = vpack.c.bf16 %v7194, %v7191
        %v7702 = vpack.c.bf16 %v7202, %v7199
        %v7703 = vpack.c.bf16 %v7210, %v7207
        %v7704 = vpack.c.bf16 %v7218, %v7215
        %v7705 = vpack.c.bf16 %v7226, %v7223
        %v7706 = vpack.c.bf16 %v7234, %v7231
        %v7707 = vpack.c.bf16 %v7242, %v7239
        %v7708 = vpack.c.bf16 %v7250, %v7247
        %v7709 = vpack.c.bf16 %v7258, %v7255
        %v7710 = vpack.c.bf16 %v7266, %v7263
        %v7711 = vpack.c.bf16 %v7274, %v7271
        %v7712 = vpack.c.bf16 %v7282, %v7279
        %v7713 = vpack.c.bf16 %v7290, %v7287
        %v7714 = vpack.c.bf16 %v7298, %v7295
        %v7715 = vpack.c.bf16 %v7306, %v7303
        %v7716 = vpack.c.bf16 %v7314, %v7311
        %v7717 = vpack.c.bf16 %v7322, %v7319
        %v7718 = vpack.c.bf16 %v7330, %v7327
        %v7719 = vpack.c.bf16 %v7338, %v7335
        %v7720 = vpack.c.bf16 %v7346, %v7343
        %v7721 = vpack.c.bf16 %v7354, %v7351
        %v7722 = vpack.c.bf16 %v7362, %v7359
        %v7723 = vpack.c.bf16 %v7370, %v7367
        %v7724 = vpack.c.bf16 %v7378, %v7375
        %v7725 = vpack.c.bf16 %v7386, %v7383
        %v7726 = vpack.c.bf16 %v7394, %v7391
        %v7727 = vpack.c.bf16 %v7402, %v7399
        %v7728 = vpack.c.bf16 %v7410, %v7407
        %v7729 = vpack.c.bf16 %v7418, %v7415
        %v7730 = vpack.c.bf16 %v7426, %v7423
        %v7731 = vpack.c.bf16 %v7434, %v7431
        %v7732 = vpack.c.bf16 %v7442, %v7439
        %v7733 = vpack.c.bf16 %v7450, %v7447
        %v7734 = vpack.c.bf16 %v7458, %v7455
        %v7735 = vpack.c.bf16 %v7466, %v7463
        %v7736 = vpack.c.bf16 %v7474, %v7471
        %v7737 = vpack.c.bf16 %v7482, %v7479
        %v7738 = vpack.c.bf16 %v7490, %v7487
        %v7739 = vpack.c.bf16 %v7498, %v7495
        %v7740 = vpack.c.bf16 %v7506, %v7503
        %v7741 = vpack.c.bf16 %v7514, %v7511
        %v7742 = vpack.c.bf16 %v7522, %v7519
        %v7743 = vpack.c.bf16 %v7530, %v7527
        %v7744 = vpack.c.bf16 %v7538, %v7535
        %v7745 = vpack.c.bf16 %v7546, %v7543
        %v7746 = vpack.c.bf16 %v7554, %v7551
        %v7747 = vpack.c.bf16 %v7562, %v7559
        %v7748 = vpack.c.bf16 %v7570, %v7567
        %v7749 = vpack.c.bf16 %v7578, %v7575
        %v7750 = vpack.c.bf16 %v7586, %v7583
        %v7751 = vpack.c.bf16 %v7594, %v7591
        %v7752 = vpack.c.bf16 %v7602, %v7599
        %v7753 = vpack.c.bf16 %v7610, %v7607
        %v7754 = vpack.c.bf16 %v7618, %v7615
        %v7755 = vpack.c.bf16 %v7626, %v7623
        %v7756 = vpack.c.bf16 %v7634, %v7631
        %v7757 = vpack.c.bf16 %v7642, %v7639
        %v7758 = vpack.c.bf16 %v7650, %v7647
        %v7759 = vpack.c.bf16 %v7658, %v7655
        %v7760 = vpack.c.bf16 %v7666, %v7663
        %v7761 = vpack.c.bf16 %v7674, %v7671
        %v7762 = vpack.c.bf16 %v7682, %v7679
        %v7763 = vpack.c.bf16 %v7690, %v7687
        %v7764 = vpack.c.bf16 %v7698, %v7695
        %7797 = vrot.lane.b32.xlu0 %v7701, 32
        %v7798 = vpop.permute.xlu0 %7797
        %7799 = vrot.lane.b32.xlu0 %v7703, 32
        %v7800 = vpop.permute.xlu0 %7799
        %7801 = vrot.lane.b32.xlu0 %v7705, 32
        %v7802 = vpop.permute.xlu0 %7801
        %7803 = vrot.lane.b32.xlu0 %v7707, 32
        %v7804 = vpop.permute.xlu0 %7803
        %7805 = vrot.lane.b32.xlu0 %v7709, 32
        %v7806 = vpop.permute.xlu0 %7805
        %7807 = vrot.lane.b32.xlu0 %v7711, 32
        %v7808 = vpop.permute.xlu0 %7807
        %7809 = vrot.lane.b32.xlu0 %v7713, 32
        %v7810 = vpop.permute.xlu0 %7809
        %7811 = vrot.lane.b32.xlu0 %v7715, 32
        %v7812 = vpop.permute.xlu0 %7811
        %7813 = vrot.lane.b32.xlu0 %v7717, 32
        %v7814 = vpop.permute.xlu0 %7813
        %7815 = vrot.lane.b32.xlu0 %v7719, 32
        %v7816 = vpop.permute.xlu0 %7815
        %7817 = vrot.lane.b32.xlu0 %v7721, 32
        %v7818 = vpop.permute.xlu0 %7817
        %7819 = vrot.lane.b32.xlu0 %v7723, 32
        %v7820 = vpop.permute.xlu0 %7819
        %7821 = vrot.lane.b32.xlu0 %v7725, 32
        %v7822 = vpop.permute.xlu0 %7821
        %7823 = vrot.lane.b32.xlu0 %v7727, 32
        %v7824 = vpop.permute.xlu0 %7823
        %7825 = vrot.lane.b32.xlu0 %v7729, 32
        %v7826 = vpop.permute.xlu0 %7825
        %7827 = vrot.lane.b32.xlu0 %v7731, 32
        %v7828 = vpop.permute.xlu0 %7827
        %7829 = vrot.lane.b32.xlu0 %v7733, 32
        %v7830 = vpop.permute.xlu0 %7829
        %7831 = vrot.lane.b32.xlu0 %v7735, 32
        %v7832 = vpop.permute.xlu0 %7831
        %7833 = vrot.lane.b32.xlu0 %v7737, 32
        %v7834 = vpop.permute.xlu0 %7833
        %7835 = vrot.lane.b32.xlu0 %v7739, 32
        %v7836 = vpop.permute.xlu0 %7835
        %7837 = vrot.lane.b32.xlu0 %v7741, 32
        %v7838 = vpop.permute.xlu0 %7837
        %7839 = vrot.lane.b32.xlu0 %v7743, 32
        %v7840 = vpop.permute.xlu0 %7839
        %7841 = vrot.lane.b32.xlu0 %v7745, 32
        %v7842 = vpop.permute.xlu0 %7841
        %7843 = vrot.lane.b32.xlu0 %v7747, 32
        %v7844 = vpop.permute.xlu0 %7843
        %7845 = vrot.lane.b32.xlu0 %v7749, 32
        %v7846 = vpop.permute.xlu0 %7845
        %7847 = vrot.lane.b32.xlu0 %v7751, 32
        %v7848 = vpop.permute.xlu0 %7847
        %7849 = vrot.lane.b32.xlu0 %v7753, 32
        %v7850 = vpop.permute.xlu0 %7849
        %7851 = vrot.lane.b32.xlu0 %v7755, 32
        %v7852 = vpop.permute.xlu0 %7851
        %7853 = vrot.lane.b32.xlu0 %v7757, 32
        %v7854 = vpop.permute.xlu0 %7853
        %7855 = vrot.lane.b32.xlu0 %v7759, 32
        %v7856 = vpop.permute.xlu0 %7855
        %7857 = vrot.lane.b32.xlu0 %v7761, 32
        %v7858 = vpop.permute.xlu0 %7857
        %7859 = vrot.lane.b32.xlu0 %v7763, 32
        %v7860 = vpop.permute.xlu0 %7859
        %7893 = vrot.lane.b32.xlu0 %v7702, 64
        %v7894 = vpop.permute.xlu0 %7893
        %7895 = vrot.lane.b32.xlu0 %v7704, 64
        %v7896 = vpop.permute.xlu0 %7895
        %7897 = vrot.lane.b32.xlu0 %v7706, 64
        %v7898 = vpop.permute.xlu0 %7897
        %7899 = vrot.lane.b32.xlu0 %v7708, 64
        %v7900 = vpop.permute.xlu0 %7899
        %7901 = vrot.lane.b32.xlu0 %v7710, 64
        %v7902 = vpop.permute.xlu0 %7901
        %7903 = vrot.lane.b32.xlu0 %v7712, 64
        %v7904 = vpop.permute.xlu0 %7903
        %7905 = vrot.lane.b32.xlu0 %v7714, 64
        %v7906 = vpop.permute.xlu0 %7905
        %7907 = vrot.lane.b32.xlu0 %v7716, 64
        %v7908 = vpop.permute.xlu0 %7907
        %7909 = vrot.lane.b32.xlu0 %v7718, 64
        %v7910 = vpop.permute.xlu0 %7909
        %7911 = vrot.lane.b32.xlu0 %v7720, 64
        %v7912 = vpop.permute.xlu0 %7911
        %7913 = vrot.lane.b32.xlu0 %v7722, 64
        %v7914 = vpop.permute.xlu0 %7913
        %7915 = vrot.lane.b32.xlu0 %v7724, 64
        %v7916 = vpop.permute.xlu0 %7915
        %7917 = vrot.lane.b32.xlu0 %v7726, 64
        %v7918 = vpop.permute.xlu0 %7917
        %7919 = vrot.lane.b32.xlu0 %v7728, 64
        %v7920 = vpop.permute.xlu0 %7919
        %7921 = vrot.lane.b32.xlu0 %v7730, 64
        %v7922 = vpop.permute.xlu0 %7921
        %7923 = vrot.lane.b32.xlu0 %v7732, 64
        %v7924 = vpop.permute.xlu0 %7923
        %7925 = vrot.lane.b32.xlu0 %v7734, 64
        %v7926 = vpop.permute.xlu0 %7925
        %7927 = vrot.lane.b32.xlu0 %v7736, 64
        %v7928 = vpop.permute.xlu0 %7927
        %7929 = vrot.lane.b32.xlu0 %v7738, 64
        %v7930 = vpop.permute.xlu0 %7929
        %7931 = vrot.lane.b32.xlu0 %v7740, 64
        %v7932 = vpop.permute.xlu0 %7931
        %7933 = vrot.lane.b32.xlu0 %v7742, 64
        %v7934 = vpop.permute.xlu0 %7933
        %7935 = vrot.lane.b32.xlu0 %v7744, 64
        %v7936 = vpop.permute.xlu0 %7935
        %7937 = vrot.lane.b32.xlu0 %v7746, 64
        %v7938 = vpop.permute.xlu0 %7937
        %7939 = vrot.lane.b32.xlu0 %v7748, 64
        %v7940 = vpop.permute.xlu0 %7939
        %7941 = vrot.lane.b32.xlu0 %v7750, 64
        %v7942 = vpop.permute.xlu0 %7941
        %7943 = vrot.lane.b32.xlu0 %v7752, 64
        %v7944 = vpop.permute.xlu0 %7943
        %7945 = vrot.lane.b32.xlu0 %v7754, 64
        %v7946 = vpop.permute.xlu0 %7945
        %7947 = vrot.lane.b32.xlu0 %v7756, 64
        %v7948 = vpop.permute.xlu0 %7947
        %7949 = vrot.lane.b32.xlu0 %v7758, 64
        %v7950 = vpop.permute.xlu0 %7949
        %7951 = vrot.lane.b32.xlu0 %v7760, 64
        %v7952 = vpop.permute.xlu0 %7951
        %7953 = vrot.lane.b32.xlu0 %v7762, 64
        %v7954 = vpop.permute.xlu0 %7953
        %7955 = vrot.lane.b32.xlu0 %v7764, 64
        %v7956 = vpop.permute.xlu0 %7955
        %vm7957 = vcmask 261120
        %v7960 = vsel %vm7957, 0, %v7798
        %v7963 = vsel %vm7957, %v7702, %v7800
        %v7966 = vsel %vm7957, %v7704, %v7802
        %v7969 = vsel %vm7957, %v7706, %v7804
        %v7972 = vsel %vm7957, %v7708, %v7806
        %v7975 = vsel %vm7957, %v7710, %v7808
        %v7978 = vsel %vm7957, %v7712, %v7810
        %v7981 = vsel %vm7957, %v7714, %v7812
        %v7984 = vsel %vm7957, %v7716, %v7814
        %v7987 = vsel %vm7957, %v7718, %v7816
        %v7990 = vsel %vm7957, %v7720, %v7818
        %v7993 = vsel %vm7957, %v7722, %v7820
        %v7996 = vsel %vm7957, %v7724, %v7822
        %v7999 = vsel %vm7957, %v7726, %v7824
        %v8002 = vsel %vm7957, %v7728, %v7826
        %v8005 = vsel %vm7957, %v7730, %v7828
        %v8008 = vsel %vm7957, %v7732, %v7830
        %v8011 = vsel %vm7957, %v7734, %v7832
        %v8014 = vsel %vm7957, %v7736, %v7834
        %v8017 = vsel %vm7957, %v7738, %v7836
        %v8020 = vsel %vm7957, %v7740, %v7838
        %v8023 = vsel %vm7957, %v7742, %v7840
        %v8026 = vsel %vm7957, %v7744, %v7842
        %v8029 = vsel %vm7957, %v7746, %v7844
        %v8032 = vsel %vm7957, %v7748, %v7846
        %v8035 = vsel %vm7957, %v7750, %v7848
        %v8038 = vsel %vm7957, %v7752, %v7850
        %v8041 = vsel %vm7957, %v7754, %v7852
        %v8044 = vsel %vm7957, %v7756, %v7854
        %v8047 = vsel %vm7957, %v7758, %v7856
        %v8050 = vsel %vm7957, %v7760, %v7858
        %v8053 = vsel %vm7957, %v7762, %v7860
        %vm8054 = vcmask 523264
        %v8056 = vsel %vm8054, %v7960, %v7894
        %v8058 = vsel %vm8054, %v7963, %v7896
        %v8060 = vsel %vm8054, %v7966, %v7898
        %v8062 = vsel %vm8054, %v7969, %v7900
        %v8064 = vsel %vm8054, %v7972, %v7902
        %v8066 = vsel %vm8054, %v7975, %v7904
        %v8068 = vsel %vm8054, %v7978, %v7906
        %v8070 = vsel %vm8054, %v7981, %v7908
        %v8072 = vsel %vm8054, %v7984, %v7910
        %v8074 = vsel %vm8054, %v7987, %v7912
        %v8076 = vsel %vm8054, %v7990, %v7914
        %v8078 = vsel %vm8054, %v7993, %v7916
        %v8080 = vsel %vm8054, %v7996, %v7918
        %v8082 = vsel %vm8054, %v7999, %v7920
        %v8084 = vsel %vm8054, %v8002, %v7922
        %v8086 = vsel %vm8054, %v8005, %v7924
        %v8088 = vsel %vm8054, %v8008, %v7926
        %v8090 = vsel %vm8054, %v8011, %v7928
        %v8092 = vsel %vm8054, %v8014, %v7930
        %v8094 = vsel %vm8054, %v8017, %v7932
        %v8096 = vsel %vm8054, %v8020, %v7934
        %v8098 = vsel %vm8054, %v8023, %v7936
        %v8100 = vsel %vm8054, %v8026, %v7938
        %v8102 = vsel %vm8054, %v8029, %v7940
        %v8104 = vsel %vm8054, %v8032, %v7942
        %v8106 = vsel %vm8054, %v8035, %v7944
        %v8108 = vsel %vm8054, %v8038, %v7946
        %v8110 = vsel %vm8054, %v8041, %v7948
        %v8112 = vsel %vm8054, %v8044, %v7950
        %v8114 = vsel %vm8054, %v8047, %v7952
        %v8116 = vsel %vm8054, %v8050, %v7954
        %v8118 = vsel %vm8054, %v8053, %v7956
        %v8119 = vld [vmem:[%s4] sm:$0xf]
        %v8120 = vld [vmem:[%s4 + $0x4] sm:$0xf]
        %v8121 = vld [vmem:[%s4 + $0x8] sm:$0xf]
        %v8122 = vld [vmem:[%s4 + $0xc] sm:$0xf]
        %v8123 = vld [vmem:[%s4 + $0x10] sm:$0xf]
        %v8124 = vld [vmem:[%s4 + $0x14] sm:$0xf]
        %v8125 = vld [vmem:[%s4 + $0x18] sm:$0xf]
        %v8126 = vld [vmem:[%s4 + $0x1c] sm:$0xf]
        %v8127 = vld [vmem:[%s4 + $0x20] sm:$0xf]
        %v8128 = vld [vmem:[%s4 + $0x24] sm:$0xf]
        %v8129 = vld [vmem:[%s4 + $0x28] sm:$0xf]
        %v8130 = vld [vmem:[%s4 + $0x2c] sm:$0xf]
        %v8131 = vld [vmem:[%s5] sm:$0x1]
        %v8133 = vlaneseq
        %v8134 = vshrl.u32 %v8133, 7
        %v8135 = vsub.s32 0, %v8134
        %v8136 = vrot.slane %v8131, %v8135
        %v8150 = vunpack.c.l.b16 %v8119
        %v8151 = vunpack.c.l.b16 %v8120
        %v8152 = vunpack.c.l.b16 %v8121
        %v8153 = vunpack.c.l.b16 %v8122
        %v8154 = vunpack.c.l.b16 %v8123
        %v8155 = vunpack.c.l.b16 %v8124
        %v8156 = vunpack.c.l.b16 %v8125
        %v8157 = vunpack.c.l.b16 %v8126
        %v8158 = vunpack.c.l.b16 %v8127
        %v8159 = vunpack.c.l.b16 %v8128
        %v8160 = vunpack.c.l.b16 %v8129
        %v8161 = vunpack.c.l.b16 %v8130
        %v8162 = vpack.c.b16 %v8151, %v8150
        %v8163 = vpack.c.b16 %v8153, %v8152
        %v8164 = vpack.c.b16 %v8155, %v8154
        %v8165 = vpack.c.b16 %v8157, %v8156
        %v8166 = vpack.c.b16 %v8159, %v8158
        %v8167 = vpack.c.b16 %v8161, %v8160
        %vm8174 = vcmask 785408
        %v8175 = vsel %vm8174, %v8056, 0
        %v8177 = vsel %vm8174, %v8058, 0
        %v8179 = vsel %vm8174, %v8060, 0
        %v8181 = vsel %vm8174, %v8062, 0
        %v8183 = vsel %vm8174, %v8064, 0
        %v8185 = vsel %vm8174, %v8066, 0
        %v8187 = vsel %vm8174, %v8068, 0
        %v8189 = vsel %vm8174, %v8070, 0
        %v8191 = vsel %vm8174, %v8072, 0
        %v8193 = vsel %vm8174, %v8074, 0
        %v8195 = vsel %vm8174, %v8076, 0
        %v8197 = vsel %vm8174, %v8078, 0
        %v8199 = vsel %vm8174, %v8080, 0
        %v8201 = vsel %vm8174, %v8082, 0
        %v8203 = vsel %vm8174, %v8084, 0
        %v8205 = vsel %vm8174, %v8086, 0
        %v8207 = vsel %vm8174, %v8088, 0
        %v8209 = vsel %vm8174, %v8090, 0
        %v8211 = vsel %vm8174, %v8092, 0
        %v8213 = vsel %vm8174, %v8094, 0
        %v8215 = vsel %vm8174, %v8096, 0
        %v8217 = vsel %vm8174, %v8098, 0
        %v8219 = vsel %vm8174, %v8100, 0
        %v8221 = vsel %vm8174, %v8102, 0
        %v8223 = vsel %vm8174, %v8104, 0
        %v8225 = vsel %vm8174, %v8106, 0
        %v8227 = vsel %vm8174, %v8108, 0
        %v8229 = vsel %vm8174, %v8110, 0
        %v8231 = vsel %vm8174, %v8112, 0
        %v8233 = vsel %vm8174, %v8114, 0
        %v8235 = vsel %vm8174, %v8116, 0
        %v8237 = vsel %vm8174, %v8118, 0
        %8239 = vmatprep.subr.bf16.mxu0 0
        %8240 = vmatpush1.bf16.msra.mxu0 0
        %8241 = vmatprep.subr.bf16.mxu0 0
        %8242 = vmatpush1.bf16.msra.mxu0 0
        %8243 = vmatprep.subr.bf16.mxu0 0
        %8244 = vmatpush1.bf16.msra.mxu0 %v8167
        %8245 = vmatprep.subr.bf16.mxu0 0
        %8246 = vmatpush1.bf16.msra.mxu0 %v8166
        %8247 = vmatprep.subr.bf16.mxu0 0
        %8248 = vmatpush1.bf16.msra.mxu0 %v8165
        %8249 = vmatprep.subr.bf16.mxu0 0
        %8250 = vmatpush1.bf16.msra.mxu0 %v8164
        %8251 = vmatprep.subr.bf16.mxu0 0
        %8252 = vmatpush1.bf16.msra.mxu0 %v8163
        %8253 = vmatprep.subr.bf16.mxu0 0
        %8254 = vmatpush1.bf16.msra.mxu0 %v8162
        %8255 = vmatprep.subr.bf16.mxu0 0
        %8256 = vmatpush2.bf16.msra.mxu0 0
        %8257 = vmatprep.subr.bf16.mxu0 0
        %8258 = vmatpush2.bf16.msra.mxu0 0
        %8259 = vmatprep.subr.bf16.mxu0 0
        %8260 = vmatpush2.bf16.msra.mxu0 0
        %8261 = vmatprep.subr.bf16.mxu0 0
        %8262 = vmatpush2.bf16.msra.mxu0 0
        %8263 = vmatprep.subr.bf16.mxu0 0
        %8264 = vmatpush2.bf16.msra.mxu0 0
        %8265 = vmatprep.subr.bf16.mxu0 0
        %8266 = vmatpush2.bf16.msra.mxu0 0
        %8267 = vmatprep.subr.bf16.mxu0 0
        %8268 = vmatpush2.bf16.msra.mxu0 0
        %8269 = vmatprep.subr.bf16.mxu0 0
        %8270 = vmatpush2.bf16.msra.mxu0 0
        %8271 = vmatprep.mubr.bf16.mxu0 0
        %8272 = vmatmul.mubr.bf16.gmra.mxu0 %v8175
        %v8273 = vpop.f32.mrf.mxu0
        %v8274 = vadd.f32 %v8136, %v8273
        %v8275 = vpop.f32.mrf.mxu0
        %v8276 = vpop.f32.mrf.mxu0
        %v8277 = vadd.f32 %v8136, %v8276
        %v8278 = vpop.f32.mrf.mxu0
        %8279 = vmatprep.mubr.bf16.mxu0 0
        %8280 = vmatmul.mubr.bf16.gmra.mxu0 %v8177
        %v8281 = vpop.f32.mrf.mxu0
        %v8282 = vadd.f32 %v8136, %v8281
        %v8283 = vpop.f32.mrf.mxu0
        %v8284 = vpop.f32.mrf.mxu0
        %v8285 = vadd.f32 %v8136, %v8284
        %v8286 = vpop.f32.mrf.mxu0
        %8287 = vmatprep.mubr.bf16.mxu0 0
        %8288 = vmatmul.mubr.bf16.gmra.mxu0 %v8179
        %v8289 = vpop.f32.mrf.mxu0
        %v8290 = vadd.f32 %v8136, %v8289
        %v8291 = vpop.f32.mrf.mxu0
        %v8292 = vpop.f32.mrf.mxu0
        %v8293 = vadd.f32 %v8136, %v8292
        %v8294 = vpop.f32.mrf.mxu0
        %8295 = vmatprep.mubr.bf16.mxu0 0
        %8296 = vmatmul.mubr.bf16.gmra.mxu0 %v8181
        %v8297 = vpop.f32.mrf.mxu0
        %v8298 = vadd.f32 %v8136, %v8297
        %v8299 = vpop.f32.mrf.mxu0
        %v8300 = vpop.f32.mrf.mxu0
        %v8301 = vadd.f32 %v8136, %v8300
        %v8302 = vpop.f32.mrf.mxu0
        %8303 = vmatprep.mubr.bf16.mxu0 0
        %8304 = vmatmul.mubr.bf16.gmra.mxu0 %v8183
        %v8305 = vpop.f32.mrf.mxu0
        %v8306 = vadd.f32 %v8136, %v8305
        %v8307 = vpop.f32.mrf.mxu0
        %v8308 = vpop.f32.mrf.mxu0
        %v8309 = vadd.f32 %v8136, %v8308
        %v8310 = vpop.f32.mrf.mxu0
        %8311 = vmatprep.mubr.bf16.mxu0 0
        %8312 = vmatmul.mubr.bf16.gmra.mxu0 %v8185
        %v8313 = vpop.f32.mrf.mxu0
        %v8314 = vadd.f32 %v8136, %v8313
        %v8315 = vpop.f32.mrf.mxu0
        %v8316 = vpop.f32.mrf.mxu0
        %v8317 = vadd.f32 %v8136, %v8316
        %v8318 = vpop.f32.mrf.mxu0
        %8319 = vmatprep.mubr.bf16.mxu0 0
        %8320 = vmatmul.mubr.bf16.gmra.mxu0 %v8187
        %v8321 = vpop.f32.mrf.mxu0
        %v8322 = vadd.f32 %v8136, %v8321
        %v8323 = vpop.f32.mrf.mxu0
        %v8324 = vpop.f32.mrf.mxu0
        %v8325 = vadd.f32 %v8136, %v8324
        %v8326 = vpop.f32.mrf.mxu0
        %8327 = vmatprep.mubr.bf16.mxu0 0
        %8328 = vmatmul.mubr.bf16.gmra.mxu0 %v8189
        %v8329 = vpop.f32.mrf.mxu0
        %v8330 = vadd.f32 %v8136, %v8329
        %v8331 = vpop.f32.mrf.mxu0
        %v8332 = vpop.f32.mrf.mxu0
        %v8333 = vadd.f32 %v8136, %v8332
        %v8334 = vpop.f32.mrf.mxu0
        %8335 = vmatprep.mubr.bf16.mxu0 0
        %8336 = vmatmul.mubr.bf16.gmra.mxu0 %v8191
        %v8337 = vpop.f32.mrf.mxu0
        %v8338 = vadd.f32 %v8136, %v8337
        %v8339 = vpop.f32.mrf.mxu0
        %v8340 = vpop.f32.mrf.mxu0
        %v8341 = vadd.f32 %v8136, %v8340
        %v8342 = vpop.f32.mrf.mxu0
        %8343 = vmatprep.mubr.bf16.mxu0 0
        %8344 = vmatmul.mubr.bf16.gmra.mxu0 %v8193
        %v8345 = vpop.f32.mrf.mxu0
        %v8346 = vadd.f32 %v8136, %v8345
        %v8347 = vpop.f32.mrf.mxu0
        %v8348 = vpop.f32.mrf.mxu0
        %v8349 = vadd.f32 %v8136, %v8348
        %v8350 = vpop.f32.mrf.mxu0
        %8351 = vmatprep.mubr.bf16.mxu0 0
        %8352 = vmatmul.mubr.bf16.gmra.mxu0 %v8195
        %v8353 = vpop.f32.mrf.mxu0
        %v8354 = vadd.f32 %v8136, %v8353
        %v8355 = vpop.f32.mrf.mxu0
        %v8356 = vpop.f32.mrf.mxu0
        %v8357 = vadd.f32 %v8136, %v8356
        %v8358 = vpop.f32.mrf.mxu0
        %8359 = vmatprep.mubr.bf16.mxu0 0
        %8360 = vmatmul.mubr.bf16.gmra.mxu0 %v8197
        %v8361 = vpop.f32.mrf.mxu0
        %v8362 = vadd.f32 %v8136, %v8361
        %v8363 = vpop.f32.mrf.mxu0
        %v8364 = vpop.f32.mrf.mxu0
        %v8365 = vadd.f32 %v8136, %v8364
        %v8366 = vpop.f32.mrf.mxu0
        %8367 = vmatprep.mubr.bf16.mxu0 0
        %8368 = vmatmul.mubr.bf16.gmra.mxu0 %v8199
        %v8369 = vpop.f32.mrf.mxu0
        %v8370 = vadd.f32 %v8136, %v8369
        %v8371 = vpop.f32.mrf.mxu0
        %v8372 = vpop.f32.mrf.mxu0
        %v8373 = vadd.f32 %v8136, %v8372
        %v8374 = vpop.f32.mrf.mxu0
        %8375 = vmatprep.mubr.bf16.mxu0 0
        %8376 = vmatmul.mubr.bf16.gmra.mxu0 %v8201
        %v8377 = vpop.f32.mrf.mxu0
        %v8378 = vadd.f32 %v8136, %v8377
        %v8379 = vpop.f32.mrf.mxu0
        %v8380 = vpop.f32.mrf.mxu0
        %v8381 = vadd.f32 %v8136, %v8380
        %v8382 = vpop.f32.mrf.mxu0
        %8383 = vmatprep.mubr.bf16.mxu0 0
        %8384 = vmatmul.mubr.bf16.gmra.mxu0 %v8203
        %v8385 = vpop.f32.mrf.mxu0
        %v8386 = vadd.f32 %v8136, %v8385
        %v8387 = vpop.f32.mrf.mxu0
        %v8388 = vpop.f32.mrf.mxu0
        %v8389 = vadd.f32 %v8136, %v8388
        %v8390 = vpop.f32.mrf.mxu0
        %8391 = vmatprep.mubr.bf16.mxu0 0
        %8392 = vmatmul.mubr.bf16.gmra.mxu0 %v8205
        %v8393 = vpop.f32.mrf.mxu0
        %v8394 = vadd.f32 %v8136, %v8393
        %v8395 = vpop.f32.mrf.mxu0
        %v8396 = vpop.f32.mrf.mxu0
        %v8397 = vadd.f32 %v8136, %v8396
        %v8398 = vpop.f32.mrf.mxu0
        %8399 = vmatprep.mubr.bf16.mxu0 0
        %8400 = vmatmul.mubr.bf16.gmra.mxu0 %v8207
        %v8401 = vpop.f32.mrf.mxu0
        %v8402 = vadd.f32 %v8136, %v8401
        %v8403 = vpop.f32.mrf.mxu0
        %v8404 = vpop.f32.mrf.mxu0
        %v8405 = vadd.f32 %v8136, %v8404
        %v8406 = vpop.f32.mrf.mxu0
        %8407 = vmatprep.mubr.bf16.mxu0 0
        %8408 = vmatmul.mubr.bf16.gmra.mxu0 %v8209
        %v8409 = vpop.f32.mrf.mxu0
        %v8410 = vadd.f32 %v8136, %v8409
        %v8411 = vpop.f32.mrf.mxu0
        %v8412 = vpop.f32.mrf.mxu0
        %v8413 = vadd.f32 %v8136, %v8412
        %v8414 = vpop.f32.mrf.mxu0
        %8415 = vmatprep.mubr.bf16.mxu0 0
        %8416 = vmatmul.mubr.bf16.gmra.mxu0 %v8211
        %v8417 = vpop.f32.mrf.mxu0
        %v8418 = vadd.f32 %v8136, %v8417
        %v8419 = vpop.f32.mrf.mxu0
        %v8420 = vpop.f32.mrf.mxu0
        %v8421 = vadd.f32 %v8136, %v8420
        %v8422 = vpop.f32.mrf.mxu0
        %8423 = vmatprep.mubr.bf16.mxu0 0
        %8424 = vmatmul.mubr.bf16.gmra.mxu0 %v8213
        %v8425 = vpop.f32.mrf.mxu0
        %v8426 = vadd.f32 %v8136, %v8425
        %v8427 = vpop.f32.mrf.mxu0
        %v8428 = vpop.f32.mrf.mxu0
        %v8429 = vadd.f32 %v8136, %v8428
        %v8430 = vpop.f32.mrf.mxu0
        %8431 = vmatprep.mubr.bf16.mxu0 0
        %8432 = vmatmul.mubr.bf16.gmra.mxu0 %v8215
        %v8433 = vpop.f32.mrf.mxu0
        %v8434 = vadd.f32 %v8136, %v8433
        %v8435 = vpop.f32.mrf.mxu0
        %v8436 = vpop.f32.mrf.mxu0
        %v8437 = vadd.f32 %v8136, %v8436
        %v8438 = vpop.f32.mrf.mxu0
        %8439 = vmatprep.mubr.bf16.mxu0 0
        %8440 = vmatmul.mubr.bf16.gmra.mxu0 %v8217
        %v8441 = vpop.f32.mrf.mxu0
        %v8442 = vadd.f32 %v8136, %v8441
        %v8443 = vpop.f32.mrf.mxu0
        %v8444 = vpop.f32.mrf.mxu0
        %v8445 = vadd.f32 %v8136, %v8444
        %v8446 = vpop.f32.mrf.mxu0
        %8447 = vmatprep.mubr.bf16.mxu0 0
        %8448 = vmatmul.mubr.bf16.gmra.mxu0 %v8219
        %v8449 = vpop.f32.mrf.mxu0
        %v8450 = vadd.f32 %v8136, %v8449
        %v8451 = vpop.f32.mrf.mxu0
        %v8452 = vpop.f32.mrf.mxu0
        %v8453 = vadd.f32 %v8136, %v8452
        %v8454 = vpop.f32.mrf.mxu0
        %8455 = vmatprep.mubr.bf16.mxu0 0
        %8456 = vmatmul.mubr.bf16.gmra.mxu0 %v8221
        %v8457 = vpop.f32.mrf.mxu0
        %v8458 = vadd.f32 %v8136, %v8457
        %v8459 = vpop.f32.mrf.mxu0
        %v8460 = vpop.f32.mrf.mxu0
        %v8461 = vadd.f32 %v8136, %v8460
        %v8462 = vpop.f32.mrf.mxu0
        %8463 = vmatprep.mubr.bf16.mxu0 0
        %8464 = vmatmul.mubr.bf16.gmra.mxu0 %v8223
        %v8465 = vpop.f32.mrf.mxu0
        %v8466 = vadd.f32 %v8136, %v8465
        %v8467 = vpop.f32.mrf.mxu0
        %v8468 = vpop.f32.mrf.mxu0
        %v8469 = vadd.f32 %v8136, %v8468
        %v8470 = vpop.f32.mrf.mxu0
        %8471 = vmatprep.mubr.bf16.mxu0 0
        %8472 = vmatmul.mubr.bf16.gmra.mxu0 %v8225
        %v8473 = vpop.f32.mrf.mxu0
        %v8474 = vadd.f32 %v8136, %v8473
        %v8475 = vpop.f32.mrf.mxu0
        %v8476 = vpop.f32.mrf.mxu0
        %v8477 = vadd.f32 %v8136, %v8476
        %v8478 = vpop.f32.mrf.mxu0
        %8479 = vmatprep.mubr.bf16.mxu0 0
        %8480 = vmatmul.mubr.bf16.gmra.mxu0 %v8227
        %v8481 = vpop.f32.mrf.mxu0
        %v8482 = vadd.f32 %v8136, %v8481
        %v8483 = vpop.f32.mrf.mxu0
        %v8484 = vpop.f32.mrf.mxu0
        %v8485 = vadd.f32 %v8136, %v8484
        %v8486 = vpop.f32.mrf.mxu0
        %8487 = vmatprep.mubr.bf16.mxu0 0
        %8488 = vmatmul.mubr.bf16.gmra.mxu0 %v8229
        %v8489 = vpop.f32.mrf.mxu0
        %v8490 = vadd.f32 %v8136, %v8489
        %v8491 = vpop.f32.mrf.mxu0
        %v8492 = vpop.f32.mrf.mxu0
        %v8493 = vadd.f32 %v8136, %v8492
        %v8494 = vpop.f32.mrf.mxu0
        %8495 = vmatprep.mubr.bf16.mxu0 0
        %8496 = vmatmul.mubr.bf16.gmra.mxu0 %v8231
        %v8497 = vpop.f32.mrf.mxu0
        %v8498 = vadd.f32 %v8136, %v8497
        %v8499 = vpop.f32.mrf.mxu0
        %v8500 = vpop.f32.mrf.mxu0
        %v8501 = vadd.f32 %v8136, %v8500
        %v8502 = vpop.f32.mrf.mxu0
        %8503 = vmatprep.mubr.bf16.mxu0 0
        %8504 = vmatmul.mubr.bf16.gmra.mxu0 %v8233
        %v8505 = vpop.f32.mrf.mxu0
        %v8506 = vadd.f32 %v8136, %v8505
        %v8507 = vpop.f32.mrf.mxu0
        %v8508 = vpop.f32.mrf.mxu0
        %v8509 = vadd.f32 %v8136, %v8508
        %v8510 = vpop.f32.mrf.mxu0
        %8511 = vmatprep.mubr.bf16.mxu0 0
        %8512 = vmatmul.mubr.bf16.gmra.mxu0 %v8235
        %v8513 = vpop.f32.mrf.mxu0
        %v8514 = vadd.f32 %v8136, %v8513
        %v8515 = vpop.f32.mrf.mxu0
        %v8516 = vpop.f32.mrf.mxu0
        %v8517 = vadd.f32 %v8136, %v8516
        %v8518 = vpop.f32.mrf.mxu0
        %8519 = vmatprep.mubr.bf16.mxu0 0
        %8520 = vmatmul.mubr.bf16.gmra.mxu0 %v8237
        %v8521 = vpop.f32.mrf.mxu0
        %v8522 = vadd.f32 %v8136, %v8521
        %v8523 = vpop.f32.mrf.mxu0
        %v8524 = vpop.f32.mrf.mxu0
        %v8525 = vadd.f32 %v8136, %v8524
        %v8526 = vpop.f32.mrf.mxu0
        %8527 = vdwg.mxu0
        %vm8528 = vcmp.ge.f32.partialorder %v8274, 0.0
        %vm8529 = vcmp.ge.f32.partialorder %v8277, 0.0
        %vm8530 = vcmp.ge.f32.partialorder %v8282, 0.0
        %vm8531 = vcmp.ge.f32.partialorder %v8285, 0.0
        %vm8532 = vcmp.ge.f32.partialorder %v8290, 0.0
        %vm8533 = vcmp.ge.f32.partialorder %v8293, 0.0
        %vm8534 = vcmp.ge.f32.partialorder %v8298, 0.0
        %vm8535 = vcmp.ge.f32.partialorder %v8301, 0.0
        %vm8536 = vcmp.ge.f32.partialorder %v8306, 0.0
        %vm8537 = vcmp.ge.f32.partialorder %v8309, 0.0
        %vm8538 = vcmp.ge.f32.partialorder %v8314, 0.0
        %vm8539 = vcmp.ge.f32.partialorder %v8317, 0.0
        %vm8540 = vcmp.ge.f32.partialorder %v8322, 0.0
        %vm8541 = vcmp.ge.f32.partialorder %v8325, 0.0
        %vm8542 = vcmp.ge.f32.partialorder %v8330, 0.0
        %vm8543 = vcmp.ge.f32.partialorder %v8333, 0.0
        %vm8544 = vcmp.ge.f32.partialorder %v8338, 0.0
        %vm8545 = vcmp.ge.f32.partialorder %v8341, 0.0
        %vm8546 = vcmp.ge.f32.partialorder %v8346, 0.0
        %vm8547 = vcmp.ge.f32.partialorder %v8349, 0.0
        %vm8548 = vcmp.ge.f32.partialorder %v8354, 0.0
        %vm8549 = vcmp.ge.f32.partialorder %v8357, 0.0
        %vm8550 = vcmp.ge.f32.partialorder %v8362, 0.0
        %vm8551 = vcmp.ge.f32.partialorder %v8365, 0.0
        %vm8552 = vcmp.ge.f32.partialorder %v8370, 0.0
        %vm8553 = vcmp.ge.f32.partialorder %v8373, 0.0
        %vm8554 = vcmp.ge.f32.partialorder %v8378, 0.0
        %vm8555 = vcmp.ge.f32.partialorder %v8381, 0.0
        %vm8556 = vcmp.ge.f32.partialorder %v8386, 0.0
        %vm8557 = vcmp.ge.f32.partialorder %v8389, 0.0
        %vm8558 = vcmp.ge.f32.partialorder %v8394, 0.0
        %vm8559 = vcmp.ge.f32.partialorder %v8397, 0.0
        %vm8560 = vcmp.ge.f32.partialorder %v8402, 0.0
        %vm8561 = vcmp.ge.f32.partialorder %v8405, 0.0
        %vm8562 = vcmp.ge.f32.partialorder %v8410, 0.0
        %vm8563 = vcmp.ge.f32.partialorder %v8413, 0.0
        %vm8564 = vcmp.ge.f32.partialorder %v8418, 0.0
        %vm8565 = vcmp.ge.f32.partialorder %v8421, 0.0
        %vm8566 = vcmp.ge.f32.partialorder %v8426, 0.0
        %vm8567 = vcmp.ge.f32.partialorder %v8429, 0.0
        %vm8568 = vcmp.ge.f32.partialorder %v8434, 0.0
        %vm8569 = vcmp.ge.f32.partialorder %v8437, 0.0
        %vm8570 = vcmp.ge.f32.partialorder %v8442, 0.0
        %vm8571 = vcmp.ge.f32.partialorder %v8445, 0.0
        %vm8572 = vcmp.ge.f32.partialorder %v8450, 0.0
        %vm8573 = vcmp.ge.f32.partialorder %v8453, 0.0
        %vm8574 = vcmp.ge.f32.partialorder %v8458, 0.0
        %vm8575 = vcmp.ge.f32.partialorder %v8461, 0.0
        %vm8576 = vcmp.ge.f32.partialorder %v8466, 0.0
        %vm8577 = vcmp.ge.f32.partialorder %v8469, 0.0
        %vm8578 = vcmp.ge.f32.partialorder %v8474, 0.0
        %vm8579 = vcmp.ge.f32.partialorder %v8477, 0.0
        %vm8580 = vcmp.ge.f32.partialorder %v8482, 0.0
        %vm8581 = vcmp.ge.f32.partialorder %v8485, 0.0
        %vm8582 = vcmp.ge.f32.partialorder %v8490, 0.0
        %vm8583 = vcmp.ge.f32.partialorder %v8493, 0.0
        %vm8584 = vcmp.ge.f32.partialorder %v8498, 0.0
        %vm8585 = vcmp.ge.f32.partialorder %v8501, 0.0
        %vm8586 = vcmp.ge.f32.partialorder %v8506, 0.0
        %vm8587 = vcmp.ge.f32.partialorder %v8509, 0.0
        %vm8588 = vcmp.ge.f32.partialorder %v8514, 0.0
        %vm8589 = vcmp.ge.f32.partialorder %v8517, 0.0
        %vm8590 = vcmp.ge.f32.partialorder %v8522, 0.0
        %vm8591 = vcmp.ge.f32.partialorder %v8525, 0.0
        %v8592 = vmul.f32 %v8274, 0.2
        %v8593 = vmul.f32 %v8277, 0.2
        %v8594 = vmul.f32 %v8282, 0.2
        %v8595 = vmul.f32 %v8285, 0.2
        %v8596 = vmul.f32 %v8290, 0.2
        %v8597 = vmul.f32 %v8293, 0.2
        %v8598 = vmul.f32 %v8298, 0.2
        %v8599 = vmul.f32 %v8301, 0.2
        %v8600 = vmul.f32 %v8306, 0.2
        %v8601 = vmul.f32 %v8309, 0.2
        %v8602 = vmul.f32 %v8314, 0.2
        %v8603 = vmul.f32 %v8317, 0.2
        %v8604 = vmul.f32 %v8322, 0.2
        %v8605 = vmul.f32 %v8325, 0.2
        %v8606 = vmul.f32 %v8330, 0.2
        %v8607 = vmul.f32 %v8333, 0.2
        %v8608 = vmul.f32 %v8338, 0.2
        %v8609 = vmul.f32 %v8341, 0.2
        %v8610 = vmul.f32 %v8346, 0.2
        %v8611 = vmul.f32 %v8349, 0.2
        %v8612 = vmul.f32 %v8354, 0.2
        %v8613 = vmul.f32 %v8357, 0.2
        %v8614 = vmul.f32 %v8362, 0.2
        %v8615 = vmul.f32 %v8365, 0.2
        %v8616 = vmul.f32 %v8370, 0.2
        %v8617 = vmul.f32 %v8373, 0.2
        %v8618 = vmul.f32 %v8378, 0.2
        %v8619 = vmul.f32 %v8381, 0.2
        %v8620 = vmul.f32 %v8386, 0.2
        %v8621 = vmul.f32 %v8389, 0.2
        %v8622 = vmul.f32 %v8394, 0.2
        %v8623 = vmul.f32 %v8397, 0.2
        %v8624 = vmul.f32 %v8402, 0.2
        %v8625 = vmul.f32 %v8405, 0.2
        %v8626 = vmul.f32 %v8410, 0.2
        %v8627 = vmul.f32 %v8413, 0.2
        %v8628 = vmul.f32 %v8418, 0.2
        %v8629 = vmul.f32 %v8421, 0.2
        %v8630 = vmul.f32 %v8426, 0.2
        %v8631 = vmul.f32 %v8429, 0.2
        %v8632 = vmul.f32 %v8434, 0.2
        %v8633 = vmul.f32 %v8437, 0.2
        %v8634 = vmul.f32 %v8442, 0.2
        %v8635 = vmul.f32 %v8445, 0.2
        %v8636 = vmul.f32 %v8450, 0.2
        %v8637 = vmul.f32 %v8453, 0.2
        %v8638 = vmul.f32 %v8458, 0.2
        %v8639 = vmul.f32 %v8461, 0.2
        %v8640 = vmul.f32 %v8466, 0.2
        %v8641 = vmul.f32 %v8469, 0.2
        %v8642 = vmul.f32 %v8474, 0.2
        %v8643 = vmul.f32 %v8477, 0.2
        %v8644 = vmul.f32 %v8482, 0.2
        %v8645 = vmul.f32 %v8485, 0.2
        %v8646 = vmul.f32 %v8490, 0.2
        %v8647 = vmul.f32 %v8493, 0.2
        %v8648 = vmul.f32 %v8498, 0.2
        %v8649 = vmul.f32 %v8501, 0.2
        %v8650 = vmul.f32 %v8506, 0.2
        %v8651 = vmul.f32 %v8509, 0.2
        %v8652 = vmul.f32 %v8514, 0.2
        %v8653 = vmul.f32 %v8517, 0.2
        %v8654 = vmul.f32 %v8522, 0.2
        %v8655 = vmul.f32 %v8525, 0.2
        %v8656 = vsel %vm8528, %v8274, %v8592
        %v8657 = vsel %vm8529, %v8277, %v8593
        %v8658 = vsel %vm8530, %v8282, %v8594
        %v8659 = vsel %vm8531, %v8285, %v8595
        %v8660 = vsel %vm8532, %v8290, %v8596
        %v8661 = vsel %vm8533, %v8293, %v8597
        %v8662 = vsel %vm8534, %v8298, %v8598
        %v8663 = vsel %vm8535, %v8301, %v8599
        %v8664 = vsel %vm8536, %v8306, %v8600
        %v8665 = vsel %vm8537, %v8309, %v8601
        %v8666 = vsel %vm8538, %v8314, %v8602
        %v8667 = vsel %vm8539, %v8317, %v8603
        %v8668 = vsel %vm8540, %v8322, %v8604
        %v8669 = vsel %vm8541, %v8325, %v8605
        %v8670 = vsel %vm8542, %v8330, %v8606
        %v8671 = vsel %vm8543, %v8333, %v8607
        %v8672 = vsel %vm8544, %v8338, %v8608
        %v8673 = vsel %vm8545, %v8341, %v8609
        %v8674 = vsel %vm8546, %v8346, %v8610
        %v8675 = vsel %vm8547, %v8349, %v8611
        %v8676 = vsel %vm8548, %v8354, %v8612
        %v8677 = vsel %vm8549, %v8357, %v8613
        %v8678 = vsel %vm8550, %v8362, %v8614
        %v8679 = vsel %vm8551, %v8365, %v8615
        %v8680 = vsel %vm8552, %v8370, %v8616
        %v8681 = vsel %vm8553, %v8373, %v8617
        %v8682 = vsel %vm8554, %v8378, %v8618
        %v8683 = vsel %vm8555, %v8381, %v8619
        %v8684 = vsel %vm8556, %v8386, %v8620
        %v8685 = vsel %vm8557, %v8389, %v8621
        %v8686 = vsel %vm8558, %v8394, %v8622
        %v8687 = vsel %vm8559, %v8397, %v8623
        %v8688 = vsel %vm8560, %v8402, %v8624
        %v8689 = vsel %vm8561, %v8405, %v8625
        %v8690 = vsel %vm8562, %v8410, %v8626
        %v8691 = vsel %vm8563, %v8413, %v8627
        %v8692 = vsel %vm8564, %v8418, %v8628
        %v8693 = vsel %vm8565, %v8421, %v8629
        %v8694 = vsel %vm8566, %v8426, %v8630
        %v8695 = vsel %vm8567, %v8429, %v8631
        %v8696 = vsel %vm8568, %v8434, %v8632
        %v8697 = vsel %vm8569, %v8437, %v8633
        %v8698 = vsel %vm8570, %v8442, %v8634
        %v8699 = vsel %vm8571, %v8445, %v8635
        %v8700 = vsel %vm8572, %v8450, %v8636
        %v8701 = vsel %vm8573, %v8453, %v8637
        %v8702 = vsel %vm8574, %v8458, %v8638
        %v8703 = vsel %vm8575, %v8461, %v8639
        %v8704 = vsel %vm8576, %v8466, %v8640
        %v8705 = vsel %vm8577, %v8469, %v8641
        %v8706 = vsel %vm8578, %v8474, %v8642
        %v8707 = vsel %vm8579, %v8477, %v8643
        %v8708 = vsel %vm8580, %v8482, %v8644
        %v8709 = vsel %vm8581, %v8485, %v8645
        %v8710 = vsel %vm8582, %v8490, %v8646
        %v8711 = vsel %vm8583, %v8493, %v8647
        %v8712 = vsel %vm8584, %v8498, %v8648
        %v8713 = vsel %vm8585, %v8501, %v8649
        %v8714 = vsel %vm8586, %v8506, %v8650
        %v8715 = vsel %vm8587, %v8509, %v8651
        %v8716 = vsel %vm8588, %v8514, %v8652
        %v8717 = vsel %vm8589, %v8517, %v8653
        %v8718 = vsel %vm8590, %v8522, %v8654
        %v8719 = vsel %vm8591, %v8525, %v8655
        %v8720 = vpack.c.bf16 %v8657, %v8656
        %v8721 = vpack.c.bf16 %v8659, %v8658
        %v8722 = vpack.c.bf16 %v8661, %v8660
        %v8723 = vpack.c.bf16 %v8663, %v8662
        %v8724 = vpack.c.bf16 %v8665, %v8664
        %v8725 = vpack.c.bf16 %v8667, %v8666
        %v8726 = vpack.c.bf16 %v8669, %v8668
        %v8727 = vpack.c.bf16 %v8671, %v8670
        %v8728 = vpack.c.bf16 %v8673, %v8672
        %v8729 = vpack.c.bf16 %v8675, %v8674
        %v8730 = vpack.c.bf16 %v8677, %v8676
        %v8731 = vpack.c.bf16 %v8679, %v8678
        %v8732 = vpack.c.bf16 %v8681, %v8680
        %v8733 = vpack.c.bf16 %v8683, %v8682
        %v8734 = vpack.c.bf16 %v8685, %v8684
        %v8735 = vpack.c.bf16 %v8687, %v8686
        %v8736 = vpack.c.bf16 %v8689, %v8688
        %v8737 = vpack.c.bf16 %v8691, %v8690
        %v8738 = vpack.c.bf16 %v8693, %v8692
        %v8739 = vpack.c.bf16 %v8695, %v8694
        %v8740 = vpack.c.bf16 %v8697, %v8696
        %v8741 = vpack.c.bf16 %v8699, %v8698
        %v8742 = vpack.c.bf16 %v8701, %v8700
        %v8743 = vpack.c.bf16 %v8703, %v8702
        %v8744 = vpack.c.bf16 %v8705, %v8704
        %v8745 = vpack.c.bf16 %v8707, %v8706
        %v8746 = vpack.c.bf16 %v8709, %v8708
        %v8747 = vpack.c.bf16 %v8711, %v8710
        %v8748 = vpack.c.bf16 %v8713, %v8712
        %v8749 = vpack.c.bf16 %v8715, %v8714
        %v8750 = vpack.c.bf16 %v8717, %v8716
        %v8751 = vpack.c.bf16 %v8719, %v8718
        %8768 = vrot.lane.b32.xlu0 %v8720, 32
        %v8769 = vpop.permute.xlu0 %8768
        %8770 = vrot.lane.b32.xlu0 %v8722, 32
        %v8771 = vpop.permute.xlu0 %8770
        %8772 = vrot.lane.b32.xlu0 %v8724, 32
        %v8773 = vpop.permute.xlu0 %8772
        %8774 = vrot.lane.b32.xlu0 %v8726, 32
        %v8775 = vpop.permute.xlu0 %8774
        %8776 = vrot.lane.b32.xlu0 %v8728, 32
        %v8777 = vpop.permute.xlu0 %8776
        %8778 = vrot.lane.b32.xlu0 %v8730, 32
        %v8779 = vpop.permute.xlu0 %8778
        %8780 = vrot.lane.b32.xlu0 %v8732, 32
        %v8781 = vpop.permute.xlu0 %8780
        %8782 = vrot.lane.b32.xlu0 %v8734, 32
        %v8783 = vpop.permute.xlu0 %8782
        %8784 = vrot.lane.b32.xlu0 %v8736, 32
        %v8785 = vpop.permute.xlu0 %8784
        %8786 = vrot.lane.b32.xlu0 %v8738, 32
        %v8787 = vpop.permute.xlu0 %8786
        %8788 = vrot.lane.b32.xlu0 %v8740, 32
        %v8789 = vpop.permute.xlu0 %8788
        %8790 = vrot.lane.b32.xlu0 %v8742, 32
        %v8791 = vpop.permute.xlu0 %8790
        %8792 = vrot.lane.b32.xlu0 %v8744, 32
        %v8793 = vpop.permute.xlu0 %8792
        %8794 = vrot.lane.b32.xlu0 %v8746, 32
        %v8795 = vpop.permute.xlu0 %8794
        %8796 = vrot.lane.b32.xlu0 %v8748, 32
        %v8797 = vpop.permute.xlu0 %8796
        %8798 = vrot.lane.b32.xlu0 %v8750, 32
        %v8799 = vpop.permute.xlu0 %8798
        %8816 = vrot.lane.b32.xlu0 %v8721, 64
        %v8817 = vpop.permute.xlu0 %8816
        %8818 = vrot.lane.b32.xlu0 %v8723, 64
        %v8819 = vpop.permute.xlu0 %8818
        %8820 = vrot.lane.b32.xlu0 %v8725, 64
        %v8821 = vpop.permute.xlu0 %8820
        %8822 = vrot.lane.b32.xlu0 %v8727, 64
        %v8823 = vpop.permute.xlu0 %8822
        %8824 = vrot.lane.b32.xlu0 %v8729, 64
        %v8825 = vpop.permute.xlu0 %8824
        %8826 = vrot.lane.b32.xlu0 %v8731, 64
        %v8827 = vpop.permute.xlu0 %8826
        %8828 = vrot.lane.b32.xlu0 %v8733, 64
        %v8829 = vpop.permute.xlu0 %8828
        %8830 = vrot.lane.b32.xlu0 %v8735, 64
        %v8831 = vpop.permute.xlu0 %8830
        %8832 = vrot.lane.b32.xlu0 %v8737, 64
        %v8833 = vpop.permute.xlu0 %8832
        %8834 = vrot.lane.b32.xlu0 %v8739, 64
        %v8835 = vpop.permute.xlu0 %8834
        %8836 = vrot.lane.b32.xlu0 %v8741, 64
        %v8837 = vpop.permute.xlu0 %8836
        %8838 = vrot.lane.b32.xlu0 %v8743, 64
        %v8839 = vpop.permute.xlu0 %8838
        %8840 = vrot.lane.b32.xlu0 %v8745, 64
        %v8841 = vpop.permute.xlu0 %8840
        %8842 = vrot.lane.b32.xlu0 %v8747, 64
        %v8843 = vpop.permute.xlu0 %8842
        %8844 = vrot.lane.b32.xlu0 %v8749, 64
        %v8845 = vpop.permute.xlu0 %8844
        %8846 = vrot.lane.b32.xlu0 %v8751, 64
        %v8847 = vpop.permute.xlu0 %8846
        %v8849 = vsel %vm7957, 0, %v8769
        %v8852 = vsel %vm7957, %v8721, %v8771
        %v8855 = vsel %vm7957, %v8723, %v8773
        %v8858 = vsel %vm7957, %v8725, %v8775
        %v8861 = vsel %vm7957, %v8727, %v8777
        %v8864 = vsel %vm7957, %v8729, %v8779
        %v8867 = vsel %vm7957, %v8731, %v8781
        %v8870 = vsel %vm7957, %v8733, %v8783
        %v8873 = vsel %vm7957, %v8735, %v8785
        %v8876 = vsel %vm7957, %v8737, %v8787
        %v8879 = vsel %vm7957, %v8739, %v8789
        %v8882 = vsel %vm7957, %v8741, %v8791
        %v8885 = vsel %vm7957, %v8743, %v8793
        %v8888 = vsel %vm7957, %v8745, %v8795
        %v8891 = vsel %vm7957, %v8747, %v8797
        %v8894 = vsel %vm7957, %v8749, %v8799
        %v8896 = vsel %vm8054, %v8849, %v8817
        %v8898 = vsel %vm8054, %v8852, %v8819
        %v8900 = vsel %vm8054, %v8855, %v8821
        %v8902 = vsel %vm8054, %v8858, %v8823
        %v8904 = vsel %vm8054, %v8861, %v8825
        %v8906 = vsel %vm8054, %v8864, %v8827
        %v8908 = vsel %vm8054, %v8867, %v8829
        %v8910 = vsel %vm8054, %v8870, %v8831
        %v8912 = vsel %vm8054, %v8873, %v8833
        %v8914 = vsel %vm8054, %v8876, %v8835
        %v8916 = vsel %vm8054, %v8879, %v8837
        %v8918 = vsel %vm8054, %v8882, %v8839
        %v8920 = vsel %vm8054, %v8885, %v8841
        %v8922 = vsel %vm8054, %v8888, %v8843
        %v8924 = vsel %vm8054, %v8891, %v8845
        %v8926 = vsel %vm8054, %v8894, %v8847
        %s8927 = scalar_lea.vmem %s4, 48
        %v8928 = vld [vmem:[%s8927] sm:$0xf]
        %v8929 = vld [vmem:[%s8927 + $0x4] sm:$0xf]
        %v8930 = vld [vmem:[%s8927 + $0x8] sm:$0xf]
        %v8931 = vld [vmem:[%s8927 + $0xc] sm:$0xf]
        %v8932 = vld [vmem:[%s8927 + $0x10] sm:$0xf]
        %v8933 = vld [vmem:[%s8927 + $0x14] sm:$0xf]
        %v8934 = vld [vmem:[%s8927 + $0x18] sm:$0xf]
        %v8935 = vld [vmem:[%s8927 + $0x1c] sm:$0xf]
        %v8936 = vld [vmem:[%s8927 + $0x20] sm:$0xf]
        %v8937 = vld [vmem:[%s8927 + $0x24] sm:$0xf]
        %v8938 = vld [vmem:[%s8927 + $0x28] sm:$0xf]
        %v8939 = vld [vmem:[%s8927 + $0x2c] sm:$0xf]
        %s8940 = scalar_lea.vmem %s5, 1
        %v8941 = vld [vmem:[%s8940] sm:$0x1]
        %v8943 = vlaneseq
        %v8944 = vshrl.u32 %v8943, 7
        %v8945 = vsub.s32 0, %v8944
        %v8946 = vrot.slane %v8941, %v8945
        %v8960 = vunpack.c.l.b16 %v8928
        %v8961 = vunpack.c.l.b16 %v8929
        %v8962 = vunpack.c.l.b16 %v8930
        %v8963 = vunpack.c.l.b16 %v8931
        %v8964 = vunpack.c.l.b16 %v8932
        %v8965 = vunpack.c.l.b16 %v8933
        %v8966 = vunpack.c.l.b16 %v8934
        %v8967 = vunpack.c.l.b16 %v8935
        %v8968 = vunpack.c.l.b16 %v8936
        %v8969 = vunpack.c.l.b16 %v8937
        %v8970 = vunpack.c.l.b16 %v8938
        %v8971 = vunpack.c.l.b16 %v8939
        %v8972 = vpack.c.b16 %v8961, %v8960
        %v8973 = vpack.c.b16 %v8963, %v8962
        %v8974 = vpack.c.b16 %v8965, %v8964
        %v8975 = vpack.c.b16 %v8967, %v8966
        %v8976 = vpack.c.b16 %v8969, %v8968
        %v8977 = vpack.c.b16 %v8971, %v8970
        %v8984 = vsel %vm8174, %v8896, 0
        %v8986 = vsel %vm8174, %v8898, 0
        %v8988 = vsel %vm8174, %v8900, 0
        %v8990 = vsel %vm8174, %v8902, 0
        %v8992 = vsel %vm8174, %v8904, 0
        %v8994 = vsel %vm8174, %v8906, 0
        %v8996 = vsel %vm8174, %v8908, 0
        %v8998 = vsel %vm8174, %v8910, 0
        %v9000 = vsel %vm8174, %v8912, 0
        %v9002 = vsel %vm8174, %v8914, 0
        %v9004 = vsel %vm8174, %v8916, 0
        %v9006 = vsel %vm8174, %v8918, 0
        %v9008 = vsel %vm8174, %v8920, 0
        %v9010 = vsel %vm8174, %v8922, 0
        %v9012 = vsel %vm8174, %v8924, 0
        %v9014 = vsel %vm8174, %v8926, 0
        %9016 = vmatprep.subr.bf16.mxu0 0
        %9017 = vmatpush1.bf16.msra.mxu0 0
        %9018 = vmatprep.subr.bf16.mxu0 0
        %9019 = vmatpush1.bf16.msra.mxu0 0
        %9020 = vmatprep.subr.bf16.mxu0 0
        %9021 = vmatpush1.bf16.msra.mxu0 %v8977
        %9022 = vmatprep.subr.bf16.mxu0 0
        %9023 = vmatpush1.bf16.msra.mxu0 %v8976
        %9024 = vmatprep.subr.bf16.mxu0 0
        %9025 = vmatpush1.bf16.msra.mxu0 %v8975
        %9026 = vmatprep.subr.bf16.mxu0 0
        %9027 = vmatpush1.bf16.msra.mxu0 %v8974
        %9028 = vmatprep.subr.bf16.mxu0 0
        %9029 = vmatpush1.bf16.msra.mxu0 %v8973
        %9030 = vmatprep.subr.bf16.mxu0 0
        %9031 = vmatpush1.bf16.msra.mxu0 %v8972
        %9032 = vmatprep.subr.bf16.mxu0 0
        %9033 = vmatpush2.bf16.msra.mxu0 0
        %9034 = vmatprep.subr.bf16.mxu0 0
        %9035 = vmatpush2.bf16.msra.mxu0 0
        %9036 = vmatprep.subr.bf16.mxu0 0
        %9037 = vmatpush2.bf16.msra.mxu0 0
        %9038 = vmatprep.subr.bf16.mxu0 0
        %9039 = vmatpush2.bf16.msra.mxu0 0
        %9040 = vmatprep.subr.bf16.mxu0 0
        %9041 = vmatpush2.bf16.msra.mxu0 0
        %9042 = vmatprep.subr.bf16.mxu0 0
        %9043 = vmatpush2.bf16.msra.mxu0 0
        %9044 = vmatprep.subr.bf16.mxu0 0
        %9045 = vmatpush2.bf16.msra.mxu0 0
        %9046 = vmatprep.subr.bf16.mxu0 0
        %9047 = vmatpush2.bf16.msra.mxu0 0
        %9048 = vmatprep.mubr.bf16.mxu0 0
        %9049 = vmatmul.mubr.bf16.gmra.mxu0 %v8984
        %v9050 = vpop.f32.mrf.mxu0
        %v9051 = vadd.f32 %v8946, %v9050
        %v9052 = vpop.f32.mrf.mxu0
        %v9053 = vpop.f32.mrf.mxu0
        %v9054 = vadd.f32 %v8946, %v9053
        %v9055 = vpop.f32.mrf.mxu0
        %9056 = vmatprep.mubr.bf16.mxu0 0
        %9057 = vmatmul.mubr.bf16.gmra.mxu0 %v8986
        %v9058 = vpop.f32.mrf.mxu0
        %v9059 = vadd.f32 %v8946, %v9058
        %v9060 = vpop.f32.mrf.mxu0
        %v9061 = vpop.f32.mrf.mxu0
        %v9062 = vadd.f32 %v8946, %v9061
        %v9063 = vpop.f32.mrf.mxu0
        %9064 = vmatprep.mubr.bf16.mxu0 0
        %9065 = vmatmul.mubr.bf16.gmra.mxu0 %v8988
        %v9066 = vpop.f32.mrf.mxu0
        %v9067 = vadd.f32 %v8946, %v9066
        %v9068 = vpop.f32.mrf.mxu0
        %v9069 = vpop.f32.mrf.mxu0
        %v9070 = vadd.f32 %v8946, %v9069
        %v9071 = vpop.f32.mrf.mxu0
        %9072 = vmatprep.mubr.bf16.mxu0 0
        %9073 = vmatmul.mubr.bf16.gmra.mxu0 %v8990
        %v9074 = vpop.f32.mrf.mxu0
        %v9075 = vadd.f32 %v8946, %v9074
        %v9076 = vpop.f32.mrf.mxu0
        %v9077 = vpop.f32.mrf.mxu0
        %v9078 = vadd.f32 %v8946, %v9077
        %v9079 = vpop.f32.mrf.mxu0
        %9080 = vmatprep.mubr.bf16.mxu0 0
        %9081 = vmatmul.mubr.bf16.gmra.mxu0 %v8992
        %v9082 = vpop.f32.mrf.mxu0
        %v9083 = vadd.f32 %v8946, %v9082
        %v9084 = vpop.f32.mrf.mxu0
        %v9085 = vpop.f32.mrf.mxu0
        %v9086 = vadd.f32 %v8946, %v9085
        %v9087 = vpop.f32.mrf.mxu0
        %9088 = vmatprep.mubr.bf16.mxu0 0
        %9089 = vmatmul.mubr.bf16.gmra.mxu0 %v8994
        %v9090 = vpop.f32.mrf.mxu0
        %v9091 = vadd.f32 %v8946, %v9090
        %v9092 = vpop.f32.mrf.mxu0
        %v9093 = vpop.f32.mrf.mxu0
        %v9094 = vadd.f32 %v8946, %v9093
        %v9095 = vpop.f32.mrf.mxu0
        %9096 = vmatprep.mubr.bf16.mxu0 0
        %9097 = vmatmul.mubr.bf16.gmra.mxu0 %v8996
        %v9098 = vpop.f32.mrf.mxu0
        %v9099 = vadd.f32 %v8946, %v9098
        %v9100 = vpop.f32.mrf.mxu0
        %v9101 = vpop.f32.mrf.mxu0
        %v9102 = vadd.f32 %v8946, %v9101
        %v9103 = vpop.f32.mrf.mxu0
        %9104 = vmatprep.mubr.bf16.mxu0 0
        %9105 = vmatmul.mubr.bf16.gmra.mxu0 %v8998
        %v9106 = vpop.f32.mrf.mxu0
        %v9107 = vadd.f32 %v8946, %v9106
        %v9108 = vpop.f32.mrf.mxu0
        %v9109 = vpop.f32.mrf.mxu0
        %v9110 = vadd.f32 %v8946, %v9109
        %v9111 = vpop.f32.mrf.mxu0
        %9112 = vmatprep.mubr.bf16.mxu0 0
        %9113 = vmatmul.mubr.bf16.gmra.mxu0 %v9000
        %v9114 = vpop.f32.mrf.mxu0
        %v9115 = vadd.f32 %v8946, %v9114
        %v9116 = vpop.f32.mrf.mxu0
        %v9117 = vpop.f32.mrf.mxu0
        %v9118 = vadd.f32 %v8946, %v9117
        %v9119 = vpop.f32.mrf.mxu0
        %9120 = vmatprep.mubr.bf16.mxu0 0
        %9121 = vmatmul.mubr.bf16.gmra.mxu0 %v9002
        %v9122 = vpop.f32.mrf.mxu0
        %v9123 = vadd.f32 %v8946, %v9122
        %v9124 = vpop.f32.mrf.mxu0
        %v9125 = vpop.f32.mrf.mxu0
        %v9126 = vadd.f32 %v8946, %v9125
        %v9127 = vpop.f32.mrf.mxu0
        %9128 = vmatprep.mubr.bf16.mxu0 0
        %9129 = vmatmul.mubr.bf16.gmra.mxu0 %v9004
        %v9130 = vpop.f32.mrf.mxu0
        %v9131 = vadd.f32 %v8946, %v9130
        %v9132 = vpop.f32.mrf.mxu0
        %v9133 = vpop.f32.mrf.mxu0
        %v9134 = vadd.f32 %v8946, %v9133
        %v9135 = vpop.f32.mrf.mxu0
        %9136 = vmatprep.mubr.bf16.mxu0 0
        %9137 = vmatmul.mubr.bf16.gmra.mxu0 %v9006
        %v9138 = vpop.f32.mrf.mxu0
        %v9139 = vadd.f32 %v8946, %v9138
        %v9140 = vpop.f32.mrf.mxu0
        %v9141 = vpop.f32.mrf.mxu0
        %v9142 = vadd.f32 %v8946, %v9141
        %v9143 = vpop.f32.mrf.mxu0
        %9144 = vmatprep.mubr.bf16.mxu0 0
        %9145 = vmatmul.mubr.bf16.gmra.mxu0 %v9008
        %v9146 = vpop.f32.mrf.mxu0
        %v9147 = vadd.f32 %v8946, %v9146
        %v9148 = vpop.f32.mrf.mxu0
        %v9149 = vpop.f32.mrf.mxu0
        %v9150 = vadd.f32 %v8946, %v9149
        %v9151 = vpop.f32.mrf.mxu0
        %9152 = vmatprep.mubr.bf16.mxu0 0
        %9153 = vmatmul.mubr.bf16.gmra.mxu0 %v9010
        %v9154 = vpop.f32.mrf.mxu0
        %v9155 = vadd.f32 %v8946, %v9154
        %v9156 = vpop.f32.mrf.mxu0
        %v9157 = vpop.f32.mrf.mxu0
        %v9158 = vadd.f32 %v8946, %v9157
        %v9159 = vpop.f32.mrf.mxu0
        %9160 = vmatprep.mubr.bf16.mxu0 0
        %9161 = vmatmul.mubr.bf16.gmra.mxu0 %v9012
        %v9162 = vpop.f32.mrf.mxu0
        %v9163 = vadd.f32 %v8946, %v9162
        %v9164 = vpop.f32.mrf.mxu0
        %v9165 = vpop.f32.mrf.mxu0
        %v9166 = vadd.f32 %v8946, %v9165
        %v9167 = vpop.f32.mrf.mxu0
        %9168 = vmatprep.mubr.bf16.mxu0 0
        %9169 = vmatmul.mubr.bf16.gmra.mxu0 %v9014
        %v9170 = vpop.f32.mrf.mxu0
        %v9171 = vadd.f32 %v8946, %v9170
        %v9172 = vpop.f32.mrf.mxu0
        %v9173 = vpop.f32.mrf.mxu0
        %v9174 = vadd.f32 %v8946, %v9173
        %v9175 = vpop.f32.mrf.mxu0
        %9176 = vdwg.mxu0
        %vm9177 = vcmp.ge.f32.partialorder %v9051, 0.0
        %vm9178 = vcmp.ge.f32.partialorder %v9054, 0.0
        %vm9179 = vcmp.ge.f32.partialorder %v9059, 0.0
        %vm9180 = vcmp.ge.f32.partialorder %v9062, 0.0
        %vm9181 = vcmp.ge.f32.partialorder %v9067, 0.0
        %vm9182 = vcmp.ge.f32.partialorder %v9070, 0.0
        %vm9183 = vcmp.ge.f32.partialorder %v9075, 0.0
        %vm9184 = vcmp.ge.f32.partialorder %v9078, 0.0
        %vm9185 = vcmp.ge.f32.partialorder %v9083, 0.0
        %vm9186 = vcmp.ge.f32.partialorder %v9086, 0.0
        %vm9187 = vcmp.ge.f32.partialorder %v9091, 0.0
        %vm9188 = vcmp.ge.f32.partialorder %v9094, 0.0
        %vm9189 = vcmp.ge.f32.partialorder %v9099, 0.0
        %vm9190 = vcmp.ge.f32.partialorder %v9102, 0.0
        %vm9191 = vcmp.ge.f32.partialorder %v9107, 0.0
        %vm9192 = vcmp.ge.f32.partialorder %v9110, 0.0
        %vm9193 = vcmp.ge.f32.partialorder %v9115, 0.0
        %vm9194 = vcmp.ge.f32.partialorder %v9118, 0.0
        %vm9195 = vcmp.ge.f32.partialorder %v9123, 0.0
        %vm9196 = vcmp.ge.f32.partialorder %v9126, 0.0
        %vm9197 = vcmp.ge.f32.partialorder %v9131, 0.0
        %vm9198 = vcmp.ge.f32.partialorder %v9134, 0.0
        %vm9199 = vcmp.ge.f32.partialorder %v9139, 0.0
        %vm9200 = vcmp.ge.f32.partialorder %v9142, 0.0
        %vm9201 = vcmp.ge.f32.partialorder %v9147, 0.0
        %vm9202 = vcmp.ge.f32.partialorder %v9150, 0.0
        %vm9203 = vcmp.ge.f32.partialorder %v9155, 0.0
        %vm9204 = vcmp.ge.f32.partialorder %v9158, 0.0
        %vm9205 = vcmp.ge.f32.partialorder %v9163, 0.0
        %vm9206 = vcmp.ge.f32.partialorder %v9166, 0.0
        %vm9207 = vcmp.ge.f32.partialorder %v9171, 0.0
        %vm9208 = vcmp.ge.f32.partialorder %v9174, 0.0
        %v9209 = vmul.f32 %v9051, 0.2
        %v9210 = vmul.f32 %v9054, 0.2
        %v9211 = vmul.f32 %v9059, 0.2
        %v9212 = vmul.f32 %v9062, 0.2
        %v9213 = vmul.f32 %v9067, 0.2
        %v9214 = vmul.f32 %v9070, 0.2
        %v9215 = vmul.f32 %v9075, 0.2
        %v9216 = vmul.f32 %v9078, 0.2
        %v9217 = vmul.f32 %v9083, 0.2
        %v9218 = vmul.f32 %v9086, 0.2
        %v9219 = vmul.f32 %v9091, 0.2
        %v9220 = vmul.f32 %v9094, 0.2
        %v9221 = vmul.f32 %v9099, 0.2
        %v9222 = vmul.f32 %v9102, 0.2
        %v9223 = vmul.f32 %v9107, 0.2
        %v9224 = vmul.f32 %v9110, 0.2
        %v9225 = vmul.f32 %v9115, 0.2
        %v9226 = vmul.f32 %v9118, 0.2
        %v9227 = vmul.f32 %v9123, 0.2
        %v9228 = vmul.f32 %v9126, 0.2
        %v9229 = vmul.f32 %v9131, 0.2
        %v9230 = vmul.f32 %v9134, 0.2
        %v9231 = vmul.f32 %v9139, 0.2
        %v9232 = vmul.f32 %v9142, 0.2
        %v9233 = vmul.f32 %v9147, 0.2
        %v9234 = vmul.f32 %v9150, 0.2
        %v9235 = vmul.f32 %v9155, 0.2
        %v9236 = vmul.f32 %v9158, 0.2
        %v9237 = vmul.f32 %v9163, 0.2
        %v9238 = vmul.f32 %v9166, 0.2
        %v9239 = vmul.f32 %v9171, 0.2
        %v9240 = vmul.f32 %v9174, 0.2
        %v9241 = vsel %vm9177, %v9051, %v9209
        %v9242 = vsel %vm9178, %v9054, %v9210
        %v9243 = vsel %vm9179, %v9059, %v9211
        %v9244 = vsel %vm9180, %v9062, %v9212
        %v9245 = vsel %vm9181, %v9067, %v9213
        %v9246 = vsel %vm9182, %v9070, %v9214
        %v9247 = vsel %vm9183, %v9075, %v9215
        %v9248 = vsel %vm9184, %v9078, %v9216
        %v9249 = vsel %vm9185, %v9083, %v9217
        %v9250 = vsel %vm9186, %v9086, %v9218
        %v9251 = vsel %vm9187, %v9091, %v9219
        %v9252 = vsel %vm9188, %v9094, %v9220
        %v9253 = vsel %vm9189, %v9099, %v9221
        %v9254 = vsel %vm9190, %v9102, %v9222
        %v9255 = vsel %vm9191, %v9107, %v9223
        %v9256 = vsel %vm9192, %v9110, %v9224
        %v9257 = vsel %vm9193, %v9115, %v9225
        %v9258 = vsel %vm9194, %v9118, %v9226
        %v9259 = vsel %vm9195, %v9123, %v9227
        %v9260 = vsel %vm9196, %v9126, %v9228
        %v9261 = vsel %vm9197, %v9131, %v9229
        %v9262 = vsel %vm9198, %v9134, %v9230
        %v9263 = vsel %vm9199, %v9139, %v9231
        %v9264 = vsel %vm9200, %v9142, %v9232
        %v9265 = vsel %vm9201, %v9147, %v9233
        %v9266 = vsel %vm9202, %v9150, %v9234
        %v9267 = vsel %vm9203, %v9155, %v9235
        %v9268 = vsel %vm9204, %v9158, %v9236
        %v9269 = vsel %vm9205, %v9163, %v9237
        %v9270 = vsel %vm9206, %v9166, %v9238
        %v9271 = vsel %vm9207, %v9171, %v9239
        %v9272 = vsel %vm9208, %v9174, %v9240
        %v9273 = vpack.c.bf16 %v9242, %v9241
        %v9274 = vpack.c.bf16 %v9244, %v9243
        %v9275 = vpack.c.bf16 %v9246, %v9245
        %v9276 = vpack.c.bf16 %v9248, %v9247
        %v9277 = vpack.c.bf16 %v9250, %v9249
        %v9278 = vpack.c.bf16 %v9252, %v9251
        %v9279 = vpack.c.bf16 %v9254, %v9253
        %v9280 = vpack.c.bf16 %v9256, %v9255
        %v9281 = vpack.c.bf16 %v9258, %v9257
        %v9282 = vpack.c.bf16 %v9260, %v9259
        %v9283 = vpack.c.bf16 %v9262, %v9261
        %v9284 = vpack.c.bf16 %v9264, %v9263
        %v9285 = vpack.c.bf16 %v9266, %v9265
        %v9286 = vpack.c.bf16 %v9268, %v9267
        %v9287 = vpack.c.bf16 %v9270, %v9269
        %v9288 = vpack.c.bf16 %v9272, %v9271
        %9297 = vrot.lane.b32.xlu0 %v9273, 32
        %v9298 = vpop.permute.xlu0 %9297
        %9299 = vrot.lane.b32.xlu0 %v9275, 32
        %v9300 = vpop.permute.xlu0 %9299
        %9301 = vrot.lane.b32.xlu0 %v9277, 32
        %v9302 = vpop.permute.xlu0 %9301
        %9303 = vrot.lane.b32.xlu0 %v9279, 32
        %v9304 = vpop.permute.xlu0 %9303
        %9305 = vrot.lane.b32.xlu0 %v9281, 32
        %v9306 = vpop.permute.xlu0 %9305
        %9307 = vrot.lane.b32.xlu0 %v9283, 32
        %v9308 = vpop.permute.xlu0 %9307
        %9309 = vrot.lane.b32.xlu0 %v9285, 32
        %v9310 = vpop.permute.xlu0 %9309
        %9311 = vrot.lane.b32.xlu0 %v9287, 32
        %v9312 = vpop.permute.xlu0 %9311
        %9321 = vrot.lane.b32.xlu0 %v9274, 64
        %v9322 = vpop.permute.xlu0 %9321
        %9323 = vrot.lane.b32.xlu0 %v9276, 64
        %v9324 = vpop.permute.xlu0 %9323
        %9325 = vrot.lane.b32.xlu0 %v9278, 64
        %v9326 = vpop.permute.xlu0 %9325
        %9327 = vrot.lane.b32.xlu0 %v9280, 64
        %v9328 = vpop.permute.xlu0 %9327
        %9329 = vrot.lane.b32.xlu0 %v9282, 64
        %v9330 = vpop.permute.xlu0 %9329
        %9331 = vrot.lane.b32.xlu0 %v9284, 64
        %v9332 = vpop.permute.xlu0 %9331
        %9333 = vrot.lane.b32.xlu0 %v9286, 64
        %v9334 = vpop.permute.xlu0 %9333
        %9335 = vrot.lane.b32.xlu0 %v9288, 64
        %v9336 = vpop.permute.xlu0 %9335
        %v9338 = vsel %vm7957, 0, %v9298
        %v9341 = vsel %vm7957, %v9274, %v9300
        %v9344 = vsel %vm7957, %v9276, %v9302
        %v9347 = vsel %vm7957, %v9278, %v9304
        %v9350 = vsel %vm7957, %v9280, %v9306
        %v9353 = vsel %vm7957, %v9282, %v9308
        %v9356 = vsel %vm7957, %v9284, %v9310
        %v9359 = vsel %vm7957, %v9286, %v9312
        %v9361 = vsel %vm8054, %v9338, %v9322
        %v9363 = vsel %vm8054, %v9341, %v9324
        %v9365 = vsel %vm8054, %v9344, %v9326
        %v9367 = vsel %vm8054, %v9347, %v9328
        %v9369 = vsel %vm8054, %v9350, %v9330
        %v9371 = vsel %vm8054, %v9353, %v9332
        %v9373 = vsel %vm8054, %v9356, %v9334
        %v9375 = vsel %vm8054, %v9359, %v9336
        %s9376 = scalar_lea.vmem %s4, 96
        %v9377 = vld [vmem:[%s9376] sm:$0xf]
        %v9378 = vld [vmem:[%s9376 + $0x4] sm:$0xf]
        %v9379 = vld [vmem:[%s9376 + $0x8] sm:$0xf]
        %v9380 = vld [vmem:[%s9376 + $0xc] sm:$0xf]
        %v9381 = vld [vmem:[%s9376 + $0x10] sm:$0xf]
        %v9382 = vld [vmem:[%s9376 + $0x14] sm:$0xf]
        %v9383 = vld [vmem:[%s9376 + $0x18] sm:$0xf]
        %v9384 = vld [vmem:[%s9376 + $0x1c] sm:$0xf]
        %v9385 = vld [vmem:[%s9376 + $0x20] sm:$0xf]
        %v9386 = vld [vmem:[%s9376 + $0x24] sm:$0xf]
        %v9387 = vld [vmem:[%s9376 + $0x28] sm:$0xf]
        %v9388 = vld [vmem:[%s9376 + $0x2c] sm:$0xf]
        %s9389 = scalar_lea.vmem %s5, 2
        %v9390 = vld [vmem:[%s9389] sm:$0x1]
        %v9392 = vlaneseq
        %v9393 = vshrl.u32 %v9392, 7
        %v9394 = vsub.s32 0, %v9393
        %v9395 = vrot.slane %v9390, %v9394
        %v9409 = vunpack.c.l.b16 %v9377
        %v9410 = vunpack.c.l.b16 %v9378
        %v9411 = vunpack.c.l.b16 %v9379
        %v9412 = vunpack.c.l.b16 %v9380
        %v9413 = vunpack.c.l.b16 %v9381
        %v9414 = vunpack.c.l.b16 %v9382
        %v9415 = vunpack.c.l.b16 %v9383
        %v9416 = vunpack.c.l.b16 %v9384
        %v9417 = vunpack.c.l.b16 %v9385
        %v9418 = vunpack.c.l.b16 %v9386
        %v9419 = vunpack.c.l.b16 %v9387
        %v9420 = vunpack.c.l.b16 %v9388
        %v9421 = vpack.c.b16 %v9410, %v9409
        %v9422 = vpack.c.b16 %v9412, %v9411
        %v9423 = vpack.c.b16 %v9414, %v9413
        %v9424 = vpack.c.b16 %v9416, %v9415
        %v9425 = vpack.c.b16 %v9418, %v9417
        %v9426 = vpack.c.b16 %v9420, %v9419
        %v9433 = vsel %vm8174, %v9361, 0
        %v9435 = vsel %vm8174, %v9363, 0
        %v9437 = vsel %vm8174, %v9365, 0
        %v9439 = vsel %vm8174, %v9367, 0
        %v9441 = vsel %vm8174, %v9369, 0
        %v9443 = vsel %vm8174, %v9371, 0
        %v9445 = vsel %vm8174, %v9373, 0
        %v9447 = vsel %vm8174, %v9375, 0
        %9449 = vmatprep.subr.bf16.mxu0 0
        %9450 = vmatpush1.bf16.msra.mxu0 0
        %9451 = vmatprep.subr.bf16.mxu0 0
        %9452 = vmatpush1.bf16.msra.mxu0 0
        %9453 = vmatprep.subr.bf16.mxu0 0
        %9454 = vmatpush1.bf16.msra.mxu0 %v9426
        %9455 = vmatprep.subr.bf16.mxu0 0
        %9456 = vmatpush1.bf16.msra.mxu0 %v9425
        %9457 = vmatprep.subr.bf16.mxu0 0
        %9458 = vmatpush1.bf16.msra.mxu0 %v9424
        %9459 = vmatprep.subr.bf16.mxu0 0
        %9460 = vmatpush1.bf16.msra.mxu0 %v9423
        %9461 = vmatprep.subr.bf16.mxu0 0
        %9462 = vmatpush1.bf16.msra.mxu0 %v9422
        %9463 = vmatprep.subr.bf16.mxu0 0
        %9464 = vmatpush1.bf16.msra.mxu0 %v9421
        %9465 = vmatprep.subr.bf16.mxu0 0
        %9466 = vmatpush2.bf16.msra.mxu0 0
        %9467 = vmatprep.subr.bf16.mxu0 0
        %9468 = vmatpush2.bf16.msra.mxu0 0
        %9469 = vmatprep.subr.bf16.mxu0 0
        %9470 = vmatpush2.bf16.msra.mxu0 0
        %9471 = vmatprep.subr.bf16.mxu0 0
        %9472 = vmatpush2.bf16.msra.mxu0 0
        %9473 = vmatprep.subr.bf16.mxu0 0
        %9474 = vmatpush2.bf16.msra.mxu0 0
        %9475 = vmatprep.subr.bf16.mxu0 0
        %9476 = vmatpush2.bf16.msra.mxu0 0
        %9477 = vmatprep.subr.bf16.mxu0 0
        %9478 = vmatpush2.bf16.msra.mxu0 0
        %9479 = vmatprep.subr.bf16.mxu0 0
        %9480 = vmatpush2.bf16.msra.mxu0 0
        %9481 = vmatprep.mubr.bf16.mxu0 0
        %9482 = vmatmul.mubr.bf16.gmra.mxu0 %v9433
        %v9483 = vpop.f32.mrf.mxu0
        %v9484 = vadd.f32 %v9395, %v9483
        %v9485 = vpop.f32.mrf.mxu0
        %v9486 = vpop.f32.mrf.mxu0
        %v9487 = vadd.f32 %v9395, %v9486
        %v9488 = vpop.f32.mrf.mxu0
        %9489 = vmatprep.mubr.bf16.mxu0 0
        %9490 = vmatmul.mubr.bf16.gmra.mxu0 %v9435
        %v9491 = vpop.f32.mrf.mxu0
        %v9492 = vadd.f32 %v9395, %v9491
        %v9493 = vpop.f32.mrf.mxu0
        %v9494 = vpop.f32.mrf.mxu0
        %v9495 = vadd.f32 %v9395, %v9494
        %v9496 = vpop.f32.mrf.mxu0
        %9497 = vmatprep.mubr.bf16.mxu0 0
        %9498 = vmatmul.mubr.bf16.gmra.mxu0 %v9437
        %v9499 = vpop.f32.mrf.mxu0
        %v9500 = vadd.f32 %v9395, %v9499
        %v9501 = vpop.f32.mrf.mxu0
        %v9502 = vpop.f32.mrf.mxu0
        %v9503 = vadd.f32 %v9395, %v9502
        %v9504 = vpop.f32.mrf.mxu0
        %9505 = vmatprep.mubr.bf16.mxu0 0
        %9506 = vmatmul.mubr.bf16.gmra.mxu0 %v9439
        %v9507 = vpop.f32.mrf.mxu0
        %v9508 = vadd.f32 %v9395, %v9507
        %v9509 = vpop.f32.mrf.mxu0
        %v9510 = vpop.f32.mrf.mxu0
        %v9511 = vadd.f32 %v9395, %v9510
        %v9512 = vpop.f32.mrf.mxu0
        %9513 = vmatprep.mubr.bf16.mxu0 0
        %9514 = vmatmul.mubr.bf16.gmra.mxu0 %v9441
        %v9515 = vpop.f32.mrf.mxu0
        %v9516 = vadd.f32 %v9395, %v9515
        %v9517 = vpop.f32.mrf.mxu0
        %v9518 = vpop.f32.mrf.mxu0
        %v9519 = vadd.f32 %v9395, %v9518
        %v9520 = vpop.f32.mrf.mxu0
        %9521 = vmatprep.mubr.bf16.mxu0 0
        %9522 = vmatmul.mubr.bf16.gmra.mxu0 %v9443
        %v9523 = vpop.f32.mrf.mxu0
        %v9524 = vadd.f32 %v9395, %v9523
        %v9525 = vpop.f32.mrf.mxu0
        %v9526 = vpop.f32.mrf.mxu0
        %v9527 = vadd.f32 %v9395, %v9526
        %v9528 = vpop.f32.mrf.mxu0
        %9529 = vmatprep.mubr.bf16.mxu0 0
        %9530 = vmatmul.mubr.bf16.gmra.mxu0 %v9445
        %v9531 = vpop.f32.mrf.mxu0
        %v9532 = vadd.f32 %v9395, %v9531
        %v9533 = vpop.f32.mrf.mxu0
        %v9534 = vpop.f32.mrf.mxu0
        %v9535 = vadd.f32 %v9395, %v9534
        %v9536 = vpop.f32.mrf.mxu0
        %9537 = vmatprep.mubr.bf16.mxu0 0
        %9538 = vmatmul.mubr.bf16.gmra.mxu0 %v9447
        %v9539 = vpop.f32.mrf.mxu0
        %v9540 = vadd.f32 %v9395, %v9539
        %v9541 = vpop.f32.mrf.mxu0
        %v9542 = vpop.f32.mrf.mxu0
        %v9543 = vadd.f32 %v9395, %v9542
        %v9544 = vpop.f32.mrf.mxu0
        %9545 = vdwg.mxu0
        %vm9546 = vcmp.ge.f32.partialorder %v9484, 0.0
        %vm9547 = vcmp.ge.f32.partialorder %v9487, 0.0
        %vm9548 = vcmp.ge.f32.partialorder %v9492, 0.0
        %vm9549 = vcmp.ge.f32.partialorder %v9495, 0.0
        %vm9550 = vcmp.ge.f32.partialorder %v9500, 0.0
        %vm9551 = vcmp.ge.f32.partialorder %v9503, 0.0
        %vm9552 = vcmp.ge.f32.partialorder %v9508, 0.0
        %vm9553 = vcmp.ge.f32.partialorder %v9511, 0.0
        %vm9554 = vcmp.ge.f32.partialorder %v9516, 0.0
        %vm9555 = vcmp.ge.f32.partialorder %v9519, 0.0
        %vm9556 = vcmp.ge.f32.partialorder %v9524, 0.0
        %vm9557 = vcmp.ge.f32.partialorder %v9527, 0.0
        %vm9558 = vcmp.ge.f32.partialorder %v9532, 0.0
        %vm9559 = vcmp.ge.f32.partialorder %v9535, 0.0
        %vm9560 = vcmp.ge.f32.partialorder %v9540, 0.0
        %vm9561 = vcmp.ge.f32.partialorder %v9543, 0.0
        %v9562 = vmul.f32 %v9484, 0.2
        %v9563 = vmul.f32 %v9487, 0.2
        %v9564 = vmul.f32 %v9492, 0.2
        %v9565 = vmul.f32 %v9495, 0.2
        %v9566 = vmul.f32 %v9500, 0.2
        %v9567 = vmul.f32 %v9503, 0.2
        %v9568 = vmul.f32 %v9508, 0.2
        %v9569 = vmul.f32 %v9511, 0.2
        %v9570 = vmul.f32 %v9516, 0.2
        %v9571 = vmul.f32 %v9519, 0.2
        %v9572 = vmul.f32 %v9524, 0.2
        %v9573 = vmul.f32 %v9527, 0.2
        %v9574 = vmul.f32 %v9532, 0.2
        %v9575 = vmul.f32 %v9535, 0.2
        %v9576 = vmul.f32 %v9540, 0.2
        %v9577 = vmul.f32 %v9543, 0.2
        %v9578 = vsel %vm9546, %v9484, %v9562
        %v9579 = vsel %vm9547, %v9487, %v9563
        %v9580 = vsel %vm9548, %v9492, %v9564
        %v9581 = vsel %vm9549, %v9495, %v9565
        %v9582 = vsel %vm9550, %v9500, %v9566
        %v9583 = vsel %vm9551, %v9503, %v9567
        %v9584 = vsel %vm9552, %v9508, %v9568
        %v9585 = vsel %vm9553, %v9511, %v9569
        %v9586 = vsel %vm9554, %v9516, %v9570
        %v9587 = vsel %vm9555, %v9519, %v9571
        %v9588 = vsel %vm9556, %v9524, %v9572
        %v9589 = vsel %vm9557, %v9527, %v9573
        %v9590 = vsel %vm9558, %v9532, %v9574
        %v9591 = vsel %vm9559, %v9535, %v9575
        %v9592 = vsel %vm9560, %v9540, %v9576
        %v9593 = vsel %vm9561, %v9543, %v9577
        %v9594 = vpack.c.bf16 %v9579, %v9578
        %v9595 = vpack.c.bf16 %v9581, %v9580
        %v9596 = vpack.c.bf16 %v9583, %v9582
        %v9597 = vpack.c.bf16 %v9585, %v9584
        %v9598 = vpack.c.bf16 %v9587, %v9586
        %v9599 = vpack.c.bf16 %v9589, %v9588
        %v9600 = vpack.c.bf16 %v9591, %v9590
        %v9601 = vpack.c.bf16 %v9593, %v9592
        %9606 = vrot.lane.b32.xlu0 %v9594, 32
        %v9607 = vpop.permute.xlu0 %9606
        %9608 = vrot.lane.b32.xlu0 %v9596, 32
        %v9609 = vpop.permute.xlu0 %9608
        %9610 = vrot.lane.b32.xlu0 %v9598, 32
        %v9611 = vpop.permute.xlu0 %9610
        %9612 = vrot.lane.b32.xlu0 %v9600, 32
        %v9613 = vpop.permute.xlu0 %9612
        %9618 = vrot.lane.b32.xlu0 %v9595, 64
        %v9619 = vpop.permute.xlu0 %9618
        %9620 = vrot.lane.b32.xlu0 %v9597, 64
        %v9621 = vpop.permute.xlu0 %9620
        %9622 = vrot.lane.b32.xlu0 %v9599, 64
        %v9623 = vpop.permute.xlu0 %9622
        %9624 = vrot.lane.b32.xlu0 %v9601, 64
        %v9625 = vpop.permute.xlu0 %9624
        %v9627 = vsel %vm7957, 0, %v9607
        %v9630 = vsel %vm7957, %v9595, %v9609
        %v9633 = vsel %vm7957, %v9597, %v9611
        %v9636 = vsel %vm7957, %v9599, %v9613
        %v9638 = vsel %vm8054, %v9627, %v9619
        %v9640 = vsel %vm8054, %v9630, %v9621
        %v9642 = vsel %vm8054, %v9633, %v9623
        %v9644 = vsel %vm8054, %v9636, %v9625
        %s9645 = scalar_lea.vmem %s4, 144
        %v9646 = vld [vmem:[%s9645] sm:$0xf]
        %v9647 = vld [vmem:[%s9645 + $0x4] sm:$0xf]
        %v9648 = vld [vmem:[%s9645 + $0x8] sm:$0xf]
        %v9649 = vld [vmem:[%s9645 + $0xc] sm:$0xf]
        %v9650 = vld [vmem:[%s9645 + $0x10] sm:$0xf]
        %v9651 = vld [vmem:[%s9645 + $0x14] sm:$0xf]
        %v9652 = vld [vmem:[%s9645 + $0x18] sm:$0xf]
        %v9653 = vld [vmem:[%s9645 + $0x1c] sm:$0xf]
        %v9654 = vld [vmem:[%s9645 + $0x20] sm:$0xf]
        %v9655 = vld [vmem:[%s9645 + $0x24] sm:$0xf]
        %v9656 = vld [vmem:[%s9645 + $0x28] sm:$0xf]
        %v9657 = vld [vmem:[%s9645 + $0x2c] sm:$0xf]
        %s9658 = scalar_lea.vmem %s5, 3
        %v9659 = vld [vmem:[%s9658] sm:$0x1]
        %v9661 = vlaneseq
        %v9662 = vshrl.u32 %v9661, 7
        %v9663 = vsub.s32 0, %v9662
        %v9664 = vrot.slane %v9659, %v9663
        %v9678 = vunpack.c.l.b16 %v9646
        %v9679 = vunpack.c.l.b16 %v9647
        %v9680 = vunpack.c.l.b16 %v9648
        %v9681 = vunpack.c.l.b16 %v9649
        %v9682 = vunpack.c.l.b16 %v9650
        %v9683 = vunpack.c.l.b16 %v9651
        %v9684 = vunpack.c.l.b16 %v9652
        %v9685 = vunpack.c.l.b16 %v9653
        %v9686 = vunpack.c.l.b16 %v9654
        %v9687 = vunpack.c.l.b16 %v9655
        %v9688 = vunpack.c.l.b16 %v9656
        %v9689 = vunpack.c.l.b16 %v9657
        %v9690 = vpack.c.b16 %v9679, %v9678
        %v9691 = vpack.c.b16 %v9681, %v9680
        %v9692 = vpack.c.b16 %v9683, %v9682
        %v9693 = vpack.c.b16 %v9685, %v9684
        %v9694 = vpack.c.b16 %v9687, %v9686
        %v9695 = vpack.c.b16 %v9689, %v9688
        %v9702 = vsel %vm8174, %v9638, 0
        %v9704 = vsel %vm8174, %v9640, 0
        %v9706 = vsel %vm8174, %v9642, 0
        %v9708 = vsel %vm8174, %v9644, 0
        %9710 = vmatprep.subr.bf16.mxu0 0
        %9711 = vmatpush1.bf16.msra.mxu0 0
        %9712 = vmatprep.subr.bf16.mxu0 0
        %9713 = vmatpush1.bf16.msra.mxu0 0
        %9714 = vmatprep.subr.bf16.mxu0 0
        %9715 = vmatpush1.bf16.msra.mxu0 %v9695
        %9716 = vmatprep.subr.bf16.mxu0 0
        %9717 = vmatpush1.bf16.msra.mxu0 %v9694
        %9718 = vmatprep.subr.bf16.mxu0 0
        %9719 = vmatpush1.bf16.msra.mxu0 %v9693
        %9720 = vmatprep.subr.bf16.mxu0 0
        %9721 = vmatpush1.bf16.msra.mxu0 %v9692
        %9722 = vmatprep.subr.bf16.mxu0 0
        %9723 = vmatpush1.bf16.msra.mxu0 %v9691
        %9724 = vmatprep.subr.bf16.mxu0 0
        %9725 = vmatpush1.bf16.msra.mxu0 %v9690
        %9726 = vmatprep.subr.bf16.mxu0 0
        %9727 = vmatpush2.bf16.msra.mxu0 0
        %9728 = vmatprep.subr.bf16.mxu0 0
        %9729 = vmatpush2.bf16.msra.mxu0 0
        %9730 = vmatprep.subr.bf16.mxu0 0
        %9731 = vmatpush2.bf16.msra.mxu0 0
        %9732 = vmatprep.subr.bf16.mxu0 0
        %9733 = vmatpush2.bf16.msra.mxu0 0
        %9734 = vmatprep.subr.bf16.mxu0 0
        %9735 = vmatpush2.bf16.msra.mxu0 0
        %9736 = vmatprep.subr.bf16.mxu0 0
        %9737 = vmatpush2.bf16.msra.mxu0 0
        %9738 = vmatprep.subr.bf16.mxu0 0
        %9739 = vmatpush2.bf16.msra.mxu0 0
        %9740 = vmatprep.subr.bf16.mxu0 0
        %9741 = vmatpush2.bf16.msra.mxu0 0
        %9742 = vmatprep.mubr.bf16.mxu0 0
        %9743 = vmatmul.mubr.bf16.gmra.mxu0 %v9702
        %v9744 = vpop.f32.mrf.mxu0
        %v9745 = vadd.f32 %v9664, %v9744
        %v9746 = vpop.f32.mrf.mxu0
        %v9747 = vpop.f32.mrf.mxu0
        %v9748 = vadd.f32 %v9664, %v9747
        %v9749 = vpop.f32.mrf.mxu0
        %9750 = vmatprep.mubr.bf16.mxu0 0
        %9751 = vmatmul.mubr.bf16.gmra.mxu0 %v9704
        %v9752 = vpop.f32.mrf.mxu0
        %v9753 = vadd.f32 %v9664, %v9752
        %v9754 = vpop.f32.mrf.mxu0
        %v9755 = vpop.f32.mrf.mxu0
        %v9756 = vadd.f32 %v9664, %v9755
        %v9757 = vpop.f32.mrf.mxu0
        %9758 = vmatprep.mubr.bf16.mxu0 0
        %9759 = vmatmul.mubr.bf16.gmra.mxu0 %v9706
        %v9760 = vpop.f32.mrf.mxu0
        %v9761 = vadd.f32 %v9664, %v9760
        %v9762 = vpop.f32.mrf.mxu0
        %v9763 = vpop.f32.mrf.mxu0
        %v9764 = vadd.f32 %v9664, %v9763
        %v9765 = vpop.f32.mrf.mxu0
        %9766 = vmatprep.mubr.bf16.mxu0 0
        %9767 = vmatmul.mubr.bf16.gmra.mxu0 %v9708
        %v9768 = vpop.f32.mrf.mxu0
        %v9769 = vadd.f32 %v9664, %v9768
        %v9770 = vpop.f32.mrf.mxu0
        %v9771 = vpop.f32.mrf.mxu0
        %v9772 = vadd.f32 %v9664, %v9771
        %v9773 = vpop.f32.mrf.mxu0
        %9774 = vdwg.mxu0
        %vm9775 = vcmp.ge.f32.partialorder %v9745, 0.0
        %vm9776 = vcmp.ge.f32.partialorder %v9748, 0.0
        %vm9777 = vcmp.ge.f32.partialorder %v9753, 0.0
        %vm9778 = vcmp.ge.f32.partialorder %v9756, 0.0
        %vm9779 = vcmp.ge.f32.partialorder %v9761, 0.0
        %vm9780 = vcmp.ge.f32.partialorder %v9764, 0.0
        %vm9781 = vcmp.ge.f32.partialorder %v9769, 0.0
        %vm9782 = vcmp.ge.f32.partialorder %v9772, 0.0
        %v9783 = vmul.f32 %v9745, 0.2
        %v9784 = vmul.f32 %v9748, 0.2
        %v9785 = vmul.f32 %v9753, 0.2
        %v9786 = vmul.f32 %v9756, 0.2
        %v9787 = vmul.f32 %v9761, 0.2
        %v9788 = vmul.f32 %v9764, 0.2
        %v9789 = vmul.f32 %v9769, 0.2
        %v9790 = vmul.f32 %v9772, 0.2
        %v9791 = vsel %vm9775, %v9745, %v9783
        %v9792 = vsel %vm9776, %v9748, %v9784
        %v9793 = vsel %vm9777, %v9753, %v9785
        %v9794 = vsel %vm9778, %v9756, %v9786
        %v9795 = vsel %vm9779, %v9761, %v9787
        %v9796 = vsel %vm9780, %v9764, %v9788
        %v9797 = vsel %vm9781, %v9769, %v9789
        %v9798 = vsel %vm9782, %v9772, %v9790
        %v9799 = vpack.c.bf16 %v9792, %v9791
        %v9800 = vpack.c.bf16 %v9794, %v9793
        %v9801 = vpack.c.bf16 %v9796, %v9795
        %v9802 = vpack.c.bf16 %v9798, %v9797
        %9805 = vrot.lane.b32.xlu0 %v9799, 32
        %v9806 = vpop.permute.xlu0 %9805
        %9807 = vrot.lane.b32.xlu0 %v9801, 32
        %v9808 = vpop.permute.xlu0 %9807
        %9811 = vrot.lane.b32.xlu0 %v9800, 64
        %v9812 = vpop.permute.xlu0 %9811
        %9813 = vrot.lane.b32.xlu0 %v9802, 64
        %v9814 = vpop.permute.xlu0 %9813
        %v9816 = vsel %vm7957, 0, %v9806
        %v9819 = vsel %vm7957, %v9800, %v9808
        %v9821 = vsel %vm8054, %v9816, %v9812
        %v9823 = vsel %vm8054, %v9819, %v9814
        %s9824 = scalar_lea.vmem %s4, 192
        %v9825 = vld [vmem:[%s9824] sm:$0xf]
        %v9826 = vld [vmem:[%s9824 + $0x4] sm:$0xf]
        %v9827 = vld [vmem:[%s9824 + $0x8] sm:$0xf]
        %v9828 = vld [vmem:[%s9824 + $0xc] sm:$0xf]
        %v9829 = vld [vmem:[%s9824 + $0x10] sm:$0xf]
        %v9830 = vld [vmem:[%s9824 + $0x14] sm:$0xf]
        %v9831 = vld [vmem:[%s9824 + $0x18] sm:$0xf]
        %v9832 = vld [vmem:[%s9824 + $0x1c] sm:$0xf]
        %v9833 = vld [vmem:[%s9824 + $0x20] sm:$0xf]
        %v9834 = vld [vmem:[%s9824 + $0x24] sm:$0xf]
        %v9835 = vld [vmem:[%s9824 + $0x28] sm:$0xf]
        %v9836 = vld [vmem:[%s9824 + $0x2c] sm:$0xf]
        %s9837 = scalar_lea.vmem %s5, 4
        %v9838 = vld [vmem:[%s9837] sm:$0x1]
        %v9840 = vlaneseq
        %v9841 = vshrl.u32 %v9840, 7
        %v9842 = vsub.s32 0, %v9841
        %v9843 = vrot.slane %v9838, %v9842
        %v9857 = vunpack.c.l.b16 %v9825
        %v9858 = vunpack.c.l.b16 %v9826
        %v9859 = vunpack.c.l.b16 %v9827
        %v9860 = vunpack.c.l.b16 %v9828
        %v9861 = vunpack.c.l.b16 %v9829
        %v9862 = vunpack.c.l.b16 %v9830
        %v9863 = vunpack.c.l.b16 %v9831
        %v9864 = vunpack.c.l.b16 %v9832
        %v9865 = vunpack.c.l.b16 %v9833
        %v9866 = vunpack.c.l.b16 %v9834
        %v9867 = vunpack.c.l.b16 %v9835
        %v9868 = vunpack.c.l.b16 %v9836
        %v9869 = vpack.c.b16 %v9858, %v9857
        %v9870 = vpack.c.b16 %v9860, %v9859
        %v9871 = vpack.c.b16 %v9862, %v9861
        %v9872 = vpack.c.b16 %v9864, %v9863
        %v9873 = vpack.c.b16 %v9866, %v9865
        %v9874 = vpack.c.b16 %v9868, %v9867
        %v9881 = vsel %vm8174, %v9821, 0
        %v9883 = vsel %vm8174, %v9823, 0
        %9885 = vmatprep.subr.bf16.mxu0 0
        %9886 = vmatpush1.bf16.msra.mxu0 0
        %9887 = vmatprep.subr.bf16.mxu0 0
        %9888 = vmatpush1.bf16.msra.mxu0 0
        %9889 = vmatprep.subr.bf16.mxu0 0
        %9890 = vmatpush1.bf16.msra.mxu0 %v9874
        %9891 = vmatprep.subr.bf16.mxu0 0
        %9892 = vmatpush1.bf16.msra.mxu0 %v9873
        %9893 = vmatprep.subr.bf16.mxu0 0
        %9894 = vmatpush1.bf16.msra.mxu0 %v9872
        %9895 = vmatprep.subr.bf16.mxu0 0
        %9896 = vmatpush1.bf16.msra.mxu0 %v9871
        %9897 = vmatprep.subr.bf16.mxu0 0
        %9898 = vmatpush1.bf16.msra.mxu0 %v9870
        %9899 = vmatprep.subr.bf16.mxu0 0
        %9900 = vmatpush1.bf16.msra.mxu0 %v9869
        %9901 = vmatprep.subr.bf16.mxu0 0
        %9902 = vmatpush2.bf16.msra.mxu0 0
        %9903 = vmatprep.subr.bf16.mxu0 0
        %9904 = vmatpush2.bf16.msra.mxu0 0
        %9905 = vmatprep.subr.bf16.mxu0 0
        %9906 = vmatpush2.bf16.msra.mxu0 0
        %9907 = vmatprep.subr.bf16.mxu0 0
        %9908 = vmatpush2.bf16.msra.mxu0 0
        %9909 = vmatprep.subr.bf16.mxu0 0
        %9910 = vmatpush2.bf16.msra.mxu0 0
        %9911 = vmatprep.subr.bf16.mxu0 0
        %9912 = vmatpush2.bf16.msra.mxu0 0
        %9913 = vmatprep.subr.bf16.mxu0 0
        %9914 = vmatpush2.bf16.msra.mxu0 0
        %9915 = vmatprep.subr.bf16.mxu0 0
        %9916 = vmatpush2.bf16.msra.mxu0 0
        %9917 = vmatprep.mubr.bf16.mxu0 0
        %9918 = vmatmul.mubr.bf16.gmra.mxu0 %v9881
        %v9919 = vpop.f32.mrf.mxu0
        %v9920 = vadd.f32 %v9843, %v9919
        %v9921 = vpop.f32.mrf.mxu0
        %v9922 = vpop.f32.mrf.mxu0
        %v9923 = vadd.f32 %v9843, %v9922
        %v9924 = vpop.f32.mrf.mxu0
        %9925 = vmatprep.mubr.bf16.mxu0 0
        %9926 = vmatmul.mubr.bf16.gmra.mxu0 %v9883
        %v9927 = vpop.f32.mrf.mxu0
        %v9928 = vadd.f32 %v9843, %v9927
        %v9929 = vpop.f32.mrf.mxu0
        %v9930 = vpop.f32.mrf.mxu0
        %v9931 = vadd.f32 %v9843, %v9930
        %v9932 = vpop.f32.mrf.mxu0
        %9933 = vdwg.mxu0
        %vm9934 = vcmp.ge.f32.partialorder %v9920, 0.0
        %vm9935 = vcmp.ge.f32.partialorder %v9923, 0.0
        %vm9936 = vcmp.ge.f32.partialorder %v9928, 0.0
        %vm9937 = vcmp.ge.f32.partialorder %v9931, 0.0
        %v9938 = vmul.f32 %v9920, 0.2
        %v9939 = vmul.f32 %v9923, 0.2
        %v9940 = vmul.f32 %v9928, 0.2
        %v9941 = vmul.f32 %v9931, 0.2
        %v9942 = vsel %vm9934, %v9920, %v9938
        %v9943 = vsel %vm9935, %v9923, %v9939
        %v9944 = vsel %vm9936, %v9928, %v9940
        %v9945 = vsel %vm9937, %v9931, %v9941
        %v9946 = vpack.c.bf16 %v9943, %v9942
        %v9947 = vpack.c.bf16 %v9945, %v9944
        %9949 = vrot.lane.b32.xlu0 %v9946, 32
        %v9950 = vpop.permute.xlu0 %9949
        %9952 = vrot.lane.b32.xlu0 %v9947, 64
        %v9953 = vpop.permute.xlu0 %9952
        %v9955 = vsel %vm7957, 0, %v9950
        %v9957 = vsel %vm8054, %v9955, %v9953
        %s9958 = scalar_lea.vmem %s4, 240
        %v9959 = vld [vmem:[%s9958] sm:$0xf]
        %v9960 = vld [vmem:[%s9958 + $0x4] sm:$0xf]
        %v9961 = vld [vmem:[%s9958 + $0x8] sm:$0xf]
        %v9962 = vld [vmem:[%s9958 + $0xc] sm:$0xf]
        %v9963 = vld [vmem:[%s9958 + $0x10] sm:$0xf]
        %v9964 = vld [vmem:[%s9958 + $0x14] sm:$0xf]
        %v9965 = vld [vmem:[%s9958 + $0x18] sm:$0xf]
        %v9966 = vld [vmem:[%s9958 + $0x1c] sm:$0xf]
        %v9967 = vld [vmem:[%s9958 + $0x20] sm:$0xf]
        %v9968 = vld [vmem:[%s9958 + $0x24] sm:$0xf]
        %v9969 = vld [vmem:[%s9958 + $0x28] sm:$0xf]
        %v9970 = vld [vmem:[%s9958 + $0x2c] sm:$0xf]
        %s9971 = scalar_lea.vmem %s5, 5
        %v9972 = vld [vmem:[%s9971] sm:$0x1]
        %v9974 = vlaneseq
        %v9975 = vshrl.u32 %v9974, 7
        %v9976 = vsub.s32 0, %v9975
        %v9977 = vrot.slane %v9972, %v9976
        %v9991 = vunpack.c.l.b16 %v9959
        %v9992 = vunpack.c.l.b16 %v9960
        %v9993 = vunpack.c.l.b16 %v9961
        %v9994 = vunpack.c.l.b16 %v9962
        %v9995 = vunpack.c.l.b16 %v9963
        %v9996 = vunpack.c.l.b16 %v9964
        %v9997 = vunpack.c.l.b16 %v9965
        %v9998 = vunpack.c.l.b16 %v9966
        %v9999 = vunpack.c.l.b16 %v9967
        %v10000 = vunpack.c.l.b16 %v9968
        %v10001 = vunpack.c.l.b16 %v9969
        %v10002 = vunpack.c.l.b16 %v9970
        %v10003 = vpack.c.b16 %v9992, %v9991
        %v10004 = vpack.c.b16 %v9994, %v9993
        %v10005 = vpack.c.b16 %v9996, %v9995
        %v10006 = vpack.c.b16 %v9998, %v9997
        %v10007 = vpack.c.b16 %v10000, %v9999
        %v10008 = vpack.c.b16 %v10002, %v10001
        %v10015 = vsel %vm8174, %v9957, 0
        %10017 = vmatprep.subr.bf16.mxu0 0
        %10018 = vmatpush1.bf16.msra.mxu0 0
        %10019 = vmatprep.subr.bf16.mxu0 0
        %10020 = vmatpush1.bf16.msra.mxu0 0
        %10021 = vmatprep.subr.bf16.mxu0 0
        %10022 = vmatpush1.bf16.msra.mxu0 %v10008
        %10023 = vmatprep.subr.bf16.mxu0 0
        %10024 = vmatpush1.bf16.msra.mxu0 %v10007
        %10025 = vmatprep.subr.bf16.mxu0 0
        %10026 = vmatpush1.bf16.msra.mxu0 %v10006
        %10027 = vmatprep.subr.bf16.mxu0 0
        %10028 = vmatpush1.bf16.msra.mxu0 %v10005
        %10029 = vmatprep.subr.bf16.mxu0 0
        %10030 = vmatpush1.bf16.msra.mxu0 %v10004
        %10031 = vmatprep.subr.bf16.mxu0 0
        %10032 = vmatpush1.bf16.msra.mxu0 %v10003
        %10033 = vmatprep.subr.bf16.mxu0 0
        %10034 = vmatpush2.bf16.msra.mxu0 0
        %10035 = vmatprep.subr.bf16.mxu0 0
        %10036 = vmatpush2.bf16.msra.mxu0 0
        %10037 = vmatprep.subr.bf16.mxu0 0
        %10038 = vmatpush2.bf16.msra.mxu0 0
        %10039 = vmatprep.subr.bf16.mxu0 0
        %10040 = vmatpush2.bf16.msra.mxu0 0
        %10041 = vmatprep.subr.bf16.mxu0 0
        %10042 = vmatpush2.bf16.msra.mxu0 0
        %10043 = vmatprep.subr.bf16.mxu0 0
        %10044 = vmatpush2.bf16.msra.mxu0 0
        %10045 = vmatprep.subr.bf16.mxu0 0
        %10046 = vmatpush2.bf16.msra.mxu0 0
        %10047 = vmatprep.subr.bf16.mxu0 0
        %10048 = vmatpush2.bf16.msra.mxu0 0
        %10049 = vmatprep.mubr.bf16.mxu0 0
        %10050 = vmatmul.mubr.bf16.gmra.mxu0 %v10015
        %v10051 = vpop.f32.mrf.mxu0
        %v10052 = vadd.f32 %v9977, %v10051
        %v10053 = vpop.f32.mrf.mxu0
        %v10054 = vpop.f32.mrf.mxu0
        %v10055 = vadd.f32 %v9977, %v10054
        %v10056 = vpop.f32.mrf.mxu0
        %10057 = vdwg.mxu0
        %vm10058 = vcmp.ge.f32.partialorder %v10052, 0.0
        %vm10059 = vcmp.ge.f32.partialorder %v10055, 0.0
        %v10060 = vmul.f32 %v10052, 0.2
        %v10061 = vmul.f32 %v10055, 0.2
        %v10062 = vsel %vm10058, %v10052, %v10060
        %v10063 = vsel %vm10059, %v10055, %v10061
        %v10064 = vpack.c.bf16 %v10063, %v10062
        %v10065 = vld [vmem:[%s6] sm:$0xf]
        %v10066 = vld [vmem:[%s6 + $0x4] sm:$0xf]
        %v10067 = vld [vmem:[%s6 + $0x8] sm:$0xf]
        %v10068 = vld [vmem:[%s6 + $0xc] sm:$0xf]
        %v10069 = vld [vmem:[%s7] sm:$0x1]
        %v10071 = vlaneseq
        %v10072 = vshrl.u32 %v10071, 7
        %v10073 = vsub.s32 0, %v10072
        %v10074 = vrot.slane %v10069, %v10073
        %v10080 = vunpack.c.l.b16 %v10065
        %v10081 = vunpack.c.l.b16 %v10066
        %v10082 = vunpack.c.l.b16 %v10067
        %v10083 = vunpack.c.l.b16 %v10068
        %v10084 = vpack.c.b16 %v10081, %v10080
        %v10085 = vpack.c.b16 %v10083, %v10082
        %v10089 = vsel %vm7957, %v10064, 0
        %10091 = vmatprep.subr.bf16.mxu0 0
        %10092 = vmatpush1.bf16.msra.mxu0 0
        %10093 = vmatprep.subr.bf16.mxu0 0
        %10094 = vmatpush1.bf16.msra.mxu0 0
        %10095 = vmatprep.subr.bf16.mxu0 0
        %10096 = vmatpush1.bf16.msra.mxu0 0
        %10097 = vmatprep.subr.bf16.mxu0 0
        %10098 = vmatpush1.bf16.msra.mxu0 0
        %10099 = vmatprep.subr.bf16.mxu0 0
        %10100 = vmatpush1.bf16.msra.mxu0 0
        %10101 = vmatprep.subr.bf16.mxu0 0
        %10102 = vmatpush1.bf16.msra.mxu0 0
        %10103 = vmatprep.subr.bf16.mxu0 0
        %10104 = vmatpush1.bf16.msra.mxu0 %v10085
        %10105 = vmatprep.subr.bf16.mxu0 0
        %10106 = vmatpush1.bf16.msra.mxu0 %v10084
        %10107 = vmatprep.subr.bf16.mxu0 0
        %10108 = vmatpush2.bf16.msra.mxu0 0
        %10109 = vmatprep.subr.bf16.mxu0 0
        %10110 = vmatpush2.bf16.msra.mxu0 0
        %10111 = vmatprep.subr.bf16.mxu0 0
        %10112 = vmatpush2.bf16.msra.mxu0 0
        %10113 = vmatprep.subr.bf16.mxu0 0
        %10114 = vmatpush2.bf16.msra.mxu0 0
        %10115 = vmatprep.subr.bf16.mxu0 0
        %10116 = vmatpush2.bf16.msra.mxu0 0
        %10117 = vmatprep.subr.bf16.mxu0 0
        %10118 = vmatpush2.bf16.msra.mxu0 0
        %10119 = vmatprep.subr.bf16.mxu0 0
        %10120 = vmatpush2.bf16.msra.mxu0 0
        %10121 = vmatprep.subr.bf16.mxu0 0
        %10122 = vmatpush2.bf16.msra.mxu0 0
        %10123 = vmatprep.mubr.bf16.mxu0 0
        %10124 = vmatmul.mubr.bf16.gmra.mxu0 %v10089
        %v10125 = vpop.f32.mrf.mxu0
        %v10126 = vadd.f32 %v10074, %v10125
        %v10127 = vpop.f32.mrf.mxu0
        %v10128 = vpop.f32.mrf.mxu0
        %v10129 = vadd.f32 %v10074, %v10128
        %v10130 = vpop.f32.mrf.mxu0
        %10131 = vdwg.mxu0
        %10132 = vst [vmem:[%s837] sm:$0xff] %v10126
        %10133 = vst [vmem:[%s837 + $0x8] sm:$0xff] %v10129
        %s10134 = smul.u32 2, %s19
        %p10135 = scmp.lt.s32.totalorder %s10134, 3
        %s10136 = scalar_select %p10135, %s10134, 3
        %s10137 = smul.addr %s10136, 8
        %s10138 = scalar_lea.vmem %s8, %s10137
        // Predicated region
        $region76: #{encoder_forward.1} parent=70 // pred_check
          %p10139 = pneg %p210
        $region77: #{encoder_forward.1} parent=70 // pred_check_branch
          %10141 = sbr.rel (%p10139) target = $region79
        $region78: #{encoder_forward.1} parent=70 // pred_region
          %s10142 = smul.u32 2, %s19
        $region79: #{encoder_forward.1} parent=70 // pred_fallthru
          _
      $region71: #{encoder_forward.1} parent=5 // pred_fallthru
        _
      %p10143 = scmp.le.s32.totalorder 2, %s14
      // Predicated region
      $region80: #{encoder_forward.1} parent=5 // pred_check
        %p10144 = pneg %p10143
      $region81: #{encoder_forward.1} parent=5 // pred_check_branch
        %10146 = sbr.rel (%p10144) target = $region83
      $region82: #{encoder_forward.1} parent=5 // pred_region
        %s10147 = ssub.s32 %s14, 2
        // Predicated region
        $region84: #{encoder_forward.1} parent=82 // pred_check
          %p10148 = pneg %p216
        $region85: #{encoder_forward.1} parent=82 // pred_check_branch
          %10150 = sbr.rel (%p10148) target = $region87
        $region86: #{encoder_forward.1} parent=82 // pred_region
          %s10151 = smul.u32 2, %s20
          %p10152 = scmp.lt.s32.totalorder %s10151, 3
          %s10153 = scalar_select %p10152, %s10151, 3
          %s10154 = smul.addr %s10153, 8
          %s10155 = scalar_lea.vmem %s8, %s10154
        $region87: #{encoder_forward.1} parent=82 // pred_fallthru
          _
      $region83: #{encoder_forward.1} parent=5 // pred_fallthru
        _
    $region6: #{encoder_forward.1} parent=1 // loop_footer
      %s18 = sadd.s32 1, %s14
    $region7: #{encoder_forward.1} parent=1 // loop_footer_branch
      %13 = sbr.rel target = $region3
    $region8: #{encoder_forward.1} parent=1 // loop_exit
      _

</llo_original>
